<compile_context>
chip_gen: v7x
topology: tpu7x:2x2x1
jax: 0.10.0
libtpu: 0.0.40
codegen_flags: <defaults>
</compile_context>

<pallas_src>
import functools

import numpy as np
import jax
import jax.numpy as jnp
from jax.experimental import pallas as pl
from jax.experimental.pallas import tpu as pltpu

FSIZE0 = 3
BN_EPS = 1e-4
MAX_ROW_TILE = 512                  # rows per grid step at production sizes
VMEM_LIMIT = 48 * 1024 * 1024       # <= ~48 MiB: safe on v7x (64 MiB physical),
                                    # well above v5e's 16 MiB default scoped limit


def _round_up(n, m):
    return ((n + m - 1) // m) * m


def _level_tiling(n):
    """(row_tile, n_pad) for a voxel level with n active sites.

    Always leaves >= 1 zero pad row so row index `n` can be used as the gather
    sentinel for convolutions reading from this level.
    """
    rt = min(MAX_ROW_TILE, _round_up(n + 1, 8))
    n_pad = _round_up(n + 1, rt)
    return rt, n_pad


def _compiler_params():
    return pltpu.CompilerParams(dimension_semantics=("parallel",),
                                vmem_limit_bytes=VMEM_LIMIT)


# ----------------------------- Pallas kernels -----------------------------

def _make_conv_kernel(relu, has_residual, n_valid, row_tile):
    """Fused [BN scale/shift(+ReLU) on gathered input] -> matmul -> (+residual)
    -> per-tile BN-stats epilogue."""

    def kernel(g_ref, inv_ref, sc_ref, sh_ref, w_ref, corr_ref, *rest):
        if has_residual:
            r_ref, o_ref, ps_ref, pq_ref = rest
        else:
            o_ref, ps_ref, pq_ref = rest

        # BN apply fused on the gathered [tile, K*Cin] tile (f32 math).
        h = g_ref[...].astype(jnp.float32) * sc_ref[...] + sh_ref[...]
        if relu:
            h = jnp.maximum(h, 0.0)

        # Single MXU matmul per row tile: [tile, K*Cin] @ [K*Cin, Cout].
        acc = jnp.dot(h.astype(jnp.bfloat16), w_ref[...],
                      preferred_element_type=jnp.float32)

        # Missing-neighbour correction: a sentinel entry gathered the zero pad
        # row, so after the fused affine(+ReLU) it contributed act(shift) @ W_k
        # instead of 0.  Subtract that with one tiny [tile, K] @ [K, Cout].
        acc = acc - jnp.dot(inv_ref[...].astype(jnp.float32), corr_ref[...],
                            preferred_element_type=jnp.float32)

        if has_residual:                       # AddTable of the residual block
            acc = acc + r_ref[...].astype(jnp.float32)

        # Keep pad rows exactly zero (they are gather sentinels downstream and
        # must not pollute the BN statistics).
        row = (pl.program_id(0) * row_tile
               + jax.lax.broadcasted_iota(jnp.int32, (row_tile, 1), 0))
        acc = jnp.where(row < n_valid, acc, 0.0)

        # BN-stats epilogue: per-tile partial sum / sumsq (reduced outside).
        ps_ref[...] = jnp.sum(acc, axis=0, keepdims=True)[None]
        pq_ref[...] = jnp.sum(acc * acc, axis=0, keepdims=True)[None]
        o_ref[...] = acc.astype(o_ref.dtype)

    return kernel


def _stats_kernel(x_ref, ps_ref, pq_ref):
    # Per-channel partial sum / sumsq for one row tile ("parallel" axis).
    x = x_ref[...].astype(jnp.float32)
    ps_ref[...] = jnp.sum(x, axis=0, keepdims=True)[None]
    pq_ref[...] = jnp.sum(x * x, axis=0, keepdims=True)[None]


def _head_kernel(x0_ref, a1_ref, a2_ref, sc_ref, sh_ref, w_ref, b_ref, o_ref):
    # Fused p3 BatchNormReLU(3nf) + p4 OutputLayer + motlinear(3nf -> 3).
    # The 3nf channels arrive as three nf-wide chunks (x0, unpooled x1,
    # unpooled x2) so the JoinTable concat is never materialized in HBM.
    acc = jnp.zeros(o_ref.shape, jnp.float32)
    for j, xr in enumerate((x0_ref, a1_ref, a2_ref)):
        h = jnp.maximum(xr[...].astype(jnp.float32) * sc_ref[j] + sh_ref[j], 0.0)
        acc = acc + jnp.dot(h.astype(jnp.bfloat16), w_ref[j],
                            preferred_element_type=jnp.float32)
    o_ref[...] = acc + b_ref[...]


# ----------------------------- kernel wrappers -----------------------------

def _bn_scale_shift(stats, gamma, beta):
    s, q, count = stats
    mean = s / count
    var = jnp.maximum(q / count - mean * mean, 0.0)
    scale = gamma * jax.lax.rsqrt(var + BN_EPS)
    shift = beta - mean * scale
    return scale, shift


def channel_stats(x_pad, row_tile):
    """Per-channel (sum, sumsq) over padded rows (pad rows are exact zeros)."""
    n_pad, c = x_pad.shape
    nt = n_pad // row_tile
    ps, pq = pl.pallas_call(
        _stats_kernel,
        out_shape=(jax.ShapeDtypeStruct((nt, 1, c), jnp.float32),
                   jax.ShapeDtypeStruct((nt, 1, c), jnp.float32)),
        grid=(nt,),
        in_specs=[pl.BlockSpec((row_tile, c), lambda i: (i, 0))],
        out_specs=(pl.BlockSpec((1, 1, c), lambda i: (i, 0, 0)),
                   pl.BlockSpec((1, 1, c), lambda i: (i, 0, 0))),
        compiler_params=_compiler_params(),
    )(x_pad)
    return ps.sum(axis=(0, 1)), pq.sum(axis=(0, 1))


def sparse_conv_bn(x_src, idx_pad, weight, *, n_src, n_dst, row_tile_dst,
                   bn=None, relu=False, residual=None):
    """Fused [BatchNorm(+ReLU) on source features] -> sparse convolution.

    x_src:    [n_pad_src, Cin] bf16 source-level features; rows >= n_src are 0.
    idx_pad:  [n_pad_dst, K] int32 rulebook; sentinel == n_src for missing
              neighbours and for padded output rows (host-built).
    weight:   [K, Cin, Cout] f32.
    bn:       None (identity, p1) or (stats=(sum,sumsq,count), gamma, beta).
    residual: optional [n_pad_dst, Cout] bf16 added to the conv output.
    Returns (y [n_pad_dst, Cout] bf16, stats=(sum, sumsq, count) of y).
    """
    _, cin = x_src.shape
    n_pad_dst, k = idx_pad.shape
    cout = weight.shape[-1]
    kc = k * cin

    if bn is None:
        scale = jnp.ones((cin,), jnp.float32)
        shift = jnp.zeros((cin,), jnp.float32)
    else:
        stats, gamma, beta = bn
        scale, shift = _bn_scale_shift(stats, gamma, beta)

    # Neighbour gather (XLA).  TODO(synk): move in-kernel once Mosaic supports
    # a general VMEM row gather; this is the remaining big HBM intermediate.
    g = jnp.take(x_src, idx_pad.reshape(-1), axis=0).reshape(n_pad_dst, kc)
    invalid = (idx_pad == n_src).astype(jnp.bfloat16)      # [n_pad_dst, K]

    scale_kc = jnp.tile(scale, k).reshape(1, kc)
    shift_kc = jnp.tile(shift, k).reshape(1, kc)
    w2 = weight.astype(jnp.bfloat16).reshape(kc, cout)
    act_shift = jnp.maximum(shift, 0.0) if relu else shift
    corr = jnp.einsum("c,kco->ko",
                      act_shift.astype(jnp.bfloat16).astype(jnp.float32),
                      weight.astype(jnp.bfloat16).astype(jnp.float32))

    nt = n_pad_dst // row_tile_dst
    kernel = _make_conv_kernel(relu, residual is not None, n_dst, row_tile_dst)

    in_specs = [
        pl.BlockSpec((row_tile_dst, kc), lambda i: (i, 0)),   # gathered tile
        pl.BlockSpec((row_tile_dst, k), lambda i: (i, 0)),    # sentinel mask
        pl.BlockSpec((1, kc), lambda i: (0, 0)),              # BN scale (resident)
        pl.BlockSpec((1, kc), lambda i: (0, 0)),              # BN shift (resident)
        pl.BlockSpec((kc, cout), lambda i: (0, 0)),           # weight  (resident)
        pl.BlockSpec((k, cout), lambda i: (0, 0)),            # correction
    ]
    args = [g, invalid, scale_kc, shift_kc, w2, corr]
    if residual is not None:
        in_specs.append(pl.BlockSpec((row_tile_dst, cout), lambda i: (i, 0)))
        args.append(residual)

    y, ps, pq = pl.pallas_call(
        kernel,
        out_shape=(jax.ShapeDtypeStruct((n_pad_dst, cout), jnp.bfloat16),
                   jax.ShapeDtypeStruct((nt, 1, cout), jnp.float32),
                   jax.ShapeDtypeStruct((nt, 1, cout), jnp.float32)),
        grid=(nt,),
        in_specs=in_specs,
        out_specs=(pl.BlockSpec((row_tile_dst, cout), lambda i: (i, 0)),
                   pl.BlockSpec((1, 1, cout), lambda i: (i, 0, 0)),
                   pl.BlockSpec((1, 1, cout), lambda i: (i, 0, 0))),
        compiler_params=_compiler_params(),
    )(*args)
    stats = (ps.sum(axis=(0, 1)), pq.sum(axis=(0, 1)), float(n_dst))
    return y, stats


def motion_head(x0, a1, a2, stats0, stats1, stats2, bn_gamma, bn_beta,
                lin_w, lin_b, *, n0, row_tile):
    """Fused p3 BatchNormReLU(3nf) + p4 OutputLayer + motlinear(3nf -> 3)."""
    n_pad, nf = x0.shape
    cout = lin_w.shape[-1]

    scs, shs = [], []
    for j, st in enumerate((stats0, stats1, stats2)):
        sc, sh = _bn_scale_shift(st, bn_gamma[j * nf:(j + 1) * nf],
                                 bn_beta[j * nf:(j + 1) * nf])
        scs.append(sc)
        shs.append(sh)
    sc = jnp.stack(scs).reshape(3, 1, nf)
    sh = jnp.stack(shs).reshape(3, 1, nf)
    w = lin_w.astype(jnp.bfloat16).reshape(3, nf, cout)
    b = lin_b.reshape(1, cout).astype(jnp.float32)

    nt = n_pad // row_tile
    tile_spec = pl.BlockSpec((row_tile, nf), lambda i: (i, 0))
    y = pl.pallas_call(
        _head_kernel,
        out_shape=jax.ShapeDtypeStruct((n_pad, cout), jnp.float32),
        grid=(nt,),
        in_specs=[tile_spec, tile_spec, tile_spec,
                  pl.BlockSpec((3, 1, nf), lambda i: (0, 0, 0)),
                  pl.BlockSpec((3, 1, nf), lambda i: (0, 0, 0)),
                  pl.BlockSpec((3, nf, cout), lambda i: (0, 0, 0)),
                  pl.BlockSpec((1, cout), lambda i: (0, 0))],
        out_specs=pl.BlockSpec((row_tile, cout), lambda i: (i, 0)),
        compiler_params=_compiler_params(),
    )(x0, a1, a2, sc, sh, w, b)
    return y[:n0]


# ------------------- host-side rulebook construction (glue) -------------------

def build_submanifold_rulebook(coords, n_pad):
    """3x3x3 submanifold conv rulebook [n_pad, 27]; sentinel == len(coords)."""
    coords = np.asarray(coords)
    n = coords.shape[0]
    table = {tuple(int(v) for v in c): i for i, c in enumerate(coords)}
    offsets = [(dx, dy, dz) for dx in (-1, 0, 1) for dy in (-1, 0, 1)
               for dz in (-1, 0, 1)]
    idx = np.full((n_pad, len(offsets)), n, np.int32)
    for i in range(n):
        b, x, y, z = (int(v) for v in coords[i])
        for kk, (dx, dy, dz) in enumerate(offsets):
            j = table.get((b, x + dx, y + dy, z + dz))
            if j is not None:
                idx[i, kk] = j
    return idx


def build_downsample(coords):
    """scn.Convolution(filter=2, stride=2) rulebook + UnPooling parent map."""
    coords = np.asarray(coords)
    n_fine = coords.shape[0]
    coarse = np.unique(
        np.concatenate([coords[:, :1], coords[:, 1:] // 2], axis=1), axis=0)
    n_coarse = coarse.shape[0]
    _, n_pad_coarse = _level_tiling(n_coarse)
    fine_table = {tuple(int(v) for v in c): i for i, c in enumerate(coords)}
    offsets = [(dx, dy, dz) for dx in (0, 1) for dy in (0, 1) for dz in (0, 1)]
    idx = np.full((n_pad_coarse, len(offsets)), n_fine, np.int32)
    for j in range(n_coarse):
        b, x, y, z = (int(v) for v in coarse[j])
        for kk, (dx, dy, dz) in enumerate(offsets):
            i = fine_table.get((b, 2 * x + dx, 2 * y + dy, 2 * z + dz))
            if i is not None:
                idx[j, kk] = i
    coarse_table = {tuple(int(v) for v in c): i for i, c in enumerate(coarse)}
    parent = np.array(
        [coarse_table[(int(b), int(x) // 2, int(y) // 2, int(z) // 2)]
         for b, x, y, z in coords], np.int32)
    return coarse, idx, parent


def build_topology(coords):
    coords = np.asarray(coords)
    n0 = coords.shape[0]
    rt0, np0 = _level_tiling(n0)
    rule0 = build_submanifold_rulebook(coords, np0)

    coarse1, down0_idx, parent0 = build_downsample(coords)
    n1 = coarse1.shape[0]
    rt1, np1 = _level_tiling(n1)
    rule1 = build_submanifold_rulebook(coarse1, np1)

    coarse2, down1_idx, parent1 = build_downsample(coarse1)
    n2 = coarse2.shape[0]
    rt2, np2 = _level_tiling(n2)
    rule2 = build_submanifold_rulebook(coarse2, np2)

    # Padded UnPooling parent maps (pad rows point at the source level's zero
    # pad row) and the composed level2->level0 map for the fused head.
    parent0_pad = np.full((np0,), n1, np.int32)
    parent0_pad[:n0] = parent0
    parent10_pad = np.full((np0,), n2, np.int32)
    parent10_pad[:n0] = parent1[parent0]

    return dict(
        n=(n0, n1, n2), row_tile=(rt0, rt1, rt2), n_pad=(np0, np1, np2),
        rule0=jnp.asarray(rule0), rule1=jnp.asarray(rule1),
        rule2=jnp.asarray(rule2),
        down0_idx=jnp.asarray(down0_idx), down1_idx=jnp.asarray(down1_idx),
        parent0=jnp.asarray(parent0_pad), parent10=jnp.asarray(parent10_pad),
    )


# ----------------------------- parameters -----------------------------

def init_params(key, nf_in, nf):
    keys = iter(jax.random.split(key, 32))

    def conv_w(k, K, cin, cout):
        std = 1.0 / np.sqrt(K * cin)
        return std * jax.random.normal(k, (K, cin, cout), jnp.float32)

    def bn(k, c):
        k1, k2 = jax.random.split(k)
        return (1.0 + 0.1 * jax.random.normal(k1, (c,), jnp.float32),
                0.1 * jax.random.normal(k2, (c,), jnp.float32))

    p = {"p1_w": conv_w(next(keys), 27, nf_in, nf)}       # p1: SMConv nf_in->nf

    def res_block():                                       # residual block (a==b)
        wa, ba = bn(next(keys), nf)
        wb, bb = bn(next(keys), nf)
        return dict(bn_a_w=wa, bn_a_b=ba,
                    conv_a=conv_w(next(keys), 27, nf, nf),
                    bn_b_w=wb, bn_b_b=bb,
                    conv_b=conv_w(next(keys), 27, nf, nf))

    p["block0"], p["block1"], p["block2"] = res_block(), res_block(), res_block()
    for lvl in (0, 1):                                     # stride-2 down convs
        w, b = bn(next(keys), nf)
        p[f"down{lvl}_bn_w"], p[f"down{lvl}_bn_b"] = w, b
        p[f"down{lvl}_w"] = conv_w(next(keys), 8, nf, nf)
    p["p3_bn_w"], p["p3_bn_b"] = bn(next(keys), 3 * nf)    # p3: BatchNormReLU(3nf)
    p["mot_w"] = (1.0 / np.sqrt(3 * nf)) * jax.random.normal(
        next(keys), (3 * nf, 3), jnp.float32)              # motlinear: 3nf -> 3
    p["mot_b"] = 0.01 * jax.random.normal(next(keys), (3,), jnp.float32)
    return p


# ----------------------------- forward pass -----------------------------

def residual_block(x, stats_x, rule_idx, bp, *, n, row_tile):
    # ConcatTable(Identity, [BNReLU, SMConv, BNReLU, SMConv]) + AddTable.
    h, stats_h = sparse_conv_bn(
        x, rule_idx, bp["conv_a"], n_src=n, n_dst=n, row_tile_dst=row_tile,
        bn=(stats_x, bp["bn_a_w"], bp["bn_a_b"]), relu=True)
    return sparse_conv_bn(
        h, rule_idx, bp["conv_b"], n_src=n, n_dst=n, row_tile_dst=row_tile,
        bn=(stats_h, bp["bn_b_w"], bp["bn_b_b"]), relu=True, residual=x)


def motion_prediction_forward(feats, topo, params):
    if feats.shape[0] == 0:          # matches `if len(x[0]) == 0: return ([], [])`
        return ([], [])
    n0, n1, n2 = topo["n"]
    rt0, rt1, rt2 = topo["row_tile"]
    np0, _, _ = topo["n_pad"]

    # p0 (InputLayer): identity on features; coordinate hashing done on host.
    feats_pad = jnp.zeros((np0, feats.shape[1]), jnp.bfloat16
                          ).at[:n0].set(feats.astype(jnp.bfloat16))

    # p1: SubmanifoldConvolution(nf_in -> nf, 3, bias=False), no BN on its input.
    x, stats_x = sparse_conv_bn(feats_pad, topo["rule0"], params["p1_w"],
                                n_src=n0, n_dst=n0, row_tile_dst=rt0)

    # p2: FullyConvolutionalNet(reps=1, nPlanes=[nf, nf, nf], residual_blocks=True)
    x0, stats_x0 = residual_block(x, stats_x, topo["rule0"], params["block0"],
                                  n=n0, row_tile=rt0)
    y1, stats_y1 = sparse_conv_bn(
        x0, topo["down0_idx"], params["down0_w"], n_src=n0, n_dst=n1,
        row_tile_dst=rt1, relu=True,
        bn=(stats_x0, params["down0_bn_w"], params["down0_bn_b"]))

    x1, stats_x1 = residual_block(y1, stats_y1, topo["rule1"], params["block1"],
                                  n=n1, row_tile=rt1)
    y2, stats_y2 = sparse_conv_bn(
        x1, topo["down1_idx"], params["down1_w"], n_src=n1, n_dst=n2,
        row_tile_dst=rt2, relu=True,
        bn=(stats_x1, params["down1_bn_w"], params["down1_bn_b"]))

    x2, _ = residual_block(y2, stats_y2, topo["rule2"], params["block2"],
                           n=n2, row_tile=rt2)

    # UnPooling + JoinTable, fused into the head: gather each level's chunk to
    # level 0 instead of materializing u1=[x1|up(x2)] and u0=[x0|up(u1)].
    a1 = jnp.take(x1, topo["parent0"], axis=0)      # level1 -> level0   [np0, nf]
    a2 = jnp.take(x2, topo["parent10"], axis=0)     # level2 -> level0   [np0, nf]
    s1, q1 = channel_stats(a1, rt0)
    s2, q2 = channel_stats(a2, rt0)

    # p3: BatchNormReLU(3*nf); p4: OutputLayer; motlinear(3*nf -> 3) -- fused.
    return motion_head(x0, a1, a2,
                       stats_x0, (s1, q1, float(n0)), (s2, q2, float(n0)),
                       params["p3_bn_w"], params["p3_bn_b"],
                       params["mot_w"], params["mot_b"],
                       n0=n0, row_tile=rt0)


# ----------------------------- demo -----------------------------

if __name__ == "__main__":
    nf_in, nf = 4, 8
    key = jax.random.PRNGKey(0)
    k_feats, k_params = jax.random.split(key, 2)

    # Deterministic sparse active-voxel set: 2 batches, 6^3 region, ~1/3 occupancy.
    coords = []
    for b in range(2):
        for xx in range(6):
            for yy in range(6):
                for zz in range(6):
                    if (xx + yy + zz + b) % 3 == 0:
                        coords.append((b, xx, yy, zz))
    coords = np.asarray(coords, np.int64)            # [144, 4]
    N = coords.shape[0]
    feats = jax.random.normal(k_feats, (N, nf_in), jnp.float32)

    topo = build_topology(coords)                     # host-side rulebooks
    params = init_params(k_params, nf_in, nf)

    fwd = jax.jit(functools.partial(motion_prediction_forward,
                                    topo=topo, params=params))
    trn = jax.block_until_ready(fwd(feats))
    assert trn.shape == (N, 3)
    assert bool(jnp.all(jnp.isfinite(trn)))
    print("KERNEL_OK")
</pallas_src>

<mosaic_0001>
module attributes {stable_mosaic.version = 11 : i64} {
  func.func @kernel(%arg0: i32, %arg1: memref<152x108xbf16, #tpu.memory_space<vmem>>, %arg2: memref<152x27xbf16, #tpu.memory_space<vmem>>, %arg3: memref<1x108xf32, #tpu.memory_space<vmem>>, %arg4: memref<1x108xf32, #tpu.memory_space<vmem>>, %arg5: memref<108x8xbf16, #tpu.memory_space<vmem>>, %arg6: memref<27x8xf32, #tpu.memory_space<vmem>>, %arg7: memref<152x8xbf16, #tpu.memory_space<vmem>>, %arg8: memref<1x1x8xf32, #tpu.memory_space<vmem>>, %arg9: memref<1x1x8xf32, #tpu.memory_space<vmem>>) attributes {dimension_semantics = [#tpu.dimension_semantics<parallel>], iteration_bounds = array<i64: 1>, scalar_prefetch = 0 : i64, scratch_operands = 0 : i64, tpu.core_type = #tpu.core_type<tc>, window_params = [{transform_indices = @transform_0, window_bounds = array<i64: 152, 108>}, {transform_indices = @transform_1, window_bounds = array<i64: 152, 27>}, {pipeline_mode = #tpu.pipeline_mode<synchronous>, transform_indices = @transform_2, window_bounds = array<i64: 1, 108>}, {pipeline_mode = #tpu.pipeline_mode<synchronous>, transform_indices = @transform_3, window_bounds = array<i64: 1, 108>}, {pipeline_mode = #tpu.pipeline_mode<synchronous>, transform_indices = @transform_4, window_bounds = array<i64: 108, 8>}, {pipeline_mode = #tpu.pipeline_mode<synchronous>, transform_indices = @transform_5, window_bounds = array<i64: 27, 8>}, {transform_indices = @transform_6, window_bounds = array<i64: 152, 8>}, {transform_indices = @transform_7, window_bounds = array<i64: 1, 1, 8>}, {transform_indices = @transform_8, window_bounds = array<i64: 1, 1, 8>}]} {
    %c0 = arith.constant 0 : index
    %c0_0 = arith.constant 0 : index
    %0 = vector.load %arg1[%c0, %c0_0] : memref<152x108xbf16, #tpu.memory_space<vmem>>, vector<152x108xbf16>
    %1 = arith.extf %0 : vector<152x108xbf16> to vector<152x108xf32>
    %c0_1 = arith.constant 0 : index
    %c0_2 = arith.constant 0 : index
    %2 = vector.load %arg3[%c0_1, %c0_2] : memref<1x108xf32, #tpu.memory_space<vmem>>, vector<1x108xf32>
    %3 = vector.broadcast %2 : vector<1x108xf32> to vector<152x108xf32>
    %4 = arith.mulf %1, %3 : vector<152x108xf32>
    %c0_3 = arith.constant 0 : index
    %c0_4 = arith.constant 0 : index
    %5 = vector.load %arg4[%c0_3, %c0_4] : memref<1x108xf32, #tpu.memory_space<vmem>>, vector<1x108xf32>
    %6 = vector.broadcast %5 : vector<1x108xf32> to vector<152x108xf32>
    %7 = arith.addf %4, %6 : vector<152x108xf32>
    %8 = arith.truncf %7 : vector<152x108xf32> to vector<152x108xbf16>
    %c0_5 = arith.constant 0 : index
    %c0_6 = arith.constant 0 : index
    %9 = vector.load %arg5[%c0_5, %c0_6] : memref<108x8xbf16, #tpu.memory_space<vmem>>, vector<108x8xbf16>
    %cst = arith.constant dense<0.000000e+00> : vector<152x8xf32>
    %10 = tpu.matmul %8, %9, %cst {dimension_numbers = #tpu.dot_dimension_numbers<[1], [0], [0], [1], [0, 0, 1, 1], [], []>} : vector<152x108xbf16>, vector<108x8xbf16>, vector<152x8xf32> -> vector<152x8xf32>
    %c0_7 = arith.constant 0 : index
    %c0_8 = arith.constant 0 : index
    %11 = vector.load %arg2[%c0_7, %c0_8] : memref<152x27xbf16, #tpu.memory_space<vmem>>, vector<152x27xbf16>
    %12 = arith.extf %11 : vector<152x27xbf16> to vector<152x27xf32>
    %c0_9 = arith.constant 0 : index
    %c0_10 = arith.constant 0 : index
    %13 = vector.load %arg6[%c0_9, %c0_10] : memref<27x8xf32, #tpu.memory_space<vmem>>, vector<27x8xf32>
    %cst_11 = arith.constant dense<0.000000e+00> : vector<152x8xf32>
    %14 = tpu.matmul %12, %13, %cst_11 {dimension_numbers = #tpu.dot_dimension_numbers<[1], [0], [0], [1], [0, 0, 1, 1], [], []>} : vector<152x27xf32>, vector<27x8xf32>, vector<152x8xf32> -> vector<152x8xf32>
    %15 = arith.subf %10, %14 : vector<152x8xf32>
    %c152_i32 = arith.constant 152 : i32
    %16 = arith.muli %arg0, %c152_i32 : i32
    %17 = tpu.iota {dimensions = array<i32: 0>} : vector<152x1xi32>
    %18 = vector.broadcast %16 : i32 to vector<152x1xi32>
    %19 = arith.addi %18, %17 : vector<152x1xi32>
    %c144_i32 = arith.constant 144 : i32
    %20 = vector.broadcast %c144_i32 : i32 to vector<152x1xi32>
    %21 = arith.cmpi slt, %19, %20 : vector<152x1xi32>
    %cst_12 = arith.constant 0.000000e+00 : f32
    %22 = vector.shape_cast %21 : vector<152x1xi1> to vector<152x1xi1>
    %23 = vector.broadcast %22 : vector<152x1xi1> to vector<152x8xi1>
    %24 = vector.broadcast %cst_12 : f32 to vector<152x8xf32>
    %25 = arith.select %23, %15, %24 : vector<152x8xi1>, vector<152x8xf32>
    %cst_13 = arith.constant dense<0.000000e+00> : vector<8xf32>
    %26 = vector.multi_reduction <add>, %25, %cst_13 [0] : vector<152x8xf32> to vector<8xf32>
    %27 = vector.shape_cast %26 : vector<8xf32> to vector<1x8xf32>
    %28 = vector.shape_cast %27 : vector<1x8xf32> to vector<1x1x8xf32>
    %c0_14 = arith.constant 0 : index
    %c0_15 = arith.constant 0 : index
    %c0_16 = arith.constant 0 : index
    %29 = vector.load %arg8[%c0_14, %c0_15, %c0_16] : memref<1x1x8xf32, #tpu.memory_space<vmem>>, vector<1x1x8xf32>
    tpu.vector_store %arg8[%c0_14, %c0_15, %c0_16], %28 {strides = array<i32>} : memref<1x1x8xf32, #tpu.memory_space<vmem>>, vector<1x1x8xf32>,
    %30 = arith.mulf %25, %25 : vector<152x8xf32>
    %cst_17 = arith.constant dense<0.000000e+00> : vector<8xf32>
    %31 = vector.multi_reduction <add>, %30, %cst_17 [0] : vector<152x8xf32> to vector<8xf32>
    %32 = vector.shape_cast %31 : vector<8xf32> to vector<1x8xf32>
    %33 = vector.shape_cast %32 : vector<1x8xf32> to vector<1x1x8xf32>
    %c0_18 = arith.constant 0 : index
    %c0_19 = arith.constant 0 : index
    %c0_20 = arith.constant 0 : index
    %34 = vector.load %arg9[%c0_18, %c0_19, %c0_20] : memref<1x1x8xf32, #tpu.memory_space<vmem>>, vector<1x1x8xf32>
    tpu.vector_store %arg9[%c0_18, %c0_19, %c0_20], %33 {strides = array<i32>} : memref<1x1x8xf32, #tpu.memory_space<vmem>>, vector<1x1x8xf32>,
    %35 = arith.truncf %25 : vector<152x8xf32> to vector<152x8xbf16>
    %c0_21 = arith.constant 0 : index
    %c0_22 = arith.constant 0 : index
    %36 = vector.load %arg7[%c0_21, %c0_22] : memref<152x8xbf16, #tpu.memory_space<vmem>>, vector<152x8xbf16>
    tpu.vector_store %arg7[%c0_21, %c0_22], %35 {strides = array<i32>} : memref<152x8xbf16, #tpu.memory_space<vmem>>, vector<152x8xbf16>,
    return
  }
  func.func @transform_0(%arg0: i32) -> (i32, i32) {
    %c0_i32 = arith.constant 0 : i32
    %c0_i32_0 = arith.constant 0 : i32
    return %arg0, %c0_i32 : i32, i32
  }
  func.func @transform_1(%arg0: i32) -> (i32, i32) {
    %c0_i32 = arith.constant 0 : i32
    %c0_i32_0 = arith.constant 0 : i32
    return %arg0, %c0_i32 : i32, i32
  }
  func.func @transform_2(%arg0: i32) -> (i32, i32) {
    %c0_i32 = arith.constant 0 : i32
    %c0_i32_0 = arith.constant 0 : i32
    %c0_i32_1 = arith.constant 0 : i32
    return %c0_i32, %c0_i32_0 : i32, i32
  }
  func.func @transform_3(%arg0: i32) -> (i32, i32) {
    %c0_i32 = arith.constant 0 : i32
    %c0_i32_0 = arith.constant 0 : i32
    %c0_i32_1 = arith.constant 0 : i32
    return %c0_i32, %c0_i32_0 : i32, i32
  }
  func.func @transform_4(%arg0: i32) -> (i32, i32) {
    %c0_i32 = arith.constant 0 : i32
    %c0_i32_0 = arith.constant 0 : i32
    %c0_i32_1 = arith.constant 0 : i32
    return %c0_i32, %c0_i32_0 : i32, i32
  }
  func.func @transform_5(%arg0: i32) -> (i32, i32) {
    %c0_i32 = arith.constant 0 : i32
    %c0_i32_0 = arith.constant 0 : i32
    %c0_i32_1 = arith.constant 0 : i32
    return %c0_i32, %c0_i32_0 : i32, i32
  }
  func.func @transform_6(%arg0: i32) -> (i32, i32) {
    %c0_i32 = arith.constant 0 : i32
    %c0_i32_0 = arith.constant 0 : i32
    return %arg0, %c0_i32 : i32, i32
  }
  func.func @transform_7(%arg0: i32) -> (i32, i32, i32) {
    %c0_i32 = arith.constant 0 : i32
    %c0_i32_0 = arith.constant 0 : i32
    %c0_i32_1 = arith.constant 0 : i32
    return %arg0, %c0_i32, %c0_i32_0 : i32, i32, i32
  }
  func.func @transform_8(%arg0: i32) -> (i32, i32, i32) {
    %c0_i32 = arith.constant 0 : i32
    %c0_i32_0 = arith.constant 0 : i32
    %c0_i32_1 = arith.constant 0 : i32
    return %arg0, %c0_i32, %c0_i32_0 : i32, i32, i32
  }
}

module attributes {stable_mosaic.version = 11 : i64} {
  func.func @kernel(%arg0: i32, %arg1: memref<152x216xbf16, #tpu.memory_space<vmem>>, %arg2: memref<152x27xbf16, #tpu.memory_space<vmem>>, %arg3: memref<1x216xf32, #tpu.memory_space<vmem>>, %arg4: memref<1x216xf32, #tpu.memory_space<vmem>>, %arg5: memref<216x8xbf16, #tpu.memory_space<vmem>>, %arg6: memref<27x8xf32, #tpu.memory_space<vmem>>, %arg7: memref<152x8xbf16, #tpu.memory_space<vmem>>, %arg8: memref<1x1x8xf32, #tpu.memory_space<vmem>>, %arg9: memref<1x1x8xf32, #tpu.memory_space<vmem>>) attributes {dimension_semantics = [#tpu.dimension_semantics<parallel>], iteration_bounds = array<i64: 1>, scalar_prefetch = 0 : i64, scratch_operands = 0 : i64, tpu.core_type = #tpu.core_type<tc>, window_params = [{transform_indices = @transform_0, window_bounds = array<i64: 152, 216>}, {transform_indices = @transform_1, window_bounds = array<i64: 152, 27>}, {pipeline_mode = #tpu.pipeline_mode<synchronous>, transform_indices = @transform_2, window_bounds = array<i64: 1, 216>}, {pipeline_mode = #tpu.pipeline_mode<synchronous>, transform_indices = @transform_3, window_bounds = array<i64: 1, 216>}, {pipeline_mode = #tpu.pipeline_mode<synchronous>, transform_indices = @transform_4, window_bounds = array<i64: 216, 8>}, {pipeline_mode = #tpu.pipeline_mode<synchronous>, transform_indices = @transform_5, window_bounds = array<i64: 27, 8>}, {transform_indices = @transform_6, window_bounds = array<i64: 152, 8>}, {transform_indices = @transform_7, window_bounds = array<i64: 1, 1, 8>}, {transform_indices = @transform_8, window_bounds = array<i64: 1, 1, 8>}]} {
    %c0 = arith.constant 0 : index
    %c0_0 = arith.constant 0 : index
    %0 = vector.load %arg1[%c0, %c0_0] : memref<152x216xbf16, #tpu.memory_space<vmem>>, vector<152x216xbf16>
    %1 = arith.extf %0 : vector<152x216xbf16> to vector<152x216xf32>
    %c0_1 = arith.constant 0 : index
    %c0_2 = arith.constant 0 : index
    %2 = vector.load %arg3[%c0_1, %c0_2] : memref<1x216xf32, #tpu.memory_space<vmem>>, vector<1x216xf32>
    %3 = vector.broadcast %2 : vector<1x216xf32> to vector<152x216xf32>
    %4 = arith.mulf %1, %3 : vector<152x216xf32>
    %c0_3 = arith.constant 0 : index
    %c0_4 = arith.constant 0 : index
    %5 = vector.load %arg4[%c0_3, %c0_4] : memref<1x216xf32, #tpu.memory_space<vmem>>, vector<1x216xf32>
    %6 = vector.broadcast %5 : vector<1x216xf32> to vector<152x216xf32>
    %7 = arith.addf %4, %6 : vector<152x216xf32>
    %cst = arith.constant 0.000000e+00 : f32
    %8 = vector.broadcast %cst : f32 to vector<152x216xf32>
    %9 = arith.maximumf %7, %8 : vector<152x216xf32>
    %10 = arith.truncf %9 : vector<152x216xf32> to vector<152x216xbf16>
    %c0_5 = arith.constant 0 : index
    %c0_6 = arith.constant 0 : index
    %11 = vector.load %arg5[%c0_5, %c0_6] : memref<216x8xbf16, #tpu.memory_space<vmem>>, vector<216x8xbf16>
    %cst_7 = arith.constant dense<0.000000e+00> : vector<152x8xf32>
    %12 = tpu.matmul %10, %11, %cst_7 {dimension_numbers = #tpu.dot_dimension_numbers<[1], [0], [0], [1], [0, 0, 1, 1], [], []>} : vector<152x216xbf16>, vector<216x8xbf16>, vector<152x8xf32> -> vector<152x8xf32>
    %c0_8 = arith.constant 0 : index
    %c0_9 = arith.constant 0 : index
    %13 = vector.load %arg2[%c0_8, %c0_9] : memref<152x27xbf16, #tpu.memory_space<vmem>>, vector<152x27xbf16>
    %14 = arith.extf %13 : vector<152x27xbf16> to vector<152x27xf32>
    %c0_10 = arith.constant 0 : index
    %c0_11 = arith.constant 0 : index
    %15 = vector.load %arg6[%c0_10, %c0_11] : memref<27x8xf32, #tpu.memory_space<vmem>>, vector<27x8xf32>
    %cst_12 = arith.constant dense<0.000000e+00> : vector<152x8xf32>
    %16 = tpu.matmul %14, %15, %cst_12 {dimension_numbers = #tpu.dot_dimension_numbers<[1], [0], [0], [1], [0, 0, 1, 1], [], []>} : vector<152x27xf32>, vector<27x8xf32>, vector<152x8xf32> -> vector<152x8xf32>
    %17 = arith.subf %12, %16 : vector<152x8xf32>
    %c152_i32 = arith.constant 152 : i32
    %18 = arith.muli %arg0, %c152_i32 : i32
    %19 = tpu.iota {dimensions = array<i32: 0>} : vector<152x1xi32>
    %20 = vector.broadcast %18 : i32 to vector<152x1xi32>
    %21 = arith.addi %20, %19 : vector<152x1xi32>
    %c144_i32 = arith.constant 144 : i32
    %22 = vector.broadcast %c144_i32 : i32 to vector<152x1xi32>
    %23 = arith.cmpi slt, %21, %22 : vector<152x1xi32>
    %cst_13 = arith.constant 0.000000e+00 : f32
    %24 = vector.shape_cast %23 : vector<152x1xi1> to vector<152x1xi1>
    %25 = vector.broadcast %24 : vector<152x1xi1> to vector<152x8xi1>
    %26 = vector.broadcast %cst_13 : f32 to vector<152x8xf32>
    %27 = arith.select %25, %17, %26 : vector<152x8xi1>, vector<152x8xf32>
    %cst_14 = arith.constant dense<0.000000e+00> : vector<8xf32>
    %28 = vector.multi_reduction <add>, %27, %cst_14 [0] : vector<152x8xf32> to vector<8xf32>
    %29 = vector.shape_cast %28 : vector<8xf32> to vector<1x8xf32>
    %30 = vector.shape_cast %29 : vector<1x8xf32> to vector<1x1x8xf32>
    %c0_15 = arith.constant 0 : index
    %c0_16 = arith.constant 0 : index
    %c0_17 = arith.constant 0 : index
    %31 = vector.load %arg8[%c0_15, %c0_16, %c0_17] : memref<1x1x8xf32, #tpu.memory_space<vmem>>, vector<1x1x8xf32>
    tpu.vector_store %arg8[%c0_15, %c0_16, %c0_17], %30 {strides = array<i32>} : memref<1x1x8xf32, #tpu.memory_space<vmem>>, vector<1x1x8xf32>,
    %32 = arith.mulf %27, %27 : vector<152x8xf32>
    %cst_18 = arith.constant dense<0.000000e+00> : vector<8xf32>
    %33 = vector.multi_reduction <add>, %32, %cst_18 [0] : vector<152x8xf32> to vector<8xf32>
    %34 = vector.shape_cast %33 : vector<8xf32> to vector<1x8xf32>
    %35 = vector.shape_cast %34 : vector<1x8xf32> to vector<1x1x8xf32>
    %c0_19 = arith.constant 0 : index
    %c0_20 = arith.constant 0 : index
    %c0_21 = arith.constant 0 : index
    %36 = vector.load %arg9[%c0_19, %c0_20, %c0_21] : memref<1x1x8xf32, #tpu.memory_space<vmem>>, vector<1x1x8xf32>
    tpu.vector_store %arg9[%c0_19, %c0_20, %c0_21], %35 {strides = array<i32>} : memref<1x1x8xf32, #tpu.memory_space<vmem>>, vector<1x1x8xf32>,
    %37 = arith.truncf %27 : vector<152x8xf32> to vector<152x8xbf16>
    %c0_22 = arith.constant 0 : index
    %c0_23 = arith.constant 0 : index
    %38 = vector.load %arg7[%c0_22, %c0_23] : memref<152x8xbf16, #tpu.memory_space<vmem>>, vector<152x8xbf16>
    tpu.vector_store %arg7[%c0_22, %c0_23], %37 {strides = array<i32>} : memref<152x8xbf16, #tpu.memory_space<vmem>>, vector<152x8xbf16>,
    return
  }
  func.func @transform_0(%arg0: i32) -> (i32, i32) {
    %c0_i32 = arith.constant 0 : i32
    %c0_i32_0 = arith.constant 0 : i32
    return %arg0, %c0_i32 : i32, i32
  }
  func.func @transform_1(%arg0: i32) -> (i32, i32) {
    %c0_i32 = arith.constant 0 : i32
    %c0_i32_0 = arith.constant 0 : i32
    return %arg0, %c0_i32 : i32, i32
  }
  func.func @transform_2(%arg0: i32) -> (i32, i32) {
    %c0_i32 = arith.constant 0 : i32
    %c0_i32_0 = arith.constant 0 : i32
    %c0_i32_1 = arith.constant 0 : i32
    return %c0_i32, %c0_i32_0 : i32, i32
  }
  func.func @transform_3(%arg0: i32) -> (i32, i32) {
    %c0_i32 = arith.constant 0 : i32
    %c0_i32_0 = arith.constant 0 : i32
    %c0_i32_1 = arith.constant 0 : i32
    return %c0_i32, %c0_i32_0 : i32, i32
  }
  func.func @transform_4(%arg0: i32) -> (i32, i32) {
    %c0_i32 = arith.constant 0 : i32
    %c0_i32_0 = arith.constant 0 : i32
    %c0_i32_1 = arith.constant 0 : i32
    return %c0_i32, %c0_i32_0 : i32, i32
  }
  func.func @transform_5(%arg0: i32) -> (i32, i32) {
    %c0_i32 = arith.constant 0 : i32
    %c0_i32_0 = arith.constant 0 : i32
    %c0_i32_1 = arith.constant 0 : i32
    return %c0_i32, %c0_i32_0 : i32, i32
  }
  func.func @transform_6(%arg0: i32) -> (i32, i32) {
    %c0_i32 = arith.constant 0 : i32
    %c0_i32_0 = arith.constant 0 : i32
    return %arg0, %c0_i32 : i32, i32
  }
  func.func @transform_7(%arg0: i32) -> (i32, i32, i32) {
    %c0_i32 = arith.constant 0 : i32
    %c0_i32_0 = arith.constant 0 : i32
    %c0_i32_1 = arith.constant 0 : i32
    return %arg0, %c0_i32, %c0_i32_0 : i32, i32, i32
  }
  func.func @transform_8(%arg0: i32) -> (i32, i32, i32) {
    %c0_i32 = arith.constant 0 : i32
    %c0_i32_0 = arith.constant 0 : i32
    %c0_i32_1 = arith.constant 0 : i32
    return %arg0, %c0_i32, %c0_i32_0 : i32, i32, i32
  }
}

module attributes {stable_mosaic.version = 11 : i64} {
  func.func @kernel(%arg0: i32, %arg1: memref<152x216xbf16, #tpu.memory_space<vmem>>, %arg2: memref<152x27xbf16, #tpu.memory_space<vmem>>, %arg3: memref<1x216xf32, #tpu.memory_space<vmem>>, %arg4: memref<1x216xf32, #tpu.memory_space<vmem>>, %arg5: memref<216x8xbf16, #tpu.memory_space<vmem>>, %arg6: memref<27x8xf32, #tpu.memory_space<vmem>>, %arg7: memref<152x8xbf16, #tpu.memory_space<vmem>>, %arg8: memref<152x8xbf16, #tpu.memory_space<vmem>>, %arg9: memref<1x1x8xf32, #tpu.memory_space<vmem>>, %arg10: memref<1x1x8xf32, #tpu.memory_space<vmem>>) attributes {dimension_semantics = [#tpu.dimension_semantics<parallel>], iteration_bounds = array<i64: 1>, scalar_prefetch = 0 : i64, scratch_operands = 0 : i64, tpu.core_type = #tpu.core_type<tc>, window_params = [{transform_indices = @transform_0, window_bounds = array<i64: 152, 216>}, {transform_indices = @transform_1, window_bounds = array<i64: 152, 27>}, {pipeline_mode = #tpu.pipeline_mode<synchronous>, transform_indices = @transform_2, window_bounds = array<i64: 1, 216>}, {pipeline_mode = #tpu.pipeline_mode<synchronous>, transform_indices = @transform_3, window_bounds = array<i64: 1, 216>}, {pipeline_mode = #tpu.pipeline_mode<synchronous>, transform_indices = @transform_4, window_bounds = array<i64: 216, 8>}, {pipeline_mode = #tpu.pipeline_mode<synchronous>, transform_indices = @transform_5, window_bounds = array<i64: 27, 8>}, {transform_indices = @transform_6, window_bounds = array<i64: 152, 8>}, {transform_indices = @transform_7, window_bounds = array<i64: 152, 8>}, {transform_indices = @transform_8, window_bounds = array<i64: 1, 1, 8>}, {transform_indices = @transform_9, window_bounds = array<i64: 1, 1, 8>}]} {
    %c0 = arith.constant 0 : index
    %c0_0 = arith.constant 0 : index
    %0 = vector.load %arg1[%c0, %c0_0] : memref<152x216xbf16, #tpu.memory_space<vmem>>, vector<152x216xbf16>
    %1 = arith.extf %0 : vector<152x216xbf16> to vector<152x216xf32>
    %c0_1 = arith.constant 0 : index
    %c0_2 = arith.constant 0 : index
    %2 = vector.load %arg3[%c0_1, %c0_2] : memref<1x216xf32, #tpu.memory_space<vmem>>, vector<1x216xf32>
    %3 = vector.broadcast %2 : vector<1x216xf32> to vector<152x216xf32>
    %4 = arith.mulf %1, %3 : vector<152x216xf32>
    %c0_3 = arith.constant 0 : index
    %c0_4 = arith.constant 0 : index
    %5 = vector.load %arg4[%c0_3, %c0_4] : memref<1x216xf32, #tpu.memory_space<vmem>>, vector<1x216xf32>
    %6 = vector.broadcast %5 : vector<1x216xf32> to vector<152x216xf32>
    %7 = arith.addf %4, %6 : vector<152x216xf32>
    %cst = arith.constant 0.000000e+00 : f32
    %8 = vector.broadcast %cst : f32 to vector<152x216xf32>
    %9 = arith.maximumf %7, %8 : vector<152x216xf32>
    %10 = arith.truncf %9 : vector<152x216xf32> to vector<152x216xbf16>
    %c0_5 = arith.constant 0 : index
    %c0_6 = arith.constant 0 : index
    %11 = vector.load %arg5[%c0_5, %c0_6] : memref<216x8xbf16, #tpu.memory_space<vmem>>, vector<216x8xbf16>
    %cst_7 = arith.constant dense<0.000000e+00> : vector<152x8xf32>
    %12 = tpu.matmul %10, %11, %cst_7 {dimension_numbers = #tpu.dot_dimension_numbers<[1], [0], [0], [1], [0, 0, 1, 1], [], []>} : vector<152x216xbf16>, vector<216x8xbf16>, vector<152x8xf32> -> vector<152x8xf32>
    %c0_8 = arith.constant 0 : index
    %c0_9 = arith.constant 0 : index
    %13 = vector.load %arg2[%c0_8, %c0_9] : memref<152x27xbf16, #tpu.memory_space<vmem>>, vector<152x27xbf16>
    %14 = arith.extf %13 : vector<152x27xbf16> to vector<152x27xf32>
    %c0_10 = arith.constant 0 : index
    %c0_11 = arith.constant 0 : index
    %15 = vector.load %arg6[%c0_10, %c0_11] : memref<27x8xf32, #tpu.memory_space<vmem>>, vector<27x8xf32>
    %cst_12 = arith.constant dense<0.000000e+00> : vector<152x8xf32>
    %16 = tpu.matmul %14, %15, %cst_12 {dimension_numbers = #tpu.dot_dimension_numbers<[1], [0], [0], [1], [0, 0, 1, 1], [], []>} : vector<152x27xf32>, vector<27x8xf32>, vector<152x8xf32> -> vector<152x8xf32>
    %17 = arith.subf %12, %16 : vector<152x8xf32>
    %c0_13 = arith.constant 0 : index
    %c0_14 = arith.constant 0 : index
    %18 = vector.load %arg7[%c0_13, %c0_14] : memref<152x8xbf16, #tpu.memory_space<vmem>>, vector<152x8xbf16>
    %19 = arith.extf %18 : vector<152x8xbf16> to vector<152x8xf32>
    %20 = arith.addf %17, %19 : vector<152x8xf32>
    %c152_i32 = arith.constant 152 : i32
    %21 = arith.muli %arg0, %c152_i32 : i32
    %22 = tpu.iota {dimensions = array<i32: 0>} : vector<152x1xi32>
    %23 = vector.broadcast %21 : i32 to vector<152x1xi32>
    %24 = arith.addi %23, %22 : vector<152x1xi32>
    %c144_i32 = arith.constant 144 : i32
    %25 = vector.broadcast %c144_i32 : i32 to vector<152x1xi32>
    %26 = arith.cmpi slt, %24, %25 : vector<152x1xi32>
    %cst_15 = arith.constant 0.000000e+00 : f32
    %27 = vector.shape_cast %26 : vector<152x1xi1> to vector<152x1xi1>
    %28 = vector.broadcast %27 : vector<152x1xi1> to vector<152x8xi1>
    %29 = vector.broadcast %cst_15 : f32 to vector<152x8xf32>
    %30 = arith.select %28, %20, %29 : vector<152x8xi1>, vector<152x8xf32>
    %cst_16 = arith.constant dense<0.000000e+00> : vector<8xf32>
    %31 = vector.multi_reduction <add>, %30, %cst_16 [0] : vector<152x8xf32> to vector<8xf32>
    %32 = vector.shape_cast %31 : vector<8xf32> to vector<1x8xf32>
    %33 = vector.shape_cast %32 : vector<1x8xf32> to vector<1x1x8xf32>
    %c0_17 = arith.constant 0 : index
    %c0_18 = arith.constant 0 : index
    %c0_19 = arith.constant 0 : index
    %34 = vector.load %arg9[%c0_17, %c0_18, %c0_19] : memref<1x1x8xf32, #tpu.memory_space<vmem>>, vector<1x1x8xf32>
    tpu.vector_store %arg9[%c0_17, %c0_18, %c0_19], %33 {strides = array<i32>} : memref<1x1x8xf32, #tpu.memory_space<vmem>>, vector<1x1x8xf32>,
    %35 = arith.mulf %30, %30 : vector<152x8xf32>
    %cst_20 = arith.constant dense<0.000000e+00> : vector<8xf32>
    %36 = vector.multi_reduction <add>, %35, %cst_20 [0] : vector<152x8xf32> to vector<8xf32>
    %37 = vector.shape_cast %36 : vector<8xf32> to vector<1x8xf32>
    %38 = vector.shape_cast %37 : vector<1x8xf32> to vector<1x1x8xf32>
    %c0_21 = arith.constant 0 : index
    %c0_22 = arith.constant 0 : index
    %c0_23 = arith.constant 0 : index
    %39 = vector.load %arg10[%c0_21, %c0_22, %c0_23] : memref<1x1x8xf32, #tpu.memory_space<vmem>>, vector<1x1x8xf32>
    tpu.vector_store %arg10[%c0_21, %c0_22, %c0_23], %38 {strides = array<i32>} : memref<1x1x8xf32, #tpu.memory_space<vmem>>, vector<1x1x8xf32>,
    %40 = arith.truncf %30 : vector<152x8xf32> to vector<152x8xbf16>
    %c0_24 = arith.constant 0 : index
    %c0_25 = arith.constant 0 : index
    %41 = vector.load %arg8[%c0_24, %c0_25] : memref<152x8xbf16, #tpu.memory_space<vmem>>, vector<152x8xbf16>
    tpu.vector_store %arg8[%c0_24, %c0_25], %40 {strides = array<i32>} : memref<152x8xbf16, #tpu.memory_space<vmem>>, vector<152x8xbf16>,
    return
  }
  func.func @transform_0(%arg0: i32) -> (i32, i32) {
    %c0_i32 = arith.constant 0 : i32
    %c0_i32_0 = arith.constant 0 : i32
    return %arg0, %c0_i32 : i32, i32
  }
  func.func @transform_1(%arg0: i32) -> (i32, i32) {
    %c0_i32 = arith.constant 0 : i32
    %c0_i32_0 = arith.constant 0 : i32
    return %arg0, %c0_i32 : i32, i32
  }
  func.func @transform_2(%arg0: i32) -> (i32, i32) {
    %c0_i32 = arith.constant 0 : i32
    %c0_i32_0 = arith.constant 0 : i32
    %c0_i32_1 = arith.constant 0 : i32
    return %c0_i32, %c0_i32_0 : i32, i32
  }
  func.func @transform_3(%arg0: i32) -> (i32, i32) {
    %c0_i32 = arith.constant 0 : i32
    %c0_i32_0 = arith.constant 0 : i32
    %c0_i32_1 = arith.constant 0 : i32
    return %c0_i32, %c0_i32_0 : i32, i32
  }
  func.func @transform_4(%arg0: i32) -> (i32, i32) {
    %c0_i32 = arith.constant 0 : i32
    %c0_i32_0 = arith.constant 0 : i32
    %c0_i32_1 = arith.constant 0 : i32
    return %c0_i32, %c0_i32_0 : i32, i32
  }
  func.func @transform_5(%arg0: i32) -> (i32, i32) {
    %c0_i32 = arith.constant 0 : i32
    %c0_i32_0 = arith.constant 0 : i32
    %c0_i32_1 = arith.constant 0 : i32
    return %c0_i32, %c0_i32_0 : i32, i32
  }
  func.func @transform_6(%arg0: i32) -> (i32, i32) {
    %c0_i32 = arith.constant 0 : i32
    %c0_i32_0 = arith.constant 0 : i32
    return %arg0, %c0_i32 : i32, i32
  }
  func.func @transform_7(%arg0: i32) -> (i32, i32) {
    %c0_i32 = arith.constant 0 : i32
    %c0_i32_0 = arith.constant 0 : i32
    return %arg0, %c0_i32 : i32, i32
  }
  func.func @transform_8(%arg0: i32) -> (i32, i32, i32) {
    %c0_i32 = arith.constant 0 : i32
    %c0_i32_0 = arith.constant 0 : i32
    %c0_i32_1 = arith.constant 0 : i32
    return %arg0, %c0_i32, %c0_i32_0 : i32, i32, i32
  }
  func.func @transform_9(%arg0: i32) -> (i32, i32, i32) {
    %c0_i32 = arith.constant 0 : i32
    %c0_i32_0 = arith.constant 0 : i32
    %c0_i32_1 = arith.constant 0 : i32
    return %arg0, %c0_i32, %c0_i32_0 : i32, i32, i32
  }
}

module attributes {stable_mosaic.version = 11 : i64} {
  func.func @kernel(%arg0: i32, %arg1: memref<56x64xbf16, #tpu.memory_space<vmem>>, %arg2: memref<56x8xbf16, #tpu.memory_space<vmem>>, %arg3: memref<1x64xf32, #tpu.memory_space<vmem>>, %arg4: memref<1x64xf32, #tpu.memory_space<vmem>>, %arg5: memref<64x8xbf16, #tpu.memory_space<vmem>>, %arg6: memref<8x8xf32, #tpu.memory_space<vmem>>, %arg7: memref<56x8xbf16, #tpu.memory_space<vmem>>, %arg8: memref<1x1x8xf32, #tpu.memory_space<vmem>>, %arg9: memref<1x1x8xf32, #tpu.memory_space<vmem>>) attributes {dimension_semantics = [#tpu.dimension_semantics<parallel>], iteration_bounds = array<i64: 1>, scalar_prefetch = 0 : i64, scratch_operands = 0 : i64, tpu.core_type = #tpu.core_type<tc>, window_params = [{transform_indices = @transform_0, window_bounds = array<i64: 56, 64>}, {transform_indices = @transform_1, window_bounds = array<i64: 56, 8>}, {pipeline_mode = #tpu.pipeline_mode<synchronous>, transform_indices = @transform_2, window_bounds = array<i64: 1, 64>}, {pipeline_mode = #tpu.pipeline_mode<synchronous>, transform_indices = @transform_3, window_bounds = array<i64: 1, 64>}, {pipeline_mode = #tpu.pipeline_mode<synchronous>, transform_indices = @transform_4, window_bounds = array<i64: 64, 8>}, {pipeline_mode = #tpu.pipeline_mode<synchronous>, transform_indices = @transform_5, window_bounds = array<i64: 8, 8>}, {transform_indices = @transform_6, window_bounds = array<i64: 56, 8>}, {transform_indices = @transform_7, window_bounds = array<i64: 1, 1, 8>}, {transform_indices = @transform_8, window_bounds = array<i64: 1, 1, 8>}]} {
    %c0 = arith.constant 0 : index
    %c0_0 = arith.constant 0 : index
    %0 = vector.load %arg1[%c0, %c0_0] : memref<56x64xbf16, #tpu.memory_space<vmem>>, vector<56x64xbf16>
    %1 = arith.extf %0 : vector<56x64xbf16> to vector<56x64xf32>
    %c0_1 = arith.constant 0 : index
    %c0_2 = arith.constant 0 : index
    %2 = vector.load %arg3[%c0_1, %c0_2] : memref<1x64xf32, #tpu.memory_space<vmem>>, vector<1x64xf32>
    %3 = vector.broadcast %2 : vector<1x64xf32> to vector<56x64xf32>
    %4 = arith.mulf %1, %3 : vector<56x64xf32>
    %c0_3 = arith.constant 0 : index
    %c0_4 = arith.constant 0 : index
    %5 = vector.load %arg4[%c0_3, %c0_4] : memref<1x64xf32, #tpu.memory_space<vmem>>, vector<1x64xf32>
    %6 = vector.broadcast %5 : vector<1x64xf32> to vector<56x64xf32>
    %7 = arith.addf %4, %6 : vector<56x64xf32>
    %cst = arith.constant 0.000000e+00 : f32
    %8 = vector.broadcast %cst : f32 to vector<56x64xf32>
    %9 = arith.maximumf %7, %8 : vector<56x64xf32>
    %10 = arith.truncf %9 : vector<56x64xf32> to vector<56x64xbf16>
    %c0_5 = arith.constant 0 : index
    %c0_6 = arith.constant 0 : index
    %11 = vector.load %arg5[%c0_5, %c0_6] : memref<64x8xbf16, #tpu.memory_space<vmem>>, vector<64x8xbf16>
    %cst_7 = arith.constant dense<0.000000e+00> : vector<56x8xf32>
    %12 = tpu.matmul %10, %11, %cst_7 {dimension_numbers = #tpu.dot_dimension_numbers<[1], [0], [0], [1], [0, 0, 1, 1], [], []>} : vector<56x64xbf16>, vector<64x8xbf16>, vector<56x8xf32> -> vector<56x8xf32>
    %c0_8 = arith.constant 0 : index
    %c0_9 = arith.constant 0 : index
    %13 = vector.load %arg2[%c0_8, %c0_9] : memref<56x8xbf16, #tpu.memory_space<vmem>>, vector<56x8xbf16>
    %14 = arith.extf %13 : vector<56x8xbf16> to vector<56x8xf32>
    %c0_10 = arith.constant 0 : index
    %c0_11 = arith.constant 0 : index
    %15 = vector.load %arg6[%c0_10, %c0_11] : memref<8x8xf32, #tpu.memory_space<vmem>>, vector<8x8xf32>
    %cst_12 = arith.constant dense<0.000000e+00> : vector<56x8xf32>
    %16 = tpu.matmul %14, %15, %cst_12 {dimension_numbers = #tpu.dot_dimension_numbers<[1], [0], [0], [1], [0, 0, 1, 1], [], []>} : vector<56x8xf32>, vector<8x8xf32>, vector<56x8xf32> -> vector<56x8xf32>
    %17 = arith.subf %12, %16 : vector<56x8xf32>
    %c56_i32 = arith.constant 56 : i32
    %18 = arith.muli %arg0, %c56_i32 : i32
    %19 = tpu.iota {dimensions = array<i32: 0>} : vector<56x1xi32>
    %20 = vector.broadcast %18 : i32 to vector<56x1xi32>
    %21 = arith.addi %20, %19 : vector<56x1xi32>
    %c54_i32 = arith.constant 54 : i32
    %22 = vector.broadcast %c54_i32 : i32 to vector<56x1xi32>
    %23 = arith.cmpi slt, %21, %22 : vector<56x1xi32>
    %cst_13 = arith.constant 0.000000e+00 : f32
    %24 = vector.shape_cast %23 : vector<56x1xi1> to vector<56x1xi1>
    %25 = vector.broadcast %24 : vector<56x1xi1> to vector<56x8xi1>
    %26 = vector.broadcast %cst_13 : f32 to vector<56x8xf32>
    %27 = arith.select %25, %17, %26 : vector<56x8xi1>, vector<56x8xf32>
    %cst_14 = arith.constant dense<0.000000e+00> : vector<8xf32>
    %28 = vector.multi_reduction <add>, %27, %cst_14 [0] : vector<56x8xf32> to vector<8xf32>
    %29 = vector.shape_cast %28 : vector<8xf32> to vector<1x8xf32>
    %30 = vector.shape_cast %29 : vector<1x8xf32> to vector<1x1x8xf32>
    %c0_15 = arith.constant 0 : index
    %c0_16 = arith.constant 0 : index
    %c0_17 = arith.constant 0 : index
    %31 = vector.load %arg8[%c0_15, %c0_16, %c0_17] : memref<1x1x8xf32, #tpu.memory_space<vmem>>, vector<1x1x8xf32>
    tpu.vector_store %arg8[%c0_15, %c0_16, %c0_17], %30 {strides = array<i32>} : memref<1x1x8xf32, #tpu.memory_space<vmem>>, vector<1x1x8xf32>,
    %32 = arith.mulf %27, %27 : vector<56x8xf32>
    %cst_18 = arith.constant dense<0.000000e+00> : vector<8xf32>
    %33 = vector.multi_reduction <add>, %32, %cst_18 [0] : vector<56x8xf32> to vector<8xf32>
    %34 = vector.shape_cast %33 : vector<8xf32> to vector<1x8xf32>
    %35 = vector.shape_cast %34 : vector<1x8xf32> to vector<1x1x8xf32>
    %c0_19 = arith.constant 0 : index
    %c0_20 = arith.constant 0 : index
    %c0_21 = arith.constant 0 : index
    %36 = vector.load %arg9[%c0_19, %c0_20, %c0_21] : memref<1x1x8xf32, #tpu.memory_space<vmem>>, vector<1x1x8xf32>
    tpu.vector_store %arg9[%c0_19, %c0_20, %c0_21], %35 {strides = array<i32>} : memref<1x1x8xf32, #tpu.memory_space<vmem>>, vector<1x1x8xf32>,
    %37 = arith.truncf %27 : vector<56x8xf32> to vector<56x8xbf16>
    %c0_22 = arith.constant 0 : index
    %c0_23 = arith.constant 0 : index
    %38 = vector.load %arg7[%c0_22, %c0_23] : memref<56x8xbf16, #tpu.memory_space<vmem>>, vector<56x8xbf16>
    tpu.vector_store %arg7[%c0_22, %c0_23], %37 {strides = array<i32>} : memref<56x8xbf16, #tpu.memory_space<vmem>>, vector<56x8xbf16>,
    return
  }
  func.func @transform_0(%arg0: i32) -> (i32, i32) {
    %c0_i32 = arith.constant 0 : i32
    %c0_i32_0 = arith.constant 0 : i32
    return %arg0, %c0_i32 : i32, i32
  }
  func.func @transform_1(%arg0: i32) -> (i32, i32) {
    %c0_i32 = arith.constant 0 : i32
    %c0_i32_0 = arith.constant 0 : i32
    return %arg0, %c0_i32 : i32, i32
  }
  func.func @transform_2(%arg0: i32) -> (i32, i32) {
    %c0_i32 = arith.constant 0 : i32
    %c0_i32_0 = arith.constant 0 : i32
    %c0_i32_1 = arith.constant 0 : i32
    return %c0_i32, %c0_i32_0 : i32, i32
  }
  func.func @transform_3(%arg0: i32) -> (i32, i32) {
    %c0_i32 = arith.constant 0 : i32
    %c0_i32_0 = arith.constant 0 : i32
    %c0_i32_1 = arith.constant 0 : i32
    return %c0_i32, %c0_i32_0 : i32, i32
  }
  func.func @transform_4(%arg0: i32) -> (i32, i32) {
    %c0_i32 = arith.constant 0 : i32
    %c0_i32_0 = arith.constant 0 : i32
    %c0_i32_1 = arith.constant 0 : i32
    return %c0_i32, %c0_i32_0 : i32, i32
  }
  func.func @transform_5(%arg0: i32) -> (i32, i32) {
    %c0_i32 = arith.constant 0 : i32
    %c0_i32_0 = arith.constant 0 : i32
    %c0_i32_1 = arith.constant 0 : i32
    return %c0_i32, %c0_i32_0 : i32, i32
  }
  func.func @transform_6(%arg0: i32) -> (i32, i32) {
    %c0_i32 = arith.constant 0 : i32
    %c0_i32_0 = arith.constant 0 : i32
    return %arg0, %c0_i32 : i32, i32
  }
  func.func @transform_7(%arg0: i32) -> (i32, i32, i32) {
    %c0_i32 = arith.constant 0 : i32
    %c0_i32_0 = arith.constant 0 : i32
    %c0_i32_1 = arith.constant 0 : i32
    return %arg0, %c0_i32, %c0_i32_0 : i32, i32, i32
  }
  func.func @transform_8(%arg0: i32) -> (i32, i32, i32) {
    %c0_i32 = arith.constant 0 : i32
    %c0_i32_0 = arith.constant 0 : i32
    %c0_i32_1 = arith.constant 0 : i32
    return %arg0, %c0_i32, %c0_i32_0 : i32, i32, i32
  }
}

module attributes {stable_mosaic.version = 11 : i64} {
  func.func @kernel(%arg0: i32, %arg1: memref<56x216xbf16, #tpu.memory_space<vmem>>, %arg2: memref<56x27xbf16, #tpu.memory_space<vmem>>, %arg3: memref<1x216xf32, #tpu.memory_space<vmem>>, %arg4: memref<1x216xf32, #tpu.memory_space<vmem>>, %arg5: memref<216x8xbf16, #tpu.memory_space<vmem>>, %arg6: memref<27x8xf32, #tpu.memory_space<vmem>>, %arg7: memref<56x8xbf16, #tpu.memory_space<vmem>>, %arg8: memref<1x1x8xf32, #tpu.memory_space<vmem>>, %arg9: memref<1x1x8xf32, #tpu.memory_space<vmem>>) attributes {dimension_semantics = [#tpu.dimension_semantics<parallel>], iteration_bounds = array<i64: 1>, scalar_prefetch = 0 : i64, scratch_operands = 0 : i64, tpu.core_type = #tpu.core_type<tc>, window_params = [{transform_indices = @transform_0, window_bounds = array<i64: 56, 216>}, {transform_indices = @transform_1, window_bounds = array<i64: 56, 27>}, {pipeline_mode = #tpu.pipeline_mode<synchronous>, transform_indices = @transform_2, window_bounds = array<i64: 1, 216>}, {pipeline_mode = #tpu.pipeline_mode<synchronous>, transform_indices = @transform_3, window_bounds = array<i64: 1, 216>}, {pipeline_mode = #tpu.pipeline_mode<synchronous>, transform_indices = @transform_4, window_bounds = array<i64: 216, 8>}, {pipeline_mode = #tpu.pipeline_mode<synchronous>, transform_indices = @transform_5, window_bounds = array<i64: 27, 8>}, {transform_indices = @transform_6, window_bounds = array<i64: 56, 8>}, {transform_indices = @transform_7, window_bounds = array<i64: 1, 1, 8>}, {transform_indices = @transform_8, window_bounds = array<i64: 1, 1, 8>}]} {
    %c0 = arith.constant 0 : index
    %c0_0 = arith.constant 0 : index
    %0 = vector.load %arg1[%c0, %c0_0] : memref<56x216xbf16, #tpu.memory_space<vmem>>, vector<56x216xbf16>
    %1 = arith.extf %0 : vector<56x216xbf16> to vector<56x216xf32>
    %c0_1 = arith.constant 0 : index
    %c0_2 = arith.constant 0 : index
    %2 = vector.load %arg3[%c0_1, %c0_2] : memref<1x216xf32, #tpu.memory_space<vmem>>, vector<1x216xf32>
    %3 = vector.broadcast %2 : vector<1x216xf32> to vector<56x216xf32>
    %4 = arith.mulf %1, %3 : vector<56x216xf32>
    %c0_3 = arith.constant 0 : index
    %c0_4 = arith.constant 0 : index
    %5 = vector.load %arg4[%c0_3, %c0_4] : memref<1x216xf32, #tpu.memory_space<vmem>>, vector<1x216xf32>
    %6 = vector.broadcast %5 : vector<1x216xf32> to vector<56x216xf32>
    %7 = arith.addf %4, %6 : vector<56x216xf32>
    %cst = arith.constant 0.000000e+00 : f32
    %8 = vector.broadcast %cst : f32 to vector<56x216xf32>
    %9 = arith.maximumf %7, %8 : vector<56x216xf32>
    %10 = arith.truncf %9 : vector<56x216xf32> to vector<56x216xbf16>
    %c0_5 = arith.constant 0 : index
    %c0_6 = arith.constant 0 : index
    %11 = vector.load %arg5[%c0_5, %c0_6] : memref<216x8xbf16, #tpu.memory_space<vmem>>, vector<216x8xbf16>
    %cst_7 = arith.constant dense<0.000000e+00> : vector<56x8xf32>
    %12 = tpu.matmul %10, %11, %cst_7 {dimension_numbers = #tpu.dot_dimension_numbers<[1], [0], [0], [1], [0, 0, 1, 1], [], []>} : vector<56x216xbf16>, vector<216x8xbf16>, vector<56x8xf32> -> vector<56x8xf32>
    %c0_8 = arith.constant 0 : index
    %c0_9 = arith.constant 0 : index
    %13 = vector.load %arg2[%c0_8, %c0_9] : memref<56x27xbf16, #tpu.memory_space<vmem>>, vector<56x27xbf16>
    %14 = arith.extf %13 : vector<56x27xbf16> to vector<56x27xf32>
    %c0_10 = arith.constant 0 : index
    %c0_11 = arith.constant 0 : index
    %15 = vector.load %arg6[%c0_10, %c0_11] : memref<27x8xf32, #tpu.memory_space<vmem>>, vector<27x8xf32>
    %cst_12 = arith.constant dense<0.000000e+00> : vector<56x8xf32>
    %16 = tpu.matmul %14, %15, %cst_12 {dimension_numbers = #tpu.dot_dimension_numbers<[1], [0], [0], [1], [0, 0, 1, 1], [], []>} : vector<56x27xf32>, vector<27x8xf32>, vector<56x8xf32> -> vector<56x8xf32>
    %17 = arith.subf %12, %16 : vector<56x8xf32>
    %c56_i32 = arith.constant 56 : i32
    %18 = arith.muli %arg0, %c56_i32 : i32
    %19 = tpu.iota {dimensions = array<i32: 0>} : vector<56x1xi32>
    %20 = vector.broadcast %18 : i32 to vector<56x1xi32>
    %21 = arith.addi %20, %19 : vector<56x1xi32>
    %c54_i32 = arith.constant 54 : i32
    %22 = vector.broadcast %c54_i32 : i32 to vector<56x1xi32>
    %23 = arith.cmpi slt, %21, %22 : vector<56x1xi32>
    %cst_13 = arith.constant 0.000000e+00 : f32
    %24 = vector.shape_cast %23 : vector<56x1xi1> to vector<56x1xi1>
    %25 = vector.broadcast %24 : vector<56x1xi1> to vector<56x8xi1>
    %26 = vector.broadcast %cst_13 : f32 to vector<56x8xf32>
    %27 = arith.select %25, %17, %26 : vector<56x8xi1>, vector<56x8xf32>
    %cst_14 = arith.constant dense<0.000000e+00> : vector<8xf32>
    %28 = vector.multi_reduction <add>, %27, %cst_14 [0] : vector<56x8xf32> to vector<8xf32>
    %29 = vector.shape_cast %28 : vector<8xf32> to vector<1x8xf32>
    %30 = vector.shape_cast %29 : vector<1x8xf32> to vector<1x1x8xf32>
    %c0_15 = arith.constant 0 : index
    %c0_16 = arith.constant 0 : index
    %c0_17 = arith.constant 0 : index
    %31 = vector.load %arg8[%c0_15, %c0_16, %c0_17] : memref<1x1x8xf32, #tpu.memory_space<vmem>>, vector<1x1x8xf32>
    tpu.vector_store %arg8[%c0_15, %c0_16, %c0_17], %30 {strides = array<i32>} : memref<1x1x8xf32, #tpu.memory_space<vmem>>, vector<1x1x8xf32>,
    %32 = arith.mulf %27, %27 : vector<56x8xf32>
    %cst_18 = arith.constant dense<0.000000e+00> : vector<8xf32>
    %33 = vector.multi_reduction <add>, %32, %cst_18 [0] : vector<56x8xf32> to vector<8xf32>
    %34 = vector.shape_cast %33 : vector<8xf32> to vector<1x8xf32>
    %35 = vector.shape_cast %34 : vector<1x8xf32> to vector<1x1x8xf32>
    %c0_19 = arith.constant 0 : index
    %c0_20 = arith.constant 0 : index
    %c0_21 = arith.constant 0 : index
    %36 = vector.load %arg9[%c0_19, %c0_20, %c0_21] : memref<1x1x8xf32, #tpu.memory_space<vmem>>, vector<1x1x8xf32>
    tpu.vector_store %arg9[%c0_19, %c0_20, %c0_21], %35 {strides = array<i32>} : memref<1x1x8xf32, #tpu.memory_space<vmem>>, vector<1x1x8xf32>,
    %37 = arith.truncf %27 : vector<56x8xf32> to vector<56x8xbf16>
    %c0_22 = arith.constant 0 : index
    %c0_23 = arith.constant 0 : index
    %38 = vector.load %arg7[%c0_22, %c0_23] : memref<56x8xbf16, #tpu.memory_space<vmem>>, vector<56x8xbf16>
    tpu.vector_store %arg7[%c0_22, %c0_23], %37 {strides = array<i32>} : memref<56x8xbf16, #tpu.memory_space<vmem>>, vector<56x8xbf16>,
    return
  }
  func.func @transform_0(%arg0: i32) -> (i32, i32) {
    %c0_i32 = arith.constant 0 : i32
    %c0_i32_0 = arith.constant 0 : i32
    return %arg0, %c0_i32 : i32, i32
  }
  func.func @transform_1(%arg0: i32) -> (i32, i32) {
    %c0_i32 = arith.constant 0 : i32
    %c0_i32_0 = arith.constant 0 : i32
    return %arg0, %c0_i32 : i32, i32
  }
  func.func @transform_2(%arg0: i32) -> (i32, i32) {
    %c0_i32 = arith.constant 0 : i32
    %c0_i32_0 = arith.constant 0 : i32
    %c0_i32_1 = arith.constant 0 : i32
    return %c0_i32, %c0_i32_0 : i32, i32
  }
  func.func @transform_3(%arg0: i32) -> (i32, i32) {
    %c0_i32 = arith.constant 0 : i32
    %c0_i32_0 = arith.constant 0 : i32
    %c0_i32_1 = arith.constant 0 : i32
    return %c0_i32, %c0_i32_0 : i32, i32
  }
  func.func @transform_4(%arg0: i32) -> (i32, i32) {
    %c0_i32 = arith.constant 0 : i32
    %c0_i32_0 = arith.constant 0 : i32
    %c0_i32_1 = arith.constant 0 : i32
    return %c0_i32, %c0_i32_0 : i32, i32
  }
  func.func @transform_5(%arg0: i32) -> (i32, i32) {
    %c0_i32 = arith.constant 0 : i32
    %c0_i32_0 = arith.constant 0 : i32
    %c0_i32_1 = arith.constant 0 : i32
    return %c0_i32, %c0_i32_0 : i32, i32
  }
  func.func @transform_6(%arg0: i32) -> (i32, i32) {
    %c0_i32 = arith.constant 0 : i32
    %c0_i32_0 = arith.constant 0 : i32
    return %arg0, %c0_i32 : i32, i32
  }
  func.func @transform_7(%arg0: i32) -> (i32, i32, i32) {
    %c0_i32 = arith.constant 0 : i32
    %c0_i32_0 = arith.constant 0 : i32
    %c0_i32_1 = arith.constant 0 : i32
    return %arg0, %c0_i32, %c0_i32_0 : i32, i32, i32
  }
  func.func @transform_8(%arg0: i32) -> (i32, i32, i32) {
    %c0_i32 = arith.constant 0 : i32
    %c0_i32_0 = arith.constant 0 : i32
    %c0_i32_1 = arith.constant 0 : i32
    return %arg0, %c0_i32, %c0_i32_0 : i32, i32, i32
  }
}

module attributes {stable_mosaic.version = 11 : i64} {
  func.func @kernel(%arg0: i32, %arg1: memref<56x216xbf16, #tpu.memory_space<vmem>>, %arg2: memref<56x27xbf16, #tpu.memory_space<vmem>>, %arg3: memref<1x216xf32, #tpu.memory_space<vmem>>, %arg4: memref<1x216xf32, #tpu.memory_space<vmem>>, %arg5: memref<216x8xbf16, #tpu.memory_space<vmem>>, %arg6: memref<27x8xf32, #tpu.memory_space<vmem>>, %arg7: memref<56x8xbf16, #tpu.memory_space<vmem>>, %arg8: memref<56x8xbf16, #tpu.memory_space<vmem>>, %arg9: memref<1x1x8xf32, #tpu.memory_space<vmem>>, %arg10: memref<1x1x8xf32, #tpu.memory_space<vmem>>) attributes {dimension_semantics = [#tpu.dimension_semantics<parallel>], iteration_bounds = array<i64: 1>, scalar_prefetch = 0 : i64, scratch_operands = 0 : i64, tpu.core_type = #tpu.core_type<tc>, window_params = [{transform_indices = @transform_0, window_bounds = array<i64: 56, 216>}, {transform_indices = @transform_1, window_bounds = array<i64: 56, 27>}, {pipeline_mode = #tpu.pipeline_mode<synchronous>, transform_indices = @transform_2, window_bounds = array<i64: 1, 216>}, {pipeline_mode = #tpu.pipeline_mode<synchronous>, transform_indices = @transform_3, window_bounds = array<i64: 1, 216>}, {pipeline_mode = #tpu.pipeline_mode<synchronous>, transform_indices = @transform_4, window_bounds = array<i64: 216, 8>}, {pipeline_mode = #tpu.pipeline_mode<synchronous>, transform_indices = @transform_5, window_bounds = array<i64: 27, 8>}, {transform_indices = @transform_6, window_bounds = array<i64: 56, 8>}, {transform_indices = @transform_7, window_bounds = array<i64: 56, 8>}, {transform_indices = @transform_8, window_bounds = array<i64: 1, 1, 8>}, {transform_indices = @transform_9, window_bounds = array<i64: 1, 1, 8>}]} {
    %c0 = arith.constant 0 : index
    %c0_0 = arith.constant 0 : index
    %0 = vector.load %arg1[%c0, %c0_0] : memref<56x216xbf16, #tpu.memory_space<vmem>>, vector<56x216xbf16>
    %1 = arith.extf %0 : vector<56x216xbf16> to vector<56x216xf32>
    %c0_1 = arith.constant 0 : index
    %c0_2 = arith.constant 0 : index
    %2 = vector.load %arg3[%c0_1, %c0_2] : memref<1x216xf32, #tpu.memory_space<vmem>>, vector<1x216xf32>
    %3 = vector.broadcast %2 : vector<1x216xf32> to vector<56x216xf32>
    %4 = arith.mulf %1, %3 : vector<56x216xf32>
    %c0_3 = arith.constant 0 : index
    %c0_4 = arith.constant 0 : index
    %5 = vector.load %arg4[%c0_3, %c0_4] : memref<1x216xf32, #tpu.memory_space<vmem>>, vector<1x216xf32>
    %6 = vector.broadcast %5 : vector<1x216xf32> to vector<56x216xf32>
    %7 = arith.addf %4, %6 : vector<56x216xf32>
    %cst = arith.constant 0.000000e+00 : f32
    %8 = vector.broadcast %cst : f32 to vector<56x216xf32>
    %9 = arith.maximumf %7, %8 : vector<56x216xf32>
    %10 = arith.truncf %9 : vector<56x216xf32> to vector<56x216xbf16>
    %c0_5 = arith.constant 0 : index
    %c0_6 = arith.constant 0 : index
    %11 = vector.load %arg5[%c0_5, %c0_6] : memref<216x8xbf16, #tpu.memory_space<vmem>>, vector<216x8xbf16>
    %cst_7 = arith.constant dense<0.000000e+00> : vector<56x8xf32>
    %12 = tpu.matmul %10, %11, %cst_7 {dimension_numbers = #tpu.dot_dimension_numbers<[1], [0], [0], [1], [0, 0, 1, 1], [], []>} : vector<56x216xbf16>, vector<216x8xbf16>, vector<56x8xf32> -> vector<56x8xf32>
    %c0_8 = arith.constant 0 : index
    %c0_9 = arith.constant 0 : index
    %13 = vector.load %arg2[%c0_8, %c0_9] : memref<56x27xbf16, #tpu.memory_space<vmem>>, vector<56x27xbf16>
    %14 = arith.extf %13 : vector<56x27xbf16> to vector<56x27xf32>
    %c0_10 = arith.constant 0 : index
    %c0_11 = arith.constant 0 : index
    %15 = vector.load %arg6[%c0_10, %c0_11] : memref<27x8xf32, #tpu.memory_space<vmem>>, vector<27x8xf32>
    %cst_12 = arith.constant dense<0.000000e+00> : vector<56x8xf32>
    %16 = tpu.matmul %14, %15, %cst_12 {dimension_numbers = #tpu.dot_dimension_numbers<[1], [0], [0], [1], [0, 0, 1, 1], [], []>} : vector<56x27xf32>, vector<27x8xf32>, vector<56x8xf32> -> vector<56x8xf32>
    %17 = arith.subf %12, %16 : vector<56x8xf32>
    %c0_13 = arith.constant 0 : index
    %c0_14 = arith.constant 0 : index
    %18 = vector.load %arg7[%c0_13, %c0_14] : memref<56x8xbf16, #tpu.memory_space<vmem>>, vector<56x8xbf16>
    %19 = arith.extf %18 : vector<56x8xbf16> to vector<56x8xf32>
    %20 = arith.addf %17, %19 : vector<56x8xf32>
    %c56_i32 = arith.constant 56 : i32
    %21 = arith.muli %arg0, %c56_i32 : i32
    %22 = tpu.iota {dimensions = array<i32: 0>} : vector<56x1xi32>
    %23 = vector.broadcast %21 : i32 to vector<56x1xi32>
    %24 = arith.addi %23, %22 : vector<56x1xi32>
    %c54_i32 = arith.constant 54 : i32
    %25 = vector.broadcast %c54_i32 : i32 to vector<56x1xi32>
    %26 = arith.cmpi slt, %24, %25 : vector<56x1xi32>
    %cst_15 = arith.constant 0.000000e+00 : f32
    %27 = vector.shape_cast %26 : vector<56x1xi1> to vector<56x1xi1>
    %28 = vector.broadcast %27 : vector<56x1xi1> to vector<56x8xi1>
    %29 = vector.broadcast %cst_15 : f32 to vector<56x8xf32>
    %30 = arith.select %28, %20, %29 : vector<56x8xi1>, vector<56x8xf32>
    %cst_16 = arith.constant dense<0.000000e+00> : vector<8xf32>
    %31 = vector.multi_reduction <add>, %30, %cst_16 [0] : vector<56x8xf32> to vector<8xf32>
    %32 = vector.shape_cast %31 : vector<8xf32> to vector<1x8xf32>
    %33 = vector.shape_cast %32 : vector<1x8xf32> to vector<1x1x8xf32>
    %c0_17 = arith.constant 0 : index
    %c0_18 = arith.constant 0 : index
    %c0_19 = arith.constant 0 : index
    %34 = vector.load %arg9[%c0_17, %c0_18, %c0_19] : memref<1x1x8xf32, #tpu.memory_space<vmem>>, vector<1x1x8xf32>
    tpu.vector_store %arg9[%c0_17, %c0_18, %c0_19], %33 {strides = array<i32>} : memref<1x1x8xf32, #tpu.memory_space<vmem>>, vector<1x1x8xf32>,
    %35 = arith.mulf %30, %30 : vector<56x8xf32>
    %cst_20 = arith.constant dense<0.000000e+00> : vector<8xf32>
    %36 = vector.multi_reduction <add>, %35, %cst_20 [0] : vector<56x8xf32> to vector<8xf32>
    %37 = vector.shape_cast %36 : vector<8xf32> to vector<1x8xf32>
    %38 = vector.shape_cast %37 : vector<1x8xf32> to vector<1x1x8xf32>
    %c0_21 = arith.constant 0 : index
    %c0_22 = arith.constant 0 : index
    %c0_23 = arith.constant 0 : index
    %39 = vector.load %arg10[%c0_21, %c0_22, %c0_23] : memref<1x1x8xf32, #tpu.memory_space<vmem>>, vector<1x1x8xf32>
    tpu.vector_store %arg10[%c0_21, %c0_22, %c0_23], %38 {strides = array<i32>} : memref<1x1x8xf32, #tpu.memory_space<vmem>>, vector<1x1x8xf32>,
    %40 = arith.truncf %30 : vector<56x8xf32> to vector<56x8xbf16>
    %c0_24 = arith.constant 0 : index
    %c0_25 = arith.constant 0 : index
    %41 = vector.load %arg8[%c0_24, %c0_25] : memref<56x8xbf16, #tpu.memory_space<vmem>>, vector<56x8xbf16>
    tpu.vector_store %arg8[%c0_24, %c0_25], %40 {strides = array<i32>} : memref<56x8xbf16, #tpu.memory_space<vmem>>, vector<56x8xbf16>,
    return
  }
  func.func @transform_0(%arg0: i32) -> (i32, i32) {
    %c0_i32 = arith.constant 0 : i32
    %c0_i32_0 = arith.constant 0 : i32
    return %arg0, %c0_i32 : i32, i32
  }
  func.func @transform_1(%arg0: i32) -> (i32, i32) {
    %c0_i32 = arith.constant 0 : i32
    %c0_i32_0 = arith.constant 0 : i32
    return %arg0, %c0_i32 : i32, i32
  }
  func.func @transform_2(%arg0: i32) -> (i32, i32) {
    %c0_i32 = arith.constant 0 : i32
    %c0_i32_0 = arith.constant 0 : i32
    %c0_i32_1 = arith.constant 0 : i32
    return %c0_i32, %c0_i32_0 : i32, i32
  }
  func.func @transform_3(%arg0: i32) -> (i32, i32) {
    %c0_i32 = arith.constant 0 : i32
    %c0_i32_0 = arith.constant 0 : i32
    %c0_i32_1 = arith.constant 0 : i32
    return %c0_i32, %c0_i32_0 : i32, i32
  }
  func.func @transform_4(%arg0: i32) -> (i32, i32) {
    %c0_i32 = arith.constant 0 : i32
    %c0_i32_0 = arith.constant 0 : i32
    %c0_i32_1 = arith.constant 0 : i32
    return %c0_i32, %c0_i32_0 : i32, i32
  }
  func.func @transform_5(%arg0: i32) -> (i32, i32) {
    %c0_i32 = arith.constant 0 : i32
    %c0_i32_0 = arith.constant 0 : i32
    %c0_i32_1 = arith.constant 0 : i32
    return %c0_i32, %c0_i32_0 : i32, i32
  }
  func.func @transform_6(%arg0: i32) -> (i32, i32) {
    %c0_i32 = arith.constant 0 : i32
    %c0_i32_0 = arith.constant 0 : i32
    return %arg0, %c0_i32 : i32, i32
  }
  func.func @transform_7(%arg0: i32) -> (i32, i32) {
    %c0_i32 = arith.constant 0 : i32
    %c0_i32_0 = arith.constant 0 : i32
    return %arg0, %c0_i32 : i32, i32
  }
  func.func @transform_8(%arg0: i32) -> (i32, i32, i32) {
    %c0_i32 = arith.constant 0 : i32
    %c0_i32_0 = arith.constant 0 : i32
    %c0_i32_1 = arith.constant 0 : i32
    return %arg0, %c0_i32, %c0_i32_0 : i32, i32, i32
  }
  func.func @transform_9(%arg0: i32) -> (i32, i32, i32) {
    %c0_i32 = arith.constant 0 : i32
    %c0_i32_0 = arith.constant 0 : i32
    %c0_i32_1 = arith.constant 0 : i32
    return %arg0, %c0_i32, %c0_i32_0 : i32, i32, i32
  }
}

module attributes {stable_mosaic.version = 11 : i64} {
  func.func @kernel(%arg0: i32, %arg1: memref<24x216xbf16, #tpu.memory_space<vmem>>, %arg2: memref<24x27xbf16, #tpu.memory_space<vmem>>, %arg3: memref<1x216xf32, #tpu.memory_space<vmem>>, %arg4: memref<1x216xf32, #tpu.memory_space<vmem>>, %arg5: memref<216x8xbf16, #tpu.memory_space<vmem>>, %arg6: memref<27x8xf32, #tpu.memory_space<vmem>>, %arg7: memref<24x8xbf16, #tpu.memory_space<vmem>>, %arg8: memref<1x1x8xf32, #tpu.memory_space<vmem>>, %arg9: memref<1x1x8xf32, #tpu.memory_space<vmem>>) attributes {dimension_semantics = [#tpu.dimension_semantics<parallel>], iteration_bounds = array<i64: 1>, scalar_prefetch = 0 : i64, scratch_operands = 0 : i64, tpu.core_type = #tpu.core_type<tc>, window_params = [{transform_indices = @transform_0, window_bounds = array<i64: 24, 216>}, {transform_indices = @transform_1, window_bounds = array<i64: 24, 27>}, {pipeline_mode = #tpu.pipeline_mode<synchronous>, transform_indices = @transform_2, window_bounds = array<i64: 1, 216>}, {pipeline_mode = #tpu.pipeline_mode<synchronous>, transform_indices = @transform_3, window_bounds = array<i64: 1, 216>}, {pipeline_mode = #tpu.pipeline_mode<synchronous>, transform_indices = @transform_4, window_bounds = array<i64: 216, 8>}, {pipeline_mode = #tpu.pipeline_mode<synchronous>, transform_indices = @transform_5, window_bounds = array<i64: 27, 8>}, {transform_indices = @transform_6, window_bounds = array<i64: 24, 8>}, {transform_indices = @transform_7, window_bounds = array<i64: 1, 1, 8>}, {transform_indices = @transform_8, window_bounds = array<i64: 1, 1, 8>}]} {
    %c0 = arith.constant 0 : index
    %c0_0 = arith.constant 0 : index
    %0 = vector.load %arg1[%c0, %c0_0] : memref<24x216xbf16, #tpu.memory_space<vmem>>, vector<24x216xbf16>
    %1 = arith.extf %0 : vector<24x216xbf16> to vector<24x216xf32>
    %c0_1 = arith.constant 0 : index
    %c0_2 = arith.constant 0 : index
    %2 = vector.load %arg3[%c0_1, %c0_2] : memref<1x216xf32, #tpu.memory_space<vmem>>, vector<1x216xf32>
    %3 = vector.broadcast %2 : vector<1x216xf32> to vector<24x216xf32>
    %4 = arith.mulf %1, %3 : vector<24x216xf32>
    %c0_3 = arith.constant 0 : index
    %c0_4 = arith.constant 0 : index
    %5 = vector.load %arg4[%c0_3, %c0_4] : memref<1x216xf32, #tpu.memory_space<vmem>>, vector<1x216xf32>
    %6 = vector.broadcast %5 : vector<1x216xf32> to vector<24x216xf32>
    %7 = arith.addf %4, %6 : vector<24x216xf32>
    %cst = arith.constant 0.000000e+00 : f32
    %8 = vector.broadcast %cst : f32 to vector<24x216xf32>
    %9 = arith.maximumf %7, %8 : vector<24x216xf32>
    %10 = arith.truncf %9 : vector<24x216xf32> to vector<24x216xbf16>
    %c0_5 = arith.constant 0 : index
    %c0_6 = arith.constant 0 : index
    %11 = vector.load %arg5[%c0_5, %c0_6] : memref<216x8xbf16, #tpu.memory_space<vmem>>, vector<216x8xbf16>
    %cst_7 = arith.constant dense<0.000000e+00> : vector<24x8xf32>
    %12 = tpu.matmul %10, %11, %cst_7 {dimension_numbers = #tpu.dot_dimension_numbers<[1], [0], [0], [1], [0, 0, 1, 1], [], []>} : vector<24x216xbf16>, vector<216x8xbf16>, vector<24x8xf32> -> vector<24x8xf32>
    %c0_8 = arith.constant 0 : index
    %c0_9 = arith.constant 0 : index
    %13 = vector.load %arg2[%c0_8, %c0_9] : memref<24x27xbf16, #tpu.memory_space<vmem>>, vector<24x27xbf16>
    %14 = arith.extf %13 : vector<24x27xbf16> to vector<24x27xf32>
    %c0_10 = arith.constant 0 : index
    %c0_11 = arith.constant 0 : index
    %15 = vector.load %arg6[%c0_10, %c0_11] : memref<27x8xf32, #tpu.memory_space<vmem>>, vector<27x8xf32>
    %cst_12 = arith.constant dense<0.000000e+00> : vector<24x8xf32>
    %16 = tpu.matmul %14, %15, %cst_12 {dimension_numbers = #tpu.dot_dimension_numbers<[1], [0], [0], [1], [0, 0, 1, 1], [], []>} : vector<24x27xf32>, vector<27x8xf32>, vector<24x8xf32> -> vector<24x8xf32>
    %17 = arith.subf %12, %16 : vector<24x8xf32>
    %c24_i32 = arith.constant 24 : i32
    %18 = arith.muli %arg0, %c24_i32 : i32
    %19 = tpu.iota {dimensions = array<i32: 0>} : vector<24x1xi32>
    %20 = vector.broadcast %18 : i32 to vector<24x1xi32>
    %21 = arith.addi %20, %19 : vector<24x1xi32>
    %c16_i32 = arith.constant 16 : i32
    %22 = vector.broadcast %c16_i32 : i32 to vector<24x1xi32>
    %23 = arith.cmpi slt, %21, %22 : vector<24x1xi32>
    %cst_13 = arith.constant 0.000000e+00 : f32
    %24 = vector.shape_cast %23 : vector<24x1xi1> to vector<24x1xi1>
    %25 = vector.broadcast %24 : vector<24x1xi1> to vector<24x8xi1>
    %26 = vector.broadcast %cst_13 : f32 to vector<24x8xf32>
    %27 = arith.select %25, %17, %26 : vector<24x8xi1>, vector<24x8xf32>
    %cst_14 = arith.constant dense<0.000000e+00> : vector<8xf32>
    %28 = vector.multi_reduction <add>, %27, %cst_14 [0] : vector<24x8xf32> to vector<8xf32>
    %29 = vector.shape_cast %28 : vector<8xf32> to vector<1x8xf32>
    %30 = vector.shape_cast %29 : vector<1x8xf32> to vector<1x1x8xf32>
    %c0_15 = arith.constant 0 : index
    %c0_16 = arith.constant 0 : index
    %c0_17 = arith.constant 0 : index
    %31 = vector.load %arg8[%c0_15, %c0_16, %c0_17] : memref<1x1x8xf32, #tpu.memory_space<vmem>>, vector<1x1x8xf32>
    tpu.vector_store %arg8[%c0_15, %c0_16, %c0_17], %30 {strides = array<i32>} : memref<1x1x8xf32, #tpu.memory_space<vmem>>, vector<1x1x8xf32>,
    %32 = arith.mulf %27, %27 : vector<24x8xf32>
    %cst_18 = arith.constant dense<0.000000e+00> : vector<8xf32>
    %33 = vector.multi_reduction <add>, %32, %cst_18 [0] : vector<24x8xf32> to vector<8xf32>
    %34 = vector.shape_cast %33 : vector<8xf32> to vector<1x8xf32>
    %35 = vector.shape_cast %34 : vector<1x8xf32> to vector<1x1x8xf32>
    %c0_19 = arith.constant 0 : index
    %c0_20 = arith.constant 0 : index
    %c0_21 = arith.constant 0 : index
    %36 = vector.load %arg9[%c0_19, %c0_20, %c0_21] : memref<1x1x8xf32, #tpu.memory_space<vmem>>, vector<1x1x8xf32>
    tpu.vector_store %arg9[%c0_19, %c0_20, %c0_21], %35 {strides = array<i32>} : memref<1x1x8xf32, #tpu.memory_space<vmem>>, vector<1x1x8xf32>,
    %37 = arith.truncf %27 : vector<24x8xf32> to vector<24x8xbf16>
    %c0_22 = arith.constant 0 : index
    %c0_23 = arith.constant 0 : index
    %38 = vector.load %arg7[%c0_22, %c0_23] : memref<24x8xbf16, #tpu.memory_space<vmem>>, vector<24x8xbf16>
    tpu.vector_store %arg7[%c0_22, %c0_23], %37 {strides = array<i32>} : memref<24x8xbf16, #tpu.memory_space<vmem>>, vector<24x8xbf16>,
    return
  }
  func.func @transform_0(%arg0: i32) -> (i32, i32) {
    %c0_i32 = arith.constant 0 : i32
    %c0_i32_0 = arith.constant 0 : i32
    return %arg0, %c0_i32 : i32, i32
  }
  func.func @transform_1(%arg0: i32) -> (i32, i32) {
    %c0_i32 = arith.constant 0 : i32
    %c0_i32_0 = arith.constant 0 : i32
    return %arg0, %c0_i32 : i32, i32
  }
  func.func @transform_2(%arg0: i32) -> (i32, i32) {
    %c0_i32 = arith.constant 0 : i32
    %c0_i32_0 = arith.constant 0 : i32
    %c0_i32_1 = arith.constant 0 : i32
    return %c0_i32, %c0_i32_0 : i32, i32
  }
  func.func @transform_3(%arg0: i32) -> (i32, i32) {
    %c0_i32 = arith.constant 0 : i32
    %c0_i32_0 = arith.constant 0 : i32
    %c0_i32_1 = arith.constant 0 : i32
    return %c0_i32, %c0_i32_0 : i32, i32
  }
  func.func @transform_4(%arg0: i32) -> (i32, i32) {
    %c0_i32 = arith.constant 0 : i32
    %c0_i32_0 = arith.constant 0 : i32
    %c0_i32_1 = arith.constant 0 : i32
    return %c0_i32, %c0_i32_0 : i32, i32
  }
  func.func @transform_5(%arg0: i32) -> (i32, i32) {
    %c0_i32 = arith.constant 0 : i32
    %c0_i32_0 = arith.constant 0 : i32
    %c0_i32_1 = arith.constant 0 : i32
    return %c0_i32, %c0_i32_0 : i32, i32
  }
  func.func @transform_6(%arg0: i32) -> (i32, i32) {
    %c0_i32 = arith.constant 0 : i32
    %c0_i32_0 = arith.constant 0 : i32
    return %arg0, %c0_i32 : i32, i32
  }
  func.func @transform_7(%arg0: i32) -> (i32, i32, i32) {
    %c0_i32 = arith.constant 0 : i32
    %c0_i32_0 = arith.constant 0 : i32
    %c0_i32_1 = arith.constant 0 : i32
    return %arg0, %c0_i32, %c0_i32_0 : i32, i32, i32
  }
  func.func @transform_8(%arg0: i32) -> (i32, i32, i32) {
    %c0_i32 = arith.constant 0 : i32
    %c0_i32_0 = arith.constant 0 : i32
    %c0_i32_1 = arith.constant 0 : i32
    return %arg0, %c0_i32, %c0_i32_0 : i32, i32, i32
  }
}

module attributes {stable_mosaic.version = 11 : i64} {
  func.func @kernel(%arg0: i32, %arg1: memref<24x216xbf16, #tpu.memory_space<vmem>>, %arg2: memref<24x27xbf16, #tpu.memory_space<vmem>>, %arg3: memref<1x216xf32, #tpu.memory_space<vmem>>, %arg4: memref<1x216xf32, #tpu.memory_space<vmem>>, %arg5: memref<216x8xbf16, #tpu.memory_space<vmem>>, %arg6: memref<27x8xf32, #tpu.memory_space<vmem>>, %arg7: memref<24x8xbf16, #tpu.memory_space<vmem>>, %arg8: memref<24x8xbf16, #tpu.memory_space<vmem>>, %arg9: memref<1x1x8xf32, #tpu.memory_space<vmem>>, %arg10: memref<1x1x8xf32, #tpu.memory_space<vmem>>) attributes {dimension_semantics = [#tpu.dimension_semantics<parallel>], iteration_bounds = array<i64: 1>, scalar_prefetch = 0 : i64, scratch_operands = 0 : i64, tpu.core_type = #tpu.core_type<tc>, window_params = [{transform_indices = @transform_0, window_bounds = array<i64: 24, 216>}, {transform_indices = @transform_1, window_bounds = array<i64: 24, 27>}, {pipeline_mode = #tpu.pipeline_mode<synchronous>, transform_indices = @transform_2, window_bounds = array<i64: 1, 216>}, {pipeline_mode = #tpu.pipeline_mode<synchronous>, transform_indices = @transform_3, window_bounds = array<i64: 1, 216>}, {pipeline_mode = #tpu.pipeline_mode<synchronous>, transform_indices = @transform_4, window_bounds = array<i64: 216, 8>}, {pipeline_mode = #tpu.pipeline_mode<synchronous>, transform_indices = @transform_5, window_bounds = array<i64: 27, 8>}, {transform_indices = @transform_6, window_bounds = array<i64: 24, 8>}, {transform_indices = @transform_7, window_bounds = array<i64: 24, 8>}, {transform_indices = @transform_8, window_bounds = array<i64: 1, 1, 8>}, {transform_indices = @transform_9, window_bounds = array<i64: 1, 1, 8>}]} {
    %c0 = arith.constant 0 : index
    %c0_0 = arith.constant 0 : index
    %0 = vector.load %arg1[%c0, %c0_0] : memref<24x216xbf16, #tpu.memory_space<vmem>>, vector<24x216xbf16>
    %1 = arith.extf %0 : vector<24x216xbf16> to vector<24x216xf32>
    %c0_1 = arith.constant 0 : index
    %c0_2 = arith.constant 0 : index
    %2 = vector.load %arg3[%c0_1, %c0_2] : memref<1x216xf32, #tpu.memory_space<vmem>>, vector<1x216xf32>
    %3 = vector.broadcast %2 : vector<1x216xf32> to vector<24x216xf32>
    %4 = arith.mulf %1, %3 : vector<24x216xf32>
    %c0_3 = arith.constant 0 : index
    %c0_4 = arith.constant 0 : index
    %5 = vector.load %arg4[%c0_3, %c0_4] : memref<1x216xf32, #tpu.memory_space<vmem>>, vector<1x216xf32>
    %6 = vector.broadcast %5 : vector<1x216xf32> to vector<24x216xf32>
    %7 = arith.addf %4, %6 : vector<24x216xf32>
    %cst = arith.constant 0.000000e+00 : f32
    %8 = vector.broadcast %cst : f32 to vector<24x216xf32>
    %9 = arith.maximumf %7, %8 : vector<24x216xf32>
    %10 = arith.truncf %9 : vector<24x216xf32> to vector<24x216xbf16>
    %c0_5 = arith.constant 0 : index
    %c0_6 = arith.constant 0 : index
    %11 = vector.load %arg5[%c0_5, %c0_6] : memref<216x8xbf16, #tpu.memory_space<vmem>>, vector<216x8xbf16>
    %cst_7 = arith.constant dense<0.000000e+00> : vector<24x8xf32>
    %12 = tpu.matmul %10, %11, %cst_7 {dimension_numbers = #tpu.dot_dimension_numbers<[1], [0], [0], [1], [0, 0, 1, 1], [], []>} : vector<24x216xbf16>, vector<216x8xbf16>, vector<24x8xf32> -> vector<24x8xf32>
    %c0_8 = arith.constant 0 : index
    %c0_9 = arith.constant 0 : index
    %13 = vector.load %arg2[%c0_8, %c0_9] : memref<24x27xbf16, #tpu.memory_space<vmem>>, vector<24x27xbf16>
    %14 = arith.extf %13 : vector<24x27xbf16> to vector<24x27xf32>
    %c0_10 = arith.constant 0 : index
    %c0_11 = arith.constant 0 : index
    %15 = vector.load %arg6[%c0_10, %c0_11] : memref<27x8xf32, #tpu.memory_space<vmem>>, vector<27x8xf32>
    %cst_12 = arith.constant dense<0.000000e+00> : vector<24x8xf32>
    %16 = tpu.matmul %14, %15, %cst_12 {dimension_numbers = #tpu.dot_dimension_numbers<[1], [0], [0], [1], [0, 0, 1, 1], [], []>} : vector<24x27xf32>, vector<27x8xf32>, vector<24x8xf32> -> vector<24x8xf32>
    %17 = arith.subf %12, %16 : vector<24x8xf32>
    %c0_13 = arith.constant 0 : index
    %c0_14 = arith.constant 0 : index
    %18 = vector.load %arg7[%c0_13, %c0_14] : memref<24x8xbf16, #tpu.memory_space<vmem>>, vector<24x8xbf16>
    %19 = arith.extf %18 : vector<24x8xbf16> to vector<24x8xf32>
    %20 = arith.addf %17, %19 : vector<24x8xf32>
    %c24_i32 = arith.constant 24 : i32
    %21 = arith.muli %arg0, %c24_i32 : i32
    %22 = tpu.iota {dimensions = array<i32: 0>} : vector<24x1xi32>
    %23 = vector.broadcast %21 : i32 to vector<24x1xi32>
    %24 = arith.addi %23, %22 : vector<24x1xi32>
    %c16_i32 = arith.constant 16 : i32
    %25 = vector.broadcast %c16_i32 : i32 to vector<24x1xi32>
    %26 = arith.cmpi slt, %24, %25 : vector<24x1xi32>
    %cst_15 = arith.constant 0.000000e+00 : f32
    %27 = vector.shape_cast %26 : vector<24x1xi1> to vector<24x1xi1>
    %28 = vector.broadcast %27 : vector<24x1xi1> to vector<24x8xi1>
    %29 = vector.broadcast %cst_15 : f32 to vector<24x8xf32>
    %30 = arith.select %28, %20, %29 : vector<24x8xi1>, vector<24x8xf32>
    %cst_16 = arith.constant dense<0.000000e+00> : vector<8xf32>
    %31 = vector.multi_reduction <add>, %30, %cst_16 [0] : vector<24x8xf32> to vector<8xf32>
    %32 = vector.shape_cast %31 : vector<8xf32> to vector<1x8xf32>
    %33 = vector.shape_cast %32 : vector<1x8xf32> to vector<1x1x8xf32>
    %c0_17 = arith.constant 0 : index
    %c0_18 = arith.constant 0 : index
    %c0_19 = arith.constant 0 : index
    %34 = vector.load %arg9[%c0_17, %c0_18, %c0_19] : memref<1x1x8xf32, #tpu.memory_space<vmem>>, vector<1x1x8xf32>
    tpu.vector_store %arg9[%c0_17, %c0_18, %c0_19], %33 {strides = array<i32>} : memref<1x1x8xf32, #tpu.memory_space<vmem>>, vector<1x1x8xf32>,
    %35 = arith.mulf %30, %30 : vector<24x8xf32>
    %cst_20 = arith.constant dense<0.000000e+00> : vector<8xf32>
    %36 = vector.multi_reduction <add>, %35, %cst_20 [0] : vector<24x8xf32> to vector<8xf32>
    %37 = vector.shape_cast %36 : vector<8xf32> to vector<1x8xf32>
    %38 = vector.shape_cast %37 : vector<1x8xf32> to vector<1x1x8xf32>
    %c0_21 = arith.constant 0 : index
    %c0_22 = arith.constant 0 : index
    %c0_23 = arith.constant 0 : index
    %39 = vector.load %arg10[%c0_21, %c0_22, %c0_23] : memref<1x1x8xf32, #tpu.memory_space<vmem>>, vector<1x1x8xf32>
    tpu.vector_store %arg10[%c0_21, %c0_22, %c0_23], %38 {strides = array<i32>} : memref<1x1x8xf32, #tpu.memory_space<vmem>>, vector<1x1x8xf32>,
    %40 = arith.truncf %30 : vector<24x8xf32> to vector<24x8xbf16>
    %c0_24 = arith.constant 0 : index
    %c0_25 = arith.constant 0 : index
    %41 = vector.load %arg8[%c0_24, %c0_25] : memref<24x8xbf16, #tpu.memory_space<vmem>>, vector<24x8xbf16>
    tpu.vector_store %arg8[%c0_24, %c0_25], %40 {strides = array<i32>} : memref<24x8xbf16, #tpu.memory_space<vmem>>, vector<24x8xbf16>,
    return
  }
  func.func @transform_0(%arg0: i32) -> (i32, i32) {
    %c0_i32 = arith.constant 0 : i32
    %c0_i32_0 = arith.constant 0 : i32
    return %arg0, %c0_i32 : i32, i32
  }
  func.func @transform_1(%arg0: i32) -> (i32, i32) {
    %c0_i32 = arith.constant 0 : i32
    %c0_i32_0 = arith.constant 0 : i32
    return %arg0, %c0_i32 : i32, i32
  }
  func.func @transform_2(%arg0: i32) -> (i32, i32) {
    %c0_i32 = arith.constant 0 : i32
    %c0_i32_0 = arith.constant 0 : i32
    %c0_i32_1 = arith.constant 0 : i32
    return %c0_i32, %c0_i32_0 : i32, i32
  }
  func.func @transform_3(%arg0: i32) -> (i32, i32) {
    %c0_i32 = arith.constant 0 : i32
    %c0_i32_0 = arith.constant 0 : i32
    %c0_i32_1 = arith.constant 0 : i32
    return %c0_i32, %c0_i32_0 : i32, i32
  }
  func.func @transform_4(%arg0: i32) -> (i32, i32) {
    %c0_i32 = arith.constant 0 : i32
    %c0_i32_0 = arith.constant 0 : i32
    %c0_i32_1 = arith.constant 0 : i32
    return %c0_i32, %c0_i32_0 : i32, i32
  }
  func.func @transform_5(%arg0: i32) -> (i32, i32) {
    %c0_i32 = arith.constant 0 : i32
    %c0_i32_0 = arith.constant 0 : i32
    %c0_i32_1 = arith.constant 0 : i32
    return %c0_i32, %c0_i32_0 : i32, i32
  }
  func.func @transform_6(%arg0: i32) -> (i32, i32) {
    %c0_i32 = arith.constant 0 : i32
    %c0_i32_0 = arith.constant 0 : i32
    return %arg0, %c0_i32 : i32, i32
  }
  func.func @transform_7(%arg0: i32) -> (i32, i32) {
    %c0_i32 = arith.constant 0 : i32
    %c0_i32_0 = arith.constant 0 : i32
    return %arg0, %c0_i32 : i32, i32
  }
  func.func @transform_8(%arg0: i32) -> (i32, i32, i32) {
    %c0_i32 = arith.constant 0 : i32
    %c0_i32_0 = arith.constant 0 : i32
    %c0_i32_1 = arith.constant 0 : i32
    return %arg0, %c0_i32, %c0_i32_0 : i32, i32, i32
  }
  func.func @transform_9(%arg0: i32) -> (i32, i32, i32) {
    %c0_i32 = arith.constant 0 : i32
    %c0_i32_0 = arith.constant 0 : i32
    %c0_i32_1 = arith.constant 0 : i32
    return %arg0, %c0_i32, %c0_i32_0 : i32, i32, i32
  }
}

module attributes {stable_mosaic.version = 11 : i64} {
  func.func @_stats_kernel(%arg0: i32, %arg1: memref<152x8xbf16, #tpu.memory_space<vmem>>, %arg2: memref<1x1x8xf32, #tpu.memory_space<vmem>>, %arg3: memref<1x1x8xf32, #tpu.memory_space<vmem>>) attributes {dimension_semantics = [#tpu.dimension_semantics<parallel>], iteration_bounds = array<i64: 1>, scalar_prefetch = 0 : i64, scratch_operands = 0 : i64, tpu.core_type = #tpu.core_type<tc>, window_params = [{transform_indices = @transform_0, window_bounds = array<i64: 152, 8>}, {transform_indices = @transform_1, window_bounds = array<i64: 1, 1, 8>}, {transform_indices = @transform_2, window_bounds = array<i64: 1, 1, 8>}]} {
    %c0 = arith.constant 0 : index
    %c0_0 = arith.constant 0 : index
    %0 = vector.load %arg1[%c0, %c0_0] : memref<152x8xbf16, #tpu.memory_space<vmem>>, vector<152x8xbf16>
    %1 = arith.extf %0 : vector<152x8xbf16> to vector<152x8xf32>
    %cst = arith.constant dense<0.000000e+00> : vector<8xf32>
    %2 = vector.multi_reduction <add>, %1, %cst [0] : vector<152x8xf32> to vector<8xf32>
    %3 = vector.shape_cast %2 : vector<8xf32> to vector<1x8xf32>
    %4 = vector.shape_cast %3 : vector<1x8xf32> to vector<1x1x8xf32>
    %c0_1 = arith.constant 0 : index
    %c0_2 = arith.constant 0 : index
    %c0_3 = arith.constant 0 : index
    %5 = vector.load %arg2[%c0_1, %c0_2, %c0_3] : memref<1x1x8xf32, #tpu.memory_space<vmem>>, vector<1x1x8xf32>
    tpu.vector_store %arg2[%c0_1, %c0_2, %c0_3], %4 {strides = array<i32>} : memref<1x1x8xf32, #tpu.memory_space<vmem>>, vector<1x1x8xf32>,
    %6 = arith.mulf %1, %1 : vector<152x8xf32>
    %cst_4 = arith.constant dense<0.000000e+00> : vector<8xf32>
    %7 = vector.multi_reduction <add>, %6, %cst_4 [0] : vector<152x8xf32> to vector<8xf32>
    %8 = vector.shape_cast %7 : vector<8xf32> to vector<1x8xf32>
    %9 = vector.shape_cast %8 : vector<1x8xf32> to vector<1x1x8xf32>
    %c0_5 = arith.constant 0 : index
    %c0_6 = arith.constant 0 : index
    %c0_7 = arith.constant 0 : index
    %10 = vector.load %arg3[%c0_5, %c0_6, %c0_7] : memref<1x1x8xf32, #tpu.memory_space<vmem>>, vector<1x1x8xf32>
    tpu.vector_store %arg3[%c0_5, %c0_6, %c0_7], %9 {strides = array<i32>} : memref<1x1x8xf32, #tpu.memory_space<vmem>>, vector<1x1x8xf32>,
    return
  }
  func.func @transform_0(%arg0: i32) -> (i32, i32) {
    %c0_i32 = arith.constant 0 : i32
    %c0_i32_0 = arith.constant 0 : i32
    return %arg0, %c0_i32 : i32, i32
  }
  func.func @transform_1(%arg0: i32) -> (i32, i32, i32) {
    %c0_i32 = arith.constant 0 : i32
    %c0_i32_0 = arith.constant 0 : i32
    %c0_i32_1 = arith.constant 0 : i32
    return %arg0, %c0_i32, %c0_i32_0 : i32, i32, i32
  }
  func.func @transform_2(%arg0: i32) -> (i32, i32, i32) {
    %c0_i32 = arith.constant 0 : i32
    %c0_i32_0 = arith.constant 0 : i32
    %c0_i32_1 = arith.constant 0 : i32
    return %arg0, %c0_i32, %c0_i32_0 : i32, i32, i32
  }
}

module attributes {stable_mosaic.version = 11 : i64} {
  func.func @_head_kernel(%arg0: i32, %arg1: memref<152x8xbf16, #tpu.memory_space<vmem>>, %arg2: memref<152x8xbf16, #tpu.memory_space<vmem>>, %arg3: memref<152x8xbf16, #tpu.memory_space<vmem>>, %arg4: memref<3x1x8xf32, #tpu.memory_space<vmem>>, %arg5: memref<3x1x8xf32, #tpu.memory_space<vmem>>, %arg6: memref<3x8x3xbf16, #tpu.memory_space<vmem>>, %arg7: memref<1x3xf32, #tpu.memory_space<vmem>>, %arg8: memref<152x3xf32, #tpu.memory_space<vmem>>) attributes {dimension_semantics = [#tpu.dimension_semantics<parallel>], iteration_bounds = array<i64: 1>, scalar_prefetch = 0 : i64, scratch_operands = 0 : i64, tpu.core_type = #tpu.core_type<tc>, window_params = [{transform_indices = @transform_0, window_bounds = array<i64: 152, 8>}, {transform_indices = @transform_1, window_bounds = array<i64: 152, 8>}, {transform_indices = @transform_2, window_bounds = array<i64: 152, 8>}, {pipeline_mode = #tpu.pipeline_mode<synchronous>, transform_indices = @transform_3, window_bounds = array<i64: 3, 1, 8>}, {pipeline_mode = #tpu.pipeline_mode<synchronous>, transform_indices = @transform_4, window_bounds = array<i64: 3, 1, 8>}, {pipeline_mode = #tpu.pipeline_mode<synchronous>, transform_indices = @transform_5, window_bounds = array<i64: 3, 8, 3>}, {pipeline_mode = #tpu.pipeline_mode<synchronous>, transform_indices = @transform_6, window_bounds = array<i64: 1, 3>}, {transform_indices = @transform_7, window_bounds = array<i64: 152, 3>}]} {
    %cst = arith.constant 0.000000e+00 : f32
    %0 = vector.broadcast %cst : f32 to vector<152x3xf32>
    %c0 = arith.constant 0 : index
    %c0_0 = arith.constant 0 : index
    %1 = vector.load %arg1[%c0, %c0_0] : memref<152x8xbf16, #tpu.memory_space<vmem>>, vector<152x8xbf16>
    %2 = arith.extf %1 : vector<152x8xbf16> to vector<152x8xf32>
    %c0_1 = arith.constant 0 : index
    %c0_2 = arith.constant 0 : index
    %c0_3 = arith.constant 0 : index
    %3 = vector.load %arg4[%c0_1, %c0_2, %c0_3] : memref<3x1x8xf32, #tpu.memory_space<vmem>>, vector<1x1x8xf32>
    %4 = vector.shape_cast %3 : vector<1x1x8xf32> to vector<1x8xf32>
    %5 = vector.broadcast %4 : vector<1x8xf32> to vector<152x8xf32>
    %6 = arith.mulf %2, %5 : vector<152x8xf32>
    %c0_4 = arith.constant 0 : index
    %c0_5 = arith.constant 0 : index
    %c0_6 = arith.constant 0 : index
    %7 = vector.load %arg5[%c0_4, %c0_5, %c0_6] : memref<3x1x8xf32, #tpu.memory_space<vmem>>, vector<1x1x8xf32>
    %8 = vector.shape_cast %7 : vector<1x1x8xf32> to vector<1x8xf32>
    %9 = vector.broadcast %8 : vector<1x8xf32> to vector<152x8xf32>
    %10 = arith.addf %6, %9 : vector<152x8xf32>
    %cst_7 = arith.constant 0.000000e+00 : f32
    %11 = vector.broadcast %cst_7 : f32 to vector<152x8xf32>
    %12 = arith.maximumf %10, %11 : vector<152x8xf32>
    %13 = arith.truncf %12 : vector<152x8xf32> to vector<152x8xbf16>
    %c0_8 = arith.constant 0 : index
    %c0_9 = arith.constant 0 : index
    %c0_10 = arith.constant 0 : index
    %14 = vector.load %arg6[%c0_8, %c0_9, %c0_10] : memref<3x8x3xbf16, #tpu.memory_space<vmem>>, vector<1x8x3xbf16>
    %15 = vector.shape_cast %14 : vector<1x8x3xbf16> to vector<8x3xbf16>
    %cst_11 = arith.constant dense<0.000000e+00> : vector<152x3xf32>
    %16 = tpu.matmul %13, %15, %cst_11 {dimension_numbers = #tpu.dot_dimension_numbers<[1], [0], [0], [1], [0, 0, 1, 1], [], []>} : vector<152x8xbf16>, vector<8x3xbf16>, vector<152x3xf32> -> vector<152x3xf32>
    %17 = arith.addf %0, %16 : vector<152x3xf32>
    %c0_12 = arith.constant 0 : index
    %c0_13 = arith.constant 0 : index
    %18 = vector.load %arg2[%c0_12, %c0_13] : memref<152x8xbf16, #tpu.memory_space<vmem>>, vector<152x8xbf16>
    %19 = arith.extf %18 : vector<152x8xbf16> to vector<152x8xf32>
    %c1 = arith.constant 1 : index
    %c0_14 = arith.constant 0 : index
    %c0_15 = arith.constant 0 : index
    %20 = vector.load %arg4[%c1, %c0_14, %c0_15] : memref<3x1x8xf32, #tpu.memory_space<vmem>>, vector<1x1x8xf32>
    %21 = vector.shape_cast %20 : vector<1x1x8xf32> to vector<1x8xf32>
    %22 = vector.broadcast %21 : vector<1x8xf32> to vector<152x8xf32>
    %23 = arith.mulf %19, %22 : vector<152x8xf32>
    %c1_16 = arith.constant 1 : index
    %c0_17 = arith.constant 0 : index
    %c0_18 = arith.constant 0 : index
    %24 = vector.load %arg5[%c1_16, %c0_17, %c0_18] : memref<3x1x8xf32, #tpu.memory_space<vmem>>, vector<1x1x8xf32>
    %25 = vector.shape_cast %24 : vector<1x1x8xf32> to vector<1x8xf32>
    %26 = vector.broadcast %25 : vector<1x8xf32> to vector<152x8xf32>
    %27 = arith.addf %23, %26 : vector<152x8xf32>
    %cst_19 = arith.constant 0.000000e+00 : f32
    %28 = vector.broadcast %cst_19 : f32 to vector<152x8xf32>
    %29 = arith.maximumf %27, %28 : vector<152x8xf32>
    %30 = arith.truncf %29 : vector<152x8xf32> to vector<152x8xbf16>
    %c1_20 = arith.constant 1 : index
    %c0_21 = arith.constant 0 : index
    %c0_22 = arith.constant 0 : index
    %31 = vector.load %arg6[%c1_20, %c0_21, %c0_22] : memref<3x8x3xbf16, #tpu.memory_space<vmem>>, vector<1x8x3xbf16>
    %32 = vector.shape_cast %31 : vector<1x8x3xbf16> to vector<8x3xbf16>
    %cst_23 = arith.constant dense<0.000000e+00> : vector<152x3xf32>
    %33 = tpu.matmul %30, %32, %cst_23 {dimension_numbers = #tpu.dot_dimension_numbers<[1], [0], [0], [1], [0, 0, 1, 1], [], []>} : vector<152x8xbf16>, vector<8x3xbf16>, vector<152x3xf32> -> vector<152x3xf32>
    %34 = arith.addf %17, %33 : vector<152x3xf32>
    %c0_24 = arith.constant 0 : index
    %c0_25 = arith.constant 0 : index
    %35 = vector.load %arg3[%c0_24, %c0_25] : memref<152x8xbf16, #tpu.memory_space<vmem>>, vector<152x8xbf16>
    %36 = arith.extf %35 : vector<152x8xbf16> to vector<152x8xf32>
    %c2 = arith.constant 2 : index
    %c0_26 = arith.constant 0 : index
    %c0_27 = arith.constant 0 : index
    %37 = vector.load %arg4[%c2, %c0_26, %c0_27] : memref<3x1x8xf32, #tpu.memory_space<vmem>>, vector<1x1x8xf32>
    %38 = vector.shape_cast %37 : vector<1x1x8xf32> to vector<1x8xf32>
    %39 = vector.broadcast %38 : vector<1x8xf32> to vector<152x8xf32>
    %40 = arith.mulf %36, %39 : vector<152x8xf32>
    %c2_28 = arith.constant 2 : index
    %c0_29 = arith.constant 0 : index
    %c0_30 = arith.constant 0 : index
    %41 = vector.load %arg5[%c2_28, %c0_29, %c0_30] : memref<3x1x8xf32, #tpu.memory_space<vmem>>, vector<1x1x8xf32>
    %42 = vector.shape_cast %41 : vector<1x1x8xf32> to vector<1x8xf32>
    %43 = vector.broadcast %42 : vector<1x8xf32> to vector<152x8xf32>
    %44 = arith.addf %40, %43 : vector<152x8xf32>
    %cst_31 = arith.constant 0.000000e+00 : f32
    %45 = vector.broadcast %cst_31 : f32 to vector<152x8xf32>
    %46 = arith.maximumf %44, %45 : vector<152x8xf32>
    %47 = arith.truncf %46 : vector<152x8xf32> to vector<152x8xbf16>
    %c2_32 = arith.constant 2 : index
    %c0_33 = arith.constant 0 : index
    %c0_34 = arith.constant 0 : index
    %48 = vector.load %arg6[%c2_32, %c0_33, %c0_34] : memref<3x8x3xbf16, #tpu.memory_space<vmem>>, vector<1x8x3xbf16>
    %49 = vector.shape_cast %48 : vector<1x8x3xbf16> to vector<8x3xbf16>
    %cst_35 = arith.constant dense<0.000000e+00> : vector<152x3xf32>
    %50 = tpu.matmul %47, %49, %cst_35 {dimension_numbers = #tpu.dot_dimension_numbers<[1], [0], [0], [1], [0, 0, 1, 1], [], []>} : vector<152x8xbf16>, vector<8x3xbf16>, vector<152x3xf32> -> vector<152x3xf32>
    %51 = arith.addf %34, %50 : vector<152x3xf32>
    %c0_36 = arith.constant 0 : index
    %c0_37 = arith.constant 0 : index
    %52 = vector.load %arg7[%c0_36, %c0_37] : memref<1x3xf32, #tpu.memory_space<vmem>>, vector<1x3xf32>
    %53 = vector.broadcast %52 : vector<1x3xf32> to vector<152x3xf32>
    %54 = arith.addf %51, %53 : vector<152x3xf32>
    %c0_38 = arith.constant 0 : index
    %c0_39 = arith.constant 0 : index
    %55 = vector.load %arg8[%c0_38, %c0_39] : memref<152x3xf32, #tpu.memory_space<vmem>>, vector<152x3xf32>
    tpu.vector_store %arg8[%c0_38, %c0_39], %54 {strides = array<i32>} : memref<152x3xf32, #tpu.memory_space<vmem>>, vector<152x3xf32>,
    return
  }
  func.func @transform_0(%arg0: i32) -> (i32, i32) {
    %c0_i32 = arith.constant 0 : i32
    %c0_i32_0 = arith.constant 0 : i32
    return %arg0, %c0_i32 : i32, i32
  }
  func.func @transform_1(%arg0: i32) -> (i32, i32) {
    %c0_i32 = arith.constant 0 : i32
    %c0_i32_0 = arith.constant 0 : i32
    return %arg0, %c0_i32 : i32, i32
  }
  func.func @transform_2(%arg0: i32) -> (i32, i32) {
    %c0_i32 = arith.constant 0 : i32
    %c0_i32_0 = arith.constant 0 : i32
    return %arg0, %c0_i32 : i32, i32
  }
  func.func @transform_3(%arg0: i32) -> (i32, i32, i32) {
    %c0_i32 = arith.constant 0 : i32
    %c0_i32_0 = arith.constant 0 : i32
    %c0_i32_1 = arith.constant 0 : i32
    %c0_i32_2 = arith.constant 0 : i32
    return %c0_i32, %c0_i32_0, %c0_i32_1 : i32, i32, i32
  }
  func.func @transform_4(%arg0: i32) -> (i32, i32, i32) {
    %c0_i32 = arith.constant 0 : i32
    %c0_i32_0 = arith.constant 0 : i32
    %c0_i32_1 = arith.constant 0 : i32
    %c0_i32_2 = arith.constant 0 : i32
    return %c0_i32, %c0_i32_0, %c0_i32_1 : i32, i32, i32
  }
  func.func @transform_5(%arg0: i32) -> (i32, i32, i32) {
    %c0_i32 = arith.constant 0 : i32
    %c0_i32_0 = arith.constant 0 : i32
    %c0_i32_1 = arith.constant 0 : i32
    %c0_i32_2 = arith.constant 0 : i32
    return %c0_i32, %c0_i32_0, %c0_i32_1 : i32, i32, i32
  }
  func.func @transform_6(%arg0: i32) -> (i32, i32) {
    %c0_i32 = arith.constant 0 : i32
    %c0_i32_0 = arith.constant 0 : i32
    %c0_i32_1 = arith.constant 0 : i32
    return %c0_i32, %c0_i32_0 : i32, i32
  }
  func.func @transform_7(%arg0: i32) -> (i32, i32) {
    %c0_i32 = arith.constant 0 : i32
    %c0_i32_0 = arith.constant 0 : i32
    return %arg0, %c0_i32 : i32, i32
  }
}

module attributes {stable_mosaic.version = 11 : i64} {
  func.func @kernel(%arg0: i32, %arg1: memref<24x64xbf16, #tpu.memory_space<vmem>>, %arg2: memref<24x8xbf16, #tpu.memory_space<vmem>>, %arg3: memref<1x64xf32, #tpu.memory_space<vmem>>, %arg4: memref<1x64xf32, #tpu.memory_space<vmem>>, %arg5: memref<64x8xbf16, #tpu.memory_space<vmem>>, %arg6: memref<8x8xf32, #tpu.memory_space<vmem>>, %arg7: memref<24x8xbf16, #tpu.memory_space<vmem>>, %arg8: memref<1x1x8xf32, #tpu.memory_space<vmem>>, %arg9: memref<1x1x8xf32, #tpu.memory_space<vmem>>) attributes {dimension_semantics = [#tpu.dimension_semantics<parallel>], iteration_bounds = array<i64: 1>, scalar_prefetch = 0 : i64, scratch_operands = 0 : i64, tpu.core_type = #tpu.core_type<tc>, window_params = [{transform_indices = @transform_0, window_bounds = array<i64: 24, 64>}, {transform_indices = @transform_1, window_bounds = array<i64: 24, 8>}, {pipeline_mode = #tpu.pipeline_mode<synchronous>, transform_indices = @transform_2, window_bounds = array<i64: 1, 64>}, {pipeline_mode = #tpu.pipeline_mode<synchronous>, transform_indices = @transform_3, window_bounds = array<i64: 1, 64>}, {pipeline_mode = #tpu.pipeline_mode<synchronous>, transform_indices = @transform_4, window_bounds = array<i64: 64, 8>}, {pipeline_mode = #tpu.pipeline_mode<synchronous>, transform_indices = @transform_5, window_bounds = array<i64: 8, 8>}, {transform_indices = @transform_6, window_bounds = array<i64: 24, 8>}, {transform_indices = @transform_7, window_bounds = array<i64: 1, 1, 8>}, {transform_indices = @transform_8, window_bounds = array<i64: 1, 1, 8>}]} {
    %c0 = arith.constant 0 : index
    %c0_0 = arith.constant 0 : index
    %0 = vector.load %arg1[%c0, %c0_0] : memref<24x64xbf16, #tpu.memory_space<vmem>>, vector<24x64xbf16>
    %1 = arith.extf %0 : vector<24x64xbf16> to vector<24x64xf32>
    %c0_1 = arith.constant 0 : index
    %c0_2 = arith.constant 0 : index
    %2 = vector.load %arg3[%c0_1, %c0_2] : memref<1x64xf32, #tpu.memory_space<vmem>>, vector<1x64xf32>
    %3 = vector.broadcast %2 : vector<1x64xf32> to vector<24x64xf32>
    %4 = arith.mulf %1, %3 : vector<24x64xf32>
    %c0_3 = arith.constant 0 : index
    %c0_4 = arith.constant 0 : index
    %5 = vector.load %arg4[%c0_3, %c0_4] : memref<1x64xf32, #tpu.memory_space<vmem>>, vector<1x64xf32>
    %6 = vector.broadcast %5 : vector<1x64xf32> to vector<24x64xf32>
    %7 = arith.addf %4, %6 : vector<24x64xf32>
    %cst = arith.constant 0.000000e+00 : f32
    %8 = vector.broadcast %cst : f32 to vector<24x64xf32>
    %9 = arith.maximumf %7, %8 : vector<24x64xf32>
    %10 = arith.truncf %9 : vector<24x64xf32> to vector<24x64xbf16>
    %c0_5 = arith.constant 0 : index
    %c0_6 = arith.constant 0 : index
    %11 = vector.load %arg5[%c0_5, %c0_6] : memref<64x8xbf16, #tpu.memory_space<vmem>>, vector<64x8xbf16>
    %cst_7 = arith.constant dense<0.000000e+00> : vector<24x8xf32>
    %12 = tpu.matmul %10, %11, %cst_7 {dimension_numbers = #tpu.dot_dimension_numbers<[1], [0], [0], [1], [0, 0, 1, 1], [], []>} : vector<24x64xbf16>, vector<64x8xbf16>, vector<24x8xf32> -> vector<24x8xf32>
    %c0_8 = arith.constant 0 : index
    %c0_9 = arith.constant 0 : index
    %13 = vector.load %arg2[%c0_8, %c0_9] : memref<24x8xbf16, #tpu.memory_space<vmem>>, vector<24x8xbf16>
    %14 = arith.extf %13 : vector<24x8xbf16> to vector<24x8xf32>
    %c0_10 = arith.constant 0 : index
    %c0_11 = arith.constant 0 : index
    %15 = vector.load %arg6[%c0_10, %c0_11] : memref<8x8xf32, #tpu.memory_space<vmem>>, vector<8x8xf32>
    %cst_12 = arith.constant dense<0.000000e+00> : vector<24x8xf32>
    %16 = tpu.matmul %14, %15, %cst_12 {dimension_numbers = #tpu.dot_dimension_numbers<[1], [0], [0], [1], [0, 0, 1, 1], [], []>} : vector<24x8xf32>, vector<8x8xf32>, vector<24x8xf32> -> vector<24x8xf32>
    %17 = arith.subf %12, %16 : vector<24x8xf32>
    %c24_i32 = arith.constant 24 : i32
    %18 = arith.muli %arg0, %c24_i32 : i32
    %19 = tpu.iota {dimensions = array<i32: 0>} : vector<24x1xi32>
    %20 = vector.broadcast %18 : i32 to vector<24x1xi32>
    %21 = arith.addi %20, %19 : vector<24x1xi32>
    %c16_i32 = arith.constant 16 : i32
    %22 = vector.broadcast %c16_i32 : i32 to vector<24x1xi32>
    %23 = arith.cmpi slt, %21, %22 : vector<24x1xi32>
    %cst_13 = arith.constant 0.000000e+00 : f32
    %24 = vector.shape_cast %23 : vector<24x1xi1> to vector<24x1xi1>
    %25 = vector.broadcast %24 : vector<24x1xi1> to vector<24x8xi1>
    %26 = vector.broadcast %cst_13 : f32 to vector<24x8xf32>
    %27 = arith.select %25, %17, %26 : vector<24x8xi1>, vector<24x8xf32>
    %cst_14 = arith.constant dense<0.000000e+00> : vector<8xf32>
    %28 = vector.multi_reduction <add>, %27, %cst_14 [0] : vector<24x8xf32> to vector<8xf32>
    %29 = vector.shape_cast %28 : vector<8xf32> to vector<1x8xf32>
    %30 = vector.shape_cast %29 : vector<1x8xf32> to vector<1x1x8xf32>
    %c0_15 = arith.constant 0 : index
    %c0_16 = arith.constant 0 : index
    %c0_17 = arith.constant 0 : index
    %31 = vector.load %arg8[%c0_15, %c0_16, %c0_17] : memref<1x1x8xf32, #tpu.memory_space<vmem>>, vector<1x1x8xf32>
    tpu.vector_store %arg8[%c0_15, %c0_16, %c0_17], %30 {strides = array<i32>} : memref<1x1x8xf32, #tpu.memory_space<vmem>>, vector<1x1x8xf32>,
    %32 = arith.mulf %27, %27 : vector<24x8xf32>
    %cst_18 = arith.constant dense<0.000000e+00> : vector<8xf32>
    %33 = vector.multi_reduction <add>, %32, %cst_18 [0] : vector<24x8xf32> to vector<8xf32>
    %34 = vector.shape_cast %33 : vector<8xf32> to vector<1x8xf32>
    %35 = vector.shape_cast %34 : vector<1x8xf32> to vector<1x1x8xf32>
    %c0_19 = arith.constant 0 : index
    %c0_20 = arith.constant 0 : index
    %c0_21 = arith.constant 0 : index
    %36 = vector.load %arg9[%c0_19, %c0_20, %c0_21] : memref<1x1x8xf32, #tpu.memory_space<vmem>>, vector<1x1x8xf32>
    tpu.vector_store %arg9[%c0_19, %c0_20, %c0_21], %35 {strides = array<i32>} : memref<1x1x8xf32, #tpu.memory_space<vmem>>, vector<1x1x8xf32>,
    %37 = arith.truncf %27 : vector<24x8xf32> to vector<24x8xbf16>
    %c0_22 = arith.constant 0 : index
    %c0_23 = arith.constant 0 : index
    %38 = vector.load %arg7[%c0_22, %c0_23] : memref<24x8xbf16, #tpu.memory_space<vmem>>, vector<24x8xbf16>
    tpu.vector_store %arg7[%c0_22, %c0_23], %37 {strides = array<i32>} : memref<24x8xbf16, #tpu.memory_space<vmem>>, vector<24x8xbf16>,
    return
  }
  func.func @transform_0(%arg0: i32) -> (i32, i32) {
    %c0_i32 = arith.constant 0 : i32
    %c0_i32_0 = arith.constant 0 : i32
    return %arg0, %c0_i32 : i32, i32
  }
  func.func @transform_1(%arg0: i32) -> (i32, i32) {
    %c0_i32 = arith.constant 0 : i32
    %c0_i32_0 = arith.constant 0 : i32
    return %arg0, %c0_i32 : i32, i32
  }
  func.func @transform_2(%arg0: i32) -> (i32, i32) {
    %c0_i32 = arith.constant 0 : i32
    %c0_i32_0 = arith.constant 0 : i32
    %c0_i32_1 = arith.constant 0 : i32
    return %c0_i32, %c0_i32_0 : i32, i32
  }
  func.func @transform_3(%arg0: i32) -> (i32, i32) {
    %c0_i32 = arith.constant 0 : i32
    %c0_i32_0 = arith.constant 0 : i32
    %c0_i32_1 = arith.constant 0 : i32
    return %c0_i32, %c0_i32_0 : i32, i32
  }
  func.func @transform_4(%arg0: i32) -> (i32, i32) {
    %c0_i32 = arith.constant 0 : i32
    %c0_i32_0 = arith.constant 0 : i32
    %c0_i32_1 = arith.constant 0 : i32
    return %c0_i32, %c0_i32_0 : i32, i32
  }
  func.func @transform_5(%arg0: i32) -> (i32, i32) {
    %c0_i32 = arith.constant 0 : i32
    %c0_i32_0 = arith.constant 0 : i32
    %c0_i32_1 = arith.constant 0 : i32
    return %c0_i32, %c0_i32_0 : i32, i32
  }
  func.func @transform_6(%arg0: i32) -> (i32, i32) {
    %c0_i32 = arith.constant 0 : i32
    %c0_i32_0 = arith.constant 0 : i32
    return %arg0, %c0_i32 : i32, i32
  }
  func.func @transform_7(%arg0: i32) -> (i32, i32, i32) {
    %c0_i32 = arith.constant 0 : i32
    %c0_i32_0 = arith.constant 0 : i32
    %c0_i32_1 = arith.constant 0 : i32
    return %arg0, %c0_i32, %c0_i32_0 : i32, i32, i32
  }
  func.func @transform_8(%arg0: i32) -> (i32, i32, i32) {
    %c0_i32 = arith.constant 0 : i32
    %c0_i32_0 = arith.constant 0 : i32
    %c0_i32_1 = arith.constant 0 : i32
    return %arg0, %c0_i32, %c0_i32_0 : i32, i32, i32
  }
}

</mosaic_0001>

<llo_original>
// kernel: tile.83
$region0: #{tile.83}
  #allocation0 [shape = 's32[1]{0}', space=sflag, size = 0x4, scoped, tag = 'scoped memory for tile.83']
  %s0 = inlined_call_operand.<no memory space> [shape: f32[], index: 0, kind: input, shape index: {}]
  %s1 = inlined_call_operand.vmem [shape: f32[1,108], index: 1, kind: output, shape index: {}]
  %v2 = vstv %s0
  %3 = vst [vmem:[%s1] sm:$0x1] %v2

// kernel: tile.87
$region0: #{tile.87}
  #allocation0 [shape = 's32[1]{0}', space=sflag, size = 0x4, scoped, tag = 'scoped memory for tile.87']
  %s0 = inlined_call_operand.vmem [shape: f32[8], index: 0, kind: input, shape index: {}]
  %s1 = inlined_call_operand.vmem [shape: f32[27,8], index: 1, kind: output, shape index: {}]
  // Predicated region
  $region2: #{tile.87} parent=0 // pred_check
    _
  $region3: #{tile.87} parent=0 // pred_check_branch
    %3 = sbr.rel (0) target = $region5
  $region4: #{tile.87} parent=0 // pred_region
    _
  $region5: #{tile.87} parent=0 // pred_fallthru
    _
  %v4 = vld [vmem:[%s0] ss:$0 sm:$0xff]
  %5 = vst [vmem:[%s1] sm:$0xff] %v4
  %s6 = scalar_lea.vmem %s1, 8
  %7 = vst [vmem:[%s6] sm:$0xff] %v4
  %s8 = scalar_lea.vmem %s1, 16
  %9 = vst [vmem:[%s8] sm:$0xff] %v4
  %s10 = scalar_lea.vmem %s1, 24
  %11 = vst [vmem:[%s10] sm:$0xff] %v4

// kernel: tile.88
$region0: #{tile.88}
  %s0 = inlined_call_operand.vmem [shape: f32[27,8], index: 0, kind: input, shape index: {}]
  %s1 = inlined_call_operand.vmem [shape: f32[1,216], index: 1, kind: output, shape index: {}]
  $region1: #{tile.88} parent=0
    #allocation0 [shape = 'u8[8192]{0}', space=vmem, size = 0x2000, scoped, tag = 'scoped mem for output reshape']
    %s2 = smov 3
    %v3 = vld [vmem:[%s0] ss:$16 sm:%s2]
    %vm4 = vcmask 64512
    %5 = vst.msk [vmem:[#allocation0] ss:$8 sm:$0x3] %vm4, %v3
    %s6 = scalar_lea.vmem %s0, 15
    %v7 = vld [vmem:[%s6] sm:$0x1]
    %8 = vrot.lane.b32.xlu0 %v7, 120
    %v9 = vpop.permute.xlu0 %8
    %vm10 = vcmask 1048512
    %11 = vst.msk [vmem:[#allocation0] sm:$0x1] %vm10, %v9
    %s12 = scalar_lea.vmem %s0, 14
    %v13 = vld [vmem:[%s12] sm:$0x1]
    %14 = vrot.lane.b32.xlu0 %v13, 112
    %v15 = vpop.permute.xlu0 %14
    %vm16 = vcmask 982912
    %17 = vst.msk [vmem:[#allocation0] sm:$0x1] %vm16, %v15
    %s18 = scalar_lea.vmem %s0, 13
    %v19 = vld [vmem:[%s18] sm:$0x1]
    %20 = vrot.lane.b32.xlu0 %v19, 104
    %v21 = vpop.permute.xlu0 %20
    %vm22 = vcmask 917312
    %23 = vst.msk [vmem:[#allocation0] sm:$0x1] %vm22, %v21
    %s24 = scalar_lea.vmem %s0, 12
    %v25 = vld [vmem:[%s24] sm:$0x1]
    %26 = vrot.lane.b32.xlu0 %v25, 96
    %v27 = vpop.permute.xlu0 %26
    %vm28 = vcmask 851712
    %29 = vst.msk [vmem:[#allocation0] sm:$0x1] %vm28, %v27
    %s30 = scalar_lea.vmem %s0, 11
    %v31 = vld [vmem:[%s30] sm:$0x1]
    %32 = vrot.lane.b32.xlu0 %v31, 88
    %v33 = vpop.permute.xlu0 %32
    %vm34 = vcmask 786112
    %35 = vst.msk [vmem:[#allocation0] sm:$0x1] %vm34, %v33
    %s36 = scalar_lea.vmem %s0, 10
    %s37 = smov 3
    %v38 = vld [vmem:[%s36] ss:$16 sm:%s37]
    %39 = vrot.lane.b32.xlu0 %v38, 80
    %v40 = vpop.permute.xlu0 %39
    %vm41 = vcmask 720512
    %42 = vst.msk [vmem:[#allocation0] ss:$8 sm:$0x3] %vm41, %v40
    %s43 = scalar_lea.vmem %s0, 9
    %s44 = smov 3
    %v45 = vld [vmem:[%s43] ss:$16 sm:%s44]
    %46 = vrot.lane.b32.xlu0 %v45, 72
    %v47 = vpop.permute.xlu0 %46
    %vm48 = vcmask 654912
    %49 = vst.msk [vmem:[#allocation0] ss:$8 sm:$0x3] %vm48, %v47
    %s50 = scalar_lea.vmem %s0, 8
    %s51 = smov 3
    %v52 = vld [vmem:[%s50] ss:$16 sm:%s51]
    %53 = vrot.lane.b32.xlu0 %v52, 64
    %v54 = vpop.permute.xlu0 %53
    %vm55 = vcmask 589312
    %56 = vst.msk [vmem:[#allocation0] ss:$8 sm:$0x3] %vm55, %v54
    %s57 = scalar_lea.vmem %s0, 7
    %s58 = smov 3
    %v59 = vld [vmem:[%s57] ss:$16 sm:%s58]
    %60 = vrot.lane.b32.xlu0 %v59, 56
    %v61 = vpop.permute.xlu0 %60
    %vm62 = vcmask 523712
    %63 = vst.msk [vmem:[#allocation0] ss:$8 sm:$0x3] %vm62, %v61
    %s64 = scalar_lea.vmem %s0, 6
    %s65 = smov 3
    %v66 = vld [vmem:[%s64] ss:$16 sm:%s65]
    %67 = vrot.lane.b32.xlu0 %v66, 48
    %v68 = vpop.permute.xlu0 %67
    %vm69 = vcmask 458112
    %70 = vst.msk [vmem:[#allocation0] ss:$8 sm:$0x3] %vm69, %v68
    %s71 = scalar_lea.vmem %s0, 5
    %s72 = smov 3
    %v73 = vld [vmem:[%s71] ss:$16 sm:%s72]
    %74 = vrot.lane.b32.xlu0 %v73, 40
    %v75 = vpop.permute.xlu0 %74
    %vm76 = vcmask 392512
    %77 = vst.msk [vmem:[#allocation0] ss:$8 sm:$0x3] %vm76, %v75
    %s78 = scalar_lea.vmem %s0, 4
    %s79 = smov 3
    %v80 = vld [vmem:[%s78] ss:$16 sm:%s79]
    %81 = vrot.lane.b32.xlu0 %v80, 32
    %v82 = vpop.permute.xlu0 %81
    %vm83 = vcmask 326912
    %84 = vst.msk [vmem:[#allocation0] ss:$8 sm:$0x3] %vm83, %v82
    %s85 = scalar_lea.vmem %s0, 3
    %s86 = smov 3
    %v87 = vld [vmem:[%s85] ss:$16 sm:%s86]
    %88 = vrot.lane.b32.xlu0 %v87, 24
    %v89 = vpop.permute.xlu0 %88
    %vm90 = vcmask 261312
    %91 = vst.msk [vmem:[#allocation0] ss:$8 sm:$0x3] %vm90, %v89
    %s92 = scalar_lea.vmem %s0, 2
    %s93 = smov 3
    %v94 = vld [vmem:[%s92] ss:$16 sm:%s93]
    %95 = vrot.lane.b32.xlu0 %v94, 16
    %v96 = vpop.permute.xlu0 %95
    %vm97 = vcmask 195712
    %98 = vst.msk [vmem:[#allocation0] ss:$8 sm:$0x3] %vm97, %v96
    %s99 = scalar_lea.vmem %s0, 1
    %s100 = smov 3
    %v101 = vld [vmem:[%s99] ss:$16 sm:%s100]
    %102 = vrot.lane.b32.xlu0 %v101, 8
    %v103 = vpop.permute.xlu0 %102
    %vm104 = vcmask 130112
    %105 = vst.msk [vmem:[#allocation0] ss:$8 sm:$0x3] %vm104, %v103
    %s107 = sshllo.u32 0, 1
    %v109 = vld [vmem:[#allocation0] sm:%s107]
    %s110 = sshllo.u32 0, 1
    %111 = vst [vmem:[%s1] sm:%s110] %v109
    %s112 = scalar_lea.vmem [#allocation0], 8
    %v113 = vld [vmem:[%s112] sm:%s107]
    %s114 = sshllo.u32 0, 1
    %s115 = scalar_lea.vmem %s1, 1
    %116 = vst [vmem:[%s115] sm:%s114] %v113

// kernel: motion_prediction_forward.12
$region0: #{motion_prediction_forward.12}
  #allocation0 [shape = 'u32[]', space=smem, size = 0x4, offset = 0x4, fixed_abs, tag = 'smem constant byte address 0x4 - core index']
  #allocation1 [shape = 'u32[144,128]{1,0:T(1,128)}', space=vmem, size = 0x12000, scoped, tag = 'internal scratch']
  %s0 = inlined_call_operand.vmem [shape: bf16[152,108], index: 0, kind: input, shape index: {}]
  %s1 = inlined_call_operand.vmem [shape: bf16[152,27], index: 1, kind: input, shape index: {}]
  %s2 = inlined_call_operand.vmem [shape: f32[1,108], index: 2, kind: input, shape index: {}]
  %s3 = inlined_call_operand.vmem [shape: f32[1,108], index: 3, kind: input, shape index: {}]
  %s4 = inlined_call_operand.vmem [shape: bf16[108,8], index: 4, kind: input, shape index: {}]
  %s5 = inlined_call_operand.vmem [shape: f32[27,8], index: 5, kind: input, shape index: {}]
  %s6 = inlined_call_operand.vmem [shape: bf16[152,8], index: 6, kind: output, shape index: {0}]
  %s7 = inlined_call_operand.vmem [shape: f32[1,1,8], index: 7, kind: output, shape index: {1}]
  %s8 = inlined_call_operand.vmem [shape: f32[1,1,8], index: 8, kind: output, shape index: {2}]
  %9 = xla_tuple %s6, %s7, %s8
  %s10 = sld [smem:[#allocation0]]
  $region50: #{motion_prediction_forward.12} parent=0
    _
  %s12 = ssub.s32 1, %s10
  %s13 = scalar_select 0, %s12, %s10
  // Predicated region
  $region2: #{motion_prediction_forward.12} parent=0 // pred_check
    _
  $region3: #{motion_prediction_forward.12} parent=0 // pred_check_branch
    %15 = sbr.rel (0) target = $region5
  $region4: #{motion_prediction_forward.12} parent=0 // pred_region
    _
  $region5: #{motion_prediction_forward.12} parent=0 // pred_fallthru
    _
  // Predicated region
  $region6: #{motion_prediction_forward.12} parent=0 // pred_check
    _
  $region7: #{motion_prediction_forward.12} parent=0 // pred_check_branch
    %17 = sbr.rel (0) target = $region9
  $region8: #{motion_prediction_forward.12} parent=0 // pred_region
    _
  $region9: #{motion_prediction_forward.12} parent=0 // pred_fallthru
    _
  // Predicated region
  $region10: #{motion_prediction_forward.12} parent=0 // pred_check
    _
  $region11: #{motion_prediction_forward.12} parent=0 // pred_check_branch
    %19 = sbr.rel (0) target = $region13
  $region12: #{motion_prediction_forward.12} parent=0 // pred_region
    _
  $region13: #{motion_prediction_forward.12} parent=0 // pred_fallthru
    _
  // Predicated region
  $region14: #{motion_prediction_forward.12} parent=0 // pred_check
    _
  $region15: #{motion_prediction_forward.12} parent=0 // pred_check_branch
    %21 = sbr.rel (0) target = $region17
  $region16: #{motion_prediction_forward.12} parent=0 // pred_region
    _
  $region17: #{motion_prediction_forward.12} parent=0 // pred_fallthru
    _
  // Predicated region
  $region18: #{motion_prediction_forward.12} parent=0 // pred_check
    _
  $region19: #{motion_prediction_forward.12} parent=0 // pred_check_branch
    %23 = sbr.rel (0) target = $region21
  $region20: #{motion_prediction_forward.12} parent=0 // pred_region
    _
  $region21: #{motion_prediction_forward.12} parent=0 // pred_fallthru
    _
  // Predicated region
  $region22: #{motion_prediction_forward.12} parent=0 // pred_check
    _
  $region23: #{motion_prediction_forward.12} parent=0 // pred_check_branch
    %25 = sbr.rel (0) target = $region25
  $region24: #{motion_prediction_forward.12} parent=0 // pred_region
    _
  $region25: #{motion_prediction_forward.12} parent=0 // pred_fallthru
    _
  %v27 = vld [vmem:[%s0] sm:$0xf]
  %v28 = vld [vmem:[%s0 + $0x4] sm:$0xf]
  %v29 = vld [vmem:[%s0 + $0x8] sm:$0xf]
  %v30 = vld [vmem:[%s0 + $0xc] sm:$0xf]
  %v31 = vld [vmem:[%s0 + $0x10] sm:$0xf]
  %v32 = vld [vmem:[%s0 + $0x14] sm:$0xf]
  %v33 = vld [vmem:[%s0 + $0x18] sm:$0xf]
  %v34 = vld [vmem:[%s0 + $0x1c] sm:$0xf]
  %v35 = vld [vmem:[%s0 + $0x20] sm:$0xf]
  %v36 = vld [vmem:[%s0 + $0x24] sm:$0xf]
  %v37 = vld [vmem:[%s0 + $0x28] sm:$0xf]
  %v38 = vld [vmem:[%s0 + $0x2c] sm:$0xf]
  %v39 = vld [vmem:[%s0 + $0x30] sm:$0xf]
  %v40 = vld [vmem:[%s0 + $0x34] sm:$0xf]
  %v41 = vld [vmem:[%s0 + $0x38] sm:$0xf]
  %v42 = vld [vmem:[%s0 + $0x3c] sm:$0xf]
  %v43 = vld [vmem:[%s0 + $0x40] sm:$0xf]
  %v44 = vld [vmem:[%s0 + $0x44] sm:$0xf]
  %v45 = vld [vmem:[%s0 + $0x48] sm:$0xf]
  %v46 = vunpack.c.l.bf16 %v27
  %v47 = vunpack.c.l.bf16 %v28
  %v48 = vunpack.c.l.bf16 %v29
  %v49 = vunpack.c.l.bf16 %v30
  %v50 = vunpack.c.l.bf16 %v31
  %v51 = vunpack.c.l.bf16 %v32
  %v52 = vunpack.c.l.bf16 %v33
  %v53 = vunpack.c.l.bf16 %v34
  %v54 = vunpack.c.l.bf16 %v35
  %v55 = vunpack.c.l.bf16 %v36
  %v56 = vunpack.c.l.bf16 %v37
  %v57 = vunpack.c.l.bf16 %v38
  %v58 = vunpack.c.l.bf16 %v39
  %v59 = vunpack.c.l.bf16 %v40
  %v60 = vunpack.c.l.bf16 %v41
  %v61 = vunpack.c.l.bf16 %v42
  %v62 = vunpack.c.l.bf16 %v43
  %v63 = vunpack.c.l.bf16 %v44
  %v64 = vunpack.c.l.bf16 %v45
  %v65 = vld [vmem:[%s2] sm:$0x1]
  %v67 = vlaneseq
  %v68 = vshrl.u32 %v67, 7
  %v69 = vsub.s32 0, %v68
  %v70 = vrot.slane %v65, %v69
  %v72 = vmul.f32 %v46, %v70
  %v73 = vmul.f32 %v47, %v70
  %v74 = vmul.f32 %v48, %v70
  %v75 = vmul.f32 %v49, %v70
  %v76 = vmul.f32 %v50, %v70
  %v77 = vmul.f32 %v51, %v70
  %v78 = vmul.f32 %v52, %v70
  %v79 = vmul.f32 %v53, %v70
  %v80 = vmul.f32 %v54, %v70
  %v81 = vmul.f32 %v55, %v70
  %v82 = vmul.f32 %v56, %v70
  %v83 = vmul.f32 %v57, %v70
  %v84 = vmul.f32 %v58, %v70
  %v85 = vmul.f32 %v59, %v70
  %v86 = vmul.f32 %v60, %v70
  %v87 = vmul.f32 %v61, %v70
  %v88 = vmul.f32 %v62, %v70
  %v89 = vmul.f32 %v63, %v70
  %v90 = vmul.f32 %v64, %v70
  %v91 = vld [vmem:[%s3] sm:$0x1]
  %v93 = vlaneseq
  %v94 = vshrl.u32 %v93, 7
  %v95 = vsub.s32 0, %v94
  %v96 = vrot.slane %v91, %v95
  %v98 = vadd.f32 %v72, %v96
  %v99 = vadd.f32 %v73, %v96
  %v100 = vadd.f32 %v74, %v96
  %v101 = vadd.f32 %v75, %v96
  %v102 = vadd.f32 %v76, %v96
  %v103 = vadd.f32 %v77, %v96
  %v104 = vadd.f32 %v78, %v96
  %v105 = vadd.f32 %v79, %v96
  %v106 = vadd.f32 %v80, %v96
  %v107 = vadd.f32 %v81, %v96
  %v108 = vadd.f32 %v82, %v96
  %v109 = vadd.f32 %v83, %v96
  %v110 = vadd.f32 %v84, %v96
  %v111 = vadd.f32 %v85, %v96
  %v112 = vadd.f32 %v86, %v96
  %v113 = vadd.f32 %v87, %v96
  %v114 = vadd.f32 %v88, %v96
  %v115 = vadd.f32 %v89, %v96
  %v116 = vadd.f32 %v90, %v96
  %v117 = vpack.c.bf16 %v99, %v98
  %v118 = vpack.c.bf16 %v101, %v100
  %v119 = vpack.c.bf16 %v103, %v102
  %v120 = vpack.c.bf16 %v105, %v104
  %v121 = vpack.c.bf16 %v107, %v106
  %v122 = vpack.c.bf16 %v109, %v108
  %v123 = vpack.c.bf16 %v111, %v110
  %v124 = vpack.c.bf16 %v113, %v112
  %v125 = vpack.c.bf16 %v115, %v114
  %v126 = vpack.c.bf16 %v116, %v116
  %v127 = vld [vmem:[%s4] sm:$0xf]
  %v128 = vld [vmem:[%s4 + $0x4] sm:$0xf]
  %v129 = vld [vmem:[%s4 + $0x8] sm:$0xf]
  %v130 = vld [vmem:[%s4 + $0xc] sm:$0xf]
  %v131 = vld [vmem:[%s4 + $0x10] sm:$0xf]
  %v132 = vld [vmem:[%s4 + $0x14] sm:$0xf]
  %v133 = vld [vmem:[%s4 + $0x18] sm:$0xf]
  %v134 = vld [vmem:[%s4 + $0x1c] sm:$0xf]
  %v135 = vld [vmem:[%s4 + $0x20] sm:$0xf]
  %v136 = vld [vmem:[%s4 + $0x24] sm:$0xf]
  %v137 = vld [vmem:[%s4 + $0x28] sm:$0xf]
  %v138 = vld [vmem:[%s4 + $0x2c] sm:$0xf]
  %v139 = vld [vmem:[%s4 + $0x30] sm:$0xf]
  %v140 = vld [vmem:[%s4 + $0x34] sm:$0x3]
  %v155 = vunpack.c.l.b16 %v127
  %v156 = vunpack.c.l.b16 %v128
  %v157 = vunpack.c.l.b16 %v129
  %v158 = vunpack.c.l.b16 %v130
  %v159 = vunpack.c.l.b16 %v131
  %v160 = vunpack.c.l.b16 %v132
  %v161 = vunpack.c.l.b16 %v133
  %v162 = vunpack.c.l.b16 %v134
  %v163 = vunpack.c.l.b16 %v135
  %v164 = vunpack.c.l.b16 %v136
  %v165 = vunpack.c.l.b16 %v137
  %v166 = vunpack.c.l.b16 %v138
  %v167 = vunpack.c.l.b16 %v139
  %v168 = vunpack.c.l.b16 %v140
  %v169 = vpack.c.b16 %v156, %v155
  %v170 = vpack.c.b16 %v158, %v157
  %v171 = vpack.c.b16 %v160, %v159
  %v172 = vpack.c.b16 %v162, %v161
  %v173 = vpack.c.b16 %v164, %v163
  %v174 = vpack.c.b16 %v166, %v165
  %v175 = vpack.c.b16 %v168, %v167
  %vm182 = vcmask 883712
  %v184 = vsel %vm182, %v117, 0
  %v187 = vsel %vm182, %v118, 0
  %v190 = vsel %vm182, %v119, 0
  %v193 = vsel %vm182, %v120, 0
  %v196 = vsel %vm182, %v121, 0
  %v199 = vsel %vm182, %v122, 0
  %v202 = vsel %vm182, %v123, 0
  %v205 = vsel %vm182, %v124, 0
  %v208 = vsel %vm182, %v125, 0
  %v211 = vsel %vm182, %v126, 0
  %vm213 = vcmask 1045504
  %v215 = vsel %vm213, %v175, 0
  %217 = vmatprep.subr.bf16.mxu0 0
  %218 = vmatpush1.bf16.msra.mxu0 %v169
  %219 = vmatprep.subr.bf16.mxu0 0
  %220 = vmatpush1.bf16.msra.mxu0 %v170
  %221 = vmatprep.subr.bf16.mxu0 0
  %222 = vmatpush1.bf16.msra.mxu0 %v171
  %223 = vmatprep.subr.bf16.mxu0 0
  %224 = vmatpush1.bf16.msra.mxu0 %v172
  %225 = vmatprep.subr.bf16.mxu0 0
  %226 = vmatpush1.bf16.msra.mxu0 %v173
  %227 = vmatprep.subr.bf16.mxu0 0
  %228 = vmatpush1.bf16.msra.mxu0 %v174
  %229 = vmatprep.subr.bf16.mxu0 0
  %230 = vmatpush1.bf16.msra.mxu0 %v215
  %231 = vmatprep.subr.bf16.mxu0 0
  %232 = vmatpush1.bf16.msra.mxu0 0
  %233 = vmatprep.subr.bf16.mxu0 0
  %234 = vmatpush1.bf16.msra.mxu0 0
  %235 = vmatprep.subr.bf16.mxu0 0
  %236 = vmatpush1.bf16.msra.mxu0 0
  %237 = vmatprep.subr.bf16.mxu0 0
  %238 = vmatpush1.bf16.msra.mxu0 0
  %239 = vmatprep.subr.bf16.mxu0 0
  %240 = vmatpush1.bf16.msra.mxu0 0
  %241 = vmatprep.subr.bf16.mxu0 0
  %242 = vmatpush1.bf16.msra.mxu0 0
  %243 = vmatprep.subr.bf16.mxu0 0
  %244 = vmatpush1.bf16.msra.mxu0 0
  %245 = vmatprep.subr.bf16.mxu0 0
  %246 = vmatpush1.bf16.msra.mxu0 0
  %247 = vmatprep.subr.bf16.mxu0 0
  %248 = vmatpush1.bf16.msra.mxu0 0
  %249 = vmatprep.mubr.bf16.mxu0 0
  %250 = vmatmul.mubr.bf16.gmra.mrb[0].mxu0 %v184
  %v251 = vpop.f32.mrb[0].mxu0
  %v252 = vadd.f32 0.0, %v251
  %v253 = vpop.f32.mrb[0].mxu0
  %v254 = vpop.f32.mrb[0].mxu0
  %v255 = vadd.f32 0.0, %v254
  %v256 = vpop.f32.mrb[0].mxu0
  %257 = vmatprep.mubr.bf16.mxu0 0
  %258 = vmatmul.mubr.bf16.gmra.mrb[0].mxu0 %v187
  %v259 = vpop.f32.mrb[0].mxu0
  %v260 = vadd.f32 0.0, %v259
  %v261 = vpop.f32.mrb[0].mxu0
  %v262 = vpop.f32.mrb[0].mxu0
  %v263 = vadd.f32 0.0, %v262
  %v264 = vpop.f32.mrb[0].mxu0
  %265 = vmatprep.mubr.bf16.mxu0 0
  %266 = vmatmul.mubr.bf16.gmra.mrb[0].mxu0 %v190
  %v267 = vpop.f32.mrb[0].mxu0
  %v268 = vadd.f32 0.0, %v267
  %v269 = vpop.f32.mrb[0].mxu0
  %v270 = vpop.f32.mrb[0].mxu0
  %v271 = vadd.f32 0.0, %v270
  %v272 = vpop.f32.mrb[0].mxu0
  %273 = vmatprep.mubr.bf16.mxu0 0
  %274 = vmatmul.mubr.bf16.gmra.mrb[0].mxu0 %v193
  %v275 = vpop.f32.mrb[0].mxu0
  %v276 = vadd.f32 0.0, %v275
  %v277 = vpop.f32.mrb[0].mxu0
  %v278 = vpop.f32.mrb[0].mxu0
  %v279 = vadd.f32 0.0, %v278
  %v280 = vpop.f32.mrb[0].mxu0
  %281 = vmatprep.mubr.bf16.mxu0 0
  %282 = vmatmul.mubr.bf16.gmra.mrb[0].mxu0 %v196
  %v283 = vpop.f32.mrb[0].mxu0
  %v284 = vadd.f32 0.0, %v283
  %v285 = vpop.f32.mrb[0].mxu0
  %v286 = vpop.f32.mrb[0].mxu0
  %v287 = vadd.f32 0.0, %v286
  %v288 = vpop.f32.mrb[0].mxu0
  %289 = vmatprep.mubr.bf16.mxu0 0
  %290 = vmatmul.mubr.bf16.gmra.mrb[0].mxu0 %v199
  %v291 = vpop.f32.mrb[0].mxu0
  %v292 = vadd.f32 0.0, %v291
  %v293 = vpop.f32.mrb[0].mxu0
  %v294 = vpop.f32.mrb[0].mxu0
  %v295 = vadd.f32 0.0, %v294
  %v296 = vpop.f32.mrb[0].mxu0
  %297 = vmatprep.mubr.bf16.mxu0 0
  %298 = vmatmul.mubr.bf16.gmra.mrb[0].mxu0 %v202
  %v299 = vpop.f32.mrb[0].mxu0
  %v300 = vadd.f32 0.0, %v299
  %v301 = vpop.f32.mrb[0].mxu0
  %v302 = vpop.f32.mrb[0].mxu0
  %v303 = vadd.f32 0.0, %v302
  %v304 = vpop.f32.mrb[0].mxu0
  %305 = vmatprep.mubr.bf16.mxu0 0
  %306 = vmatmul.mubr.bf16.gmra.mrb[0].mxu0 %v205
  %v307 = vpop.f32.mrb[0].mxu0
  %v308 = vadd.f32 0.0, %v307
  %v309 = vpop.f32.mrb[0].mxu0
  %v310 = vpop.f32.mrb[0].mxu0
  %v311 = vadd.f32 0.0, %v310
  %v312 = vpop.f32.mrb[0].mxu0
  %313 = vmatprep.mubr.bf16.mxu0 0
  %314 = vmatmul.mubr.bf16.gmra.mrb[0].mxu0 %v208
  %v315 = vpop.f32.mrb[0].mxu0
  %v316 = vadd.f32 0.0, %v315
  %v317 = vpop.f32.mrb[0].mxu0
  %v318 = vpop.f32.mrb[0].mxu0
  %v319 = vadd.f32 0.0, %v318
  %v320 = vpop.f32.mrb[0].mxu0
  %321 = vmatprep.mubr.bf16.mxu0 0
  %322 = vmatmul.mubr.bf16.gmra.mrb[0].mxu0 %v211
  %v323 = vpop.f32.mrb[0].mxu0
  %v324 = vadd.f32 0.0, %v323
  %v325 = vpop.f32.mrb[0].mxu0
  %v326 = vpop.f32.mrb[0].mxu0
  %v327 = vpop.f32.mrb[0].mxu0
  %328 = vdwg.mxu0
  %v329 = vld [vmem:[%s1] sm:$0xf]
  %v330 = vld [vmem:[%s1 + $0x4] sm:$0xf]
  %v331 = vld [vmem:[%s1 + $0x8] sm:$0xf]
  %v332 = vld [vmem:[%s1 + $0xc] sm:$0xf]
  %v333 = vld [vmem:[%s1 + $0x10] sm:$0xf]
  %v334 = vld [vmem:[%s1 + $0x14] sm:$0xf]
  %v335 = vld [vmem:[%s1 + $0x18] sm:$0xf]
  %v336 = vld [vmem:[%s1 + $0x1c] sm:$0xf]
  %v337 = vld [vmem:[%s1 + $0x20] sm:$0xf]
  %v338 = vld [vmem:[%s1 + $0x24] sm:$0xf]
  %v339 = vld [vmem:[%s1 + $0x28] sm:$0xf]
  %v340 = vld [vmem:[%s1 + $0x2c] sm:$0xf]
  %v341 = vld [vmem:[%s1 + $0x30] sm:$0xf]
  %v342 = vld [vmem:[%s1 + $0x34] sm:$0xf]
  %v343 = vld [vmem:[%s1 + $0x38] sm:$0xf]
  %v344 = vld [vmem:[%s1 + $0x3c] sm:$0xf]
  %v345 = vld [vmem:[%s1 + $0x40] sm:$0xf]
  %v346 = vld [vmem:[%s1 + $0x44] sm:$0xf]
  %v347 = vld [vmem:[%s1 + $0x48] sm:$0xf]
  %v348 = vunpack.c.l.bf16 %v329
  %v349 = vunpack.c.l.bf16 %v330
  %v350 = vunpack.c.l.bf16 %v331
  %v351 = vunpack.c.l.bf16 %v332
  %v352 = vunpack.c.l.bf16 %v333
  %v353 = vunpack.c.l.bf16 %v334
  %v354 = vunpack.c.l.bf16 %v335
  %v355 = vunpack.c.l.bf16 %v336
  %v356 = vunpack.c.l.bf16 %v337
  %v357 = vunpack.c.l.bf16 %v338
  %v358 = vunpack.c.l.bf16 %v339
  %v359 = vunpack.c.l.bf16 %v340
  %v360 = vunpack.c.l.bf16 %v341
  %v361 = vunpack.c.l.bf16 %v342
  %v362 = vunpack.c.l.bf16 %v343
  %v363 = vunpack.c.l.bf16 %v344
  %v364 = vunpack.c.l.bf16 %v345
  %v365 = vunpack.c.l.bf16 %v346
  %v366 = vunpack.c.l.bf16 %v347
  %v367 = vld [vmem:[%s5] sm:$0xff]
  %v368 = vld [vmem:[%s5 + $0x8] sm:$0xff]
  %v369 = vld [vmem:[%s5 + $0x10] sm:$0xff]
  %v370 = vld [vmem:[%s5 + $0x18] sm:$0x7]
  %vm371 = vcmask 220160
  %v373 = vsel %vm371, %v348, 0
  %v376 = vsel %vm371, %v349, 0
  %v379 = vsel %vm371, %v350, 0
  %v382 = vsel %vm371, %v351, 0
  %v385 = vsel %vm371, %v352, 0
  %v388 = vsel %vm371, %v353, 0
  %v391 = vsel %vm371, %v354, 0
  %v394 = vsel %vm371, %v355, 0
  %v397 = vsel %vm371, %v356, 0
  %v400 = vsel %vm371, %v357, 0
  %v403 = vsel %vm371, %v358, 0
  %v406 = vsel %vm371, %v359, 0
  %v409 = vsel %vm371, %v360, 0
  %v412 = vsel %vm371, %v361, 0
  %v415 = vsel %vm371, %v362, 0
  %v418 = vsel %vm371, %v363, 0
  %v421 = vsel %vm371, %v364, 0
  %v424 = vsel %vm371, %v365, 0
  %v427 = vsel %vm371, %v366, 0
  %vm429 = vcmask 1042432
  %v431 = vsel %vm429, %v370, 0
  %433 = vmatprep.subr.mxu0 0.0
  %434 = vmatpush1.msra.mxu0 %v367
  %435 = vmatprep.subr.mxu0 0.0
  %436 = vmatpush1.msra.mxu0 %v368
  %437 = vmatprep.subr.mxu0 0.0
  %438 = vmatpush1.msra.mxu0 %v369
  %439 = vmatprep.subr.mxu0 0.0
  %440 = vmatpush1.msra.mxu0 %v431
  %441 = vmatprep.subr.mxu0 0.0
  %442 = vmatpush1.msra.mxu0 0.0
  %443 = vmatprep.subr.mxu0 0.0
  %444 = vmatpush1.msra.mxu0 0.0
  %445 = vmatprep.subr.mxu0 0.0
  %446 = vmatpush1.msra.mxu0 0.0
  %447 = vmatprep.subr.mxu0 0.0
  %448 = vmatpush1.msra.mxu0 0.0
  %449 = vmatprep.subr.mxu0 0.0
  %450 = vmatpush1.msra.mxu0 0.0
  %451 = vmatprep.subr.mxu0 0.0
  %452 = vmatpush1.msra.mxu0 0.0
  %453 = vmatprep.subr.mxu0 0.0
  %454 = vmatpush1.msra.mxu0 0.0
  %455 = vmatprep.subr.mxu0 0.0
  %456 = vmatpush1.msra.mxu0 0.0
  %457 = vmatprep.subr.mxu0 0.0
  %458 = vmatpush1.msra.mxu0 0.0
  %459 = vmatprep.subr.mxu0 0.0
  %460 = vmatpush1.msra.mxu0 0.0
  %461 = vmatprep.subr.mxu0 0.0
  %462 = vmatpush1.msra.mxu0 0.0
  %463 = vmatprep.subr.mxu0 0.0
  %464 = vmatpush1.msra.mxu0 0.0
  %465 = vmatprep.subr.mxu0 0.0
  %466 = vmatpush1.msra.mxu0 0.0
  %467 = vmatprep.subr.mxu0 0.0
  %468 = vmatpush1.msra.mxu0 0.0
  %469 = vmatprep.subr.mxu0 0.0
  %470 = vmatpush1.msra.mxu0 0.0
  %471 = vmatprep.subr.mxu0 0.0
  %472 = vmatpush1.msra.mxu0 0.0
  %473 = vmatprep.subr.mxu0 0.0
  %474 = vmatpush1.msra.mxu0 0.0
  %475 = vmatprep.subr.mxu0 0.0
  %476 = vmatpush1.msra.mxu0 0.0
  %477 = vmatprep.subr.mxu0 0.0
  %478 = vmatpush1.msra.mxu0 0.0
  %479 = vmatprep.subr.mxu0 0.0
  %480 = vmatpush1.msra.mxu0 0.0
  %481 = vmatprep.subr.mxu0 0.0
  %482 = vmatpush1.msra.mxu0 0.0
  %483 = vmatprep.subr.mxu0 0.0
  %484 = vmatpush1.msra.mxu0 0.0
  %485 = vmatprep.subr.mxu0 0.0
  %486 = vmatpush1.msra.mxu0 0.0
  %487 = vmatprep.subr.mxu0 0.0
  %488 = vmatpush1.msra.mxu0 0.0
  %489 = vmatprep.subr.mxu0 0.0
  %490 = vmatpush1.msra.mxu0 0.0
  %491 = vmatprep.subr.mxu0 0.0
  %492 = vmatpush1.msra.mxu0 0.0
  %493 = vmatprep.subr.mxu0 0.0
  %494 = vmatpush1.msra.mxu0 0.0
  %495 = vmatprep.subr.mxu0 0.0
  %496 = vmatpush1.msra.mxu0 0.0
  %497 = vmatprep.mubr.f32.mxu0 0.0
  %498 = vmatmul.mubr.f32.gmra.mrb[0].mxu0 %v373
  %v499 = vpop.f32.mrb[0].mxu0
  %v500 = vadd.f32 0.0, %v499
  %v501 = vpop.f32.mrb[0].mxu0
  %502 = vmatprep.mubr.f32.mxu0 0.0
  %503 = vmatmul.mubr.f32.gmra.mrb[0].mxu0 %v376
  %v504 = vpop.f32.mrb[0].mxu0
  %v505 = vadd.f32 0.0, %v504
  %v506 = vpop.f32.mrb[0].mxu0
  %507 = vmatprep.mubr.f32.mxu0 0.0
  %508 = vmatmul.mubr.f32.gmra.mrb[0].mxu0 %v379
  %v509 = vpop.f32.mrb[0].mxu0
  %v510 = vadd.f32 0.0, %v509
  %v511 = vpop.f32.mrb[0].mxu0
  %512 = vmatprep.mubr.f32.mxu0 0.0
  %513 = vmatmul.mubr.f32.gmra.mrb[0].mxu0 %v382
  %v514 = vpop.f32.mrb[0].mxu0
  %v515 = vadd.f32 0.0, %v514
  %v516 = vpop.f32.mrb[0].mxu0
  %517 = vmatprep.mubr.f32.mxu0 0.0
  %518 = vmatmul.mubr.f32.gmra.mrb[0].mxu0 %v385
  %v519 = vpop.f32.mrb[0].mxu0
  %v520 = vadd.f32 0.0, %v519
  %v521 = vpop.f32.mrb[0].mxu0
  %522 = vmatprep.mubr.f32.mxu0 0.0
  %523 = vmatmul.mubr.f32.gmra.mrb[0].mxu0 %v388
  %v524 = vpop.f32.mrb[0].mxu0
  %v525 = vadd.f32 0.0, %v524
  %v526 = vpop.f32.mrb[0].mxu0
  %527 = vmatprep.mubr.f32.mxu0 0.0
  %528 = vmatmul.mubr.f32.gmra.mrb[0].mxu0 %v391
  %v529 = vpop.f32.mrb[0].mxu0
  %v530 = vadd.f32 0.0, %v529
  %v531 = vpop.f32.mrb[0].mxu0
  %532 = vmatprep.mubr.f32.mxu0 0.0
  %533 = vmatmul.mubr.f32.gmra.mrb[0].mxu0 %v394
  %v534 = vpop.f32.mrb[0].mxu0
  %v535 = vadd.f32 0.0, %v534
  %v536 = vpop.f32.mrb[0].mxu0
  %537 = vmatprep.mubr.f32.mxu0 0.0
  %538 = vmatmul.mubr.f32.gmra.mrb[0].mxu0 %v397
  %v539 = vpop.f32.mrb[0].mxu0
  %v540 = vadd.f32 0.0, %v539
  %v541 = vpop.f32.mrb[0].mxu0
  %542 = vmatprep.mubr.f32.mxu0 0.0
  %543 = vmatmul.mubr.f32.gmra.mrb[0].mxu0 %v400
  %v544 = vpop.f32.mrb[0].mxu0
  %v545 = vadd.f32 0.0, %v544
  %v546 = vpop.f32.mrb[0].mxu0
  %547 = vmatprep.mubr.f32.mxu0 0.0
  %548 = vmatmul.mubr.f32.gmra.mrb[0].mxu0 %v403
  %v549 = vpop.f32.mrb[0].mxu0
  %v550 = vadd.f32 0.0, %v549
  %v551 = vpop.f32.mrb[0].mxu0
  %552 = vmatprep.mubr.f32.mxu0 0.0
  %553 = vmatmul.mubr.f32.gmra.mrb[0].mxu0 %v406
  %v554 = vpop.f32.mrb[0].mxu0
  %v555 = vadd.f32 0.0, %v554
  %v556 = vpop.f32.mrb[0].mxu0
  %557 = vmatprep.mubr.f32.mxu0 0.0
  %558 = vmatmul.mubr.f32.gmra.mrb[0].mxu0 %v409
  %v559 = vpop.f32.mrb[0].mxu0
  %v560 = vadd.f32 0.0, %v559
  %v561 = vpop.f32.mrb[0].mxu0
  %562 = vmatprep.mubr.f32.mxu0 0.0
  %563 = vmatmul.mubr.f32.gmra.mrb[0].mxu0 %v412
  %v564 = vpop.f32.mrb[0].mxu0
  %v565 = vadd.f32 0.0, %v564
  %v566 = vpop.f32.mrb[0].mxu0
  %567 = vmatprep.mubr.f32.mxu0 0.0
  %568 = vmatmul.mubr.f32.gmra.mrb[0].mxu0 %v415
  %v569 = vpop.f32.mrb[0].mxu0
  %v570 = vadd.f32 0.0, %v569
  %v571 = vpop.f32.mrb[0].mxu0
  %572 = vmatprep.mubr.f32.mxu0 0.0
  %573 = vmatmul.mubr.f32.gmra.mrb[0].mxu0 %v418
  %v574 = vpop.f32.mrb[0].mxu0
  %v575 = vadd.f32 0.0, %v574
  %v576 = vpop.f32.mrb[0].mxu0
  %577 = vmatprep.mubr.f32.mxu0 0.0
  %578 = vmatmul.mubr.f32.gmra.mrb[0].mxu0 %v421
  %v579 = vpop.f32.mrb[0].mxu0
  %v580 = vadd.f32 0.0, %v579
  %v581 = vpop.f32.mrb[0].mxu0
  %582 = vmatprep.mubr.f32.mxu0 0.0
  %583 = vmatmul.mubr.f32.gmra.mrb[0].mxu0 %v424
  %v584 = vpop.f32.mrb[0].mxu0
  %v585 = vadd.f32 0.0, %v584
  %v586 = vpop.f32.mrb[0].mxu0
  %587 = vmatprep.mubr.f32.mxu0 0.0
  %588 = vmatmul.mubr.f32.gmra.mrb[0].mxu0 %v427
  %v589 = vpop.f32.mrb[0].mxu0
  %v590 = vadd.f32 0.0, %v589
  %v591 = vpop.f32.mrb[0].mxu0
  %592 = vdwg.mxu0
  %v593 = vsub.f32 %v252, %v500
  %v594 = vsub.f32 %v255, %v505
  %v595 = vsub.f32 %v260, %v510
  %v596 = vsub.f32 %v263, %v515
  %v597 = vsub.f32 %v268, %v520
  %v598 = vsub.f32 %v271, %v525
  %v599 = vsub.f32 %v276, %v530
  %v600 = vsub.f32 %v279, %v535
  %v601 = vsub.f32 %v284, %v540
  %v602 = vsub.f32 %v287, %v545
  %v603 = vsub.f32 %v292, %v550
  %v604 = vsub.f32 %v295, %v555
  %v605 = vsub.f32 %v300, %v560
  %v606 = vsub.f32 %v303, %v565
  %v607 = vsub.f32 %v308, %v570
  %v608 = vsub.f32 %v311, %v575
  %v609 = vsub.f32 %v316, %v580
  %v610 = vsub.f32 %v319, %v585
  %v611 = vsub.f32 %v324, %v590
  %s612 = smul.u32 0, 152
  %v613 = vlaneseq
  %v614 = vshrl.u32 %v613, 7
  %v615 = vadd.s32 %v614, 8
  %v616 = vadd.s32 %v614, 16
  %v617 = vadd.s32 %v614, 24
  %v618 = vadd.s32 %v614, 32
  %v619 = vadd.s32 %v614, 40
  %v620 = vadd.s32 %v614, 48
  %v621 = vadd.s32 %v614, 56
  %v622 = vadd.s32 %v614, 64
  %v623 = vadd.s32 %v614, 72
  %v624 = vadd.s32 %v614, 80
  %v625 = vadd.s32 %v614, 88
  %v626 = vadd.s32 %v614, 96
  %v627 = vadd.s32 %v614, 104
  %v628 = vadd.s32 %v614, 112
  %v629 = vadd.s32 %v614, 120
  %v630 = vadd.s32 %v614, 128
  %v631 = vadd.s32 %v614, 136
  %v632 = vadd.s32 %v614, 144
  %v633 = vstv %s612
  %v634 = vadd.s32 %v633, %v614
  %v635 = vadd.s32 %v633, %v615
  %v636 = vadd.s32 %v633, %v616
  %v637 = vadd.s32 %v633, %v617
  %v638 = vadd.s32 %v633, %v618
  %v639 = vadd.s32 %v633, %v619
  %v640 = vadd.s32 %v633, %v620
  %v641 = vadd.s32 %v633, %v621
  %v642 = vadd.s32 %v633, %v622
  %v643 = vadd.s32 %v633, %v623
  %v644 = vadd.s32 %v633, %v624
  %v645 = vadd.s32 %v633, %v625
  %v646 = vadd.s32 %v633, %v626
  %v647 = vadd.s32 %v633, %v627
  %v648 = vadd.s32 %v633, %v628
  %v649 = vadd.s32 %v633, %v629
  %v650 = vadd.s32 %v633, %v630
  %v651 = vadd.s32 %v633, %v631
  %v652 = vadd.s32 %v633, %v632
  %vm653 = vcmp.lt.s32.totalorder %v634, 144
  %vm654 = vcmp.lt.s32.totalorder %v635, 144
  %vm655 = vcmp.lt.s32.totalorder %v636, 144
  %vm656 = vcmp.lt.s32.totalorder %v637, 144
  %vm657 = vcmp.lt.s32.totalorder %v638, 144
  %vm658 = vcmp.lt.s32.totalorder %v639, 144
  %vm659 = vcmp.lt.s32.totalorder %v640, 144
  %vm660 = vcmp.lt.s32.totalorder %v641, 144
  %vm661 = vcmp.lt.s32.totalorder %v642, 144
  %vm662 = vcmp.lt.s32.totalorder %v643, 144
  %vm663 = vcmp.lt.s32.totalorder %v644, 144
  %vm664 = vcmp.lt.s32.totalorder %v645, 144
  %vm665 = vcmp.lt.s32.totalorder %v646, 144
  %vm666 = vcmp.lt.s32.totalorder %v647, 144
  %vm667 = vcmp.lt.s32.totalorder %v648, 144
  %vm668 = vcmp.lt.s32.totalorder %v649, 144
  %vm669 = vcmp.lt.s32.totalorder %v650, 144
  %vm670 = vcmp.lt.s32.totalorder %v651, 144
  %vm671 = vcmp.lt.s32.totalorder %v652, 144
  %v672 = vsel %vm653, 1, 0
  %v673 = vsel %vm654, 1, 0
  %v674 = vsel %vm655, 1, 0
  %v675 = vsel %vm656, 1, 0
  %v676 = vsel %vm657, 1, 0
  %v677 = vsel %vm658, 1, 0
  %v678 = vsel %vm659, 1, 0
  %v679 = vsel %vm660, 1, 0
  %v680 = vsel %vm661, 1, 0
  %v681 = vsel %vm662, 1, 0
  %v682 = vsel %vm663, 1, 0
  %v683 = vsel %vm664, 1, 0
  %v684 = vsel %vm665, 1, 0
  %v685 = vsel %vm666, 1, 0
  %v686 = vsel %vm667, 1, 0
  %v687 = vsel %vm668, 1, 0
  %v688 = vsel %vm669, 1, 0
  %v689 = vsel %vm670, 1, 0
  %v690 = vsel %vm671, 1, 0
  %vm691 = vcmp.eq.s32.totalorder %v672, 1
  %vm692 = vcmp.eq.s32.totalorder %v673, 1
  %vm693 = vcmp.eq.s32.totalorder %v674, 1
  %vm694 = vcmp.eq.s32.totalorder %v675, 1
  %vm695 = vcmp.eq.s32.totalorder %v676, 1
  %vm696 = vcmp.eq.s32.totalorder %v677, 1
  %vm697 = vcmp.eq.s32.totalorder %v678, 1
  %vm698 = vcmp.eq.s32.totalorder %v679, 1
  %vm699 = vcmp.eq.s32.totalorder %v680, 1
  %vm700 = vcmp.eq.s32.totalorder %v681, 1
  %vm701 = vcmp.eq.s32.totalorder %v682, 1
  %vm702 = vcmp.eq.s32.totalorder %v683, 1
  %vm703 = vcmp.eq.s32.totalorder %v684, 1
  %vm704 = vcmp.eq.s32.totalorder %v685, 1
  %vm705 = vcmp.eq.s32.totalorder %v686, 1
  %vm706 = vcmp.eq.s32.totalorder %v687, 1
  %vm707 = vcmp.eq.s32.totalorder %v688, 1
  %vm708 = vcmp.eq.s32.totalorder %v689, 1
  %vm709 = vcmp.eq.s32.totalorder %v690, 1
  %v710 = vsel %vm691, %v593, 0.0
  %v711 = vsel %vm692, %v594, 0.0
  %v712 = vsel %vm693, %v595, 0.0
  %v713 = vsel %vm694, %v596, 0.0
  %v714 = vsel %vm695, %v597, 0.0
  %v715 = vsel %vm696, %v598, 0.0
  %v716 = vsel %vm697, %v599, 0.0
  %v717 = vsel %vm698, %v600, 0.0
  %v718 = vsel %vm699, %v601, 0.0
  %v719 = vsel %vm700, %v602, 0.0
  %v720 = vsel %vm701, %v603, 0.0
  %v721 = vsel %vm702, %v604, 0.0
  %v722 = vsel %vm703, %v605, 0.0
  %v723 = vsel %vm704, %v606, 0.0
  %v724 = vsel %vm705, %v607, 0.0
  %v725 = vsel %vm706, %v608, 0.0
  %v726 = vsel %vm707, %v609, 0.0
  %v727 = vsel %vm708, %v610, 0.0
  %v728 = vsel %vm709, %v611, 0.0
  %vm729 = vcmask 64512
  %v730 = vsel %vm729, %v710, 0.0
  %v731 = vsel %vm729, %v711, 0.0
  %v732 = vadd.f32 %v730, %v731
  %v733 = vsel %vm729, %v712, 0.0
  %v734 = vadd.f32 %v732, %v733
  %v735 = vsel %vm729, %v713, 0.0
  %v736 = vadd.f32 %v734, %v735
  %v737 = vsel %vm729, %v714, 0.0
  %v738 = vadd.f32 %v736, %v737
  %v739 = vsel %vm729, %v715, 0.0
  %v740 = vadd.f32 %v738, %v739
  %v741 = vsel %vm729, %v716, 0.0
  %v742 = vadd.f32 %v740, %v741
  %v743 = vsel %vm729, %v717, 0.0
  %v744 = vadd.f32 %v742, %v743
  %v745 = vsel %vm729, %v718, 0.0
  %v746 = vadd.f32 %v744, %v745
  %v747 = vsel %vm729, %v719, 0.0
  %v748 = vadd.f32 %v746, %v747
  %v749 = vsel %vm729, %v720, 0.0
  %v750 = vadd.f32 %v748, %v749
  %v751 = vsel %vm729, %v721, 0.0
  %v752 = vadd.f32 %v750, %v751
  %v753 = vsel %vm729, %v722, 0.0
  %v754 = vadd.f32 %v752, %v753
  %v755 = vsel %vm729, %v723, 0.0
  %v756 = vadd.f32 %v754, %v755
  %v757 = vsel %vm729, %v724, 0.0
  %v758 = vadd.f32 %v756, %v757
  %v759 = vsel %vm729, %v725, 0.0
  %v760 = vadd.f32 %v758, %v759
  %v761 = vsel %vm729, %v726, 0.0
  %v762 = vadd.f32 %v760, %v761
  %v763 = vsel %vm729, %v727, 0.0
  %v764 = vadd.f32 %v762, %v763
  %v765 = vsel %vm729, %v728, 0.0
  %v766 = vadd.f32 %v764, %v765
  %v767 = vrot.slane %v766, 4
  %v768 = vadd.f32 %v766, %v767
  %v769 = vrot.slane %v768, 2
  %v770 = vadd.f32 %v768, %v769
  %v771 = vrot.slane %v770, 1
  %v772 = vadd.f32 %v770, %v771
  %vm773 = vcmask 57344
  %774 = vst.msk [vmem:[%s7] sm:$0x1] %vm773, %v772
  %v775 = vmul.f32 %v710, %v710
  %v776 = vmul.f32 %v711, %v711
  %v777 = vmul.f32 %v712, %v712
  %v778 = vmul.f32 %v713, %v713
  %v779 = vmul.f32 %v714, %v714
  %v780 = vmul.f32 %v715, %v715
  %v781 = vmul.f32 %v716, %v716
  %v782 = vmul.f32 %v717, %v717
  %v783 = vmul.f32 %v718, %v718
  %v784 = vmul.f32 %v719, %v719
  %v785 = vmul.f32 %v720, %v720
  %v786 = vmul.f32 %v721, %v721
  %v787 = vmul.f32 %v722, %v722
  %v788 = vmul.f32 %v723, %v723
  %v789 = vmul.f32 %v724, %v724
  %v790 = vmul.f32 %v725, %v725
  %v791 = vmul.f32 %v726, %v726
  %v792 = vmul.f32 %v727, %v727
  %v793 = vmul.f32 %v728, %v728
  %v794 = vsel %vm729, %v775, 0.0
  %v795 = vsel %vm729, %v776, 0.0
  %v796 = vadd.f32 %v794, %v795
  %v797 = vsel %vm729, %v777, 0.0
  %v798 = vadd.f32 %v796, %v797
  %v799 = vsel %vm729, %v778, 0.0
  %v800 = vadd.f32 %v798, %v799
  %v801 = vsel %vm729, %v779, 0.0
  %v802 = vadd.f32 %v800, %v801
  %v803 = vsel %vm729, %v780, 0.0
  %v804 = vadd.f32 %v802, %v803
  %v805 = vsel %vm729, %v781, 0.0
  %v806 = vadd.f32 %v804, %v805
  %v807 = vsel %vm729, %v782, 0.0
  %v808 = vadd.f32 %v806, %v807
  %v809 = vsel %vm729, %v783, 0.0
  %v810 = vadd.f32 %v808, %v809
  %v811 = vsel %vm729, %v784, 0.0
  %v812 = vadd.f32 %v810, %v811
  %v813 = vsel %vm729, %v785, 0.0
  %v814 = vadd.f32 %v812, %v813
  %v815 = vsel %vm729, %v786, 0.0
  %v816 = vadd.f32 %v814, %v815
  %v817 = vsel %vm729, %v787, 0.0
  %v818 = vadd.f32 %v816, %v817
  %v819 = vsel %vm729, %v788, 0.0
  %v820 = vadd.f32 %v818, %v819
  %v821 = vsel %vm729, %v789, 0.0
  %v822 = vadd.f32 %v820, %v821
  %v823 = vsel %vm729, %v790, 0.0
  %v824 = vadd.f32 %v822, %v823
  %v825 = vsel %vm729, %v791, 0.0
  %v826 = vadd.f32 %v824, %v825
  %v827 = vsel %vm729, %v792, 0.0
  %v828 = vadd.f32 %v826, %v827
  %v829 = vsel %vm729, %v793, 0.0
  %v830 = vadd.f32 %v828, %v829
  %v831 = vrot.slane %v830, 4
  %v832 = vadd.f32 %v830, %v831
  %v833 = vrot.slane %v832, 2
  %v834 = vadd.f32 %v832, %v833
  %v835 = vrot.slane %v834, 1
  %v836 = vadd.f32 %v834, %v835
  %837 = vst.msk [vmem:[%s8] sm:$0x1] %vm773, %v836
  %v838 = vpack.c.bf16 %v711, %v710
  %v839 = vpack.c.bf16 %v713, %v712
  %v840 = vpack.c.bf16 %v715, %v714
  %v841 = vpack.c.bf16 %v717, %v716
  %v842 = vpack.c.bf16 %v719, %v718
  %v843 = vpack.c.bf16 %v721, %v720
  %v844 = vpack.c.bf16 %v723, %v722
  %v845 = vpack.c.bf16 %v725, %v724
  %v846 = vpack.c.bf16 %v727, %v726
  %v847 = vpack.c.bf16 %v728, %v728
  %v858 = vunpack.c.l.b16 %v838
  %v859 = vunpack.c.h.b16 %v838
  %v860 = vunpack.c.l.b16 %v839
  %v861 = vunpack.c.h.b16 %v839
  %v862 = vunpack.c.l.b16 %v840
  %v863 = vunpack.c.h.b16 %v840
  %v864 = vunpack.c.l.b16 %v841
  %v865 = vunpack.c.h.b16 %v841
  %v866 = vunpack.c.l.b16 %v842
  %v867 = vunpack.c.h.b16 %v842
  %v868 = vunpack.c.l.b16 %v843
  %v869 = vunpack.c.h.b16 %v843
  %v870 = vunpack.c.l.b16 %v844
  %v871 = vunpack.c.h.b16 %v844
  %v872 = vunpack.c.l.b16 %v845
  %v873 = vunpack.c.h.b16 %v845
  %v874 = vunpack.c.l.b16 %v846
  %v875 = vunpack.c.h.b16 %v846
  %v876 = vunpack.c.l.b16 %v847
  %v877 = vpack.c.b16 %v858, %v858
  %v878 = vpack.c.b16 %v859, %v859
  %v879 = vpack.c.b16 %v860, %v860
  %v880 = vpack.c.b16 %v861, %v861
  %v881 = vpack.c.b16 %v862, %v862
  %v882 = vpack.c.b16 %v863, %v863
  %v883 = vpack.c.b16 %v864, %v864
  %v884 = vpack.c.b16 %v865, %v865
  %v885 = vpack.c.b16 %v866, %v866
  %v886 = vpack.c.b16 %v867, %v867
  %v887 = vpack.c.b16 %v868, %v868
  %v888 = vpack.c.b16 %v869, %v869
  %v889 = vpack.c.b16 %v870, %v870
  %v890 = vpack.c.b16 %v871, %v871
  %v891 = vpack.c.b16 %v872, %v872
  %v892 = vpack.c.b16 %v873, %v873
  %v893 = vpack.c.b16 %v874, %v874
  %v894 = vpack.c.b16 %v875, %v875
  %v895 = vpack.c.b16 %v876, %v876
  %vm915 = vcmask 60416
  %916 = vst.msk [vmem:[%s6] sm:$0xf] %vm915, %v877
  %917 = vst.msk [vmem:[%s6 + $0x4] sm:$0xf] %vm915, %v878
  %918 = vst.msk [vmem:[%s6 + $0x8] sm:$0xf] %vm915, %v879
  %919 = vst.msk [vmem:[%s6 + $0xc] sm:$0xf] %vm915, %v880
  %920 = vst.msk [vmem:[%s6 + $0x10] sm:$0xf] %vm915, %v881
  %921 = vst.msk [vmem:[%s6 + $0x14] sm:$0xf] %vm915, %v882
  %922 = vst.msk [vmem:[%s6 + $0x18] sm:$0xf] %vm915, %v883
  %923 = vst.msk [vmem:[%s6 + $0x1c] sm:$0xf] %vm915, %v884
  %924 = vst.msk [vmem:[%s6 + $0x20] sm:$0xf] %vm915, %v885
  %925 = vst.msk [vmem:[%s6 + $0x24] sm:$0xf] %vm915, %v886
  %926 = vst.msk [vmem:[%s6 + $0x28] sm:$0xf] %vm915, %v887
  %927 = vst.msk [vmem:[%s6 + $0x2c] sm:$0xf] %vm915, %v888
  %928 = vst.msk [vmem:[%s6 + $0x30] sm:$0xf] %vm915, %v889
  %929 = vst.msk [vmem:[%s6 + $0x34] sm:$0xf] %vm915, %v890
  %930 = vst.msk [vmem:[%s6 + $0x38] sm:$0xf] %vm915, %v891
  %931 = vst.msk [vmem:[%s6 + $0x3c] sm:$0xf] %vm915, %v892
  %932 = vst.msk [vmem:[%s6 + $0x40] sm:$0xf] %vm915, %v893
  %933 = vst.msk [vmem:[%s6 + $0x44] sm:$0xf] %vm915, %v894
  %934 = vst.msk [vmem:[%s6 + $0x48] sm:$0xf] %vm915, %v895
  // Predicated region
  $region26: #{motion_prediction_forward.12} parent=0 // pred_check
    _
  $region27: #{motion_prediction_forward.12} parent=0 // pred_check_branch
    %936 = sbr.rel (0) target = $region29
  $region28: #{motion_prediction_forward.12} parent=0 // pred_region
    _
  $region29: #{motion_prediction_forward.12} parent=0 // pred_fallthru
    _
  // Predicated region
  $region30: #{motion_prediction_forward.12} parent=0 // pred_check
    _
  $region31: #{motion_prediction_forward.12} parent=0 // pred_check_branch
    %938 = sbr.rel (0) target = $region33
  $region32: #{motion_prediction_forward.12} parent=0 // pred_region
    _
  $region33: #{motion_prediction_forward.12} parent=0 // pred_fallthru
    _
  // Predicated region
  $region34: #{motion_prediction_forward.12} parent=0 // pred_check
    _
  $region35: #{motion_prediction_forward.12} parent=0 // pred_check_branch
    %940 = sbr.rel (0) target = $region37
  $region36: #{motion_prediction_forward.12} parent=0 // pred_region
    _
  $region37: #{motion_prediction_forward.12} parent=0 // pred_fallthru
    _
  // Predicated region
  $region38: #{motion_prediction_forward.12} parent=0 // pred_check
    _
  $region39: #{motion_prediction_forward.12} parent=0 // pred_check_branch
    %942 = sbr.rel (0) target = $region41
  $region40: #{motion_prediction_forward.12} parent=0 // pred_region
    _
  $region41: #{motion_prediction_forward.12} parent=0 // pred_fallthru
    _
  // Predicated region
  $region42: #{motion_prediction_forward.12} parent=0 // pred_check
    _
  $region43: #{motion_prediction_forward.12} parent=0 // pred_check_branch
    %944 = sbr.rel (0) target = $region45
  $region44: #{motion_prediction_forward.12} parent=0 // pred_region
    _
  $region45: #{motion_prediction_forward.12} parent=0 // pred_fallthru
    _
  // Predicated region
  $region46: #{motion_prediction_forward.12} parent=0 // pred_check
    _
  $region47: #{motion_prediction_forward.12} parent=0 // pred_check_branch
    %946 = sbr.rel (0) target = $region49
  $region48: #{motion_prediction_forward.12} parent=0 // pred_region
    _
  $region49: #{motion_prediction_forward.12} parent=0 // pred_fallthru
    _

// kernel: motion_prediction_forward.14
$region0: #{motion_prediction_forward.14}
  #allocation0 [shape = 'u32[]', space=smem, size = 0x4, offset = 0x4, fixed_abs, tag = 'smem constant byte address 0x4 - core index']
  #allocation1 [shape = 'u32[144,128]{1,0:T(1,128)}', space=vmem, size = 0x12000, scoped, tag = 'internal scratch']
  %s0 = inlined_call_operand.vmem [shape: bf16[152,216], index: 0, kind: input, shape index: {}]
  %s1 = inlined_call_operand.vmem [shape: bf16[152,27], index: 1, kind: input, shape index: {}]
  %s2 = inlined_call_operand.vmem [shape: f32[1,216], index: 2, kind: input, shape index: {}]
  %s3 = inlined_call_operand.vmem [shape: f32[1,216], index: 3, kind: input, shape index: {}]
  %s4 = inlined_call_operand.vmem [shape: bf16[216,8], index: 4, kind: input, shape index: {}]
  %s5 = inlined_call_operand.vmem [shape: f32[27,8], index: 5, kind: input, shape index: {}]
  %s6 = inlined_call_operand.vmem [shape: bf16[152,8], index: 6, kind: input, shape index: {}]
  %s7 = inlined_call_operand.vmem [shape: bf16[152,8], index: 7, kind: output, shape index: {0}]
  %s8 = inlined_call_operand.vmem [shape: f32[1,1,8], index: 8, kind: output, shape index: {1}]
  %s9 = inlined_call_operand.vmem [shape: f32[1,1,8], index: 9, kind: output, shape index: {2}]
  %10 = xla_tuple %s7, %s8, %s9
  %s11 = sld [smem:[#allocation0]]
  $region54: #{motion_prediction_forward.14} parent=0
    _
  %s13 = ssub.s32 1, %s11
  %s14 = scalar_select 0, %s13, %s11
  // Predicated region
  $region2: #{motion_prediction_forward.14} parent=0 // pred_check
    _
  $region3: #{motion_prediction_forward.14} parent=0 // pred_check_branch
    %16 = sbr.rel (0) target = $region5
  $region4: #{motion_prediction_forward.14} parent=0 // pred_region
    _
  $region5: #{motion_prediction_forward.14} parent=0 // pred_fallthru
    _
  // Predicated region
  $region6: #{motion_prediction_forward.14} parent=0 // pred_check
    _
  $region7: #{motion_prediction_forward.14} parent=0 // pred_check_branch
    %18 = sbr.rel (0) target = $region9
  $region8: #{motion_prediction_forward.14} parent=0 // pred_region
    _
  $region9: #{motion_prediction_forward.14} parent=0 // pred_fallthru
    _
  // Predicated region
  $region10: #{motion_prediction_forward.14} parent=0 // pred_check
    _
  $region11: #{motion_prediction_forward.14} parent=0 // pred_check_branch
    %20 = sbr.rel (0) target = $region13
  $region12: #{motion_prediction_forward.14} parent=0 // pred_region
    _
  $region13: #{motion_prediction_forward.14} parent=0 // pred_fallthru
    _
  // Predicated region
  $region14: #{motion_prediction_forward.14} parent=0 // pred_check
    _
  $region15: #{motion_prediction_forward.14} parent=0 // pred_check_branch
    %22 = sbr.rel (0) target = $region17
  $region16: #{motion_prediction_forward.14} parent=0 // pred_region
    _
  $region17: #{motion_prediction_forward.14} parent=0 // pred_fallthru
    _
  // Predicated region
  $region18: #{motion_prediction_forward.14} parent=0 // pred_check
    _
  $region19: #{motion_prediction_forward.14} parent=0 // pred_check_branch
    %24 = sbr.rel (0) target = $region21
  $region20: #{motion_prediction_forward.14} parent=0 // pred_region
    _
  $region21: #{motion_prediction_forward.14} parent=0 // pred_fallthru
    _
  // Predicated region
  $region22: #{motion_prediction_forward.14} parent=0 // pred_check
    _
  $region23: #{motion_prediction_forward.14} parent=0 // pred_check_branch
    %26 = sbr.rel (0) target = $region25
  $region24: #{motion_prediction_forward.14} parent=0 // pred_region
    _
  $region25: #{motion_prediction_forward.14} parent=0 // pred_fallthru
    _
  // Predicated region
  $region26: #{motion_prediction_forward.14} parent=0 // pred_check
    _
  $region27: #{motion_prediction_forward.14} parent=0 // pred_check_branch
    %28 = sbr.rel (0) target = $region29
  $region28: #{motion_prediction_forward.14} parent=0 // pred_region
    _
  $region29: #{motion_prediction_forward.14} parent=0 // pred_fallthru
    _
  %v30 = vld [vmem:[%s0] sm:$0xff]
  %v31 = vld [vmem:[%s0 + $0x8] sm:$0xff]
  %v32 = vld [vmem:[%s0 + $0x10] sm:$0xff]
  %v33 = vld [vmem:[%s0 + $0x18] sm:$0xff]
  %v34 = vld [vmem:[%s0 + $0x20] sm:$0xff]
  %v35 = vld [vmem:[%s0 + $0x28] sm:$0xff]
  %v36 = vld [vmem:[%s0 + $0x30] sm:$0xff]
  %v37 = vld [vmem:[%s0 + $0x38] sm:$0xff]
  %v38 = vld [vmem:[%s0 + $0x40] sm:$0xff]
  %v39 = vld [vmem:[%s0 + $0x48] sm:$0xff]
  %v40 = vld [vmem:[%s0 + $0x50] sm:$0xff]
  %v41 = vld [vmem:[%s0 + $0x58] sm:$0xff]
  %v42 = vld [vmem:[%s0 + $0x60] sm:$0xff]
  %v43 = vld [vmem:[%s0 + $0x68] sm:$0xff]
  %v44 = vld [vmem:[%s0 + $0x70] sm:$0xff]
  %v45 = vld [vmem:[%s0 + $0x78] sm:$0xff]
  %v46 = vld [vmem:[%s0 + $0x80] sm:$0xff]
  %v47 = vld [vmem:[%s0 + $0x88] sm:$0xff]
  %v48 = vld [vmem:[%s0 + $0x90] sm:$0xff]
  %v49 = vunpack.c.l.bf16 %v30
  %v50 = vunpack.c.h.bf16 %v30
  %v51 = vunpack.c.l.bf16 %v31
  %v52 = vunpack.c.h.bf16 %v31
  %v53 = vunpack.c.l.bf16 %v32
  %v54 = vunpack.c.h.bf16 %v32
  %v55 = vunpack.c.l.bf16 %v33
  %v56 = vunpack.c.h.bf16 %v33
  %v57 = vunpack.c.l.bf16 %v34
  %v58 = vunpack.c.h.bf16 %v34
  %v59 = vunpack.c.l.bf16 %v35
  %v60 = vunpack.c.h.bf16 %v35
  %v61 = vunpack.c.l.bf16 %v36
  %v62 = vunpack.c.h.bf16 %v36
  %v63 = vunpack.c.l.bf16 %v37
  %v64 = vunpack.c.h.bf16 %v37
  %v65 = vunpack.c.l.bf16 %v38
  %v66 = vunpack.c.h.bf16 %v38
  %v67 = vunpack.c.l.bf16 %v39
  %v68 = vunpack.c.h.bf16 %v39
  %v69 = vunpack.c.l.bf16 %v40
  %v70 = vunpack.c.h.bf16 %v40
  %v71 = vunpack.c.l.bf16 %v41
  %v72 = vunpack.c.h.bf16 %v41
  %v73 = vunpack.c.l.bf16 %v42
  %v74 = vunpack.c.h.bf16 %v42
  %v75 = vunpack.c.l.bf16 %v43
  %v76 = vunpack.c.h.bf16 %v43
  %v77 = vunpack.c.l.bf16 %v44
  %v78 = vunpack.c.h.bf16 %v44
  %v79 = vunpack.c.l.bf16 %v45
  %v80 = vunpack.c.h.bf16 %v45
  %v81 = vunpack.c.l.bf16 %v46
  %v82 = vunpack.c.h.bf16 %v46
  %v83 = vunpack.c.l.bf16 %v47
  %v84 = vunpack.c.h.bf16 %v47
  %v85 = vunpack.c.l.bf16 %v48
  %v86 = vunpack.c.h.bf16 %v48
  %v87 = vld [vmem:[%s2] sm:$0x3]
  %v89 = vlaneseq
  %v90 = vshrl.u32 %v89, 7
  %v91 = vsub.s32 0, %v90
  %v92 = vrot.slane %v87, %v91
  %v93 = vlaneseq
  %v94 = vshrl.u32 %v93, 7
  %v95 = vsub.s32 1, %v94
  %v96 = vrot.slane %v87, %v95
  %v99 = vmul.f32 %v49, %v92
  %v100 = vmul.f32 %v50, %v96
  %v101 = vmul.f32 %v51, %v92
  %v102 = vmul.f32 %v52, %v96
  %v103 = vmul.f32 %v53, %v92
  %v104 = vmul.f32 %v54, %v96
  %v105 = vmul.f32 %v55, %v92
  %v106 = vmul.f32 %v56, %v96
  %v107 = vmul.f32 %v57, %v92
  %v108 = vmul.f32 %v58, %v96
  %v109 = vmul.f32 %v59, %v92
  %v110 = vmul.f32 %v60, %v96
  %v111 = vmul.f32 %v61, %v92
  %v112 = vmul.f32 %v62, %v96
  %v113 = vmul.f32 %v63, %v92
  %v114 = vmul.f32 %v64, %v96
  %v115 = vmul.f32 %v65, %v92
  %v116 = vmul.f32 %v66, %v96
  %v117 = vmul.f32 %v67, %v92
  %v118 = vmul.f32 %v68, %v96
  %v119 = vmul.f32 %v69, %v92
  %v120 = vmul.f32 %v70, %v96
  %v121 = vmul.f32 %v71, %v92
  %v122 = vmul.f32 %v72, %v96
  %v123 = vmul.f32 %v73, %v92
  %v124 = vmul.f32 %v74, %v96
  %v125 = vmul.f32 %v75, %v92
  %v126 = vmul.f32 %v76, %v96
  %v127 = vmul.f32 %v77, %v92
  %v128 = vmul.f32 %v78, %v96
  %v129 = vmul.f32 %v79, %v92
  %v130 = vmul.f32 %v80, %v96
  %v131 = vmul.f32 %v81, %v92
  %v132 = vmul.f32 %v82, %v96
  %v133 = vmul.f32 %v83, %v92
  %v134 = vmul.f32 %v84, %v96
  %v135 = vmul.f32 %v85, %v92
  %v136 = vmul.f32 %v86, %v96
  %v137 = vld [vmem:[%s3] sm:$0x3]
  %v139 = vlaneseq
  %v140 = vshrl.u32 %v139, 7
  %v141 = vsub.s32 0, %v140
  %v142 = vrot.slane %v137, %v141
  %v143 = vlaneseq
  %v144 = vshrl.u32 %v143, 7
  %v145 = vsub.s32 1, %v144
  %v146 = vrot.slane %v137, %v145
  %v149 = vadd.f32 %v99, %v142
  %v150 = vadd.f32 %v100, %v146
  %v151 = vadd.f32 %v101, %v142
  %v152 = vadd.f32 %v102, %v146
  %v153 = vadd.f32 %v103, %v142
  %v154 = vadd.f32 %v104, %v146
  %v155 = vadd.f32 %v105, %v142
  %v156 = vadd.f32 %v106, %v146
  %v157 = vadd.f32 %v107, %v142
  %v158 = vadd.f32 %v108, %v146
  %v159 = vadd.f32 %v109, %v142
  %v160 = vadd.f32 %v110, %v146
  %v161 = vadd.f32 %v111, %v142
  %v162 = vadd.f32 %v112, %v146
  %v163 = vadd.f32 %v113, %v142
  %v164 = vadd.f32 %v114, %v146
  %v165 = vadd.f32 %v115, %v142
  %v166 = vadd.f32 %v116, %v146
  %v167 = vadd.f32 %v117, %v142
  %v168 = vadd.f32 %v118, %v146
  %v169 = vadd.f32 %v119, %v142
  %v170 = vadd.f32 %v120, %v146
  %v171 = vadd.f32 %v121, %v142
  %v172 = vadd.f32 %v122, %v146
  %v173 = vadd.f32 %v123, %v142
  %v174 = vadd.f32 %v124, %v146
  %v175 = vadd.f32 %v125, %v142
  %v176 = vadd.f32 %v126, %v146
  %v177 = vadd.f32 %v127, %v142
  %v178 = vadd.f32 %v128, %v146
  %v179 = vadd.f32 %v129, %v142
  %v180 = vadd.f32 %v130, %v146
  %v181 = vadd.f32 %v131, %v142
  %v182 = vadd.f32 %v132, %v146
  %v183 = vadd.f32 %v133, %v142
  %v184 = vadd.f32 %v134, %v146
  %v185 = vadd.f32 %v135, %v142
  %v186 = vadd.f32 %v136, %v146
  %v187 = vmax.f32 %v149, 0.0
  %v188 = vmax.f32 %v150, 0.0
  %v189 = vmax.f32 %v151, 0.0
  %v190 = vmax.f32 %v152, 0.0
  %v191 = vmax.f32 %v153, 0.0
  %v192 = vmax.f32 %v154, 0.0
  %v193 = vmax.f32 %v155, 0.0
  %v194 = vmax.f32 %v156, 0.0
  %v195 = vmax.f32 %v157, 0.0
  %v196 = vmax.f32 %v158, 0.0
  %v197 = vmax.f32 %v159, 0.0
  %v198 = vmax.f32 %v160, 0.0
  %v199 = vmax.f32 %v161, 0.0
  %v200 = vmax.f32 %v162, 0.0
  %v201 = vmax.f32 %v163, 0.0
  %v202 = vmax.f32 %v164, 0.0
  %v203 = vmax.f32 %v165, 0.0
  %v204 = vmax.f32 %v166, 0.0
  %v205 = vmax.f32 %v167, 0.0
  %v206 = vmax.f32 %v168, 0.0
  %v207 = vmax.f32 %v169, 0.0
  %v208 = vmax.f32 %v170, 0.0
  %v209 = vmax.f32 %v171, 0.0
  %v210 = vmax.f32 %v172, 0.0
  %v211 = vmax.f32 %v173, 0.0
  %v212 = vmax.f32 %v174, 0.0
  %v213 = vmax.f32 %v175, 0.0
  %v214 = vmax.f32 %v176, 0.0
  %v215 = vmax.f32 %v177, 0.0
  %v216 = vmax.f32 %v178, 0.0
  %v217 = vmax.f32 %v179, 0.0
  %v218 = vmax.f32 %v180, 0.0
  %v219 = vmax.f32 %v181, 0.0
  %v220 = vmax.f32 %v182, 0.0
  %v221 = vmax.f32 %v183, 0.0
  %v222 = vmax.f32 %v184, 0.0
  %v223 = vmax.f32 %v185, 0.0
  %v224 = vmax.f32 %v186, 0.0
  %v225 = vpack.c.bf16 %v189, %v187
  %v226 = vpack.c.bf16 %v190, %v188
  %v227 = vpack.c.bf16 %v193, %v191
  %v228 = vpack.c.bf16 %v194, %v192
  %v229 = vpack.c.bf16 %v197, %v195
  %v230 = vpack.c.bf16 %v198, %v196
  %v231 = vpack.c.bf16 %v201, %v199
  %v232 = vpack.c.bf16 %v202, %v200
  %v233 = vpack.c.bf16 %v205, %v203
  %v234 = vpack.c.bf16 %v206, %v204
  %v235 = vpack.c.bf16 %v209, %v207
  %v236 = vpack.c.bf16 %v210, %v208
  %v237 = vpack.c.bf16 %v213, %v211
  %v238 = vpack.c.bf16 %v214, %v212
  %v239 = vpack.c.bf16 %v217, %v215
  %v240 = vpack.c.bf16 %v218, %v216
  %v241 = vpack.c.bf16 %v221, %v219
  %v242 = vpack.c.bf16 %v222, %v220
  %v243 = vpack.c.bf16 %v223, %v223
  %v244 = vpack.c.bf16 %v224, %v224
  %v245 = vld [vmem:[%s4] sm:$0xf]
  %v246 = vld [vmem:[%s4 + $0x4] sm:$0xf]
  %v247 = vld [vmem:[%s4 + $0x8] sm:$0xf]
  %v248 = vld [vmem:[%s4 + $0xc] sm:$0xf]
  %v249 = vld [vmem:[%s4 + $0x10] sm:$0xf]
  %v250 = vld [vmem:[%s4 + $0x14] sm:$0xf]
  %v251 = vld [vmem:[%s4 + $0x18] sm:$0xf]
  %v252 = vld [vmem:[%s4 + $0x1c] sm:$0xf]
  %v253 = vld [vmem:[%s4 + $0x20] sm:$0xf]
  %v254 = vld [vmem:[%s4 + $0x24] sm:$0xf]
  %v255 = vld [vmem:[%s4 + $0x28] sm:$0xf]
  %v256 = vld [vmem:[%s4 + $0x2c] sm:$0xf]
  %v257 = vld [vmem:[%s4 + $0x30] sm:$0xf]
  %v258 = vld [vmem:[%s4 + $0x34] sm:$0xf]
  %v259 = vld [vmem:[%s4 + $0x38] sm:$0xf]
  %v260 = vld [vmem:[%s4 + $0x3c] sm:$0xf]
  %v261 = vld [vmem:[%s4 + $0x40] sm:$0xf]
  %v262 = vld [vmem:[%s4 + $0x44] sm:$0xf]
  %v263 = vld [vmem:[%s4 + $0x48] sm:$0xf]
  %v264 = vld [vmem:[%s4 + $0x4c] sm:$0xf]
  %v265 = vld [vmem:[%s4 + $0x50] sm:$0xf]
  %v266 = vld [vmem:[%s4 + $0x54] sm:$0xf]
  %v267 = vld [vmem:[%s4 + $0x58] sm:$0xf]
  %v268 = vld [vmem:[%s4 + $0x5c] sm:$0xf]
  %v269 = vld [vmem:[%s4 + $0x60] sm:$0xf]
  %v270 = vld [vmem:[%s4 + $0x64] sm:$0xf]
  %v271 = vld [vmem:[%s4 + $0x68] sm:$0xf]
  %v299 = vunpack.c.l.b16 %v245
  %v300 = vunpack.c.l.b16 %v246
  %v301 = vunpack.c.l.b16 %v247
  %v302 = vunpack.c.l.b16 %v248
  %v303 = vunpack.c.l.b16 %v249
  %v304 = vunpack.c.l.b16 %v250
  %v305 = vunpack.c.l.b16 %v251
  %v306 = vunpack.c.l.b16 %v252
  %v307 = vunpack.c.l.b16 %v253
  %v308 = vunpack.c.l.b16 %v254
  %v309 = vunpack.c.l.b16 %v255
  %v310 = vunpack.c.l.b16 %v256
  %v311 = vunpack.c.l.b16 %v257
  %v312 = vunpack.c.l.b16 %v258
  %v313 = vunpack.c.l.b16 %v259
  %v314 = vunpack.c.l.b16 %v260
  %v315 = vunpack.c.l.b16 %v261
  %v316 = vunpack.c.l.b16 %v262
  %v317 = vunpack.c.l.b16 %v263
  %v318 = vunpack.c.l.b16 %v264
  %v319 = vunpack.c.l.b16 %v265
  %v320 = vunpack.c.l.b16 %v266
  %v321 = vunpack.c.l.b16 %v267
  %v322 = vunpack.c.l.b16 %v268
  %v323 = vunpack.c.l.b16 %v269
  %v324 = vunpack.c.l.b16 %v270
  %v325 = vunpack.c.l.b16 %v271
  %v326 = vpack.c.b16 %v300, %v299
  %v327 = vpack.c.b16 %v302, %v301
  %v328 = vpack.c.b16 %v304, %v303
  %v329 = vpack.c.b16 %v306, %v305
  %v330 = vpack.c.b16 %v308, %v307
  %v331 = vpack.c.b16 %v310, %v309
  %v332 = vpack.c.b16 %v312, %v311
  %v333 = vpack.c.b16 %v314, %v313
  %v334 = vpack.c.b16 %v316, %v315
  %v335 = vpack.c.b16 %v318, %v317
  %v336 = vpack.c.b16 %v320, %v319
  %v337 = vpack.c.b16 %v322, %v321
  %v338 = vpack.c.b16 %v324, %v323
  %v339 = vpack.c.b16 %v325, %v325
  %vm353 = vcmask 719872
  %v355 = vsel %vm353, %v226, 0
  %v358 = vsel %vm353, %v228, 0
  %v361 = vsel %vm353, %v230, 0
  %v364 = vsel %vm353, %v232, 0
  %v367 = vsel %vm353, %v234, 0
  %v370 = vsel %vm353, %v236, 0
  %v373 = vsel %vm353, %v238, 0
  %v376 = vsel %vm353, %v240, 0
  %v379 = vsel %vm353, %v242, 0
  %v382 = vsel %vm353, %v244, 0
  %vm384 = vcmask 1043456
  %v386 = vsel %vm384, %v339, 0
  %388 = vmatprep.subr.bf16.mxu0 0
  %389 = vmatpush1.bf16.msra.mxu0 %v326
  %390 = vmatprep.subr.bf16.mxu0 0
  %391 = vmatpush1.bf16.msra.mxu0 %v327
  %392 = vmatprep.subr.bf16.mxu0 0
  %393 = vmatpush1.bf16.msra.mxu0 %v328
  %394 = vmatprep.subr.bf16.mxu0 0
  %395 = vmatpush1.bf16.msra.mxu0 %v329
  %396 = vmatprep.subr.bf16.mxu0 0
  %397 = vmatpush1.bf16.msra.mxu0 %v330
  %398 = vmatprep.subr.bf16.mxu0 0
  %399 = vmatpush1.bf16.msra.mxu0 %v331
  %400 = vmatprep.subr.bf16.mxu0 0
  %401 = vmatpush1.bf16.msra.mxu0 %v332
  %402 = vmatprep.subr.bf16.mxu0 0
  %403 = vmatpush1.bf16.msra.mxu0 %v333
  %404 = vmatprep.subr.bf16.mxu0 0
  %405 = vmatpush1.bf16.msra.mxu0 %v334
  %406 = vmatprep.subr.bf16.mxu0 0
  %407 = vmatpush1.bf16.msra.mxu0 %v335
  %408 = vmatprep.subr.bf16.mxu0 0
  %409 = vmatpush1.bf16.msra.mxu0 %v336
  %410 = vmatprep.subr.bf16.mxu0 0
  %411 = vmatpush1.bf16.msra.mxu0 %v337
  %412 = vmatprep.subr.bf16.mxu0 0
  %413 = vmatpush1.bf16.msra.mxu0 %v338
  %414 = vmatprep.subr.bf16.mxu0 0
  %415 = vmatpush1.bf16.msra.mxu0 %v386
  %416 = vmatprep.subr.bf16.mxu0 0
  %417 = vmatpush1.bf16.msra.mxu0 0
  %418 = vmatprep.subr.bf16.mxu0 0
  %419 = vmatpush1.bf16.msra.mxu0 0
  %420 = vmatprep.mubr.bf16.mxu0 %v355
  %421 = vmatmul.mubr.bf16.gmra.mrb[0].mxu0 %v225
  %v422 = vpop.f32.mrb[0].mxu0
  %v423 = vadd.f32 0.0, %v422
  %v424 = vpop.f32.mrb[0].mxu0
  %v425 = vpop.f32.mrb[0].mxu0
  %v426 = vadd.f32 0.0, %v425
  %v427 = vpop.f32.mrb[0].mxu0
  %428 = vmatprep.mubr.bf16.mxu0 %v358
  %429 = vmatmul.mubr.bf16.gmra.mrb[0].mxu0 %v227
  %v430 = vpop.f32.mrb[0].mxu0
  %v431 = vadd.f32 0.0, %v430
  %v432 = vpop.f32.mrb[0].mxu0
  %v433 = vpop.f32.mrb[0].mxu0
  %v434 = vadd.f32 0.0, %v433
  %v435 = vpop.f32.mrb[0].mxu0
  %436 = vmatprep.mubr.bf16.mxu0 %v361
  %437 = vmatmul.mubr.bf16.gmra.mrb[0].mxu0 %v229
  %v438 = vpop.f32.mrb[0].mxu0
  %v439 = vadd.f32 0.0, %v438
  %v440 = vpop.f32.mrb[0].mxu0
  %v441 = vpop.f32.mrb[0].mxu0
  %v442 = vadd.f32 0.0, %v441
  %v443 = vpop.f32.mrb[0].mxu0
  %444 = vmatprep.mubr.bf16.mxu0 %v364
  %445 = vmatmul.mubr.bf16.gmra.mrb[0].mxu0 %v231
  %v446 = vpop.f32.mrb[0].mxu0
  %v447 = vadd.f32 0.0, %v446
  %v448 = vpop.f32.mrb[0].mxu0
  %v449 = vpop.f32.mrb[0].mxu0
  %v450 = vadd.f32 0.0, %v449
  %v451 = vpop.f32.mrb[0].mxu0
  %452 = vmatprep.mubr.bf16.mxu0 %v367
  %453 = vmatmul.mubr.bf16.gmra.mrb[0].mxu0 %v233
  %v454 = vpop.f32.mrb[0].mxu0
  %v455 = vadd.f32 0.0, %v454
  %v456 = vpop.f32.mrb[0].mxu0
  %v457 = vpop.f32.mrb[0].mxu0
  %v458 = vadd.f32 0.0, %v457
  %v459 = vpop.f32.mrb[0].mxu0
  %460 = vmatprep.mubr.bf16.mxu0 %v370
  %461 = vmatmul.mubr.bf16.gmra.mrb[0].mxu0 %v235
  %v462 = vpop.f32.mrb[0].mxu0
  %v463 = vadd.f32 0.0, %v462
  %v464 = vpop.f32.mrb[0].mxu0
  %v465 = vpop.f32.mrb[0].mxu0
  %v466 = vadd.f32 0.0, %v465
  %v467 = vpop.f32.mrb[0].mxu0
  %468 = vmatprep.mubr.bf16.mxu0 %v373
  %469 = vmatmul.mubr.bf16.gmra.mrb[0].mxu0 %v237
  %v470 = vpop.f32.mrb[0].mxu0
  %v471 = vadd.f32 0.0, %v470
  %v472 = vpop.f32.mrb[0].mxu0
  %v473 = vpop.f32.mrb[0].mxu0
  %v474 = vadd.f32 0.0, %v473
  %v475 = vpop.f32.mrb[0].mxu0
  %476 = vmatprep.mubr.bf16.mxu0 %v376
  %477 = vmatmul.mubr.bf16.gmra.mrb[0].mxu0 %v239
  %v478 = vpop.f32.mrb[0].mxu0
  %v479 = vadd.f32 0.0, %v478
  %v480 = vpop.f32.mrb[0].mxu0
  %v481 = vpop.f32.mrb[0].mxu0
  %v482 = vadd.f32 0.0, %v481
  %v483 = vpop.f32.mrb[0].mxu0
  %484 = vmatprep.mubr.bf16.mxu0 %v379
  %485 = vmatmul.mubr.bf16.gmra.mrb[0].mxu0 %v241
  %v486 = vpop.f32.mrb[0].mxu0
  %v487 = vadd.f32 0.0, %v486
  %v488 = vpop.f32.mrb[0].mxu0
  %v489 = vpop.f32.mrb[0].mxu0
  %v490 = vadd.f32 0.0, %v489
  %v491 = vpop.f32.mrb[0].mxu0
  %492 = vmatprep.mubr.bf16.mxu0 %v382
  %493 = vmatmul.mubr.bf16.gmra.mrb[0].mxu0 %v243
  %v494 = vpop.f32.mrb[0].mxu0
  %v495 = vadd.f32 0.0, %v494
  %v496 = vpop.f32.mrb[0].mxu0
  %v497 = vpop.f32.mrb[0].mxu0
  %v498 = vpop.f32.mrb[0].mxu0
  %499 = vdwg.mxu0
  %v500 = vld [vmem:[%s1] sm:$0xf]
  %v501 = vld [vmem:[%s1 + $0x4] sm:$0xf]
  %v502 = vld [vmem:[%s1 + $0x8] sm:$0xf]
  %v503 = vld [vmem:[%s1 + $0xc] sm:$0xf]
  %v504 = vld [vmem:[%s1 + $0x10] sm:$0xf]
  %v505 = vld [vmem:[%s1 + $0x14] sm:$0xf]
  %v506 = vld [vmem:[%s1 + $0x18] sm:$0xf]
  %v507 = vld [vmem:[%s1 + $0x1c] sm:$0xf]
  %v508 = vld [vmem:[%s1 + $0x20] sm:$0xf]
  %v509 = vld [vmem:[%s1 + $0x24] sm:$0xf]
  %v510 = vld [vmem:[%s1 + $0x28] sm:$0xf]
  %v511 = vld [vmem:[%s1 + $0x2c] sm:$0xf]
  %v512 = vld [vmem:[%s1 + $0x30] sm:$0xf]
  %v513 = vld [vmem:[%s1 + $0x34] sm:$0xf]
  %v514 = vld [vmem:[%s1 + $0x38] sm:$0xf]
  %v515 = vld [vmem:[%s1 + $0x3c] sm:$0xf]
  %v516 = vld [vmem:[%s1 + $0x40] sm:$0xf]
  %v517 = vld [vmem:[%s1 + $0x44] sm:$0xf]
  %v518 = vld [vmem:[%s1 + $0x48] sm:$0xf]
  %v519 = vunpack.c.l.bf16 %v500
  %v520 = vunpack.c.l.bf16 %v501
  %v521 = vunpack.c.l.bf16 %v502
  %v522 = vunpack.c.l.bf16 %v503
  %v523 = vunpack.c.l.bf16 %v504
  %v524 = vunpack.c.l.bf16 %v505
  %v525 = vunpack.c.l.bf16 %v506
  %v526 = vunpack.c.l.bf16 %v507
  %v527 = vunpack.c.l.bf16 %v508
  %v528 = vunpack.c.l.bf16 %v509
  %v529 = vunpack.c.l.bf16 %v510
  %v530 = vunpack.c.l.bf16 %v511
  %v531 = vunpack.c.l.bf16 %v512
  %v532 = vunpack.c.l.bf16 %v513
  %v533 = vunpack.c.l.bf16 %v514
  %v534 = vunpack.c.l.bf16 %v515
  %v535 = vunpack.c.l.bf16 %v516
  %v536 = vunpack.c.l.bf16 %v517
  %v537 = vunpack.c.l.bf16 %v518
  %v538 = vld [vmem:[%s5] sm:$0xff]
  %v539 = vld [vmem:[%s5 + $0x8] sm:$0xff]
  %v540 = vld [vmem:[%s5 + $0x10] sm:$0xff]
  %v541 = vld [vmem:[%s5 + $0x18] sm:$0x7]
  %vm542 = vcmask 220160
  %v544 = vsel %vm542, %v519, 0
  %v547 = vsel %vm542, %v520, 0
  %v550 = vsel %vm542, %v521, 0
  %v553 = vsel %vm542, %v522, 0
  %v556 = vsel %vm542, %v523, 0
  %v559 = vsel %vm542, %v524, 0
  %v562 = vsel %vm542, %v525, 0
  %v565 = vsel %vm542, %v526, 0
  %v568 = vsel %vm542, %v527, 0
  %v571 = vsel %vm542, %v528, 0
  %v574 = vsel %vm542, %v529, 0
  %v577 = vsel %vm542, %v530, 0
  %v580 = vsel %vm542, %v531, 0
  %v583 = vsel %vm542, %v532, 0
  %v586 = vsel %vm542, %v533, 0
  %v589 = vsel %vm542, %v534, 0
  %v592 = vsel %vm542, %v535, 0
  %v595 = vsel %vm542, %v536, 0
  %v598 = vsel %vm542, %v537, 0
  %vm600 = vcmask 1042432
  %v602 = vsel %vm600, %v541, 0
  %604 = vmatprep.subr.mxu0 0.0
  %605 = vmatpush1.msra.mxu0 %v538
  %606 = vmatprep.subr.mxu0 0.0
  %607 = vmatpush1.msra.mxu0 %v539
  %608 = vmatprep.subr.mxu0 0.0
  %609 = vmatpush1.msra.mxu0 %v540
  %610 = vmatprep.subr.mxu0 0.0
  %611 = vmatpush1.msra.mxu0 %v602
  %612 = vmatprep.subr.mxu0 0.0
  %613 = vmatpush1.msra.mxu0 0.0
  %614 = vmatprep.subr.mxu0 0.0
  %615 = vmatpush1.msra.mxu0 0.0
  %616 = vmatprep.subr.mxu0 0.0
  %617 = vmatpush1.msra.mxu0 0.0
  %618 = vmatprep.subr.mxu0 0.0
  %619 = vmatpush1.msra.mxu0 0.0
  %620 = vmatprep.subr.mxu0 0.0
  %621 = vmatpush1.msra.mxu0 0.0
  %622 = vmatprep.subr.mxu0 0.0
  %623 = vmatpush1.msra.mxu0 0.0
  %624 = vmatprep.subr.mxu0 0.0
  %625 = vmatpush1.msra.mxu0 0.0
  %626 = vmatprep.subr.mxu0 0.0
  %627 = vmatpush1.msra.mxu0 0.0
  %628 = vmatprep.subr.mxu0 0.0
  %629 = vmatpush1.msra.mxu0 0.0
  %630 = vmatprep.subr.mxu0 0.0
  %631 = vmatpush1.msra.mxu0 0.0
  %632 = vmatprep.subr.mxu0 0.0
  %633 = vmatpush1.msra.mxu0 0.0
  %634 = vmatprep.subr.mxu0 0.0
  %635 = vmatpush1.msra.mxu0 0.0
  %636 = vmatprep.subr.mxu0 0.0
  %637 = vmatpush1.msra.mxu0 0.0
  %638 = vmatprep.subr.mxu0 0.0
  %639 = vmatpush1.msra.mxu0 0.0
  %640 = vmatprep.subr.mxu0 0.0
  %641 = vmatpush1.msra.mxu0 0.0
  %642 = vmatprep.subr.mxu0 0.0
  %643 = vmatpush1.msra.mxu0 0.0
  %644 = vmatprep.subr.mxu0 0.0
  %645 = vmatpush1.msra.mxu0 0.0
  %646 = vmatprep.subr.mxu0 0.0
  %647 = vmatpush1.msra.mxu0 0.0
  %648 = vmatprep.subr.mxu0 0.0
  %649 = vmatpush1.msra.mxu0 0.0
  %650 = vmatprep.subr.mxu0 0.0
  %651 = vmatpush1.msra.mxu0 0.0
  %652 = vmatprep.subr.mxu0 0.0
  %653 = vmatpush1.msra.mxu0 0.0
  %654 = vmatprep.subr.mxu0 0.0
  %655 = vmatpush1.msra.mxu0 0.0
  %656 = vmatprep.subr.mxu0 0.0
  %657 = vmatpush1.msra.mxu0 0.0
  %658 = vmatprep.subr.mxu0 0.0
  %659 = vmatpush1.msra.mxu0 0.0
  %660 = vmatprep.subr.mxu0 0.0
  %661 = vmatpush1.msra.mxu0 0.0
  %662 = vmatprep.subr.mxu0 0.0
  %663 = vmatpush1.msra.mxu0 0.0
  %664 = vmatprep.subr.mxu0 0.0
  %665 = vmatpush1.msra.mxu0 0.0
  %666 = vmatprep.subr.mxu0 0.0
  %667 = vmatpush1.msra.mxu0 0.0
  %668 = vmatprep.mubr.f32.mxu0 0.0
  %669 = vmatmul.mubr.f32.gmra.mrb[0].mxu0 %v544
  %v670 = vpop.f32.mrb[0].mxu0
  %v671 = vadd.f32 0.0, %v670
  %v672 = vpop.f32.mrb[0].mxu0
  %673 = vmatprep.mubr.f32.mxu0 0.0
  %674 = vmatmul.mubr.f32.gmra.mrb[0].mxu0 %v547
  %v675 = vpop.f32.mrb[0].mxu0
  %v676 = vadd.f32 0.0, %v675
  %v677 = vpop.f32.mrb[0].mxu0
  %678 = vmatprep.mubr.f32.mxu0 0.0
  %679 = vmatmul.mubr.f32.gmra.mrb[0].mxu0 %v550
  %v680 = vpop.f32.mrb[0].mxu0
  %v681 = vadd.f32 0.0, %v680
  %v682 = vpop.f32.mrb[0].mxu0
  %683 = vmatprep.mubr.f32.mxu0 0.0
  %684 = vmatmul.mubr.f32.gmra.mrb[0].mxu0 %v553
  %v685 = vpop.f32.mrb[0].mxu0
  %v686 = vadd.f32 0.0, %v685
  %v687 = vpop.f32.mrb[0].mxu0
  %688 = vmatprep.mubr.f32.mxu0 0.0
  %689 = vmatmul.mubr.f32.gmra.mrb[0].mxu0 %v556
  %v690 = vpop.f32.mrb[0].mxu0
  %v691 = vadd.f32 0.0, %v690
  %v692 = vpop.f32.mrb[0].mxu0
  %693 = vmatprep.mubr.f32.mxu0 0.0
  %694 = vmatmul.mubr.f32.gmra.mrb[0].mxu0 %v559
  %v695 = vpop.f32.mrb[0].mxu0
  %v696 = vadd.f32 0.0, %v695
  %v697 = vpop.f32.mrb[0].mxu0
  %698 = vmatprep.mubr.f32.mxu0 0.0
  %699 = vmatmul.mubr.f32.gmra.mrb[0].mxu0 %v562
  %v700 = vpop.f32.mrb[0].mxu0
  %v701 = vadd.f32 0.0, %v700
  %v702 = vpop.f32.mrb[0].mxu0
  %703 = vmatprep.mubr.f32.mxu0 0.0
  %704 = vmatmul.mubr.f32.gmra.mrb[0].mxu0 %v565
  %v705 = vpop.f32.mrb[0].mxu0
  %v706 = vadd.f32 0.0, %v705
  %v707 = vpop.f32.mrb[0].mxu0
  %708 = vmatprep.mubr.f32.mxu0 0.0
  %709 = vmatmul.mubr.f32.gmra.mrb[0].mxu0 %v568
  %v710 = vpop.f32.mrb[0].mxu0
  %v711 = vadd.f32 0.0, %v710
  %v712 = vpop.f32.mrb[0].mxu0
  %713 = vmatprep.mubr.f32.mxu0 0.0
  %714 = vmatmul.mubr.f32.gmra.mrb[0].mxu0 %v571
  %v715 = vpop.f32.mrb[0].mxu0
  %v716 = vadd.f32 0.0, %v715
  %v717 = vpop.f32.mrb[0].mxu0
  %718 = vmatprep.mubr.f32.mxu0 0.0
  %719 = vmatmul.mubr.f32.gmra.mrb[0].mxu0 %v574
  %v720 = vpop.f32.mrb[0].mxu0
  %v721 = vadd.f32 0.0, %v720
  %v722 = vpop.f32.mrb[0].mxu0
  %723 = vmatprep.mubr.f32.mxu0 0.0
  %724 = vmatmul.mubr.f32.gmra.mrb[0].mxu0 %v577
  %v725 = vpop.f32.mrb[0].mxu0
  %v726 = vadd.f32 0.0, %v725
  %v727 = vpop.f32.mrb[0].mxu0
  %728 = vmatprep.mubr.f32.mxu0 0.0
  %729 = vmatmul.mubr.f32.gmra.mrb[0].mxu0 %v580
  %v730 = vpop.f32.mrb[0].mxu0
  %v731 = vadd.f32 0.0, %v730
  %v732 = vpop.f32.mrb[0].mxu0
  %733 = vmatprep.mubr.f32.mxu0 0.0
  %734 = vmatmul.mubr.f32.gmra.mrb[0].mxu0 %v583
  %v735 = vpop.f32.mrb[0].mxu0
  %v736 = vadd.f32 0.0, %v735
  %v737 = vpop.f32.mrb[0].mxu0
  %738 = vmatprep.mubr.f32.mxu0 0.0
  %739 = vmatmul.mubr.f32.gmra.mrb[0].mxu0 %v586
  %v740 = vpop.f32.mrb[0].mxu0
  %v741 = vadd.f32 0.0, %v740
  %v742 = vpop.f32.mrb[0].mxu0
  %743 = vmatprep.mubr.f32.mxu0 0.0
  %744 = vmatmul.mubr.f32.gmra.mrb[0].mxu0 %v589
  %v745 = vpop.f32.mrb[0].mxu0
  %v746 = vadd.f32 0.0, %v745
  %v747 = vpop.f32.mrb[0].mxu0
  %748 = vmatprep.mubr.f32.mxu0 0.0
  %749 = vmatmul.mubr.f32.gmra.mrb[0].mxu0 %v592
  %v750 = vpop.f32.mrb[0].mxu0
  %v751 = vadd.f32 0.0, %v750
  %v752 = vpop.f32.mrb[0].mxu0
  %753 = vmatprep.mubr.f32.mxu0 0.0
  %754 = vmatmul.mubr.f32.gmra.mrb[0].mxu0 %v595
  %v755 = vpop.f32.mrb[0].mxu0
  %v756 = vadd.f32 0.0, %v755
  %v757 = vpop.f32.mrb[0].mxu0
  %758 = vmatprep.mubr.f32.mxu0 0.0
  %759 = vmatmul.mubr.f32.gmra.mrb[0].mxu0 %v598
  %v760 = vpop.f32.mrb[0].mxu0
  %v761 = vadd.f32 0.0, %v760
  %v762 = vpop.f32.mrb[0].mxu0
  %763 = vdwg.mxu0
  %v764 = vsub.f32 %v423, %v671
  %v765 = vsub.f32 %v426, %v676
  %v766 = vsub.f32 %v431, %v681
  %v767 = vsub.f32 %v434, %v686
  %v768 = vsub.f32 %v439, %v691
  %v769 = vsub.f32 %v442, %v696
  %v770 = vsub.f32 %v447, %v701
  %v771 = vsub.f32 %v450, %v706
  %v772 = vsub.f32 %v455, %v711
  %v773 = vsub.f32 %v458, %v716
  %v774 = vsub.f32 %v463, %v721
  %v775 = vsub.f32 %v466, %v726
  %v776 = vsub.f32 %v471, %v731
  %v777 = vsub.f32 %v474, %v736
  %v778 = vsub.f32 %v479, %v741
  %v779 = vsub.f32 %v482, %v746
  %v780 = vsub.f32 %v487, %v751
  %v781 = vsub.f32 %v490, %v756
  %v782 = vsub.f32 %v495, %v761
  %v783 = vld [vmem:[%s6] sm:$0xf]
  %v784 = vld [vmem:[%s6 + $0x4] sm:$0xf]
  %v785 = vld [vmem:[%s6 + $0x8] sm:$0xf]
  %v786 = vld [vmem:[%s6 + $0xc] sm:$0xf]
  %v787 = vld [vmem:[%s6 + $0x10] sm:$0xf]
  %v788 = vld [vmem:[%s6 + $0x14] sm:$0xf]
  %v789 = vld [vmem:[%s6 + $0x18] sm:$0xf]
  %v790 = vld [vmem:[%s6 + $0x1c] sm:$0xf]
  %v791 = vld [vmem:[%s6 + $0x20] sm:$0xf]
  %v792 = vld [vmem:[%s6 + $0x24] sm:$0xf]
  %v793 = vld [vmem:[%s6 + $0x28] sm:$0xf]
  %v794 = vld [vmem:[%s6 + $0x2c] sm:$0xf]
  %v795 = vld [vmem:[%s6 + $0x30] sm:$0xf]
  %v796 = vld [vmem:[%s6 + $0x34] sm:$0xf]
  %v797 = vld [vmem:[%s6 + $0x38] sm:$0xf]
  %v798 = vld [vmem:[%s6 + $0x3c] sm:$0xf]
  %v799 = vld [vmem:[%s6 + $0x40] sm:$0xf]
  %v800 = vld [vmem:[%s6 + $0x44] sm:$0xf]
  %v801 = vld [vmem:[%s6 + $0x48] sm:$0xf]
  %v802 = vunpack.c.l.bf16 %v783
  %v803 = vunpack.c.l.bf16 %v784
  %v804 = vunpack.c.l.bf16 %v785
  %v805 = vunpack.c.l.bf16 %v786
  %v806 = vunpack.c.l.bf16 %v787
  %v807 = vunpack.c.l.bf16 %v788
  %v808 = vunpack.c.l.bf16 %v789
  %v809 = vunpack.c.l.bf16 %v790
  %v810 = vunpack.c.l.bf16 %v791
  %v811 = vunpack.c.l.bf16 %v792
  %v812 = vunpack.c.l.bf16 %v793
  %v813 = vunpack.c.l.bf16 %v794
  %v814 = vunpack.c.l.bf16 %v795
  %v815 = vunpack.c.l.bf16 %v796
  %v816 = vunpack.c.l.bf16 %v797
  %v817 = vunpack.c.l.bf16 %v798
  %v818 = vunpack.c.l.bf16 %v799
  %v819 = vunpack.c.l.bf16 %v800
  %v820 = vunpack.c.l.bf16 %v801
  %v821 = vadd.f32 %v764, %v802
  %v822 = vadd.f32 %v765, %v803
  %v823 = vadd.f32 %v766, %v804
  %v824 = vadd.f32 %v767, %v805
  %v825 = vadd.f32 %v768, %v806
  %v826 = vadd.f32 %v769, %v807
  %v827 = vadd.f32 %v770, %v808
  %v828 = vadd.f32 %v771, %v809
  %v829 = vadd.f32 %v772, %v810
  %v830 = vadd.f32 %v773, %v811
  %v831 = vadd.f32 %v774, %v812
  %v832 = vadd.f32 %v775, %v813
  %v833 = vadd.f32 %v776, %v814
  %v834 = vadd.f32 %v777, %v815
  %v835 = vadd.f32 %v778, %v816
  %v836 = vadd.f32 %v779, %v817
  %v837 = vadd.f32 %v780, %v818
  %v838 = vadd.f32 %v781, %v819
  %v839 = vadd.f32 %v782, %v820
  %s840 = smul.u32 0, 152
  %v841 = vlaneseq
  %v842 = vshrl.u32 %v841, 7
  %v843 = vadd.s32 %v842, 8
  %v844 = vadd.s32 %v842, 16
  %v845 = vadd.s32 %v842, 24
  %v846 = vadd.s32 %v842, 32
  %v847 = vadd.s32 %v842, 40
  %v848 = vadd.s32 %v842, 48
  %v849 = vadd.s32 %v842, 56
  %v850 = vadd.s32 %v842, 64
  %v851 = vadd.s32 %v842, 72
  %v852 = vadd.s32 %v842, 80
  %v853 = vadd.s32 %v842, 88
  %v854 = vadd.s32 %v842, 96
  %v855 = vadd.s32 %v842, 104
  %v856 = vadd.s32 %v842, 112
  %v857 = vadd.s32 %v842, 120
  %v858 = vadd.s32 %v842, 128
  %v859 = vadd.s32 %v842, 136
  %v860 = vadd.s32 %v842, 144
  %v861 = vstv %s840
  %v862 = vadd.s32 %v861, %v842
  %v863 = vadd.s32 %v861, %v843
  %v864 = vadd.s32 %v861, %v844
  %v865 = vadd.s32 %v861, %v845
  %v866 = vadd.s32 %v861, %v846
  %v867 = vadd.s32 %v861, %v847
  %v868 = vadd.s32 %v861, %v848
  %v869 = vadd.s32 %v861, %v849
  %v870 = vadd.s32 %v861, %v850
  %v871 = vadd.s32 %v861, %v851
  %v872 = vadd.s32 %v861, %v852
  %v873 = vadd.s32 %v861, %v853
  %v874 = vadd.s32 %v861, %v854
  %v875 = vadd.s32 %v861, %v855
  %v876 = vadd.s32 %v861, %v856
  %v877 = vadd.s32 %v861, %v857
  %v878 = vadd.s32 %v861, %v858
  %v879 = vadd.s32 %v861, %v859
  %v880 = vadd.s32 %v861, %v860
  %vm881 = vcmp.lt.s32.totalorder %v862, 144
  %vm882 = vcmp.lt.s32.totalorder %v863, 144
  %vm883 = vcmp.lt.s32.totalorder %v864, 144
  %vm884 = vcmp.lt.s32.totalorder %v865, 144
  %vm885 = vcmp.lt.s32.totalorder %v866, 144
  %vm886 = vcmp.lt.s32.totalorder %v867, 144
  %vm887 = vcmp.lt.s32.totalorder %v868, 144
  %vm888 = vcmp.lt.s32.totalorder %v869, 144
  %vm889 = vcmp.lt.s32.totalorder %v870, 144
  %vm890 = vcmp.lt.s32.totalorder %v871, 144
  %vm891 = vcmp.lt.s32.totalorder %v872, 144
  %vm892 = vcmp.lt.s32.totalorder %v873, 144
  %vm893 = vcmp.lt.s32.totalorder %v874, 144
  %vm894 = vcmp.lt.s32.totalorder %v875, 144
  %vm895 = vcmp.lt.s32.totalorder %v876, 144
  %vm896 = vcmp.lt.s32.totalorder %v877, 144
  %vm897 = vcmp.lt.s32.totalorder %v878, 144
  %vm898 = vcmp.lt.s32.totalorder %v879, 144
  %vm899 = vcmp.lt.s32.totalorder %v880, 144
  %v900 = vsel %vm881, 1, 0
  %v901 = vsel %vm882, 1, 0
  %v902 = vsel %vm883, 1, 0
  %v903 = vsel %vm884, 1, 0
  %v904 = vsel %vm885, 1, 0
  %v905 = vsel %vm886, 1, 0
  %v906 = vsel %vm887, 1, 0
  %v907 = vsel %vm888, 1, 0
  %v908 = vsel %vm889, 1, 0
  %v909 = vsel %vm890, 1, 0
  %v910 = vsel %vm891, 1, 0
  %v911 = vsel %vm892, 1, 0
  %v912 = vsel %vm893, 1, 0
  %v913 = vsel %vm894, 1, 0
  %v914 = vsel %vm895, 1, 0
  %v915 = vsel %vm896, 1, 0
  %v916 = vsel %vm897, 1, 0
  %v917 = vsel %vm898, 1, 0
  %v918 = vsel %vm899, 1, 0
  %vm919 = vcmp.eq.s32.totalorder %v900, 1
  %vm920 = vcmp.eq.s32.totalorder %v901, 1
  %vm921 = vcmp.eq.s32.totalorder %v902, 1
  %vm922 = vcmp.eq.s32.totalorder %v903, 1
  %vm923 = vcmp.eq.s32.totalorder %v904, 1
  %vm924 = vcmp.eq.s32.totalorder %v905, 1
  %vm925 = vcmp.eq.s32.totalorder %v906, 1
  %vm926 = vcmp.eq.s32.totalorder %v907, 1
  %vm927 = vcmp.eq.s32.totalorder %v908, 1
  %vm928 = vcmp.eq.s32.totalorder %v909, 1
  %vm929 = vcmp.eq.s32.totalorder %v910, 1
  %vm930 = vcmp.eq.s32.totalorder %v911, 1
  %vm931 = vcmp.eq.s32.totalorder %v912, 1
  %vm932 = vcmp.eq.s32.totalorder %v913, 1
  %vm933 = vcmp.eq.s32.totalorder %v914, 1
  %vm934 = vcmp.eq.s32.totalorder %v915, 1
  %vm935 = vcmp.eq.s32.totalorder %v916, 1
  %vm936 = vcmp.eq.s32.totalorder %v917, 1
  %vm937 = vcmp.eq.s32.totalorder %v918, 1
  %v938 = vsel %vm919, %v821, 0.0
  %v939 = vsel %vm920, %v822, 0.0
  %v940 = vsel %vm921, %v823, 0.0
  %v941 = vsel %vm922, %v824, 0.0
  %v942 = vsel %vm923, %v825, 0.0
  %v943 = vsel %vm924, %v826, 0.0
  %v944 = vsel %vm925, %v827, 0.0
  %v945 = vsel %vm926, %v828, 0.0
  %v946 = vsel %vm927, %v829, 0.0
  %v947 = vsel %vm928, %v830, 0.0
  %v948 = vsel %vm929, %v831, 0.0
  %v949 = vsel %vm930, %v832, 0.0
  %v950 = vsel %vm931, %v833, 0.0
  %v951 = vsel %vm932, %v834, 0.0
  %v952 = vsel %vm933, %v835, 0.0
  %v953 = vsel %vm934, %v836, 0.0
  %v954 = vsel %vm935, %v837, 0.0
  %v955 = vsel %vm936, %v838, 0.0
  %v956 = vsel %vm937, %v839, 0.0
  %vm957 = vcmask 64512
  %v958 = vsel %vm957, %v938, 0.0
  %v959 = vsel %vm957, %v939, 0.0
  %v960 = vadd.f32 %v958, %v959
  %v961 = vsel %vm957, %v940, 0.0
  %v962 = vadd.f32 %v960, %v961
  %v963 = vsel %vm957, %v941, 0.0
  %v964 = vadd.f32 %v962, %v963
  %v965 = vsel %vm957, %v942, 0.0
  %v966 = vadd.f32 %v964, %v965
  %v967 = vsel %vm957, %v943, 0.0
  %v968 = vadd.f32 %v966, %v967
  %v969 = vsel %vm957, %v944, 0.0
  %v970 = vadd.f32 %v968, %v969
  %v971 = vsel %vm957, %v945, 0.0
  %v972 = vadd.f32 %v970, %v971
  %v973 = vsel %vm957, %v946, 0.0
  %v974 = vadd.f32 %v972, %v973
  %v975 = vsel %vm957, %v947, 0.0
  %v976 = vadd.f32 %v974, %v975
  %v977 = vsel %vm957, %v948, 0.0
  %v978 = vadd.f32 %v976, %v977
  %v979 = vsel %vm957, %v949, 0.0
  %v980 = vadd.f32 %v978, %v979
  %v981 = vsel %vm957, %v950, 0.0
  %v982 = vadd.f32 %v980, %v981
  %v983 = vsel %vm957, %v951, 0.0
  %v984 = vadd.f32 %v982, %v983
  %v985 = vsel %vm957, %v952, 0.0
  %v986 = vadd.f32 %v984, %v985
  %v987 = vsel %vm957, %v953, 0.0
  %v988 = vadd.f32 %v986, %v987
  %v989 = vsel %vm957, %v954, 0.0
  %v990 = vadd.f32 %v988, %v989
  %v991 = vsel %vm957, %v955, 0.0
  %v992 = vadd.f32 %v990, %v991
  %v993 = vsel %vm957, %v956, 0.0
  %v994 = vadd.f32 %v992, %v993
  %v995 = vrot.slane %v994, 4
  %v996 = vadd.f32 %v994, %v995
  %v997 = vrot.slane %v996, 2
  %v998 = vadd.f32 %v996, %v997
  %v999 = vrot.slane %v998, 1
  %v1000 = vadd.f32 %v998, %v999
  %vm1001 = vcmask 57344
  %1002 = vst.msk [vmem:[%s8] sm:$0x1] %vm1001, %v1000
  %v1003 = vmul.f32 %v938, %v938
  %v1004 = vmul.f32 %v939, %v939
  %v1005 = vmul.f32 %v940, %v940
  %v1006 = vmul.f32 %v941, %v941
  %v1007 = vmul.f32 %v942, %v942
  %v1008 = vmul.f32 %v943, %v943
  %v1009 = vmul.f32 %v944, %v944
  %v1010 = vmul.f32 %v945, %v945
  %v1011 = vmul.f32 %v946, %v946
  %v1012 = vmul.f32 %v947, %v947
  %v1013 = vmul.f32 %v948, %v948
  %v1014 = vmul.f32 %v949, %v949
  %v1015 = vmul.f32 %v950, %v950
  %v1016 = vmul.f32 %v951, %v951
  %v1017 = vmul.f32 %v952, %v952
  %v1018 = vmul.f32 %v953, %v953
  %v1019 = vmul.f32 %v954, %v954
  %v1020 = vmul.f32 %v955, %v955
  %v1021 = vmul.f32 %v956, %v956
  %v1022 = vsel %vm957, %v1003, 0.0
  %v1023 = vsel %vm957, %v1004, 0.0
  %v1024 = vadd.f32 %v1022, %v1023
  %v1025 = vsel %vm957, %v1005, 0.0
  %v1026 = vadd.f32 %v1024, %v1025
  %v1027 = vsel %vm957, %v1006, 0.0
  %v1028 = vadd.f32 %v1026, %v1027
  %v1029 = vsel %vm957, %v1007, 0.0
  %v1030 = vadd.f32 %v1028, %v1029
  %v1031 = vsel %vm957, %v1008, 0.0
  %v1032 = vadd.f32 %v1030, %v1031
  %v1033 = vsel %vm957, %v1009, 0.0
  %v1034 = vadd.f32 %v1032, %v1033
  %v1035 = vsel %vm957, %v1010, 0.0
  %v1036 = vadd.f32 %v1034, %v1035
  %v1037 = vsel %vm957, %v1011, 0.0
  %v1038 = vadd.f32 %v1036, %v1037
  %v1039 = vsel %vm957, %v1012, 0.0
  %v1040 = vadd.f32 %v1038, %v1039
  %v1041 = vsel %vm957, %v1013, 0.0
  %v1042 = vadd.f32 %v1040, %v1041
  %v1043 = vsel %vm957, %v1014, 0.0
  %v1044 = vadd.f32 %v1042, %v1043
  %v1045 = vsel %vm957, %v1015, 0.0
  %v1046 = vadd.f32 %v1044, %v1045
  %v1047 = vsel %vm957, %v1016, 0.0
  %v1048 = vadd.f32 %v1046, %v1047
  %v1049 = vsel %vm957, %v1017, 0.0
  %v1050 = vadd.f32 %v1048, %v1049
  %v1051 = vsel %vm957, %v1018, 0.0
  %v1052 = vadd.f32 %v1050, %v1051
  %v1053 = vsel %vm957, %v1019, 0.0
  %v1054 = vadd.f32 %v1052, %v1053
  %v1055 = vsel %vm957, %v1020, 0.0
  %v1056 = vadd.f32 %v1054, %v1055
  %v1057 = vsel %vm957, %v1021, 0.0
  %v1058 = vadd.f32 %v1056, %v1057
  %v1059 = vrot.slane %v1058, 4
  %v1060 = vadd.f32 %v1058, %v1059
  %v1061 = vrot.slane %v1060, 2
  %v1062 = vadd.f32 %v1060, %v1061
  %v1063 = vrot.slane %v1062, 1
  %v1064 = vadd.f32 %v1062, %v1063
  %1065 = vst.msk [vmem:[%s9] sm:$0x1] %vm1001, %v1064
  %v1066 = vpack.c.bf16 %v939, %v938
  %v1067 = vpack.c.bf16 %v941, %v940
  %v1068 = vpack.c.bf16 %v943, %v942
  %v1069 = vpack.c.bf16 %v945, %v944
  %v1070 = vpack.c.bf16 %v947, %v946
  %v1071 = vpack.c.bf16 %v949, %v948
  %v1072 = vpack.c.bf16 %v951, %v950
  %v1073 = vpack.c.bf16 %v953, %v952
  %v1074 = vpack.c.bf16 %v955, %v954
  %v1075 = vpack.c.bf16 %v956, %v956
  %v1086 = vunpack.c.l.b16 %v1066
  %v1087 = vunpack.c.h.b16 %v1066
  %v1088 = vunpack.c.l.b16 %v1067
  %v1089 = vunpack.c.h.b16 %v1067
  %v1090 = vunpack.c.l.b16 %v1068
  %v1091 = vunpack.c.h.b16 %v1068
  %v1092 = vunpack.c.l.b16 %v1069
  %v1093 = vunpack.c.h.b16 %v1069
  %v1094 = vunpack.c.l.b16 %v1070
  %v1095 = vunpack.c.h.b16 %v1070
  %v1096 = vunpack.c.l.b16 %v1071
  %v1097 = vunpack.c.h.b16 %v1071
  %v1098 = vunpack.c.l.b16 %v1072
  %v1099 = vunpack.c.h.b16 %v1072
  %v1100 = vunpack.c.l.b16 %v1073
  %v1101 = vunpack.c.h.b16 %v1073
  %v1102 = vunpack.c.l.b16 %v1074
  %v1103 = vunpack.c.h.b16 %v1074
  %v1104 = vunpack.c.l.b16 %v1075
  %v1105 = vpack.c.b16 %v1086, %v1086
  %v1106 = vpack.c.b16 %v1087, %v1087
  %v1107 = vpack.c.b16 %v1088, %v1088
  %v1108 = vpack.c.b16 %v1089, %v1089
  %v1109 = vpack.c.b16 %v1090, %v1090
  %v1110 = vpack.c.b16 %v1091, %v1091
  %v1111 = vpack.c.b16 %v1092, %v1092
  %v1112 = vpack.c.b16 %v1093, %v1093
  %v1113 = vpack.c.b16 %v1094, %v1094
  %v1114 = vpack.c.b16 %v1095, %v1095
  %v1115 = vpack.c.b16 %v1096, %v1096
  %v1116 = vpack.c.b16 %v1097, %v1097
  %v1117 = vpack.c.b16 %v1098, %v1098
  %v1118 = vpack.c.b16 %v1099, %v1099
  %v1119 = vpack.c.b16 %v1100, %v1100
  %v1120 = vpack.c.b16 %v1101, %v1101
  %v1121 = vpack.c.b16 %v1102, %v1102
  %v1122 = vpack.c.b16 %v1103, %v1103
  %v1123 = vpack.c.b16 %v1104, %v1104
  %vm1143 = vcmask 60416
  %1144 = vst.msk [vmem:[%s7] sm:$0xf] %vm1143, %v1105
  %1145 = vst.msk [vmem:[%s7 + $0x4] sm:$0xf] %vm1143, %v1106
  %1146 = vst.msk [vmem:[%s7 + $0x8] sm:$0xf] %vm1143, %v1107
  %1147 = vst.msk [vmem:[%s7 + $0xc] sm:$0xf] %vm1143, %v1108
  %1148 = vst.msk [vmem:[%s7 + $0x10] sm:$0xf] %vm1143, %v1109
  %1149 = vst.msk [vmem:[%s7 + $0x14] sm:$0xf] %vm1143, %v1110
  %1150 = vst.msk [vmem:[%s7 + $0x18] sm:$0xf] %vm1143, %v1111
  %1151 = vst.msk [vmem:[%s7 + $0x1c] sm:$0xf] %vm1143, %v1112
  %1152 = vst.msk [vmem:[%s7 + $0x20] sm:$0xf] %vm1143, %v1113
  %1153 = vst.msk [vmem:[%s7 + $0x24] sm:$0xf] %vm1143, %v1114
  %1154 = vst.msk [vmem:[%s7 + $0x28] sm:$0xf] %vm1143, %v1115
  %1155 = vst.msk [vmem:[%s7 + $0x2c] sm:$0xf] %vm1143, %v1116
  %1156 = vst.msk [vmem:[%s7 + $0x30] sm:$0xf] %vm1143, %v1117
  %1157 = vst.msk [vmem:[%s7 + $0x34] sm:$0xf] %vm1143, %v1118
  %1158 = vst.msk [vmem:[%s7 + $0x38] sm:$0xf] %vm1143, %v1119
  %1159 = vst.msk [vmem:[%s7 + $0x3c] sm:$0xf] %vm1143, %v1120
  %1160 = vst.msk [vmem:[%s7 + $0x40] sm:$0xf] %vm1143, %v1121
  %1161 = vst.msk [vmem:[%s7 + $0x44] sm:$0xf] %vm1143, %v1122
  %1162 = vst.msk [vmem:[%s7 + $0x48] sm:$0xf] %vm1143, %v1123
  // Predicated region
  $region30: #{motion_prediction_forward.14} parent=0 // pred_check
    _
  $region31: #{motion_prediction_forward.14} parent=0 // pred_check_branch
    %1164 = sbr.rel (0) target = $region33
  $region32: #{motion_prediction_forward.14} parent=0 // pred_region
    _
  $region33: #{motion_prediction_forward.14} parent=0 // pred_fallthru
    _
  // Predicated region
  $region34: #{motion_prediction_forward.14} parent=0 // pred_check
    _
  $region35: #{motion_prediction_forward.14} parent=0 // pred_check_branch
    %1166 = sbr.rel (0) target = $region37
  $region36: #{motion_prediction_forward.14} parent=0 // pred_region
    _
  $region37: #{motion_prediction_forward.14} parent=0 // pred_fallthru
    _
  // Predicated region
  $region38: #{motion_prediction_forward.14} parent=0 // pred_check
    _
  $region39: #{motion_prediction_forward.14} parent=0 // pred_check_branch
    %1168 = sbr.rel (0) target = $region41
  $region40: #{motion_prediction_forward.14} parent=0 // pred_region
    _
  $region41: #{motion_prediction_forward.14} parent=0 // pred_fallthru
    _
  // Predicated region
  $region42: #{motion_prediction_forward.14} parent=0 // pred_check
    _
  $region43: #{motion_prediction_forward.14} parent=0 // pred_check_branch
    %1170 = sbr.rel (0) target = $region45
  $region44: #{motion_prediction_forward.14} parent=0 // pred_region
    _
  $region45: #{motion_prediction_forward.14} parent=0 // pred_fallthru
    _
  // Predicated region
  $region46: #{motion_prediction_forward.14} parent=0 // pred_check
    _
  $region47: #{motion_prediction_forward.14} parent=0 // pred_check_branch
    %1172 = sbr.rel (0) target = $region49
  $region48: #{motion_prediction_forward.14} parent=0 // pred_region
    _
  $region49: #{motion_prediction_forward.14} parent=0 // pred_fallthru
    _
  // Predicated region
  $region50: #{motion_prediction_forward.14} parent=0 // pred_check
    _
  $region51: #{motion_prediction_forward.14} parent=0 // pred_check_branch
    %1174 = sbr.rel (0) target = $region53
  $region52: #{motion_prediction_forward.14} parent=0 // pred_region
    _
  $region53: #{motion_prediction_forward.14} parent=0 // pred_fallthru
    _

// kernel: motion_prediction_forward.13
$region0: #{motion_prediction_forward.13}
  #allocation0 [shape = 'u32[]', space=smem, size = 0x4, offset = 0x4, fixed_abs, tag = 'smem constant byte address 0x4 - core index']
  #allocation1 [shape = 'u32[144,128]{1,0:T(1,128)}', space=vmem, size = 0x12000, scoped, tag = 'internal scratch']
  %s0 = inlined_call_operand.vmem [shape: bf16[152,216], index: 0, kind: input, shape index: {}]
  %s1 = inlined_call_operand.vmem [shape: bf16[152,27], index: 1, kind: input, shape index: {}]
  %s2 = inlined_call_operand.vmem [shape: f32[1,216], index: 2, kind: input, shape index: {}]
  %s3 = inlined_call_operand.vmem [shape: f32[1,216], index: 3, kind: input, shape index: {}]
  %s4 = inlined_call_operand.vmem [shape: bf16[216,8], index: 4, kind: input, shape index: {}]
  %s5 = inlined_call_operand.vmem [shape: f32[27,8], index: 5, kind: input, shape index: {}]
  %s6 = inlined_call_operand.vmem [shape: bf16[152,8], index: 6, kind: output, shape index: {0}]
  %s7 = inlined_call_operand.vmem [shape: f32[1,1,8], index: 7, kind: output, shape index: {1}]
  %s8 = inlined_call_operand.vmem [shape: f32[1,1,8], index: 8, kind: output, shape index: {2}]
  %9 = xla_tuple %s6, %s7, %s8
  %s10 = sld [smem:[#allocation0]]
  $region50: #{motion_prediction_forward.13} parent=0
    _
  %s12 = ssub.s32 1, %s10
  %s13 = scalar_select 0, %s12, %s10
  // Predicated region
  $region2: #{motion_prediction_forward.13} parent=0 // pred_check
    _
  $region3: #{motion_prediction_forward.13} parent=0 // pred_check_branch
    %15 = sbr.rel (0) target = $region5
  $region4: #{motion_prediction_forward.13} parent=0 // pred_region
    _
  $region5: #{motion_prediction_forward.13} parent=0 // pred_fallthru
    _
  // Predicated region
  $region6: #{motion_prediction_forward.13} parent=0 // pred_check
    _
  $region7: #{motion_prediction_forward.13} parent=0 // pred_check_branch
    %17 = sbr.rel (0) target = $region9
  $region8: #{motion_prediction_forward.13} parent=0 // pred_region
    _
  $region9: #{motion_prediction_forward.13} parent=0 // pred_fallthru
    _
  // Predicated region
  $region10: #{motion_prediction_forward.13} parent=0 // pred_check
    _
  $region11: #{motion_prediction_forward.13} parent=0 // pred_check_branch
    %19 = sbr.rel (0) target = $region13
  $region12: #{motion_prediction_forward.13} parent=0 // pred_region
    _
  $region13: #{motion_prediction_forward.13} parent=0 // pred_fallthru
    _
  // Predicated region
  $region14: #{motion_prediction_forward.13} parent=0 // pred_check
    _
  $region15: #{motion_prediction_forward.13} parent=0 // pred_check_branch
    %21 = sbr.rel (0) target = $region17
  $region16: #{motion_prediction_forward.13} parent=0 // pred_region
    _
  $region17: #{motion_prediction_forward.13} parent=0 // pred_fallthru
    _
  // Predicated region
  $region18: #{motion_prediction_forward.13} parent=0 // pred_check
    _
  $region19: #{motion_prediction_forward.13} parent=0 // pred_check_branch
    %23 = sbr.rel (0) target = $region21
  $region20: #{motion_prediction_forward.13} parent=0 // pred_region
    _
  $region21: #{motion_prediction_forward.13} parent=0 // pred_fallthru
    _
  // Predicated region
  $region22: #{motion_prediction_forward.13} parent=0 // pred_check
    _
  $region23: #{motion_prediction_forward.13} parent=0 // pred_check_branch
    %25 = sbr.rel (0) target = $region25
  $region24: #{motion_prediction_forward.13} parent=0 // pred_region
    _
  $region25: #{motion_prediction_forward.13} parent=0 // pred_fallthru
    _
  %v27 = vld [vmem:[%s0] sm:$0xff]
  %v28 = vld [vmem:[%s0 + $0x8] sm:$0xff]
  %v29 = vld [vmem:[%s0 + $0x10] sm:$0xff]
  %v30 = vld [vmem:[%s0 + $0x18] sm:$0xff]
  %v31 = vld [vmem:[%s0 + $0x20] sm:$0xff]
  %v32 = vld [vmem:[%s0 + $0x28] sm:$0xff]
  %v33 = vld [vmem:[%s0 + $0x30] sm:$0xff]
  %v34 = vld [vmem:[%s0 + $0x38] sm:$0xff]
  %v35 = vld [vmem:[%s0 + $0x40] sm:$0xff]
  %v36 = vld [vmem:[%s0 + $0x48] sm:$0xff]
  %v37 = vld [vmem:[%s0 + $0x50] sm:$0xff]
  %v38 = vld [vmem:[%s0 + $0x58] sm:$0xff]
  %v39 = vld [vmem:[%s0 + $0x60] sm:$0xff]
  %v40 = vld [vmem:[%s0 + $0x68] sm:$0xff]
  %v41 = vld [vmem:[%s0 + $0x70] sm:$0xff]
  %v42 = vld [vmem:[%s0 + $0x78] sm:$0xff]
  %v43 = vld [vmem:[%s0 + $0x80] sm:$0xff]
  %v44 = vld [vmem:[%s0 + $0x88] sm:$0xff]
  %v45 = vld [vmem:[%s0 + $0x90] sm:$0xff]
  %v46 = vunpack.c.l.bf16 %v27
  %v47 = vunpack.c.h.bf16 %v27
  %v48 = vunpack.c.l.bf16 %v28
  %v49 = vunpack.c.h.bf16 %v28
  %v50 = vunpack.c.l.bf16 %v29
  %v51 = vunpack.c.h.bf16 %v29
  %v52 = vunpack.c.l.bf16 %v30
  %v53 = vunpack.c.h.bf16 %v30
  %v54 = vunpack.c.l.bf16 %v31
  %v55 = vunpack.c.h.bf16 %v31
  %v56 = vunpack.c.l.bf16 %v32
  %v57 = vunpack.c.h.bf16 %v32
  %v58 = vunpack.c.l.bf16 %v33
  %v59 = vunpack.c.h.bf16 %v33
  %v60 = vunpack.c.l.bf16 %v34
  %v61 = vunpack.c.h.bf16 %v34
  %v62 = vunpack.c.l.bf16 %v35
  %v63 = vunpack.c.h.bf16 %v35
  %v64 = vunpack.c.l.bf16 %v36
  %v65 = vunpack.c.h.bf16 %v36
  %v66 = vunpack.c.l.bf16 %v37
  %v67 = vunpack.c.h.bf16 %v37
  %v68 = vunpack.c.l.bf16 %v38
  %v69 = vunpack.c.h.bf16 %v38
  %v70 = vunpack.c.l.bf16 %v39
  %v71 = vunpack.c.h.bf16 %v39
  %v72 = vunpack.c.l.bf16 %v40
  %v73 = vunpack.c.h.bf16 %v40
  %v74 = vunpack.c.l.bf16 %v41
  %v75 = vunpack.c.h.bf16 %v41
  %v76 = vunpack.c.l.bf16 %v42
  %v77 = vunpack.c.h.bf16 %v42
  %v78 = vunpack.c.l.bf16 %v43
  %v79 = vunpack.c.h.bf16 %v43
  %v80 = vunpack.c.l.bf16 %v44
  %v81 = vunpack.c.h.bf16 %v44
  %v82 = vunpack.c.l.bf16 %v45
  %v83 = vunpack.c.h.bf16 %v45
  %v84 = vld [vmem:[%s2] sm:$0x3]
  %v86 = vlaneseq
  %v87 = vshrl.u32 %v86, 7
  %v88 = vsub.s32 0, %v87
  %v89 = vrot.slane %v84, %v88
  %v90 = vlaneseq
  %v91 = vshrl.u32 %v90, 7
  %v92 = vsub.s32 1, %v91
  %v93 = vrot.slane %v84, %v92
  %v96 = vmul.f32 %v46, %v89
  %v97 = vmul.f32 %v47, %v93
  %v98 = vmul.f32 %v48, %v89
  %v99 = vmul.f32 %v49, %v93
  %v100 = vmul.f32 %v50, %v89
  %v101 = vmul.f32 %v51, %v93
  %v102 = vmul.f32 %v52, %v89
  %v103 = vmul.f32 %v53, %v93
  %v104 = vmul.f32 %v54, %v89
  %v105 = vmul.f32 %v55, %v93
  %v106 = vmul.f32 %v56, %v89
  %v107 = vmul.f32 %v57, %v93
  %v108 = vmul.f32 %v58, %v89
  %v109 = vmul.f32 %v59, %v93
  %v110 = vmul.f32 %v60, %v89
  %v111 = vmul.f32 %v61, %v93
  %v112 = vmul.f32 %v62, %v89
  %v113 = vmul.f32 %v63, %v93
  %v114 = vmul.f32 %v64, %v89
  %v115 = vmul.f32 %v65, %v93
  %v116 = vmul.f32 %v66, %v89
  %v117 = vmul.f32 %v67, %v93
  %v118 = vmul.f32 %v68, %v89
  %v119 = vmul.f32 %v69, %v93
  %v120 = vmul.f32 %v70, %v89
  %v121 = vmul.f32 %v71, %v93
  %v122 = vmul.f32 %v72, %v89
  %v123 = vmul.f32 %v73, %v93
  %v124 = vmul.f32 %v74, %v89
  %v125 = vmul.f32 %v75, %v93
  %v126 = vmul.f32 %v76, %v89
  %v127 = vmul.f32 %v77, %v93
  %v128 = vmul.f32 %v78, %v89
  %v129 = vmul.f32 %v79, %v93
  %v130 = vmul.f32 %v80, %v89
  %v131 = vmul.f32 %v81, %v93
  %v132 = vmul.f32 %v82, %v89
  %v133 = vmul.f32 %v83, %v93
  %v134 = vld [vmem:[%s3] sm:$0x3]
  %v136 = vlaneseq
  %v137 = vshrl.u32 %v136, 7
  %v138 = vsub.s32 0, %v137
  %v139 = vrot.slane %v134, %v138
  %v140 = vlaneseq
  %v141 = vshrl.u32 %v140, 7
  %v142 = vsub.s32 1, %v141
  %v143 = vrot.slane %v134, %v142
  %v146 = vadd.f32 %v96, %v139
  %v147 = vadd.f32 %v97, %v143
  %v148 = vadd.f32 %v98, %v139
  %v149 = vadd.f32 %v99, %v143
  %v150 = vadd.f32 %v100, %v139
  %v151 = vadd.f32 %v101, %v143
  %v152 = vadd.f32 %v102, %v139
  %v153 = vadd.f32 %v103, %v143
  %v154 = vadd.f32 %v104, %v139
  %v155 = vadd.f32 %v105, %v143
  %v156 = vadd.f32 %v106, %v139
  %v157 = vadd.f32 %v107, %v143
  %v158 = vadd.f32 %v108, %v139
  %v159 = vadd.f32 %v109, %v143
  %v160 = vadd.f32 %v110, %v139
  %v161 = vadd.f32 %v111, %v143
  %v162 = vadd.f32 %v112, %v139
  %v163 = vadd.f32 %v113, %v143
  %v164 = vadd.f32 %v114, %v139
  %v165 = vadd.f32 %v115, %v143
  %v166 = vadd.f32 %v116, %v139
  %v167 = vadd.f32 %v117, %v143
  %v168 = vadd.f32 %v118, %v139
  %v169 = vadd.f32 %v119, %v143
  %v170 = vadd.f32 %v120, %v139
  %v171 = vadd.f32 %v121, %v143
  %v172 = vadd.f32 %v122, %v139
  %v173 = vadd.f32 %v123, %v143
  %v174 = vadd.f32 %v124, %v139
  %v175 = vadd.f32 %v125, %v143
  %v176 = vadd.f32 %v126, %v139
  %v177 = vadd.f32 %v127, %v143
  %v178 = vadd.f32 %v128, %v139
  %v179 = vadd.f32 %v129, %v143
  %v180 = vadd.f32 %v130, %v139
  %v181 = vadd.f32 %v131, %v143
  %v182 = vadd.f32 %v132, %v139
  %v183 = vadd.f32 %v133, %v143
  %v184 = vmax.f32 %v146, 0.0
  %v185 = vmax.f32 %v147, 0.0
  %v186 = vmax.f32 %v148, 0.0
  %v187 = vmax.f32 %v149, 0.0
  %v188 = vmax.f32 %v150, 0.0
  %v189 = vmax.f32 %v151, 0.0
  %v190 = vmax.f32 %v152, 0.0
  %v191 = vmax.f32 %v153, 0.0
  %v192 = vmax.f32 %v154, 0.0
  %v193 = vmax.f32 %v155, 0.0
  %v194 = vmax.f32 %v156, 0.0
  %v195 = vmax.f32 %v157, 0.0
  %v196 = vmax.f32 %v158, 0.0
  %v197 = vmax.f32 %v159, 0.0
  %v198 = vmax.f32 %v160, 0.0
  %v199 = vmax.f32 %v161, 0.0
  %v200 = vmax.f32 %v162, 0.0
  %v201 = vmax.f32 %v163, 0.0
  %v202 = vmax.f32 %v164, 0.0
  %v203 = vmax.f32 %v165, 0.0
  %v204 = vmax.f32 %v166, 0.0
  %v205 = vmax.f32 %v167, 0.0
  %v206 = vmax.f32 %v168, 0.0
  %v207 = vmax.f32 %v169, 0.0
  %v208 = vmax.f32 %v170, 0.0
  %v209 = vmax.f32 %v171, 0.0
  %v210 = vmax.f32 %v172, 0.0
  %v211 = vmax.f32 %v173, 0.0
  %v212 = vmax.f32 %v174, 0.0
  %v213 = vmax.f32 %v175, 0.0
  %v214 = vmax.f32 %v176, 0.0
  %v215 = vmax.f32 %v177, 0.0
  %v216 = vmax.f32 %v178, 0.0
  %v217 = vmax.f32 %v179, 0.0
  %v218 = vmax.f32 %v180, 0.0
  %v219 = vmax.f32 %v181, 0.0
  %v220 = vmax.f32 %v182, 0.0
  %v221 = vmax.f32 %v183, 0.0
  %v222 = vpack.c.bf16 %v186, %v184
  %v223 = vpack.c.bf16 %v187, %v185
  %v224 = vpack.c.bf16 %v190, %v188
  %v225 = vpack.c.bf16 %v191, %v189
  %v226 = vpack.c.bf16 %v194, %v192
  %v227 = vpack.c.bf16 %v195, %v193
  %v228 = vpack.c.bf16 %v198, %v196
  %v229 = vpack.c.bf16 %v199, %v197
  %v230 = vpack.c.bf16 %v202, %v200
  %v231 = vpack.c.bf16 %v203, %v201
  %v232 = vpack.c.bf16 %v206, %v204
  %v233 = vpack.c.bf16 %v207, %v205
  %v234 = vpack.c.bf16 %v210, %v208
  %v235 = vpack.c.bf16 %v211, %v209
  %v236 = vpack.c.bf16 %v214, %v212
  %v237 = vpack.c.bf16 %v215, %v213
  %v238 = vpack.c.bf16 %v218, %v216
  %v239 = vpack.c.bf16 %v219, %v217
  %v240 = vpack.c.bf16 %v220, %v220
  %v241 = vpack.c.bf16 %v221, %v221
  %v242 = vld [vmem:[%s4] sm:$0xf]
  %v243 = vld [vmem:[%s4 + $0x4] sm:$0xf]
  %v244 = vld [vmem:[%s4 + $0x8] sm:$0xf]
  %v245 = vld [vmem:[%s4 + $0xc] sm:$0xf]
  %v246 = vld [vmem:[%s4 + $0x10] sm:$0xf]
  %v247 = vld [vmem:[%s4 + $0x14] sm:$0xf]
  %v248 = vld [vmem:[%s4 + $0x18] sm:$0xf]
  %v249 = vld [vmem:[%s4 + $0x1c] sm:$0xf]
  %v250 = vld [vmem:[%s4 + $0x20] sm:$0xf]
  %v251 = vld [vmem:[%s4 + $0x24] sm:$0xf]
  %v252 = vld [vmem:[%s4 + $0x28] sm:$0xf]
  %v253 = vld [vmem:[%s4 + $0x2c] sm:$0xf]
  %v254 = vld [vmem:[%s4 + $0x30] sm:$0xf]
  %v255 = vld [vmem:[%s4 + $0x34] sm:$0xf]
  %v256 = vld [vmem:[%s4 + $0x38] sm:$0xf]
  %v257 = vld [vmem:[%s4 + $0x3c] sm:$0xf]
  %v258 = vld [vmem:[%s4 + $0x40] sm:$0xf]
  %v259 = vld [vmem:[%s4 + $0x44] sm:$0xf]
  %v260 = vld [vmem:[%s4 + $0x48] sm:$0xf]
  %v261 = vld [vmem:[%s4 + $0x4c] sm:$0xf]
  %v262 = vld [vmem:[%s4 + $0x50] sm:$0xf]
  %v263 = vld [vmem:[%s4 + $0x54] sm:$0xf]
  %v264 = vld [vmem:[%s4 + $0x58] sm:$0xf]
  %v265 = vld [vmem:[%s4 + $0x5c] sm:$0xf]
  %v266 = vld [vmem:[%s4 + $0x60] sm:$0xf]
  %v267 = vld [vmem:[%s4 + $0x64] sm:$0xf]
  %v268 = vld [vmem:[%s4 + $0x68] sm:$0xf]
  %v296 = vunpack.c.l.b16 %v242
  %v297 = vunpack.c.l.b16 %v243
  %v298 = vunpack.c.l.b16 %v244
  %v299 = vunpack.c.l.b16 %v245
  %v300 = vunpack.c.l.b16 %v246
  %v301 = vunpack.c.l.b16 %v247
  %v302 = vunpack.c.l.b16 %v248
  %v303 = vunpack.c.l.b16 %v249
  %v304 = vunpack.c.l.b16 %v250
  %v305 = vunpack.c.l.b16 %v251
  %v306 = vunpack.c.l.b16 %v252
  %v307 = vunpack.c.l.b16 %v253
  %v308 = vunpack.c.l.b16 %v254
  %v309 = vunpack.c.l.b16 %v255
  %v310 = vunpack.c.l.b16 %v256
  %v311 = vunpack.c.l.b16 %v257
  %v312 = vunpack.c.l.b16 %v258
  %v313 = vunpack.c.l.b16 %v259
  %v314 = vunpack.c.l.b16 %v260
  %v315 = vunpack.c.l.b16 %v261
  %v316 = vunpack.c.l.b16 %v262
  %v317 = vunpack.c.l.b16 %v263
  %v318 = vunpack.c.l.b16 %v264
  %v319 = vunpack.c.l.b16 %v265
  %v320 = vunpack.c.l.b16 %v266
  %v321 = vunpack.c.l.b16 %v267
  %v322 = vunpack.c.l.b16 %v268
  %v323 = vpack.c.b16 %v297, %v296
  %v324 = vpack.c.b16 %v299, %v298
  %v325 = vpack.c.b16 %v301, %v300
  %v326 = vpack.c.b16 %v303, %v302
  %v327 = vpack.c.b16 %v305, %v304
  %v328 = vpack.c.b16 %v307, %v306
  %v329 = vpack.c.b16 %v309, %v308
  %v330 = vpack.c.b16 %v311, %v310
  %v331 = vpack.c.b16 %v313, %v312
  %v332 = vpack.c.b16 %v315, %v314
  %v333 = vpack.c.b16 %v317, %v316
  %v334 = vpack.c.b16 %v319, %v318
  %v335 = vpack.c.b16 %v321, %v320
  %v336 = vpack.c.b16 %v322, %v322
  %vm350 = vcmask 719872
  %v352 = vsel %vm350, %v223, 0
  %v355 = vsel %vm350, %v225, 0
  %v358 = vsel %vm350, %v227, 0
  %v361 = vsel %vm350, %v229, 0
  %v364 = vsel %vm350, %v231, 0
  %v367 = vsel %vm350, %v233, 0
  %v370 = vsel %vm350, %v235, 0
  %v373 = vsel %vm350, %v237, 0
  %v376 = vsel %vm350, %v239, 0
  %v379 = vsel %vm350, %v241, 0
  %vm381 = vcmask 1043456
  %v383 = vsel %vm381, %v336, 0
  %385 = vmatprep.subr.bf16.mxu0 0
  %386 = vmatpush1.bf16.msra.mxu0 %v323
  %387 = vmatprep.subr.bf16.mxu0 0
  %388 = vmatpush1.bf16.msra.mxu0 %v324
  %389 = vmatprep.subr.bf16.mxu0 0
  %390 = vmatpush1.bf16.msra.mxu0 %v325
  %391 = vmatprep.subr.bf16.mxu0 0
  %392 = vmatpush1.bf16.msra.mxu0 %v326
  %393 = vmatprep.subr.bf16.mxu0 0
  %394 = vmatpush1.bf16.msra.mxu0 %v327
  %395 = vmatprep.subr.bf16.mxu0 0
  %396 = vmatpush1.bf16.msra.mxu0 %v328
  %397 = vmatprep.subr.bf16.mxu0 0
  %398 = vmatpush1.bf16.msra.mxu0 %v329
  %399 = vmatprep.subr.bf16.mxu0 0
  %400 = vmatpush1.bf16.msra.mxu0 %v330
  %401 = vmatprep.subr.bf16.mxu0 0
  %402 = vmatpush1.bf16.msra.mxu0 %v331
  %403 = vmatprep.subr.bf16.mxu0 0
  %404 = vmatpush1.bf16.msra.mxu0 %v332
  %405 = vmatprep.subr.bf16.mxu0 0
  %406 = vmatpush1.bf16.msra.mxu0 %v333
  %407 = vmatprep.subr.bf16.mxu0 0
  %408 = vmatpush1.bf16.msra.mxu0 %v334
  %409 = vmatprep.subr.bf16.mxu0 0
  %410 = vmatpush1.bf16.msra.mxu0 %v335
  %411 = vmatprep.subr.bf16.mxu0 0
  %412 = vmatpush1.bf16.msra.mxu0 %v383
  %413 = vmatprep.subr.bf16.mxu0 0
  %414 = vmatpush1.bf16.msra.mxu0 0
  %415 = vmatprep.subr.bf16.mxu0 0
  %416 = vmatpush1.bf16.msra.mxu0 0
  %417 = vmatprep.mubr.bf16.mxu0 %v352
  %418 = vmatmul.mubr.bf16.gmra.mrb[0].mxu0 %v222
  %v419 = vpop.f32.mrb[0].mxu0
  %v420 = vadd.f32 0.0, %v419
  %v421 = vpop.f32.mrb[0].mxu0
  %v422 = vpop.f32.mrb[0].mxu0
  %v423 = vadd.f32 0.0, %v422
  %v424 = vpop.f32.mrb[0].mxu0
  %425 = vmatprep.mubr.bf16.mxu0 %v355
  %426 = vmatmul.mubr.bf16.gmra.mrb[0].mxu0 %v224
  %v427 = vpop.f32.mrb[0].mxu0
  %v428 = vadd.f32 0.0, %v427
  %v429 = vpop.f32.mrb[0].mxu0
  %v430 = vpop.f32.mrb[0].mxu0
  %v431 = vadd.f32 0.0, %v430
  %v432 = vpop.f32.mrb[0].mxu0
  %433 = vmatprep.mubr.bf16.mxu0 %v358
  %434 = vmatmul.mubr.bf16.gmra.mrb[0].mxu0 %v226
  %v435 = vpop.f32.mrb[0].mxu0
  %v436 = vadd.f32 0.0, %v435
  %v437 = vpop.f32.mrb[0].mxu0
  %v438 = vpop.f32.mrb[0].mxu0
  %v439 = vadd.f32 0.0, %v438
  %v440 = vpop.f32.mrb[0].mxu0
  %441 = vmatprep.mubr.bf16.mxu0 %v361
  %442 = vmatmul.mubr.bf16.gmra.mrb[0].mxu0 %v228
  %v443 = vpop.f32.mrb[0].mxu0
  %v444 = vadd.f32 0.0, %v443
  %v445 = vpop.f32.mrb[0].mxu0
  %v446 = vpop.f32.mrb[0].mxu0
  %v447 = vadd.f32 0.0, %v446
  %v448 = vpop.f32.mrb[0].mxu0
  %449 = vmatprep.mubr.bf16.mxu0 %v364
  %450 = vmatmul.mubr.bf16.gmra.mrb[0].mxu0 %v230
  %v451 = vpop.f32.mrb[0].mxu0
  %v452 = vadd.f32 0.0, %v451
  %v453 = vpop.f32.mrb[0].mxu0
  %v454 = vpop.f32.mrb[0].mxu0
  %v455 = vadd.f32 0.0, %v454
  %v456 = vpop.f32.mrb[0].mxu0
  %457 = vmatprep.mubr.bf16.mxu0 %v367
  %458 = vmatmul.mubr.bf16.gmra.mrb[0].mxu0 %v232
  %v459 = vpop.f32.mrb[0].mxu0
  %v460 = vadd.f32 0.0, %v459
  %v461 = vpop.f32.mrb[0].mxu0
  %v462 = vpop.f32.mrb[0].mxu0
  %v463 = vadd.f32 0.0, %v462
  %v464 = vpop.f32.mrb[0].mxu0
  %465 = vmatprep.mubr.bf16.mxu0 %v370
  %466 = vmatmul.mubr.bf16.gmra.mrb[0].mxu0 %v234
  %v467 = vpop.f32.mrb[0].mxu0
  %v468 = vadd.f32 0.0, %v467
  %v469 = vpop.f32.mrb[0].mxu0
  %v470 = vpop.f32.mrb[0].mxu0
  %v471 = vadd.f32 0.0, %v470
  %v472 = vpop.f32.mrb[0].mxu0
  %473 = vmatprep.mubr.bf16.mxu0 %v373
  %474 = vmatmul.mubr.bf16.gmra.mrb[0].mxu0 %v236
  %v475 = vpop.f32.mrb[0].mxu0
  %v476 = vadd.f32 0.0, %v475
  %v477 = vpop.f32.mrb[0].mxu0
  %v478 = vpop.f32.mrb[0].mxu0
  %v479 = vadd.f32 0.0, %v478
  %v480 = vpop.f32.mrb[0].mxu0
  %481 = vmatprep.mubr.bf16.mxu0 %v376
  %482 = vmatmul.mubr.bf16.gmra.mrb[0].mxu0 %v238
  %v483 = vpop.f32.mrb[0].mxu0
  %v484 = vadd.f32 0.0, %v483
  %v485 = vpop.f32.mrb[0].mxu0
  %v486 = vpop.f32.mrb[0].mxu0
  %v487 = vadd.f32 0.0, %v486
  %v488 = vpop.f32.mrb[0].mxu0
  %489 = vmatprep.mubr.bf16.mxu0 %v379
  %490 = vmatmul.mubr.bf16.gmra.mrb[0].mxu0 %v240
  %v491 = vpop.f32.mrb[0].mxu0
  %v492 = vadd.f32 0.0, %v491
  %v493 = vpop.f32.mrb[0].mxu0
  %v494 = vpop.f32.mrb[0].mxu0
  %v495 = vpop.f32.mrb[0].mxu0
  %496 = vdwg.mxu0
  %v497 = vld [vmem:[%s1] sm:$0xf]
  %v498 = vld [vmem:[%s1 + $0x4] sm:$0xf]
  %v499 = vld [vmem:[%s1 + $0x8] sm:$0xf]
  %v500 = vld [vmem:[%s1 + $0xc] sm:$0xf]
  %v501 = vld [vmem:[%s1 + $0x10] sm:$0xf]
  %v502 = vld [vmem:[%s1 + $0x14] sm:$0xf]
  %v503 = vld [vmem:[%s1 + $0x18] sm:$0xf]
  %v504 = vld [vmem:[%s1 + $0x1c] sm:$0xf]
  %v505 = vld [vmem:[%s1 + $0x20] sm:$0xf]
  %v506 = vld [vmem:[%s1 + $0x24] sm:$0xf]
  %v507 = vld [vmem:[%s1 + $0x28] sm:$0xf]
  %v508 = vld [vmem:[%s1 + $0x2c] sm:$0xf]
  %v509 = vld [vmem:[%s1 + $0x30] sm:$0xf]
  %v510 = vld [vmem:[%s1 + $0x34] sm:$0xf]
  %v511 = vld [vmem:[%s1 + $0x38] sm:$0xf]
  %v512 = vld [vmem:[%s1 + $0x3c] sm:$0xf]
  %v513 = vld [vmem:[%s1 + $0x40] sm:$0xf]
  %v514 = vld [vmem:[%s1 + $0x44] sm:$0xf]
  %v515 = vld [vmem:[%s1 + $0x48] sm:$0xf]
  %v516 = vunpack.c.l.bf16 %v497
  %v517 = vunpack.c.l.bf16 %v498
  %v518 = vunpack.c.l.bf16 %v499
  %v519 = vunpack.c.l.bf16 %v500
  %v520 = vunpack.c.l.bf16 %v501
  %v521 = vunpack.c.l.bf16 %v502
  %v522 = vunpack.c.l.bf16 %v503
  %v523 = vunpack.c.l.bf16 %v504
  %v524 = vunpack.c.l.bf16 %v505
  %v525 = vunpack.c.l.bf16 %v506
  %v526 = vunpack.c.l.bf16 %v507
  %v527 = vunpack.c.l.bf16 %v508
  %v528 = vunpack.c.l.bf16 %v509
  %v529 = vunpack.c.l.bf16 %v510
  %v530 = vunpack.c.l.bf16 %v511
  %v531 = vunpack.c.l.bf16 %v512
  %v532 = vunpack.c.l.bf16 %v513
  %v533 = vunpack.c.l.bf16 %v514
  %v534 = vunpack.c.l.bf16 %v515
  %v535 = vld [vmem:[%s5] sm:$0xff]
  %v536 = vld [vmem:[%s5 + $0x8] sm:$0xff]
  %v537 = vld [vmem:[%s5 + $0x10] sm:$0xff]
  %v538 = vld [vmem:[%s5 + $0x18] sm:$0x7]
  %vm539 = vcmask 220160
  %v541 = vsel %vm539, %v516, 0
  %v544 = vsel %vm539, %v517, 0
  %v547 = vsel %vm539, %v518, 0
  %v550 = vsel %vm539, %v519, 0
  %v553 = vsel %vm539, %v520, 0
  %v556 = vsel %vm539, %v521, 0
  %v559 = vsel %vm539, %v522, 0
  %v562 = vsel %vm539, %v523, 0
  %v565 = vsel %vm539, %v524, 0
  %v568 = vsel %vm539, %v525, 0
  %v571 = vsel %vm539, %v526, 0
  %v574 = vsel %vm539, %v527, 0
  %v577 = vsel %vm539, %v528, 0
  %v580 = vsel %vm539, %v529, 0
  %v583 = vsel %vm539, %v530, 0
  %v586 = vsel %vm539, %v531, 0
  %v589 = vsel %vm539, %v532, 0
  %v592 = vsel %vm539, %v533, 0
  %v595 = vsel %vm539, %v534, 0
  %vm597 = vcmask 1042432
  %v599 = vsel %vm597, %v538, 0
  %601 = vmatprep.subr.mxu0 0.0
  %602 = vmatpush1.msra.mxu0 %v535
  %603 = vmatprep.subr.mxu0 0.0
  %604 = vmatpush1.msra.mxu0 %v536
  %605 = vmatprep.subr.mxu0 0.0
  %606 = vmatpush1.msra.mxu0 %v537
  %607 = vmatprep.subr.mxu0 0.0
  %608 = vmatpush1.msra.mxu0 %v599
  %609 = vmatprep.subr.mxu0 0.0
  %610 = vmatpush1.msra.mxu0 0.0
  %611 = vmatprep.subr.mxu0 0.0
  %612 = vmatpush1.msra.mxu0 0.0
  %613 = vmatprep.subr.mxu0 0.0
  %614 = vmatpush1.msra.mxu0 0.0
  %615 = vmatprep.subr.mxu0 0.0
  %616 = vmatpush1.msra.mxu0 0.0
  %617 = vmatprep.subr.mxu0 0.0
  %618 = vmatpush1.msra.mxu0 0.0
  %619 = vmatprep.subr.mxu0 0.0
  %620 = vmatpush1.msra.mxu0 0.0
  %621 = vmatprep.subr.mxu0 0.0
  %622 = vmatpush1.msra.mxu0 0.0
  %623 = vmatprep.subr.mxu0 0.0
  %624 = vmatpush1.msra.mxu0 0.0
  %625 = vmatprep.subr.mxu0 0.0
  %626 = vmatpush1.msra.mxu0 0.0
  %627 = vmatprep.subr.mxu0 0.0
  %628 = vmatpush1.msra.mxu0 0.0
  %629 = vmatprep.subr.mxu0 0.0
  %630 = vmatpush1.msra.mxu0 0.0
  %631 = vmatprep.subr.mxu0 0.0
  %632 = vmatpush1.msra.mxu0 0.0
  %633 = vmatprep.subr.mxu0 0.0
  %634 = vmatpush1.msra.mxu0 0.0
  %635 = vmatprep.subr.mxu0 0.0
  %636 = vmatpush1.msra.mxu0 0.0
  %637 = vmatprep.subr.mxu0 0.0
  %638 = vmatpush1.msra.mxu0 0.0
  %639 = vmatprep.subr.mxu0 0.0
  %640 = vmatpush1.msra.mxu0 0.0
  %641 = vmatprep.subr.mxu0 0.0
  %642 = vmatpush1.msra.mxu0 0.0
  %643 = vmatprep.subr.mxu0 0.0
  %644 = vmatpush1.msra.mxu0 0.0
  %645 = vmatprep.subr.mxu0 0.0
  %646 = vmatpush1.msra.mxu0 0.0
  %647 = vmatprep.subr.mxu0 0.0
  %648 = vmatpush1.msra.mxu0 0.0
  %649 = vmatprep.subr.mxu0 0.0
  %650 = vmatpush1.msra.mxu0 0.0
  %651 = vmatprep.subr.mxu0 0.0
  %652 = vmatpush1.msra.mxu0 0.0
  %653 = vmatprep.subr.mxu0 0.0
  %654 = vmatpush1.msra.mxu0 0.0
  %655 = vmatprep.subr.mxu0 0.0
  %656 = vmatpush1.msra.mxu0 0.0
  %657 = vmatprep.subr.mxu0 0.0
  %658 = vmatpush1.msra.mxu0 0.0
  %659 = vmatprep.subr.mxu0 0.0
  %660 = vmatpush1.msra.mxu0 0.0
  %661 = vmatprep.subr.mxu0 0.0
  %662 = vmatpush1.msra.mxu0 0.0
  %663 = vmatprep.subr.mxu0 0.0
  %664 = vmatpush1.msra.mxu0 0.0
  %665 = vmatprep.mubr.f32.mxu0 0.0
  %666 = vmatmul.mubr.f32.gmra.mrb[0].mxu0 %v541
  %v667 = vpop.f32.mrb[0].mxu0
  %v668 = vadd.f32 0.0, %v667
  %v669 = vpop.f32.mrb[0].mxu0
  %670 = vmatprep.mubr.f32.mxu0 0.0
  %671 = vmatmul.mubr.f32.gmra.mrb[0].mxu0 %v544
  %v672 = vpop.f32.mrb[0].mxu0
  %v673 = vadd.f32 0.0, %v672
  %v674 = vpop.f32.mrb[0].mxu0
  %675 = vmatprep.mubr.f32.mxu0 0.0
  %676 = vmatmul.mubr.f32.gmra.mrb[0].mxu0 %v547
  %v677 = vpop.f32.mrb[0].mxu0
  %v678 = vadd.f32 0.0, %v677
  %v679 = vpop.f32.mrb[0].mxu0
  %680 = vmatprep.mubr.f32.mxu0 0.0
  %681 = vmatmul.mubr.f32.gmra.mrb[0].mxu0 %v550
  %v682 = vpop.f32.mrb[0].mxu0
  %v683 = vadd.f32 0.0, %v682
  %v684 = vpop.f32.mrb[0].mxu0
  %685 = vmatprep.mubr.f32.mxu0 0.0
  %686 = vmatmul.mubr.f32.gmra.mrb[0].mxu0 %v553
  %v687 = vpop.f32.mrb[0].mxu0
  %v688 = vadd.f32 0.0, %v687
  %v689 = vpop.f32.mrb[0].mxu0
  %690 = vmatprep.mubr.f32.mxu0 0.0
  %691 = vmatmul.mubr.f32.gmra.mrb[0].mxu0 %v556
  %v692 = vpop.f32.mrb[0].mxu0
  %v693 = vadd.f32 0.0, %v692
  %v694 = vpop.f32.mrb[0].mxu0
  %695 = vmatprep.mubr.f32.mxu0 0.0
  %696 = vmatmul.mubr.f32.gmra.mrb[0].mxu0 %v559
  %v697 = vpop.f32.mrb[0].mxu0
  %v698 = vadd.f32 0.0, %v697
  %v699 = vpop.f32.mrb[0].mxu0
  %700 = vmatprep.mubr.f32.mxu0 0.0
  %701 = vmatmul.mubr.f32.gmra.mrb[0].mxu0 %v562
  %v702 = vpop.f32.mrb[0].mxu0
  %v703 = vadd.f32 0.0, %v702
  %v704 = vpop.f32.mrb[0].mxu0
  %705 = vmatprep.mubr.f32.mxu0 0.0
  %706 = vmatmul.mubr.f32.gmra.mrb[0].mxu0 %v565
  %v707 = vpop.f32.mrb[0].mxu0
  %v708 = vadd.f32 0.0, %v707
  %v709 = vpop.f32.mrb[0].mxu0
  %710 = vmatprep.mubr.f32.mxu0 0.0
  %711 = vmatmul.mubr.f32.gmra.mrb[0].mxu0 %v568
  %v712 = vpop.f32.mrb[0].mxu0
  %v713 = vadd.f32 0.0, %v712
  %v714 = vpop.f32.mrb[0].mxu0
  %715 = vmatprep.mubr.f32.mxu0 0.0
  %716 = vmatmul.mubr.f32.gmra.mrb[0].mxu0 %v571
  %v717 = vpop.f32.mrb[0].mxu0
  %v718 = vadd.f32 0.0, %v717
  %v719 = vpop.f32.mrb[0].mxu0
  %720 = vmatprep.mubr.f32.mxu0 0.0
  %721 = vmatmul.mubr.f32.gmra.mrb[0].mxu0 %v574
  %v722 = vpop.f32.mrb[0].mxu0
  %v723 = vadd.f32 0.0, %v722
  %v724 = vpop.f32.mrb[0].mxu0
  %725 = vmatprep.mubr.f32.mxu0 0.0
  %726 = vmatmul.mubr.f32.gmra.mrb[0].mxu0 %v577
  %v727 = vpop.f32.mrb[0].mxu0
  %v728 = vadd.f32 0.0, %v727
  %v729 = vpop.f32.mrb[0].mxu0
  %730 = vmatprep.mubr.f32.mxu0 0.0
  %731 = vmatmul.mubr.f32.gmra.mrb[0].mxu0 %v580
  %v732 = vpop.f32.mrb[0].mxu0
  %v733 = vadd.f32 0.0, %v732
  %v734 = vpop.f32.mrb[0].mxu0
  %735 = vmatprep.mubr.f32.mxu0 0.0
  %736 = vmatmul.mubr.f32.gmra.mrb[0].mxu0 %v583
  %v737 = vpop.f32.mrb[0].mxu0
  %v738 = vadd.f32 0.0, %v737
  %v739 = vpop.f32.mrb[0].mxu0
  %740 = vmatprep.mubr.f32.mxu0 0.0
  %741 = vmatmul.mubr.f32.gmra.mrb[0].mxu0 %v586
  %v742 = vpop.f32.mrb[0].mxu0
  %v743 = vadd.f32 0.0, %v742
  %v744 = vpop.f32.mrb[0].mxu0
  %745 = vmatprep.mubr.f32.mxu0 0.0
  %746 = vmatmul.mubr.f32.gmra.mrb[0].mxu0 %v589
  %v747 = vpop.f32.mrb[0].mxu0
  %v748 = vadd.f32 0.0, %v747
  %v749 = vpop.f32.mrb[0].mxu0
  %750 = vmatprep.mubr.f32.mxu0 0.0
  %751 = vmatmul.mubr.f32.gmra.mrb[0].mxu0 %v592
  %v752 = vpop.f32.mrb[0].mxu0
  %v753 = vadd.f32 0.0, %v752
  %v754 = vpop.f32.mrb[0].mxu0
  %755 = vmatprep.mubr.f32.mxu0 0.0
  %756 = vmatmul.mubr.f32.gmra.mrb[0].mxu0 %v595
  %v757 = vpop.f32.mrb[0].mxu0
  %v758 = vadd.f32 0.0, %v757
  %v759 = vpop.f32.mrb[0].mxu0
  %760 = vdwg.mxu0
  %v761 = vsub.f32 %v420, %v668
  %v762 = vsub.f32 %v423, %v673
  %v763 = vsub.f32 %v428, %v678
  %v764 = vsub.f32 %v431, %v683
  %v765 = vsub.f32 %v436, %v688
  %v766 = vsub.f32 %v439, %v693
  %v767 = vsub.f32 %v444, %v698
  %v768 = vsub.f32 %v447, %v703
  %v769 = vsub.f32 %v452, %v708
  %v770 = vsub.f32 %v455, %v713
  %v771 = vsub.f32 %v460, %v718
  %v772 = vsub.f32 %v463, %v723
  %v773 = vsub.f32 %v468, %v728
  %v774 = vsub.f32 %v471, %v733
  %v775 = vsub.f32 %v476, %v738
  %v776 = vsub.f32 %v479, %v743
  %v777 = vsub.f32 %v484, %v748
  %v778 = vsub.f32 %v487, %v753
  %v779 = vsub.f32 %v492, %v758
  %s780 = smul.u32 0, 152
  %v781 = vlaneseq
  %v782 = vshrl.u32 %v781, 7
  %v783 = vadd.s32 %v782, 8
  %v784 = vadd.s32 %v782, 16
  %v785 = vadd.s32 %v782, 24
  %v786 = vadd.s32 %v782, 32
  %v787 = vadd.s32 %v782, 40
  %v788 = vadd.s32 %v782, 48
  %v789 = vadd.s32 %v782, 56
  %v790 = vadd.s32 %v782, 64
  %v791 = vadd.s32 %v782, 72
  %v792 = vadd.s32 %v782, 80
  %v793 = vadd.s32 %v782, 88
  %v794 = vadd.s32 %v782, 96
  %v795 = vadd.s32 %v782, 104
  %v796 = vadd.s32 %v782, 112
  %v797 = vadd.s32 %v782, 120
  %v798 = vadd.s32 %v782, 128
  %v799 = vadd.s32 %v782, 136
  %v800 = vadd.s32 %v782, 144
  %v801 = vstv %s780
  %v802 = vadd.s32 %v801, %v782
  %v803 = vadd.s32 %v801, %v783
  %v804 = vadd.s32 %v801, %v784
  %v805 = vadd.s32 %v801, %v785
  %v806 = vadd.s32 %v801, %v786
  %v807 = vadd.s32 %v801, %v787
  %v808 = vadd.s32 %v801, %v788
  %v809 = vadd.s32 %v801, %v789
  %v810 = vadd.s32 %v801, %v790
  %v811 = vadd.s32 %v801, %v791
  %v812 = vadd.s32 %v801, %v792
  %v813 = vadd.s32 %v801, %v793
  %v814 = vadd.s32 %v801, %v794
  %v815 = vadd.s32 %v801, %v795
  %v816 = vadd.s32 %v801, %v796
  %v817 = vadd.s32 %v801, %v797
  %v818 = vadd.s32 %v801, %v798
  %v819 = vadd.s32 %v801, %v799
  %v820 = vadd.s32 %v801, %v800
  %vm821 = vcmp.lt.s32.totalorder %v802, 144
  %vm822 = vcmp.lt.s32.totalorder %v803, 144
  %vm823 = vcmp.lt.s32.totalorder %v804, 144
  %vm824 = vcmp.lt.s32.totalorder %v805, 144
  %vm825 = vcmp.lt.s32.totalorder %v806, 144
  %vm826 = vcmp.lt.s32.totalorder %v807, 144
  %vm827 = vcmp.lt.s32.totalorder %v808, 144
  %vm828 = vcmp.lt.s32.totalorder %v809, 144
  %vm829 = vcmp.lt.s32.totalorder %v810, 144
  %vm830 = vcmp.lt.s32.totalorder %v811, 144
  %vm831 = vcmp.lt.s32.totalorder %v812, 144
  %vm832 = vcmp.lt.s32.totalorder %v813, 144
  %vm833 = vcmp.lt.s32.totalorder %v814, 144
  %vm834 = vcmp.lt.s32.totalorder %v815, 144
  %vm835 = vcmp.lt.s32.totalorder %v816, 144
  %vm836 = vcmp.lt.s32.totalorder %v817, 144
  %vm837 = vcmp.lt.s32.totalorder %v818, 144
  %vm838 = vcmp.lt.s32.totalorder %v819, 144
  %vm839 = vcmp.lt.s32.totalorder %v820, 144
  %v840 = vsel %vm821, 1, 0
  %v841 = vsel %vm822, 1, 0
  %v842 = vsel %vm823, 1, 0
  %v843 = vsel %vm824, 1, 0
  %v844 = vsel %vm825, 1, 0
  %v845 = vsel %vm826, 1, 0
  %v846 = vsel %vm827, 1, 0
  %v847 = vsel %vm828, 1, 0
  %v848 = vsel %vm829, 1, 0
  %v849 = vsel %vm830, 1, 0
  %v850 = vsel %vm831, 1, 0
  %v851 = vsel %vm832, 1, 0
  %v852 = vsel %vm833, 1, 0
  %v853 = vsel %vm834, 1, 0
  %v854 = vsel %vm835, 1, 0
  %v855 = vsel %vm836, 1, 0
  %v856 = vsel %vm837, 1, 0
  %v857 = vsel %vm838, 1, 0
  %v858 = vsel %vm839, 1, 0
  %vm859 = vcmp.eq.s32.totalorder %v840, 1
  %vm860 = vcmp.eq.s32.totalorder %v841, 1
  %vm861 = vcmp.eq.s32.totalorder %v842, 1
  %vm862 = vcmp.eq.s32.totalorder %v843, 1
  %vm863 = vcmp.eq.s32.totalorder %v844, 1
  %vm864 = vcmp.eq.s32.totalorder %v845, 1
  %vm865 = vcmp.eq.s32.totalorder %v846, 1
  %vm866 = vcmp.eq.s32.totalorder %v847, 1
  %vm867 = vcmp.eq.s32.totalorder %v848, 1
  %vm868 = vcmp.eq.s32.totalorder %v849, 1
  %vm869 = vcmp.eq.s32.totalorder %v850, 1
  %vm870 = vcmp.eq.s32.totalorder %v851, 1
  %vm871 = vcmp.eq.s32.totalorder %v852, 1
  %vm872 = vcmp.eq.s32.totalorder %v853, 1
  %vm873 = vcmp.eq.s32.totalorder %v854, 1
  %vm874 = vcmp.eq.s32.totalorder %v855, 1
  %vm875 = vcmp.eq.s32.totalorder %v856, 1
  %vm876 = vcmp.eq.s32.totalorder %v857, 1
  %vm877 = vcmp.eq.s32.totalorder %v858, 1
  %v878 = vsel %vm859, %v761, 0.0
  %v879 = vsel %vm860, %v762, 0.0
  %v880 = vsel %vm861, %v763, 0.0
  %v881 = vsel %vm862, %v764, 0.0
  %v882 = vsel %vm863, %v765, 0.0
  %v883 = vsel %vm864, %v766, 0.0
  %v884 = vsel %vm865, %v767, 0.0
  %v885 = vsel %vm866, %v768, 0.0
  %v886 = vsel %vm867, %v769, 0.0
  %v887 = vsel %vm868, %v770, 0.0
  %v888 = vsel %vm869, %v771, 0.0
  %v889 = vsel %vm870, %v772, 0.0
  %v890 = vsel %vm871, %v773, 0.0
  %v891 = vsel %vm872, %v774, 0.0
  %v892 = vsel %vm873, %v775, 0.0
  %v893 = vsel %vm874, %v776, 0.0
  %v894 = vsel %vm875, %v777, 0.0
  %v895 = vsel %vm876, %v778, 0.0
  %v896 = vsel %vm877, %v779, 0.0
  %vm897 = vcmask 64512
  %v898 = vsel %vm897, %v878, 0.0
  %v899 = vsel %vm897, %v879, 0.0
  %v900 = vadd.f32 %v898, %v899
  %v901 = vsel %vm897, %v880, 0.0
  %v902 = vadd.f32 %v900, %v901
  %v903 = vsel %vm897, %v881, 0.0
  %v904 = vadd.f32 %v902, %v903
  %v905 = vsel %vm897, %v882, 0.0
  %v906 = vadd.f32 %v904, %v905
  %v907 = vsel %vm897, %v883, 0.0
  %v908 = vadd.f32 %v906, %v907
  %v909 = vsel %vm897, %v884, 0.0
  %v910 = vadd.f32 %v908, %v909
  %v911 = vsel %vm897, %v885, 0.0
  %v912 = vadd.f32 %v910, %v911
  %v913 = vsel %vm897, %v886, 0.0
  %v914 = vadd.f32 %v912, %v913
  %v915 = vsel %vm897, %v887, 0.0
  %v916 = vadd.f32 %v914, %v915
  %v917 = vsel %vm897, %v888, 0.0
  %v918 = vadd.f32 %v916, %v917
  %v919 = vsel %vm897, %v889, 0.0
  %v920 = vadd.f32 %v918, %v919
  %v921 = vsel %vm897, %v890, 0.0
  %v922 = vadd.f32 %v920, %v921
  %v923 = vsel %vm897, %v891, 0.0
  %v924 = vadd.f32 %v922, %v923
  %v925 = vsel %vm897, %v892, 0.0
  %v926 = vadd.f32 %v924, %v925
  %v927 = vsel %vm897, %v893, 0.0
  %v928 = vadd.f32 %v926, %v927
  %v929 = vsel %vm897, %v894, 0.0
  %v930 = vadd.f32 %v928, %v929
  %v931 = vsel %vm897, %v895, 0.0
  %v932 = vadd.f32 %v930, %v931
  %v933 = vsel %vm897, %v896, 0.0
  %v934 = vadd.f32 %v932, %v933
  %v935 = vrot.slane %v934, 4
  %v936 = vadd.f32 %v934, %v935
  %v937 = vrot.slane %v936, 2
  %v938 = vadd.f32 %v936, %v937
  %v939 = vrot.slane %v938, 1
  %v940 = vadd.f32 %v938, %v939
  %vm941 = vcmask 57344
  %942 = vst.msk [vmem:[%s7] sm:$0x1] %vm941, %v940
  %v943 = vmul.f32 %v878, %v878
  %v944 = vmul.f32 %v879, %v879
  %v945 = vmul.f32 %v880, %v880
  %v946 = vmul.f32 %v881, %v881
  %v947 = vmul.f32 %v882, %v882
  %v948 = vmul.f32 %v883, %v883
  %v949 = vmul.f32 %v884, %v884
  %v950 = vmul.f32 %v885, %v885
  %v951 = vmul.f32 %v886, %v886
  %v952 = vmul.f32 %v887, %v887
  %v953 = vmul.f32 %v888, %v888
  %v954 = vmul.f32 %v889, %v889
  %v955 = vmul.f32 %v890, %v890
  %v956 = vmul.f32 %v891, %v891
  %v957 = vmul.f32 %v892, %v892
  %v958 = vmul.f32 %v893, %v893
  %v959 = vmul.f32 %v894, %v894
  %v960 = vmul.f32 %v895, %v895
  %v961 = vmul.f32 %v896, %v896
  %v962 = vsel %vm897, %v943, 0.0
  %v963 = vsel %vm897, %v944, 0.0
  %v964 = vadd.f32 %v962, %v963
  %v965 = vsel %vm897, %v945, 0.0
  %v966 = vadd.f32 %v964, %v965
  %v967 = vsel %vm897, %v946, 0.0
  %v968 = vadd.f32 %v966, %v967
  %v969 = vsel %vm897, %v947, 0.0
  %v970 = vadd.f32 %v968, %v969
  %v971 = vsel %vm897, %v948, 0.0
  %v972 = vadd.f32 %v970, %v971
  %v973 = vsel %vm897, %v949, 0.0
  %v974 = vadd.f32 %v972, %v973
  %v975 = vsel %vm897, %v950, 0.0
  %v976 = vadd.f32 %v974, %v975
  %v977 = vsel %vm897, %v951, 0.0
  %v978 = vadd.f32 %v976, %v977
  %v979 = vsel %vm897, %v952, 0.0
  %v980 = vadd.f32 %v978, %v979
  %v981 = vsel %vm897, %v953, 0.0
  %v982 = vadd.f32 %v980, %v981
  %v983 = vsel %vm897, %v954, 0.0
  %v984 = vadd.f32 %v982, %v983
  %v985 = vsel %vm897, %v955, 0.0
  %v986 = vadd.f32 %v984, %v985
  %v987 = vsel %vm897, %v956, 0.0
  %v988 = vadd.f32 %v986, %v987
  %v989 = vsel %vm897, %v957, 0.0
  %v990 = vadd.f32 %v988, %v989
  %v991 = vsel %vm897, %v958, 0.0
  %v992 = vadd.f32 %v990, %v991
  %v993 = vsel %vm897, %v959, 0.0
  %v994 = vadd.f32 %v992, %v993
  %v995 = vsel %vm897, %v960, 0.0
  %v996 = vadd.f32 %v994, %v995
  %v997 = vsel %vm897, %v961, 0.0
  %v998 = vadd.f32 %v996, %v997
  %v999 = vrot.slane %v998, 4
  %v1000 = vadd.f32 %v998, %v999
  %v1001 = vrot.slane %v1000, 2
  %v1002 = vadd.f32 %v1000, %v1001
  %v1003 = vrot.slane %v1002, 1
  %v1004 = vadd.f32 %v1002, %v1003
  %1005 = vst.msk [vmem:[%s8] sm:$0x1] %vm941, %v1004
  %v1006 = vpack.c.bf16 %v879, %v878
  %v1007 = vpack.c.bf16 %v881, %v880
  %v1008 = vpack.c.bf16 %v883, %v882
  %v1009 = vpack.c.bf16 %v885, %v884
  %v1010 = vpack.c.bf16 %v887, %v886
  %v1011 = vpack.c.bf16 %v889, %v888
  %v1012 = vpack.c.bf16 %v891, %v890
  %v1013 = vpack.c.bf16 %v893, %v892
  %v1014 = vpack.c.bf16 %v895, %v894
  %v1015 = vpack.c.bf16 %v896, %v896
  %v1026 = vunpack.c.l.b16 %v1006
  %v1027 = vunpack.c.h.b16 %v1006
  %v1028 = vunpack.c.l.b16 %v1007
  %v1029 = vunpack.c.h.b16 %v1007
  %v1030 = vunpack.c.l.b16 %v1008
  %v1031 = vunpack.c.h.b16 %v1008
  %v1032 = vunpack.c.l.b16 %v1009
  %v1033 = vunpack.c.h.b16 %v1009
  %v1034 = vunpack.c.l.b16 %v1010
  %v1035 = vunpack.c.h.b16 %v1010
  %v1036 = vunpack.c.l.b16 %v1011
  %v1037 = vunpack.c.h.b16 %v1011
  %v1038 = vunpack.c.l.b16 %v1012
  %v1039 = vunpack.c.h.b16 %v1012
  %v1040 = vunpack.c.l.b16 %v1013
  %v1041 = vunpack.c.h.b16 %v1013
  %v1042 = vunpack.c.l.b16 %v1014
  %v1043 = vunpack.c.h.b16 %v1014
  %v1044 = vunpack.c.l.b16 %v1015
  %v1045 = vpack.c.b16 %v1026, %v1026
  %v1046 = vpack.c.b16 %v1027, %v1027
  %v1047 = vpack.c.b16 %v1028, %v1028
  %v1048 = vpack.c.b16 %v1029, %v1029
  %v1049 = vpack.c.b16 %v1030, %v1030
  %v1050 = vpack.c.b16 %v1031, %v1031
  %v1051 = vpack.c.b16 %v1032, %v1032
  %v1052 = vpack.c.b16 %v1033, %v1033
  %v1053 = vpack.c.b16 %v1034, %v1034
  %v1054 = vpack.c.b16 %v1035, %v1035
  %v1055 = vpack.c.b16 %v1036, %v1036
  %v1056 = vpack.c.b16 %v1037, %v1037
  %v1057 = vpack.c.b16 %v1038, %v1038
  %v1058 = vpack.c.b16 %v1039, %v1039
  %v1059 = vpack.c.b16 %v1040, %v1040
  %v1060 = vpack.c.b16 %v1041, %v1041
  %v1061 = vpack.c.b16 %v1042, %v1042
  %v1062 = vpack.c.b16 %v1043, %v1043
  %v1063 = vpack.c.b16 %v1044, %v1044
  %vm1083 = vcmask 60416
  %1084 = vst.msk [vmem:[%s6] sm:$0xf] %vm1083, %v1045
  %1085 = vst.msk [vmem:[%s6 + $0x4] sm:$0xf] %vm1083, %v1046
  %1086 = vst.msk [vmem:[%s6 + $0x8] sm:$0xf] %vm1083, %v1047
  %1087 = vst.msk [vmem:[%s6 + $0xc] sm:$0xf] %vm1083, %v1048
  %1088 = vst.msk [vmem:[%s6 + $0x10] sm:$0xf] %vm1083, %v1049
  %1089 = vst.msk [vmem:[%s6 + $0x14] sm:$0xf] %vm1083, %v1050
  %1090 = vst.msk [vmem:[%s6 + $0x18] sm:$0xf] %vm1083, %v1051
  %1091 = vst.msk [vmem:[%s6 + $0x1c] sm:$0xf] %vm1083, %v1052
  %1092 = vst.msk [vmem:[%s6 + $0x20] sm:$0xf] %vm1083, %v1053
  %1093 = vst.msk [vmem:[%s6 + $0x24] sm:$0xf] %vm1083, %v1054
  %1094 = vst.msk [vmem:[%s6 + $0x28] sm:$0xf] %vm1083, %v1055
  %1095 = vst.msk [vmem:[%s6 + $0x2c] sm:$0xf] %vm1083, %v1056
  %1096 = vst.msk [vmem:[%s6 + $0x30] sm:$0xf] %vm1083, %v1057
  %1097 = vst.msk [vmem:[%s6 + $0x34] sm:$0xf] %vm1083, %v1058
  %1098 = vst.msk [vmem:[%s6 + $0x38] sm:$0xf] %vm1083, %v1059
  %1099 = vst.msk [vmem:[%s6 + $0x3c] sm:$0xf] %vm1083, %v1060
  %1100 = vst.msk [vmem:[%s6 + $0x40] sm:$0xf] %vm1083, %v1061
  %1101 = vst.msk [vmem:[%s6 + $0x44] sm:$0xf] %vm1083, %v1062
  %1102 = vst.msk [vmem:[%s6 + $0x48] sm:$0xf] %vm1083, %v1063
  // Predicated region
  $region26: #{motion_prediction_forward.13} parent=0 // pred_check
    _
  $region27: #{motion_prediction_forward.13} parent=0 // pred_check_branch
    %1104 = sbr.rel (0) target = $region29
  $region28: #{motion_prediction_forward.13} parent=0 // pred_region
    _
  $region29: #{motion_prediction_forward.13} parent=0 // pred_fallthru
    _
  // Predicated region
  $region30: #{motion_prediction_forward.13} parent=0 // pred_check
    _
  $region31: #{motion_prediction_forward.13} parent=0 // pred_check_branch
    %1106 = sbr.rel (0) target = $region33
  $region32: #{motion_prediction_forward.13} parent=0 // pred_region
    _
  $region33: #{motion_prediction_forward.13} parent=0 // pred_fallthru
    _
  // Predicated region
  $region34: #{motion_prediction_forward.13} parent=0 // pred_check
    _
  $region35: #{motion_prediction_forward.13} parent=0 // pred_check_branch
    %1108 = sbr.rel (0) target = $region37
  $region36: #{motion_prediction_forward.13} parent=0 // pred_region
    _
  $region37: #{motion_prediction_forward.13} parent=0 // pred_fallthru
    _
  // Predicated region
  $region38: #{motion_prediction_forward.13} parent=0 // pred_check
    _
  $region39: #{motion_prediction_forward.13} parent=0 // pred_check_branch
    %1110 = sbr.rel (0) target = $region41
  $region40: #{motion_prediction_forward.13} parent=0 // pred_region
    _
  $region41: #{motion_prediction_forward.13} parent=0 // pred_fallthru
    _
  // Predicated region
  $region42: #{motion_prediction_forward.13} parent=0 // pred_check
    _
  $region43: #{motion_prediction_forward.13} parent=0 // pred_check_branch
    %1112 = sbr.rel (0) target = $region45
  $region44: #{motion_prediction_forward.13} parent=0 // pred_region
    _
  $region45: #{motion_prediction_forward.13} parent=0 // pred_fallthru
    _
  // Predicated region
  $region46: #{motion_prediction_forward.13} parent=0 // pred_check
    _
  $region47: #{motion_prediction_forward.13} parent=0 // pred_check_branch
    %1114 = sbr.rel (0) target = $region49
  $region48: #{motion_prediction_forward.13} parent=0 // pred_region
    _
  $region49: #{motion_prediction_forward.13} parent=0 // pred_fallthru
    _

// kernel: tile.107
$region0: #{tile.107}
  #allocation0 [shape = 's32[1]{0}', space=sflag, size = 0x4, scoped, tag = 'scoped memory for tile.107']
  %s0 = inlined_call_operand.vmem [shape: f32[8], index: 0, kind: input, shape index: {}]
  %s1 = inlined_call_operand.vmem [shape: f32[8,8], index: 1, kind: output, shape index: {}]
  // Predicated region
  $region2: #{tile.107} parent=0 // pred_check
    _
  $region3: #{tile.107} parent=0 // pred_check_branch
    %3 = sbr.rel (0) target = $region5
  $region4: #{tile.107} parent=0 // pred_region
    _
  $region5: #{tile.107} parent=0 // pred_fallthru
    _
  %v4 = vld [vmem:[%s0] ss:$0 sm:$0xff]
  %5 = vst [vmem:[%s1] sm:$0xff] %v4

// kernel: tile.108
$region0: #{tile.108}
  %s0 = inlined_call_operand.vmem [shape: f32[8,8], index: 0, kind: input, shape index: {}]
  %s1 = inlined_call_operand.vmem [shape: f32[1,64], index: 1, kind: output, shape index: {}]
  $region1: #{tile.108} parent=0
    #allocation0 [shape = 'u8[4096]{0}', space=vmem, size = 0x1000, scoped, tag = 'scoped mem for output reshape']
    %v2 = vld [vmem:[%s0] sm:$0x1]
    %vm3 = vcmask 64512
    %4 = vst.msk [vmem:[#allocation0] sm:$0x1] %vm3, %v2
    %s5 = scalar_lea.vmem %s0, 7
    %v6 = vld [vmem:[%s5] sm:$0x1]
    %7 = vrot.lane.b32.xlu0 %v6, 56
    %v8 = vpop.permute.xlu0 %7
    %vm9 = vcmask 523712
    %10 = vst.msk [vmem:[#allocation0] sm:$0x1] %vm9, %v8
    %s11 = scalar_lea.vmem %s0, 6
    %v12 = vld [vmem:[%s11] sm:$0x1]
    %13 = vrot.lane.b32.xlu0 %v12, 48
    %v14 = vpop.permute.xlu0 %13
    %vm15 = vcmask 458112
    %16 = vst.msk [vmem:[#allocation0] sm:$0x1] %vm15, %v14
    %s17 = scalar_lea.vmem %s0, 5
    %v18 = vld [vmem:[%s17] sm:$0x1]
    %19 = vrot.lane.b32.xlu0 %v18, 40
    %v20 = vpop.permute.xlu0 %19
    %vm21 = vcmask 392512
    %22 = vst.msk [vmem:[#allocation0] sm:$0x1] %vm21, %v20
    %s23 = scalar_lea.vmem %s0, 4
    %v24 = vld [vmem:[%s23] sm:$0x1]
    %25 = vrot.lane.b32.xlu0 %v24, 32
    %v26 = vpop.permute.xlu0 %25
    %vm27 = vcmask 326912
    %28 = vst.msk [vmem:[#allocation0] sm:$0x1] %vm27, %v26
    %s29 = scalar_lea.vmem %s0, 3
    %v30 = vld [vmem:[%s29] sm:$0x1]
    %31 = vrot.lane.b32.xlu0 %v30, 24
    %v32 = vpop.permute.xlu0 %31
    %vm33 = vcmask 261312
    %34 = vst.msk [vmem:[#allocation0] sm:$0x1] %vm33, %v32
    %s35 = scalar_lea.vmem %s0, 2
    %v36 = vld [vmem:[%s35] sm:$0x1]
    %37 = vrot.lane.b32.xlu0 %v36, 16
    %v38 = vpop.permute.xlu0 %37
    %vm39 = vcmask 195712
    %40 = vst.msk [vmem:[#allocation0] sm:$0x1] %vm39, %v38
    %s41 = scalar_lea.vmem %s0, 1
    %v42 = vld [vmem:[%s41] sm:$0x1]
    %43 = vrot.lane.b32.xlu0 %v42, 8
    %v44 = vpop.permute.xlu0 %43
    %vm45 = vcmask 130112
    %46 = vst.msk [vmem:[#allocation0] sm:$0x1] %vm45, %v44
    %s48 = sshllo.u32 0, 1
    %v50 = vld [vmem:[#allocation0] sm:%s48]
    %s51 = sshllo.u32 0, 1
    %52 = vst [vmem:[%s1] sm:%s51] %v50

// kernel: motion_prediction_forward.15
$region0: #{motion_prediction_forward.15}
  #allocation0 [shape = 'u32[]', space=smem, size = 0x4, offset = 0x4, fixed_abs, tag = 'smem constant byte address 0x4 - core index']
  #allocation1 [shape = 'u32[144,128]{1,0:T(1,128)}', space=vmem, size = 0x12000, scoped, tag = 'internal scratch']
  %s0 = inlined_call_operand.vmem [shape: bf16[56,64], index: 0, kind: input, shape index: {}]
  %s1 = inlined_call_operand.vmem [shape: bf16[56,8], index: 1, kind: input, shape index: {}]
  %s2 = inlined_call_operand.vmem [shape: f32[1,64], index: 2, kind: input, shape index: {}]
  %s3 = inlined_call_operand.vmem [shape: f32[1,64], index: 3, kind: input, shape index: {}]
  %s4 = inlined_call_operand.vmem [shape: bf16[64,8], index: 4, kind: input, shape index: {}]
  %s5 = inlined_call_operand.vmem [shape: f32[8,8], index: 5, kind: input, shape index: {}]
  %s6 = inlined_call_operand.vmem [shape: bf16[56,8], index: 6, kind: output, shape index: {0}]
  %s7 = inlined_call_operand.vmem [shape: f32[1,1,8], index: 7, kind: output, shape index: {1}]
  %s8 = inlined_call_operand.vmem [shape: f32[1,1,8], index: 8, kind: output, shape index: {2}]
  %9 = xla_tuple %s6, %s7, %s8
  %s10 = sld [smem:[#allocation0]]
  $region50: #{motion_prediction_forward.15} parent=0
    _
  %s12 = ssub.s32 1, %s10
  %s13 = scalar_select 0, %s12, %s10
  // Predicated region
  $region2: #{motion_prediction_forward.15} parent=0 // pred_check
    _
  $region3: #{motion_prediction_forward.15} parent=0 // pred_check_branch
    %15 = sbr.rel (0) target = $region5
  $region4: #{motion_prediction_forward.15} parent=0 // pred_region
    _
  $region5: #{motion_prediction_forward.15} parent=0 // pred_fallthru
    _
  // Predicated region
  $region6: #{motion_prediction_forward.15} parent=0 // pred_check
    _
  $region7: #{motion_prediction_forward.15} parent=0 // pred_check_branch
    %17 = sbr.rel (0) target = $region9
  $region8: #{motion_prediction_forward.15} parent=0 // pred_region
    _
  $region9: #{motion_prediction_forward.15} parent=0 // pred_fallthru
    _
  // Predicated region
  $region10: #{motion_prediction_forward.15} parent=0 // pred_check
    _
  $region11: #{motion_prediction_forward.15} parent=0 // pred_check_branch
    %19 = sbr.rel (0) target = $region13
  $region12: #{motion_prediction_forward.15} parent=0 // pred_region
    _
  $region13: #{motion_prediction_forward.15} parent=0 // pred_fallthru
    _
  // Predicated region
  $region14: #{motion_prediction_forward.15} parent=0 // pred_check
    _
  $region15: #{motion_prediction_forward.15} parent=0 // pred_check_branch
    %21 = sbr.rel (0) target = $region17
  $region16: #{motion_prediction_forward.15} parent=0 // pred_region
    _
  $region17: #{motion_prediction_forward.15} parent=0 // pred_fallthru
    _
  // Predicated region
  $region18: #{motion_prediction_forward.15} parent=0 // pred_check
    _
  $region19: #{motion_prediction_forward.15} parent=0 // pred_check_branch
    %23 = sbr.rel (0) target = $region21
  $region20: #{motion_prediction_forward.15} parent=0 // pred_region
    _
  $region21: #{motion_prediction_forward.15} parent=0 // pred_fallthru
    _
  // Predicated region
  $region22: #{motion_prediction_forward.15} parent=0 // pred_check
    _
  $region23: #{motion_prediction_forward.15} parent=0 // pred_check_branch
    %25 = sbr.rel (0) target = $region25
  $region24: #{motion_prediction_forward.15} parent=0 // pred_region
    _
  $region25: #{motion_prediction_forward.15} parent=0 // pred_fallthru
    _
  %v27 = vld [vmem:[%s0] sm:$0xf]
  %v28 = vld [vmem:[%s0 + $0x4] sm:$0xf]
  %v29 = vld [vmem:[%s0 + $0x8] sm:$0xf]
  %v30 = vld [vmem:[%s0 + $0xc] sm:$0xf]
  %v31 = vld [vmem:[%s0 + $0x10] sm:$0xf]
  %v32 = vld [vmem:[%s0 + $0x14] sm:$0xf]
  %v33 = vld [vmem:[%s0 + $0x18] sm:$0xf]
  %v34 = vunpack.c.l.bf16 %v27
  %v35 = vunpack.c.l.bf16 %v28
  %v36 = vunpack.c.l.bf16 %v29
  %v37 = vunpack.c.l.bf16 %v30
  %v38 = vunpack.c.l.bf16 %v31
  %v39 = vunpack.c.l.bf16 %v32
  %v40 = vunpack.c.l.bf16 %v33
  %v41 = vld [vmem:[%s2] sm:$0x1]
  %v43 = vlaneseq
  %v44 = vshrl.u32 %v43, 7
  %v45 = vsub.s32 0, %v44
  %v46 = vrot.slane %v41, %v45
  %v48 = vmul.f32 %v34, %v46
  %v49 = vmul.f32 %v35, %v46
  %v50 = vmul.f32 %v36, %v46
  %v51 = vmul.f32 %v37, %v46
  %v52 = vmul.f32 %v38, %v46
  %v53 = vmul.f32 %v39, %v46
  %v54 = vmul.f32 %v40, %v46
  %v55 = vld [vmem:[%s3] sm:$0x1]
  %v57 = vlaneseq
  %v58 = vshrl.u32 %v57, 7
  %v59 = vsub.s32 0, %v58
  %v60 = vrot.slane %v55, %v59
  %v62 = vadd.f32 %v48, %v60
  %v63 = vadd.f32 %v49, %v60
  %v64 = vadd.f32 %v50, %v60
  %v65 = vadd.f32 %v51, %v60
  %v66 = vadd.f32 %v52, %v60
  %v67 = vadd.f32 %v53, %v60
  %v68 = vadd.f32 %v54, %v60
  %v69 = vmax.f32 %v62, 0.0
  %v70 = vmax.f32 %v63, 0.0
  %v71 = vmax.f32 %v64, 0.0
  %v72 = vmax.f32 %v65, 0.0
  %v73 = vmax.f32 %v66, 0.0
  %v74 = vmax.f32 %v67, 0.0
  %v75 = vmax.f32 %v68, 0.0
  %v76 = vpack.c.bf16 %v70, %v69
  %v77 = vpack.c.bf16 %v72, %v71
  %v78 = vpack.c.bf16 %v74, %v73
  %v79 = vpack.c.bf16 %v75, %v75
  %v80 = vld [vmem:[%s4] sm:$0xf]
  %v81 = vld [vmem:[%s4 + $0x4] sm:$0xf]
  %v82 = vld [vmem:[%s4 + $0x8] sm:$0xf]
  %v83 = vld [vmem:[%s4 + $0xc] sm:$0xf]
  %v84 = vld [vmem:[%s4 + $0x10] sm:$0xf]
  %v85 = vld [vmem:[%s4 + $0x14] sm:$0xf]
  %v86 = vld [vmem:[%s4 + $0x18] sm:$0xf]
  %v87 = vld [vmem:[%s4 + $0x1c] sm:$0xf]
  %v96 = vunpack.c.l.b16 %v80
  %v97 = vunpack.c.l.b16 %v81
  %v98 = vunpack.c.l.b16 %v82
  %v99 = vunpack.c.l.b16 %v83
  %v100 = vunpack.c.l.b16 %v84
  %v101 = vunpack.c.l.b16 %v85
  %v102 = vunpack.c.l.b16 %v86
  %v103 = vunpack.c.l.b16 %v87
  %v104 = vpack.c.b16 %v97, %v96
  %v105 = vpack.c.b16 %v99, %v98
  %v106 = vpack.c.b16 %v101, %v100
  %v107 = vpack.c.b16 %v103, %v102
  %vm112 = vcmask 523264
  %v114 = vsel %vm112, %v76, 0
  %v117 = vsel %vm112, %v77, 0
  %v120 = vsel %vm112, %v78, 0
  %v123 = vsel %vm112, %v79, 0
  %125 = vmatprep.subr.bf16.mxu0 0
  %126 = vmatpush1.bf16.msra.mxu0 %v104
  %127 = vmatprep.subr.bf16.mxu0 0
  %128 = vmatpush1.bf16.msra.mxu0 %v105
  %129 = vmatprep.subr.bf16.mxu0 0
  %130 = vmatpush1.bf16.msra.mxu0 %v106
  %131 = vmatprep.subr.bf16.mxu0 0
  %132 = vmatpush1.bf16.msra.mxu0 %v107
  %133 = vmatprep.subr.bf16.mxu0 0
  %134 = vmatpush1.bf16.msra.mxu0 0
  %135 = vmatprep.subr.bf16.mxu0 0
  %136 = vmatpush1.bf16.msra.mxu0 0
  %137 = vmatprep.subr.bf16.mxu0 0
  %138 = vmatpush1.bf16.msra.mxu0 0
  %139 = vmatprep.subr.bf16.mxu0 0
  %140 = vmatpush1.bf16.msra.mxu0 0
  %141 = vmatprep.subr.bf16.mxu0 0
  %142 = vmatpush1.bf16.msra.mxu0 0
  %143 = vmatprep.subr.bf16.mxu0 0
  %144 = vmatpush1.bf16.msra.mxu0 0
  %145 = vmatprep.subr.bf16.mxu0 0
  %146 = vmatpush1.bf16.msra.mxu0 0
  %147 = vmatprep.subr.bf16.mxu0 0
  %148 = vmatpush1.bf16.msra.mxu0 0
  %149 = vmatprep.subr.bf16.mxu0 0
  %150 = vmatpush1.bf16.msra.mxu0 0
  %151 = vmatprep.subr.bf16.mxu0 0
  %152 = vmatpush1.bf16.msra.mxu0 0
  %153 = vmatprep.subr.bf16.mxu0 0
  %154 = vmatpush1.bf16.msra.mxu0 0
  %155 = vmatprep.subr.bf16.mxu0 0
  %156 = vmatpush1.bf16.msra.mxu0 0
  %157 = vmatprep.mubr.bf16.mxu0 0
  %158 = vmatmul.mubr.bf16.gmra.mrb[0].mxu0 %v114
  %v159 = vpop.f32.mrb[0].mxu0
  %v160 = vadd.f32 0.0, %v159
  %v161 = vpop.f32.mrb[0].mxu0
  %v162 = vpop.f32.mrb[0].mxu0
  %v163 = vadd.f32 0.0, %v162
  %v164 = vpop.f32.mrb[0].mxu0
  %165 = vmatprep.mubr.bf16.mxu0 0
  %166 = vmatmul.mubr.bf16.gmra.mrb[0].mxu0 %v117
  %v167 = vpop.f32.mrb[0].mxu0
  %v168 = vadd.f32 0.0, %v167
  %v169 = vpop.f32.mrb[0].mxu0
  %v170 = vpop.f32.mrb[0].mxu0
  %v171 = vadd.f32 0.0, %v170
  %v172 = vpop.f32.mrb[0].mxu0
  %173 = vmatprep.mubr.bf16.mxu0 0
  %174 = vmatmul.mubr.bf16.gmra.mrb[0].mxu0 %v120
  %v175 = vpop.f32.mrb[0].mxu0
  %v176 = vadd.f32 0.0, %v175
  %v177 = vpop.f32.mrb[0].mxu0
  %v178 = vpop.f32.mrb[0].mxu0
  %v179 = vadd.f32 0.0, %v178
  %v180 = vpop.f32.mrb[0].mxu0
  %181 = vmatprep.mubr.bf16.mxu0 0
  %182 = vmatmul.mubr.bf16.gmra.mrb[0].mxu0 %v123
  %v183 = vpop.f32.mrb[0].mxu0
  %v184 = vadd.f32 0.0, %v183
  %v185 = vpop.f32.mrb[0].mxu0
  %v186 = vpop.f32.mrb[0].mxu0
  %v187 = vpop.f32.mrb[0].mxu0
  %188 = vdwg.mxu0
  %v189 = vld [vmem:[%s1] sm:$0xf]
  %v190 = vld [vmem:[%s1 + $0x4] sm:$0xf]
  %v191 = vld [vmem:[%s1 + $0x8] sm:$0xf]
  %v192 = vld [vmem:[%s1 + $0xc] sm:$0xf]
  %v193 = vld [vmem:[%s1 + $0x10] sm:$0xf]
  %v194 = vld [vmem:[%s1 + $0x14] sm:$0xf]
  %v195 = vld [vmem:[%s1 + $0x18] sm:$0xf]
  %v196 = vunpack.c.l.bf16 %v189
  %v197 = vunpack.c.l.bf16 %v190
  %v198 = vunpack.c.l.bf16 %v191
  %v199 = vunpack.c.l.bf16 %v192
  %v200 = vunpack.c.l.bf16 %v193
  %v201 = vunpack.c.l.bf16 %v194
  %v202 = vunpack.c.l.bf16 %v195
  %v203 = vld [vmem:[%s5] sm:$0xff]
  %vm204 = vcmask 64512
  %v206 = vsel %vm204, %v196, 0
  %v209 = vsel %vm204, %v197, 0
  %v212 = vsel %vm204, %v198, 0
  %v215 = vsel %vm204, %v199, 0
  %v218 = vsel %vm204, %v200, 0
  %v221 = vsel %vm204, %v201, 0
  %v224 = vsel %vm204, %v202, 0
  %226 = vmatprep.subr.mxu0 0.0
  %227 = vmatpush1.msra.mxu0 %v203
  %228 = vmatprep.subr.mxu0 0.0
  %229 = vmatpush1.msra.mxu0 0.0
  %230 = vmatprep.subr.mxu0 0.0
  %231 = vmatpush1.msra.mxu0 0.0
  %232 = vmatprep.subr.mxu0 0.0
  %233 = vmatpush1.msra.mxu0 0.0
  %234 = vmatprep.subr.mxu0 0.0
  %235 = vmatpush1.msra.mxu0 0.0
  %236 = vmatprep.subr.mxu0 0.0
  %237 = vmatpush1.msra.mxu0 0.0
  %238 = vmatprep.subr.mxu0 0.0
  %239 = vmatpush1.msra.mxu0 0.0
  %240 = vmatprep.subr.mxu0 0.0
  %241 = vmatpush1.msra.mxu0 0.0
  %242 = vmatprep.subr.mxu0 0.0
  %243 = vmatpush1.msra.mxu0 0.0
  %244 = vmatprep.subr.mxu0 0.0
  %245 = vmatpush1.msra.mxu0 0.0
  %246 = vmatprep.subr.mxu0 0.0
  %247 = vmatpush1.msra.mxu0 0.0
  %248 = vmatprep.subr.mxu0 0.0
  %249 = vmatpush1.msra.mxu0 0.0
  %250 = vmatprep.subr.mxu0 0.0
  %251 = vmatpush1.msra.mxu0 0.0
  %252 = vmatprep.subr.mxu0 0.0
  %253 = vmatpush1.msra.mxu0 0.0
  %254 = vmatprep.subr.mxu0 0.0
  %255 = vmatpush1.msra.mxu0 0.0
  %256 = vmatprep.subr.mxu0 0.0
  %257 = vmatpush1.msra.mxu0 0.0
  %258 = vmatprep.subr.mxu0 0.0
  %259 = vmatpush1.msra.mxu0 0.0
  %260 = vmatprep.subr.mxu0 0.0
  %261 = vmatpush1.msra.mxu0 0.0
  %262 = vmatprep.subr.mxu0 0.0
  %263 = vmatpush1.msra.mxu0 0.0
  %264 = vmatprep.subr.mxu0 0.0
  %265 = vmatpush1.msra.mxu0 0.0
  %266 = vmatprep.subr.mxu0 0.0
  %267 = vmatpush1.msra.mxu0 0.0
  %268 = vmatprep.subr.mxu0 0.0
  %269 = vmatpush1.msra.mxu0 0.0
  %270 = vmatprep.subr.mxu0 0.0
  %271 = vmatpush1.msra.mxu0 0.0
  %272 = vmatprep.subr.mxu0 0.0
  %273 = vmatpush1.msra.mxu0 0.0
  %274 = vmatprep.subr.mxu0 0.0
  %275 = vmatpush1.msra.mxu0 0.0
  %276 = vmatprep.subr.mxu0 0.0
  %277 = vmatpush1.msra.mxu0 0.0
  %278 = vmatprep.subr.mxu0 0.0
  %279 = vmatpush1.msra.mxu0 0.0
  %280 = vmatprep.subr.mxu0 0.0
  %281 = vmatpush1.msra.mxu0 0.0
  %282 = vmatprep.subr.mxu0 0.0
  %283 = vmatpush1.msra.mxu0 0.0
  %284 = vmatprep.subr.mxu0 0.0
  %285 = vmatpush1.msra.mxu0 0.0
  %286 = vmatprep.subr.mxu0 0.0
  %287 = vmatpush1.msra.mxu0 0.0
  %288 = vmatprep.subr.mxu0 0.0
  %289 = vmatpush1.msra.mxu0 0.0
  %290 = vmatprep.mubr.f32.mxu0 0.0
  %291 = vmatmul.mubr.f32.gmra.mrb[0].mxu0 %v206
  %v292 = vpop.f32.mrb[0].mxu0
  %v293 = vadd.f32 0.0, %v292
  %v294 = vpop.f32.mrb[0].mxu0
  %295 = vmatprep.mubr.f32.mxu0 0.0
  %296 = vmatmul.mubr.f32.gmra.mrb[0].mxu0 %v209
  %v297 = vpop.f32.mrb[0].mxu0
  %v298 = vadd.f32 0.0, %v297
  %v299 = vpop.f32.mrb[0].mxu0
  %300 = vmatprep.mubr.f32.mxu0 0.0
  %301 = vmatmul.mubr.f32.gmra.mrb[0].mxu0 %v212
  %v302 = vpop.f32.mrb[0].mxu0
  %v303 = vadd.f32 0.0, %v302
  %v304 = vpop.f32.mrb[0].mxu0
  %305 = vmatprep.mubr.f32.mxu0 0.0
  %306 = vmatmul.mubr.f32.gmra.mrb[0].mxu0 %v215
  %v307 = vpop.f32.mrb[0].mxu0
  %v308 = vadd.f32 0.0, %v307
  %v309 = vpop.f32.mrb[0].mxu0
  %310 = vmatprep.mubr.f32.mxu0 0.0
  %311 = vmatmul.mubr.f32.gmra.mrb[0].mxu0 %v218
  %v312 = vpop.f32.mrb[0].mxu0
  %v313 = vadd.f32 0.0, %v312
  %v314 = vpop.f32.mrb[0].mxu0
  %315 = vmatprep.mubr.f32.mxu0 0.0
  %316 = vmatmul.mubr.f32.gmra.mrb[0].mxu0 %v221
  %v317 = vpop.f32.mrb[0].mxu0
  %v318 = vadd.f32 0.0, %v317
  %v319 = vpop.f32.mrb[0].mxu0
  %320 = vmatprep.mubr.f32.mxu0 0.0
  %321 = vmatmul.mubr.f32.gmra.mrb[0].mxu0 %v224
  %v322 = vpop.f32.mrb[0].mxu0
  %v323 = vadd.f32 0.0, %v322
  %v324 = vpop.f32.mrb[0].mxu0
  %325 = vdwg.mxu0
  %v326 = vsub.f32 %v160, %v293
  %v327 = vsub.f32 %v163, %v298
  %v328 = vsub.f32 %v168, %v303
  %v329 = vsub.f32 %v171, %v308
  %v330 = vsub.f32 %v176, %v313
  %v331 = vsub.f32 %v179, %v318
  %v332 = vsub.f32 %v184, %v323
  %s333 = smul.u32 0, 56
  %v334 = vlaneseq
  %v335 = vshrl.u32 %v334, 7
  %v336 = vadd.s32 %v335, 8
  %v337 = vadd.s32 %v335, 16
  %v338 = vadd.s32 %v335, 24
  %v339 = vadd.s32 %v335, 32
  %v340 = vadd.s32 %v335, 40
  %v341 = vadd.s32 %v335, 48
  %v342 = vstv %s333
  %v343 = vadd.s32 %v342, %v335
  %v344 = vadd.s32 %v342, %v336
  %v345 = vadd.s32 %v342, %v337
  %v346 = vadd.s32 %v342, %v338
  %v347 = vadd.s32 %v342, %v339
  %v348 = vadd.s32 %v342, %v340
  %v349 = vadd.s32 %v342, %v341
  %vm350 = vcmp.lt.s32.totalorder %v343, 54
  %vm351 = vcmp.lt.s32.totalorder %v344, 54
  %vm352 = vcmp.lt.s32.totalorder %v345, 54
  %vm353 = vcmp.lt.s32.totalorder %v346, 54
  %vm354 = vcmp.lt.s32.totalorder %v347, 54
  %vm355 = vcmp.lt.s32.totalorder %v348, 54
  %vm356 = vcmp.lt.s32.totalorder %v349, 54
  %v357 = vsel %vm350, 1, 0
  %v358 = vsel %vm351, 1, 0
  %v359 = vsel %vm352, 1, 0
  %v360 = vsel %vm353, 1, 0
  %v361 = vsel %vm354, 1, 0
  %v362 = vsel %vm355, 1, 0
  %v363 = vsel %vm356, 1, 0
  %vm364 = vcmp.eq.s32.totalorder %v357, 1
  %vm365 = vcmp.eq.s32.totalorder %v358, 1
  %vm366 = vcmp.eq.s32.totalorder %v359, 1
  %vm367 = vcmp.eq.s32.totalorder %v360, 1
  %vm368 = vcmp.eq.s32.totalorder %v361, 1
  %vm369 = vcmp.eq.s32.totalorder %v362, 1
  %vm370 = vcmp.eq.s32.totalorder %v363, 1
  %v371 = vsel %vm364, %v326, 0.0
  %v372 = vsel %vm365, %v327, 0.0
  %v373 = vsel %vm366, %v328, 0.0
  %v374 = vsel %vm367, %v329, 0.0
  %v375 = vsel %vm368, %v330, 0.0
  %v376 = vsel %vm369, %v331, 0.0
  %v377 = vsel %vm370, %v332, 0.0
  %v378 = vsel %vm204, %v371, 0.0
  %v379 = vsel %vm204, %v372, 0.0
  %v380 = vadd.f32 %v378, %v379
  %v381 = vsel %vm204, %v373, 0.0
  %v382 = vadd.f32 %v380, %v381
  %v383 = vsel %vm204, %v374, 0.0
  %v384 = vadd.f32 %v382, %v383
  %v385 = vsel %vm204, %v375, 0.0
  %v386 = vadd.f32 %v384, %v385
  %v387 = vsel %vm204, %v376, 0.0
  %v388 = vadd.f32 %v386, %v387
  %v389 = vsel %vm204, %v377, 0.0
  %v390 = vadd.f32 %v388, %v389
  %v391 = vrot.slane %v390, 4
  %v392 = vadd.f32 %v390, %v391
  %v393 = vrot.slane %v392, 2
  %v394 = vadd.f32 %v392, %v393
  %v395 = vrot.slane %v394, 1
  %v396 = vadd.f32 %v394, %v395
  %vm397 = vcmask 57344
  %398 = vst.msk [vmem:[%s7] sm:$0x1] %vm397, %v396
  %v399 = vmul.f32 %v371, %v371
  %v400 = vmul.f32 %v372, %v372
  %v401 = vmul.f32 %v373, %v373
  %v402 = vmul.f32 %v374, %v374
  %v403 = vmul.f32 %v375, %v375
  %v404 = vmul.f32 %v376, %v376
  %v405 = vmul.f32 %v377, %v377
  %v406 = vsel %vm204, %v399, 0.0
  %v407 = vsel %vm204, %v400, 0.0
  %v408 = vadd.f32 %v406, %v407
  %v409 = vsel %vm204, %v401, 0.0
  %v410 = vadd.f32 %v408, %v409
  %v411 = vsel %vm204, %v402, 0.0
  %v412 = vadd.f32 %v410, %v411
  %v413 = vsel %vm204, %v403, 0.0
  %v414 = vadd.f32 %v412, %v413
  %v415 = vsel %vm204, %v404, 0.0
  %v416 = vadd.f32 %v414, %v415
  %v417 = vsel %vm204, %v405, 0.0
  %v418 = vadd.f32 %v416, %v417
  %v419 = vrot.slane %v418, 4
  %v420 = vadd.f32 %v418, %v419
  %v421 = vrot.slane %v420, 2
  %v422 = vadd.f32 %v420, %v421
  %v423 = vrot.slane %v422, 1
  %v424 = vadd.f32 %v422, %v423
  %425 = vst.msk [vmem:[%s8] sm:$0x1] %vm397, %v424
  %v426 = vpack.c.bf16 %v372, %v371
  %v427 = vpack.c.bf16 %v374, %v373
  %v428 = vpack.c.bf16 %v376, %v375
  %v429 = vpack.c.bf16 %v377, %v377
  %v434 = vunpack.c.l.b16 %v426
  %v435 = vunpack.c.h.b16 %v426
  %v436 = vunpack.c.l.b16 %v427
  %v437 = vunpack.c.h.b16 %v427
  %v438 = vunpack.c.l.b16 %v428
  %v439 = vunpack.c.h.b16 %v428
  %v440 = vunpack.c.l.b16 %v429
  %v441 = vpack.c.b16 %v434, %v434
  %v442 = vpack.c.b16 %v435, %v435
  %v443 = vpack.c.b16 %v436, %v436
  %v444 = vpack.c.b16 %v437, %v437
  %v445 = vpack.c.b16 %v438, %v438
  %v446 = vpack.c.b16 %v439, %v439
  %v447 = vpack.c.b16 %v440, %v440
  %vm455 = vcmask 60416
  %456 = vst.msk [vmem:[%s6] sm:$0xf] %vm455, %v441
  %457 = vst.msk [vmem:[%s6 + $0x4] sm:$0xf] %vm455, %v442
  %458 = vst.msk [vmem:[%s6 + $0x8] sm:$0xf] %vm455, %v443
  %459 = vst.msk [vmem:[%s6 + $0xc] sm:$0xf] %vm455, %v444
  %460 = vst.msk [vmem:[%s6 + $0x10] sm:$0xf] %vm455, %v445
  %461 = vst.msk [vmem:[%s6 + $0x14] sm:$0xf] %vm455, %v446
  %462 = vst.msk [vmem:[%s6 + $0x18] sm:$0xf] %vm455, %v447
  // Predicated region
  $region26: #{motion_prediction_forward.15} parent=0 // pred_check
    _
  $region27: #{motion_prediction_forward.15} parent=0 // pred_check_branch
    %464 = sbr.rel (0) target = $region29
  $region28: #{motion_prediction_forward.15} parent=0 // pred_region
    _
  $region29: #{motion_prediction_forward.15} parent=0 // pred_fallthru
    _
  // Predicated region
  $region30: #{motion_prediction_forward.15} parent=0 // pred_check
    _
  $region31: #{motion_prediction_forward.15} parent=0 // pred_check_branch
    %466 = sbr.rel (0) target = $region33
  $region32: #{motion_prediction_forward.15} parent=0 // pred_region
    _
  $region33: #{motion_prediction_forward.15} parent=0 // pred_fallthru
    _
  // Predicated region
  $region34: #{motion_prediction_forward.15} parent=0 // pred_check
    _
  $region35: #{motion_prediction_forward.15} parent=0 // pred_check_branch
    %468 = sbr.rel (0) target = $region37
  $region36: #{motion_prediction_forward.15} parent=0 // pred_region
    _
  $region37: #{motion_prediction_forward.15} parent=0 // pred_fallthru
    _
  // Predicated region
  $region38: #{motion_prediction_forward.15} parent=0 // pred_check
    _
  $region39: #{motion_prediction_forward.15} parent=0 // pred_check_branch
    %470 = sbr.rel (0) target = $region41
  $region40: #{motion_prediction_forward.15} parent=0 // pred_region
    _
  $region41: #{motion_prediction_forward.15} parent=0 // pred_fallthru
    _
  // Predicated region
  $region42: #{motion_prediction_forward.15} parent=0 // pred_check
    _
  $region43: #{motion_prediction_forward.15} parent=0 // pred_check_branch
    %472 = sbr.rel (0) target = $region45
  $region44: #{motion_prediction_forward.15} parent=0 // pred_region
    _
  $region45: #{motion_prediction_forward.15} parent=0 // pred_fallthru
    _
  // Predicated region
  $region46: #{motion_prediction_forward.15} parent=0 // pred_check
    _
  $region47: #{motion_prediction_forward.15} parent=0 // pred_check_branch
    %474 = sbr.rel (0) target = $region49
  $region48: #{motion_prediction_forward.15} parent=0 // pred_region
    _
  $region49: #{motion_prediction_forward.15} parent=0 // pred_fallthru
    _

// kernel: motion_prediction_forward.16
$region0: #{motion_prediction_forward.16}
  #allocation0 [shape = 'u32[]', space=smem, size = 0x4, offset = 0x4, fixed_abs, tag = 'smem constant byte address 0x4 - core index']
  #allocation1 [shape = 'u32[144,128]{1,0:T(1,128)}', space=vmem, size = 0x12000, scoped, tag = 'internal scratch']
  %s0 = inlined_call_operand.vmem [shape: bf16[56,216], index: 0, kind: input, shape index: {}]
  %s1 = inlined_call_operand.vmem [shape: bf16[56,27], index: 1, kind: input, shape index: {}]
  %s2 = inlined_call_operand.vmem [shape: f32[1,216], index: 2, kind: input, shape index: {}]
  %s3 = inlined_call_operand.vmem [shape: f32[1,216], index: 3, kind: input, shape index: {}]
  %s4 = inlined_call_operand.vmem [shape: bf16[216,8], index: 4, kind: input, shape index: {}]
  %s5 = inlined_call_operand.vmem [shape: f32[27,8], index: 5, kind: input, shape index: {}]
  %s6 = inlined_call_operand.vmem [shape: bf16[56,8], index: 6, kind: output, shape index: {0}]
  %s7 = inlined_call_operand.vmem [shape: f32[1,1,8], index: 7, kind: output, shape index: {1}]
  %s8 = inlined_call_operand.vmem [shape: f32[1,1,8], index: 8, kind: output, shape index: {2}]
  %9 = xla_tuple %s6, %s7, %s8
  %s10 = sld [smem:[#allocation0]]
  $region50: #{motion_prediction_forward.16} parent=0
    _
  %s12 = ssub.s32 1, %s10
  %s13 = scalar_select 0, %s12, %s10
  // Predicated region
  $region2: #{motion_prediction_forward.16} parent=0 // pred_check
    _
  $region3: #{motion_prediction_forward.16} parent=0 // pred_check_branch
    %15 = sbr.rel (0) target = $region5
  $region4: #{motion_prediction_forward.16} parent=0 // pred_region
    _
  $region5: #{motion_prediction_forward.16} parent=0 // pred_fallthru
    _
  // Predicated region
  $region6: #{motion_prediction_forward.16} parent=0 // pred_check
    _
  $region7: #{motion_prediction_forward.16} parent=0 // pred_check_branch
    %17 = sbr.rel (0) target = $region9
  $region8: #{motion_prediction_forward.16} parent=0 // pred_region
    _
  $region9: #{motion_prediction_forward.16} parent=0 // pred_fallthru
    _
  // Predicated region
  $region10: #{motion_prediction_forward.16} parent=0 // pred_check
    _
  $region11: #{motion_prediction_forward.16} parent=0 // pred_check_branch
    %19 = sbr.rel (0) target = $region13
  $region12: #{motion_prediction_forward.16} parent=0 // pred_region
    _
  $region13: #{motion_prediction_forward.16} parent=0 // pred_fallthru
    _
  // Predicated region
  $region14: #{motion_prediction_forward.16} parent=0 // pred_check
    _
  $region15: #{motion_prediction_forward.16} parent=0 // pred_check_branch
    %21 = sbr.rel (0) target = $region17
  $region16: #{motion_prediction_forward.16} parent=0 // pred_region
    _
  $region17: #{motion_prediction_forward.16} parent=0 // pred_fallthru
    _
  // Predicated region
  $region18: #{motion_prediction_forward.16} parent=0 // pred_check
    _
  $region19: #{motion_prediction_forward.16} parent=0 // pred_check_branch
    %23 = sbr.rel (0) target = $region21
  $region20: #{motion_prediction_forward.16} parent=0 // pred_region
    _
  $region21: #{motion_prediction_forward.16} parent=0 // pred_fallthru
    _
  // Predicated region
  $region22: #{motion_prediction_forward.16} parent=0 // pred_check
    _
  $region23: #{motion_prediction_forward.16} parent=0 // pred_check_branch
    %25 = sbr.rel (0) target = $region25
  $region24: #{motion_prediction_forward.16} parent=0 // pred_region
    _
  $region25: #{motion_prediction_forward.16} parent=0 // pred_fallthru
    _
  %v27 = vld [vmem:[%s0] sm:$0xff]
  %v28 = vld [vmem:[%s0 + $0x8] sm:$0xff]
  %v29 = vld [vmem:[%s0 + $0x10] sm:$0xff]
  %v30 = vld [vmem:[%s0 + $0x18] sm:$0xff]
  %v31 = vld [vmem:[%s0 + $0x20] sm:$0xff]
  %v32 = vld [vmem:[%s0 + $0x28] sm:$0xff]
  %v33 = vld [vmem:[%s0 + $0x30] sm:$0xff]
  %v34 = vunpack.c.l.bf16 %v27
  %v35 = vunpack.c.h.bf16 %v27
  %v36 = vunpack.c.l.bf16 %v28
  %v37 = vunpack.c.h.bf16 %v28
  %v38 = vunpack.c.l.bf16 %v29
  %v39 = vunpack.c.h.bf16 %v29
  %v40 = vunpack.c.l.bf16 %v30
  %v41 = vunpack.c.h.bf16 %v30
  %v42 = vunpack.c.l.bf16 %v31
  %v43 = vunpack.c.h.bf16 %v31
  %v44 = vunpack.c.l.bf16 %v32
  %v45 = vunpack.c.h.bf16 %v32
  %v46 = vunpack.c.l.bf16 %v33
  %v47 = vunpack.c.h.bf16 %v33
  %v48 = vld [vmem:[%s2] sm:$0x3]
  %v50 = vlaneseq
  %v51 = vshrl.u32 %v50, 7
  %v52 = vsub.s32 0, %v51
  %v53 = vrot.slane %v48, %v52
  %v54 = vlaneseq
  %v55 = vshrl.u32 %v54, 7
  %v56 = vsub.s32 1, %v55
  %v57 = vrot.slane %v48, %v56
  %v60 = vmul.f32 %v34, %v53
  %v61 = vmul.f32 %v35, %v57
  %v62 = vmul.f32 %v36, %v53
  %v63 = vmul.f32 %v37, %v57
  %v64 = vmul.f32 %v38, %v53
  %v65 = vmul.f32 %v39, %v57
  %v66 = vmul.f32 %v40, %v53
  %v67 = vmul.f32 %v41, %v57
  %v68 = vmul.f32 %v42, %v53
  %v69 = vmul.f32 %v43, %v57
  %v70 = vmul.f32 %v44, %v53
  %v71 = vmul.f32 %v45, %v57
  %v72 = vmul.f32 %v46, %v53
  %v73 = vmul.f32 %v47, %v57
  %v74 = vld [vmem:[%s3] sm:$0x3]
  %v76 = vlaneseq
  %v77 = vshrl.u32 %v76, 7
  %v78 = vsub.s32 0, %v77
  %v79 = vrot.slane %v74, %v78
  %v80 = vlaneseq
  %v81 = vshrl.u32 %v80, 7
  %v82 = vsub.s32 1, %v81
  %v83 = vrot.slane %v74, %v82
  %v86 = vadd.f32 %v60, %v79
  %v87 = vadd.f32 %v61, %v83
  %v88 = vadd.f32 %v62, %v79
  %v89 = vadd.f32 %v63, %v83
  %v90 = vadd.f32 %v64, %v79
  %v91 = vadd.f32 %v65, %v83
  %v92 = vadd.f32 %v66, %v79
  %v93 = vadd.f32 %v67, %v83
  %v94 = vadd.f32 %v68, %v79
  %v95 = vadd.f32 %v69, %v83
  %v96 = vadd.f32 %v70, %v79
  %v97 = vadd.f32 %v71, %v83
  %v98 = vadd.f32 %v72, %v79
  %v99 = vadd.f32 %v73, %v83
  %v100 = vmax.f32 %v86, 0.0
  %v101 = vmax.f32 %v87, 0.0
  %v102 = vmax.f32 %v88, 0.0
  %v103 = vmax.f32 %v89, 0.0
  %v104 = vmax.f32 %v90, 0.0
  %v105 = vmax.f32 %v91, 0.0
  %v106 = vmax.f32 %v92, 0.0
  %v107 = vmax.f32 %v93, 0.0
  %v108 = vmax.f32 %v94, 0.0
  %v109 = vmax.f32 %v95, 0.0
  %v110 = vmax.f32 %v96, 0.0
  %v111 = vmax.f32 %v97, 0.0
  %v112 = vmax.f32 %v98, 0.0
  %v113 = vmax.f32 %v99, 0.0
  %v114 = vpack.c.bf16 %v102, %v100
  %v115 = vpack.c.bf16 %v103, %v101
  %v116 = vpack.c.bf16 %v106, %v104
  %v117 = vpack.c.bf16 %v107, %v105
  %v118 = vpack.c.bf16 %v110, %v108
  %v119 = vpack.c.bf16 %v111, %v109
  %v120 = vpack.c.bf16 %v112, %v112
  %v121 = vpack.c.bf16 %v113, %v113
  %v122 = vld [vmem:[%s4] sm:$0xf]
  %v123 = vld [vmem:[%s4 + $0x4] sm:$0xf]
  %v124 = vld [vmem:[%s4 + $0x8] sm:$0xf]
  %v125 = vld [vmem:[%s4 + $0xc] sm:$0xf]
  %v126 = vld [vmem:[%s4 + $0x10] sm:$0xf]
  %v127 = vld [vmem:[%s4 + $0x14] sm:$0xf]
  %v128 = vld [vmem:[%s4 + $0x18] sm:$0xf]
  %v129 = vld [vmem:[%s4 + $0x1c] sm:$0xf]
  %v130 = vld [vmem:[%s4 + $0x20] sm:$0xf]
  %v131 = vld [vmem:[%s4 + $0x24] sm:$0xf]
  %v132 = vld [vmem:[%s4 + $0x28] sm:$0xf]
  %v133 = vld [vmem:[%s4 + $0x2c] sm:$0xf]
  %v134 = vld [vmem:[%s4 + $0x30] sm:$0xf]
  %v135 = vld [vmem:[%s4 + $0x34] sm:$0xf]
  %v136 = vld [vmem:[%s4 + $0x38] sm:$0xf]
  %v137 = vld [vmem:[%s4 + $0x3c] sm:$0xf]
  %v138 = vld [vmem:[%s4 + $0x40] sm:$0xf]
  %v139 = vld [vmem:[%s4 + $0x44] sm:$0xf]
  %v140 = vld [vmem:[%s4 + $0x48] sm:$0xf]
  %v141 = vld [vmem:[%s4 + $0x4c] sm:$0xf]
  %v142 = vld [vmem:[%s4 + $0x50] sm:$0xf]
  %v143 = vld [vmem:[%s4 + $0x54] sm:$0xf]
  %v144 = vld [vmem:[%s4 + $0x58] sm:$0xf]
  %v145 = vld [vmem:[%s4 + $0x5c] sm:$0xf]
  %v146 = vld [vmem:[%s4 + $0x60] sm:$0xf]
  %v147 = vld [vmem:[%s4 + $0x64] sm:$0xf]
  %v148 = vld [vmem:[%s4 + $0x68] sm:$0xf]
  %v176 = vunpack.c.l.b16 %v122
  %v177 = vunpack.c.l.b16 %v123
  %v178 = vunpack.c.l.b16 %v124
  %v179 = vunpack.c.l.b16 %v125
  %v180 = vunpack.c.l.b16 %v126
  %v181 = vunpack.c.l.b16 %v127
  %v182 = vunpack.c.l.b16 %v128
  %v183 = vunpack.c.l.b16 %v129
  %v184 = vunpack.c.l.b16 %v130
  %v185 = vunpack.c.l.b16 %v131
  %v186 = vunpack.c.l.b16 %v132
  %v187 = vunpack.c.l.b16 %v133
  %v188 = vunpack.c.l.b16 %v134
  %v189 = vunpack.c.l.b16 %v135
  %v190 = vunpack.c.l.b16 %v136
  %v191 = vunpack.c.l.b16 %v137
  %v192 = vunpack.c.l.b16 %v138
  %v193 = vunpack.c.l.b16 %v139
  %v194 = vunpack.c.l.b16 %v140
  %v195 = vunpack.c.l.b16 %v141
  %v196 = vunpack.c.l.b16 %v142
  %v197 = vunpack.c.l.b16 %v143
  %v198 = vunpack.c.l.b16 %v144
  %v199 = vunpack.c.l.b16 %v145
  %v200 = vunpack.c.l.b16 %v146
  %v201 = vunpack.c.l.b16 %v147
  %v202 = vunpack.c.l.b16 %v148
  %v203 = vpack.c.b16 %v177, %v176
  %v204 = vpack.c.b16 %v179, %v178
  %v205 = vpack.c.b16 %v181, %v180
  %v206 = vpack.c.b16 %v183, %v182
  %v207 = vpack.c.b16 %v185, %v184
  %v208 = vpack.c.b16 %v187, %v186
  %v209 = vpack.c.b16 %v189, %v188
  %v210 = vpack.c.b16 %v191, %v190
  %v211 = vpack.c.b16 %v193, %v192
  %v212 = vpack.c.b16 %v195, %v194
  %v213 = vpack.c.b16 %v197, %v196
  %v214 = vpack.c.b16 %v199, %v198
  %v215 = vpack.c.b16 %v201, %v200
  %v216 = vpack.c.b16 %v202, %v202
  %vm230 = vcmask 719872
  %v232 = vsel %vm230, %v115, 0
  %v235 = vsel %vm230, %v117, 0
  %v238 = vsel %vm230, %v119, 0
  %v241 = vsel %vm230, %v121, 0
  %vm243 = vcmask 1043456
  %v245 = vsel %vm243, %v216, 0
  %247 = vmatprep.subr.bf16.mxu0 0
  %248 = vmatpush1.bf16.msra.mxu0 %v203
  %249 = vmatprep.subr.bf16.mxu0 0
  %250 = vmatpush1.bf16.msra.mxu0 %v204
  %251 = vmatprep.subr.bf16.mxu0 0
  %252 = vmatpush1.bf16.msra.mxu0 %v205
  %253 = vmatprep.subr.bf16.mxu0 0
  %254 = vmatpush1.bf16.msra.mxu0 %v206
  %255 = vmatprep.subr.bf16.mxu0 0
  %256 = vmatpush1.bf16.msra.mxu0 %v207
  %257 = vmatprep.subr.bf16.mxu0 0
  %258 = vmatpush1.bf16.msra.mxu0 %v208
  %259 = vmatprep.subr.bf16.mxu0 0
  %260 = vmatpush1.bf16.msra.mxu0 %v209
  %261 = vmatprep.subr.bf16.mxu0 0
  %262 = vmatpush1.bf16.msra.mxu0 %v210
  %263 = vmatprep.subr.bf16.mxu0 0
  %264 = vmatpush1.bf16.msra.mxu0 %v211
  %265 = vmatprep.subr.bf16.mxu0 0
  %266 = vmatpush1.bf16.msra.mxu0 %v212
  %267 = vmatprep.subr.bf16.mxu0 0
  %268 = vmatpush1.bf16.msra.mxu0 %v213
  %269 = vmatprep.subr.bf16.mxu0 0
  %270 = vmatpush1.bf16.msra.mxu0 %v214
  %271 = vmatprep.subr.bf16.mxu0 0
  %272 = vmatpush1.bf16.msra.mxu0 %v215
  %273 = vmatprep.subr.bf16.mxu0 0
  %274 = vmatpush1.bf16.msra.mxu0 %v245
  %275 = vmatprep.subr.bf16.mxu0 0
  %276 = vmatpush1.bf16.msra.mxu0 0
  %277 = vmatprep.subr.bf16.mxu0 0
  %278 = vmatpush1.bf16.msra.mxu0 0
  %279 = vmatprep.mubr.bf16.mxu0 %v232
  %280 = vmatmul.mubr.bf16.gmra.mrb[0].mxu0 %v114
  %v281 = vpop.f32.mrb[0].mxu0
  %v282 = vadd.f32 0.0, %v281
  %v283 = vpop.f32.mrb[0].mxu0
  %v284 = vpop.f32.mrb[0].mxu0
  %v285 = vadd.f32 0.0, %v284
  %v286 = vpop.f32.mrb[0].mxu0
  %287 = vmatprep.mubr.bf16.mxu0 %v235
  %288 = vmatmul.mubr.bf16.gmra.mrb[0].mxu0 %v116
  %v289 = vpop.f32.mrb[0].mxu0
  %v290 = vadd.f32 0.0, %v289
  %v291 = vpop.f32.mrb[0].mxu0
  %v292 = vpop.f32.mrb[0].mxu0
  %v293 = vadd.f32 0.0, %v292
  %v294 = vpop.f32.mrb[0].mxu0
  %295 = vmatprep.mubr.bf16.mxu0 %v238
  %296 = vmatmul.mubr.bf16.gmra.mrb[0].mxu0 %v118
  %v297 = vpop.f32.mrb[0].mxu0
  %v298 = vadd.f32 0.0, %v297
  %v299 = vpop.f32.mrb[0].mxu0
  %v300 = vpop.f32.mrb[0].mxu0
  %v301 = vadd.f32 0.0, %v300
  %v302 = vpop.f32.mrb[0].mxu0
  %303 = vmatprep.mubr.bf16.mxu0 %v241
  %304 = vmatmul.mubr.bf16.gmra.mrb[0].mxu0 %v120
  %v305 = vpop.f32.mrb[0].mxu0
  %v306 = vadd.f32 0.0, %v305
  %v307 = vpop.f32.mrb[0].mxu0
  %v308 = vpop.f32.mrb[0].mxu0
  %v309 = vpop.f32.mrb[0].mxu0
  %310 = vdwg.mxu0
  %v311 = vld [vmem:[%s1] sm:$0xf]
  %v312 = vld [vmem:[%s1 + $0x4] sm:$0xf]
  %v313 = vld [vmem:[%s1 + $0x8] sm:$0xf]
  %v314 = vld [vmem:[%s1 + $0xc] sm:$0xf]
  %v315 = vld [vmem:[%s1 + $0x10] sm:$0xf]
  %v316 = vld [vmem:[%s1 + $0x14] sm:$0xf]
  %v317 = vld [vmem:[%s1 + $0x18] sm:$0xf]
  %v318 = vunpack.c.l.bf16 %v311
  %v319 = vunpack.c.l.bf16 %v312
  %v320 = vunpack.c.l.bf16 %v313
  %v321 = vunpack.c.l.bf16 %v314
  %v322 = vunpack.c.l.bf16 %v315
  %v323 = vunpack.c.l.bf16 %v316
  %v324 = vunpack.c.l.bf16 %v317
  %v325 = vld [vmem:[%s5] sm:$0xff]
  %v326 = vld [vmem:[%s5 + $0x8] sm:$0xff]
  %v327 = vld [vmem:[%s5 + $0x10] sm:$0xff]
  %v328 = vld [vmem:[%s5 + $0x18] sm:$0x7]
  %vm329 = vcmask 220160
  %v331 = vsel %vm329, %v318, 0
  %v334 = vsel %vm329, %v319, 0
  %v337 = vsel %vm329, %v320, 0
  %v340 = vsel %vm329, %v321, 0
  %v343 = vsel %vm329, %v322, 0
  %v346 = vsel %vm329, %v323, 0
  %v349 = vsel %vm329, %v324, 0
  %vm351 = vcmask 1042432
  %v353 = vsel %vm351, %v328, 0
  %355 = vmatprep.subr.mxu0 0.0
  %356 = vmatpush1.msra.mxu0 %v325
  %357 = vmatprep.subr.mxu0 0.0
  %358 = vmatpush1.msra.mxu0 %v326
  %359 = vmatprep.subr.mxu0 0.0
  %360 = vmatpush1.msra.mxu0 %v327
  %361 = vmatprep.subr.mxu0 0.0
  %362 = vmatpush1.msra.mxu0 %v353
  %363 = vmatprep.subr.mxu0 0.0
  %364 = vmatpush1.msra.mxu0 0.0
  %365 = vmatprep.subr.mxu0 0.0
  %366 = vmatpush1.msra.mxu0 0.0
  %367 = vmatprep.subr.mxu0 0.0
  %368 = vmatpush1.msra.mxu0 0.0
  %369 = vmatprep.subr.mxu0 0.0
  %370 = vmatpush1.msra.mxu0 0.0
  %371 = vmatprep.subr.mxu0 0.0
  %372 = vmatpush1.msra.mxu0 0.0
  %373 = vmatprep.subr.mxu0 0.0
  %374 = vmatpush1.msra.mxu0 0.0
  %375 = vmatprep.subr.mxu0 0.0
  %376 = vmatpush1.msra.mxu0 0.0
  %377 = vmatprep.subr.mxu0 0.0
  %378 = vmatpush1.msra.mxu0 0.0
  %379 = vmatprep.subr.mxu0 0.0
  %380 = vmatpush1.msra.mxu0 0.0
  %381 = vmatprep.subr.mxu0 0.0
  %382 = vmatpush1.msra.mxu0 0.0
  %383 = vmatprep.subr.mxu0 0.0
  %384 = vmatpush1.msra.mxu0 0.0
  %385 = vmatprep.subr.mxu0 0.0
  %386 = vmatpush1.msra.mxu0 0.0
  %387 = vmatprep.subr.mxu0 0.0
  %388 = vmatpush1.msra.mxu0 0.0
  %389 = vmatprep.subr.mxu0 0.0
  %390 = vmatpush1.msra.mxu0 0.0
  %391 = vmatprep.subr.mxu0 0.0
  %392 = vmatpush1.msra.mxu0 0.0
  %393 = vmatprep.subr.mxu0 0.0
  %394 = vmatpush1.msra.mxu0 0.0
  %395 = vmatprep.subr.mxu0 0.0
  %396 = vmatpush1.msra.mxu0 0.0
  %397 = vmatprep.subr.mxu0 0.0
  %398 = vmatpush1.msra.mxu0 0.0
  %399 = vmatprep.subr.mxu0 0.0
  %400 = vmatpush1.msra.mxu0 0.0
  %401 = vmatprep.subr.mxu0 0.0
  %402 = vmatpush1.msra.mxu0 0.0
  %403 = vmatprep.subr.mxu0 0.0
  %404 = vmatpush1.msra.mxu0 0.0
  %405 = vmatprep.subr.mxu0 0.0
  %406 = vmatpush1.msra.mxu0 0.0
  %407 = vmatprep.subr.mxu0 0.0
  %408 = vmatpush1.msra.mxu0 0.0
  %409 = vmatprep.subr.mxu0 0.0
  %410 = vmatpush1.msra.mxu0 0.0
  %411 = vmatprep.subr.mxu0 0.0
  %412 = vmatpush1.msra.mxu0 0.0
  %413 = vmatprep.subr.mxu0 0.0
  %414 = vmatpush1.msra.mxu0 0.0
  %415 = vmatprep.subr.mxu0 0.0
  %416 = vmatpush1.msra.mxu0 0.0
  %417 = vmatprep.subr.mxu0 0.0
  %418 = vmatpush1.msra.mxu0 0.0
  %419 = vmatprep.mubr.f32.mxu0 0.0
  %420 = vmatmul.mubr.f32.gmra.mrb[0].mxu0 %v331
  %v421 = vpop.f32.mrb[0].mxu0
  %v422 = vadd.f32 0.0, %v421
  %v423 = vpop.f32.mrb[0].mxu0
  %424 = vmatprep.mubr.f32.mxu0 0.0
  %425 = vmatmul.mubr.f32.gmra.mrb[0].mxu0 %v334
  %v426 = vpop.f32.mrb[0].mxu0
  %v427 = vadd.f32 0.0, %v426
  %v428 = vpop.f32.mrb[0].mxu0
  %429 = vmatprep.mubr.f32.mxu0 0.0
  %430 = vmatmul.mubr.f32.gmra.mrb[0].mxu0 %v337
  %v431 = vpop.f32.mrb[0].mxu0
  %v432 = vadd.f32 0.0, %v431
  %v433 = vpop.f32.mrb[0].mxu0
  %434 = vmatprep.mubr.f32.mxu0 0.0
  %435 = vmatmul.mubr.f32.gmra.mrb[0].mxu0 %v340
  %v436 = vpop.f32.mrb[0].mxu0
  %v437 = vadd.f32 0.0, %v436
  %v438 = vpop.f32.mrb[0].mxu0
  %439 = vmatprep.mubr.f32.mxu0 0.0
  %440 = vmatmul.mubr.f32.gmra.mrb[0].mxu0 %v343
  %v441 = vpop.f32.mrb[0].mxu0
  %v442 = vadd.f32 0.0, %v441
  %v443 = vpop.f32.mrb[0].mxu0
  %444 = vmatprep.mubr.f32.mxu0 0.0
  %445 = vmatmul.mubr.f32.gmra.mrb[0].mxu0 %v346
  %v446 = vpop.f32.mrb[0].mxu0
  %v447 = vadd.f32 0.0, %v446
  %v448 = vpop.f32.mrb[0].mxu0
  %449 = vmatprep.mubr.f32.mxu0 0.0
  %450 = vmatmul.mubr.f32.gmra.mrb[0].mxu0 %v349
  %v451 = vpop.f32.mrb[0].mxu0
  %v452 = vadd.f32 0.0, %v451
  %v453 = vpop.f32.mrb[0].mxu0
  %454 = vdwg.mxu0
  %v455 = vsub.f32 %v282, %v422
  %v456 = vsub.f32 %v285, %v427
  %v457 = vsub.f32 %v290, %v432
  %v458 = vsub.f32 %v293, %v437
  %v459 = vsub.f32 %v298, %v442
  %v460 = vsub.f32 %v301, %v447
  %v461 = vsub.f32 %v306, %v452
  %s462 = smul.u32 0, 56
  %v463 = vlaneseq
  %v464 = vshrl.u32 %v463, 7
  %v465 = vadd.s32 %v464, 8
  %v466 = vadd.s32 %v464, 16
  %v467 = vadd.s32 %v464, 24
  %v468 = vadd.s32 %v464, 32
  %v469 = vadd.s32 %v464, 40
  %v470 = vadd.s32 %v464, 48
  %v471 = vstv %s462
  %v472 = vadd.s32 %v471, %v464
  %v473 = vadd.s32 %v471, %v465
  %v474 = vadd.s32 %v471, %v466
  %v475 = vadd.s32 %v471, %v467
  %v476 = vadd.s32 %v471, %v468
  %v477 = vadd.s32 %v471, %v469
  %v478 = vadd.s32 %v471, %v470
  %vm479 = vcmp.lt.s32.totalorder %v472, 54
  %vm480 = vcmp.lt.s32.totalorder %v473, 54
  %vm481 = vcmp.lt.s32.totalorder %v474, 54
  %vm482 = vcmp.lt.s32.totalorder %v475, 54
  %vm483 = vcmp.lt.s32.totalorder %v476, 54
  %vm484 = vcmp.lt.s32.totalorder %v477, 54
  %vm485 = vcmp.lt.s32.totalorder %v478, 54
  %v486 = vsel %vm479, 1, 0
  %v487 = vsel %vm480, 1, 0
  %v488 = vsel %vm481, 1, 0
  %v489 = vsel %vm482, 1, 0
  %v490 = vsel %vm483, 1, 0
  %v491 = vsel %vm484, 1, 0
  %v492 = vsel %vm485, 1, 0
  %vm493 = vcmp.eq.s32.totalorder %v486, 1
  %vm494 = vcmp.eq.s32.totalorder %v487, 1
  %vm495 = vcmp.eq.s32.totalorder %v488, 1
  %vm496 = vcmp.eq.s32.totalorder %v489, 1
  %vm497 = vcmp.eq.s32.totalorder %v490, 1
  %vm498 = vcmp.eq.s32.totalorder %v491, 1
  %vm499 = vcmp.eq.s32.totalorder %v492, 1
  %v500 = vsel %vm493, %v455, 0.0
  %v501 = vsel %vm494, %v456, 0.0
  %v502 = vsel %vm495, %v457, 0.0
  %v503 = vsel %vm496, %v458, 0.0
  %v504 = vsel %vm497, %v459, 0.0
  %v505 = vsel %vm498, %v460, 0.0
  %v506 = vsel %vm499, %v461, 0.0
  %vm507 = vcmask 64512
  %v508 = vsel %vm507, %v500, 0.0
  %v509 = vsel %vm507, %v501, 0.0
  %v510 = vadd.f32 %v508, %v509
  %v511 = vsel %vm507, %v502, 0.0
  %v512 = vadd.f32 %v510, %v511
  %v513 = vsel %vm507, %v503, 0.0
  %v514 = vadd.f32 %v512, %v513
  %v515 = vsel %vm507, %v504, 0.0
  %v516 = vadd.f32 %v514, %v515
  %v517 = vsel %vm507, %v505, 0.0
  %v518 = vadd.f32 %v516, %v517
  %v519 = vsel %vm507, %v506, 0.0
  %v520 = vadd.f32 %v518, %v519
  %v521 = vrot.slane %v520, 4
  %v522 = vadd.f32 %v520, %v521
  %v523 = vrot.slane %v522, 2
  %v524 = vadd.f32 %v522, %v523
  %v525 = vrot.slane %v524, 1
  %v526 = vadd.f32 %v524, %v525
  %vm527 = vcmask 57344
  %528 = vst.msk [vmem:[%s7] sm:$0x1] %vm527, %v526
  %v529 = vmul.f32 %v500, %v500
  %v530 = vmul.f32 %v501, %v501
  %v531 = vmul.f32 %v502, %v502
  %v532 = vmul.f32 %v503, %v503
  %v533 = vmul.f32 %v504, %v504
  %v534 = vmul.f32 %v505, %v505
  %v535 = vmul.f32 %v506, %v506
  %v536 = vsel %vm507, %v529, 0.0
  %v537 = vsel %vm507, %v530, 0.0
  %v538 = vadd.f32 %v536, %v537
  %v539 = vsel %vm507, %v531, 0.0
  %v540 = vadd.f32 %v538, %v539
  %v541 = vsel %vm507, %v532, 0.0
  %v542 = vadd.f32 %v540, %v541
  %v543 = vsel %vm507, %v533, 0.0
  %v544 = vadd.f32 %v542, %v543
  %v545 = vsel %vm507, %v534, 0.0
  %v546 = vadd.f32 %v544, %v545
  %v547 = vsel %vm507, %v535, 0.0
  %v548 = vadd.f32 %v546, %v547
  %v549 = vrot.slane %v548, 4
  %v550 = vadd.f32 %v548, %v549
  %v551 = vrot.slane %v550, 2
  %v552 = vadd.f32 %v550, %v551
  %v553 = vrot.slane %v552, 1
  %v554 = vadd.f32 %v552, %v553
  %555 = vst.msk [vmem:[%s8] sm:$0x1] %vm527, %v554
  %v556 = vpack.c.bf16 %v501, %v500
  %v557 = vpack.c.bf16 %v503, %v502
  %v558 = vpack.c.bf16 %v505, %v504
  %v559 = vpack.c.bf16 %v506, %v506
  %v564 = vunpack.c.l.b16 %v556
  %v565 = vunpack.c.h.b16 %v556
  %v566 = vunpack.c.l.b16 %v557
  %v567 = vunpack.c.h.b16 %v557
  %v568 = vunpack.c.l.b16 %v558
  %v569 = vunpack.c.h.b16 %v558
  %v570 = vunpack.c.l.b16 %v559
  %v571 = vpack.c.b16 %v564, %v564
  %v572 = vpack.c.b16 %v565, %v565
  %v573 = vpack.c.b16 %v566, %v566
  %v574 = vpack.c.b16 %v567, %v567
  %v575 = vpack.c.b16 %v568, %v568
  %v576 = vpack.c.b16 %v569, %v569
  %v577 = vpack.c.b16 %v570, %v570
  %vm585 = vcmask 60416
  %586 = vst.msk [vmem:[%s6] sm:$0xf] %vm585, %v571
  %587 = vst.msk [vmem:[%s6 + $0x4] sm:$0xf] %vm585, %v572
  %588 = vst.msk [vmem:[%s6 + $0x8] sm:$0xf] %vm585, %v573
  %589 = vst.msk [vmem:[%s6 + $0xc] sm:$0xf] %vm585, %v574
  %590 = vst.msk [vmem:[%s6 + $0x10] sm:$0xf] %vm585, %v575
  %591 = vst.msk [vmem:[%s6 + $0x14] sm:$0xf] %vm585, %v576
  %592 = vst.msk [vmem:[%s6 + $0x18] sm:$0xf] %vm585, %v577
  // Predicated region
  $region26: #{motion_prediction_forward.16} parent=0 // pred_check
    _
  $region27: #{motion_prediction_forward.16} parent=0 // pred_check_branch
    %594 = sbr.rel (0) target = $region29
  $region28: #{motion_prediction_forward.16} parent=0 // pred_region
    _
  $region29: #{motion_prediction_forward.16} parent=0 // pred_fallthru
    _
  // Predicated region
  $region30: #{motion_prediction_forward.16} parent=0 // pred_check
    _
  $region31: #{motion_prediction_forward.16} parent=0 // pred_check_branch
    %596 = sbr.rel (0) target = $region33
  $region32: #{motion_prediction_forward.16} parent=0 // pred_region
    _
  $region33: #{motion_prediction_forward.16} parent=0 // pred_fallthru
    _
  // Predicated region
  $region34: #{motion_prediction_forward.16} parent=0 // pred_check
    _
  $region35: #{motion_prediction_forward.16} parent=0 // pred_check_branch
    %598 = sbr.rel (0) target = $region37
  $region36: #{motion_prediction_forward.16} parent=0 // pred_region
    _
  $region37: #{motion_prediction_forward.16} parent=0 // pred_fallthru
    _
  // Predicated region
  $region38: #{motion_prediction_forward.16} parent=0 // pred_check
    _
  $region39: #{motion_prediction_forward.16} parent=0 // pred_check_branch
    %600 = sbr.rel (0) target = $region41
  $region40: #{motion_prediction_forward.16} parent=0 // pred_region
    _
  $region41: #{motion_prediction_forward.16} parent=0 // pred_fallthru
    _
  // Predicated region
  $region42: #{motion_prediction_forward.16} parent=0 // pred_check
    _
  $region43: #{motion_prediction_forward.16} parent=0 // pred_check_branch
    %602 = sbr.rel (0) target = $region45
  $region44: #{motion_prediction_forward.16} parent=0 // pred_region
    _
  $region45: #{motion_prediction_forward.16} parent=0 // pred_fallthru
    _
  // Predicated region
  $region46: #{motion_prediction_forward.16} parent=0 // pred_check
    _
  $region47: #{motion_prediction_forward.16} parent=0 // pred_check_branch
    %604 = sbr.rel (0) target = $region49
  $region48: #{motion_prediction_forward.16} parent=0 // pred_region
    _
  $region49: #{motion_prediction_forward.16} parent=0 // pred_fallthru
    _

// kernel: motion_prediction_forward.17
$region0: #{motion_prediction_forward.17}
  #allocation0 [shape = 'u32[]', space=smem, size = 0x4, offset = 0x4, fixed_abs, tag = 'smem constant byte address 0x4 - core index']
  #allocation1 [shape = 'u32[144,128]{1,0:T(1,128)}', space=vmem, size = 0x12000, scoped, tag = 'internal scratch']
  %s0 = inlined_call_operand.vmem [shape: bf16[56,216], index: 0, kind: input, shape index: {}]
  %s1 = inlined_call_operand.vmem [shape: bf16[56,27], index: 1, kind: input, shape index: {}]
  %s2 = inlined_call_operand.vmem [shape: f32[1,216], index: 2, kind: input, shape index: {}]
  %s3 = inlined_call_operand.vmem [shape: f32[1,216], index: 3, kind: input, shape index: {}]
  %s4 = inlined_call_operand.vmem [shape: bf16[216,8], index: 4, kind: input, shape index: {}]
  %s5 = inlined_call_operand.vmem [shape: f32[27,8], index: 5, kind: input, shape index: {}]
  %s6 = inlined_call_operand.vmem [shape: bf16[56,8], index: 6, kind: input, shape index: {}]
  %s7 = inlined_call_operand.vmem [shape: bf16[56,8], index: 7, kind: output, shape index: {0}]
  %s8 = inlined_call_operand.vmem [shape: f32[1,1,8], index: 8, kind: output, shape index: {1}]
  %s9 = inlined_call_operand.vmem [shape: f32[1,1,8], index: 9, kind: output, shape index: {2}]
  %10 = xla_tuple %s7, %s8, %s9
  %s11 = sld [smem:[#allocation0]]
  $region54: #{motion_prediction_forward.17} parent=0
    _
  %s13 = ssub.s32 1, %s11
  %s14 = scalar_select 0, %s13, %s11
  // Predicated region
  $region2: #{motion_prediction_forward.17} parent=0 // pred_check
    _
  $region3: #{motion_prediction_forward.17} parent=0 // pred_check_branch
    %16 = sbr.rel (0) target = $region5
  $region4: #{motion_prediction_forward.17} parent=0 // pred_region
    _
  $region5: #{motion_prediction_forward.17} parent=0 // pred_fallthru
    _
  // Predicated region
  $region6: #{motion_prediction_forward.17} parent=0 // pred_check
    _
  $region7: #{motion_prediction_forward.17} parent=0 // pred_check_branch
    %18 = sbr.rel (0) target = $region9
  $region8: #{motion_prediction_forward.17} parent=0 // pred_region
    _
  $region9: #{motion_prediction_forward.17} parent=0 // pred_fallthru
    _
  // Predicated region
  $region10: #{motion_prediction_forward.17} parent=0 // pred_check
    _
  $region11: #{motion_prediction_forward.17} parent=0 // pred_check_branch
    %20 = sbr.rel (0) target = $region13
  $region12: #{motion_prediction_forward.17} parent=0 // pred_region
    _
  $region13: #{motion_prediction_forward.17} parent=0 // pred_fallthru
    _
  // Predicated region
  $region14: #{motion_prediction_forward.17} parent=0 // pred_check
    _
  $region15: #{motion_prediction_forward.17} parent=0 // pred_check_branch
    %22 = sbr.rel (0) target = $region17
  $region16: #{motion_prediction_forward.17} parent=0 // pred_region
    _
  $region17: #{motion_prediction_forward.17} parent=0 // pred_fallthru
    _
  // Predicated region
  $region18: #{motion_prediction_forward.17} parent=0 // pred_check
    _
  $region19: #{motion_prediction_forward.17} parent=0 // pred_check_branch
    %24 = sbr.rel (0) target = $region21
  $region20: #{motion_prediction_forward.17} parent=0 // pred_region
    _
  $region21: #{motion_prediction_forward.17} parent=0 // pred_fallthru
    _
  // Predicated region
  $region22: #{motion_prediction_forward.17} parent=0 // pred_check
    _
  $region23: #{motion_prediction_forward.17} parent=0 // pred_check_branch
    %26 = sbr.rel (0) target = $region25
  $region24: #{motion_prediction_forward.17} parent=0 // pred_region
    _
  $region25: #{motion_prediction_forward.17} parent=0 // pred_fallthru
    _
  // Predicated region
  $region26: #{motion_prediction_forward.17} parent=0 // pred_check
    _
  $region27: #{motion_prediction_forward.17} parent=0 // pred_check_branch
    %28 = sbr.rel (0) target = $region29
  $region28: #{motion_prediction_forward.17} parent=0 // pred_region
    _
  $region29: #{motion_prediction_forward.17} parent=0 // pred_fallthru
    _
  %v30 = vld [vmem:[%s0] sm:$0xff]
  %v31 = vld [vmem:[%s0 + $0x8] sm:$0xff]
  %v32 = vld [vmem:[%s0 + $0x10] sm:$0xff]
  %v33 = vld [vmem:[%s0 + $0x18] sm:$0xff]
  %v34 = vld [vmem:[%s0 + $0x20] sm:$0xff]
  %v35 = vld [vmem:[%s0 + $0x28] sm:$0xff]
  %v36 = vld [vmem:[%s0 + $0x30] sm:$0xff]
  %v37 = vunpack.c.l.bf16 %v30
  %v38 = vunpack.c.h.bf16 %v30
  %v39 = vunpack.c.l.bf16 %v31
  %v40 = vunpack.c.h.bf16 %v31
  %v41 = vunpack.c.l.bf16 %v32
  %v42 = vunpack.c.h.bf16 %v32
  %v43 = vunpack.c.l.bf16 %v33
  %v44 = vunpack.c.h.bf16 %v33
  %v45 = vunpack.c.l.bf16 %v34
  %v46 = vunpack.c.h.bf16 %v34
  %v47 = vunpack.c.l.bf16 %v35
  %v48 = vunpack.c.h.bf16 %v35
  %v49 = vunpack.c.l.bf16 %v36
  %v50 = vunpack.c.h.bf16 %v36
  %v51 = vld [vmem:[%s2] sm:$0x3]
  %v53 = vlaneseq
  %v54 = vshrl.u32 %v53, 7
  %v55 = vsub.s32 0, %v54
  %v56 = vrot.slane %v51, %v55
  %v57 = vlaneseq
  %v58 = vshrl.u32 %v57, 7
  %v59 = vsub.s32 1, %v58
  %v60 = vrot.slane %v51, %v59
  %v63 = vmul.f32 %v37, %v56
  %v64 = vmul.f32 %v38, %v60
  %v65 = vmul.f32 %v39, %v56
  %v66 = vmul.f32 %v40, %v60
  %v67 = vmul.f32 %v41, %v56
  %v68 = vmul.f32 %v42, %v60
  %v69 = vmul.f32 %v43, %v56
  %v70 = vmul.f32 %v44, %v60
  %v71 = vmul.f32 %v45, %v56
  %v72 = vmul.f32 %v46, %v60
  %v73 = vmul.f32 %v47, %v56
  %v74 = vmul.f32 %v48, %v60
  %v75 = vmul.f32 %v49, %v56
  %v76 = vmul.f32 %v50, %v60
  %v77 = vld [vmem:[%s3] sm:$0x3]
  %v79 = vlaneseq
  %v80 = vshrl.u32 %v79, 7
  %v81 = vsub.s32 0, %v80
  %v82 = vrot.slane %v77, %v81
  %v83 = vlaneseq
  %v84 = vshrl.u32 %v83, 7
  %v85 = vsub.s32 1, %v84
  %v86 = vrot.slane %v77, %v85
  %v89 = vadd.f32 %v63, %v82
  %v90 = vadd.f32 %v64, %v86
  %v91 = vadd.f32 %v65, %v82
  %v92 = vadd.f32 %v66, %v86
  %v93 = vadd.f32 %v67, %v82
  %v94 = vadd.f32 %v68, %v86
  %v95 = vadd.f32 %v69, %v82
  %v96 = vadd.f32 %v70, %v86
  %v97 = vadd.f32 %v71, %v82
  %v98 = vadd.f32 %v72, %v86
  %v99 = vadd.f32 %v73, %v82
  %v100 = vadd.f32 %v74, %v86
  %v101 = vadd.f32 %v75, %v82
  %v102 = vadd.f32 %v76, %v86
  %v103 = vmax.f32 %v89, 0.0
  %v104 = vmax.f32 %v90, 0.0
  %v105 = vmax.f32 %v91, 0.0
  %v106 = vmax.f32 %v92, 0.0
  %v107 = vmax.f32 %v93, 0.0
  %v108 = vmax.f32 %v94, 0.0
  %v109 = vmax.f32 %v95, 0.0
  %v110 = vmax.f32 %v96, 0.0
  %v111 = vmax.f32 %v97, 0.0
  %v112 = vmax.f32 %v98, 0.0
  %v113 = vmax.f32 %v99, 0.0
  %v114 = vmax.f32 %v100, 0.0
  %v115 = vmax.f32 %v101, 0.0
  %v116 = vmax.f32 %v102, 0.0
  %v117 = vpack.c.bf16 %v105, %v103
  %v118 = vpack.c.bf16 %v106, %v104
  %v119 = vpack.c.bf16 %v109, %v107
  %v120 = vpack.c.bf16 %v110, %v108
  %v121 = vpack.c.bf16 %v113, %v111
  %v122 = vpack.c.bf16 %v114, %v112
  %v123 = vpack.c.bf16 %v115, %v115
  %v124 = vpack.c.bf16 %v116, %v116
  %v125 = vld [vmem:[%s4] sm:$0xf]
  %v126 = vld [vmem:[%s4 + $0x4] sm:$0xf]
  %v127 = vld [vmem:[%s4 + $0x8] sm:$0xf]
  %v128 = vld [vmem:[%s4 + $0xc] sm:$0xf]
  %v129 = vld [vmem:[%s4 + $0x10] sm:$0xf]
  %v130 = vld [vmem:[%s4 + $0x14] sm:$0xf]
  %v131 = vld [vmem:[%s4 + $0x18] sm:$0xf]
  %v132 = vld [vmem:[%s4 + $0x1c] sm:$0xf]
  %v133 = vld [vmem:[%s4 + $0x20] sm:$0xf]
  %v134 = vld [vmem:[%s4 + $0x24] sm:$0xf]
  %v135 = vld [vmem:[%s4 + $0x28] sm:$0xf]
  %v136 = vld [vmem:[%s4 + $0x2c] sm:$0xf]
  %v137 = vld [vmem:[%s4 + $0x30] sm:$0xf]
  %v138 = vld [vmem:[%s4 + $0x34] sm:$0xf]
  %v139 = vld [vmem:[%s4 + $0x38] sm:$0xf]
  %v140 = vld [vmem:[%s4 + $0x3c] sm:$0xf]
  %v141 = vld [vmem:[%s4 + $0x40] sm:$0xf]
  %v142 = vld [vmem:[%s4 + $0x44] sm:$0xf]
  %v143 = vld [vmem:[%s4 + $0x48] sm:$0xf]
  %v144 = vld [vmem:[%s4 + $0x4c] sm:$0xf]
  %v145 = vld [vmem:[%s4 + $0x50] sm:$0xf]
  %v146 = vld [vmem:[%s4 + $0x54] sm:$0xf]
  %v147 = vld [vmem:[%s4 + $0x58] sm:$0xf]
  %v148 = vld [vmem:[%s4 + $0x5c] sm:$0xf]
  %v149 = vld [vmem:[%s4 + $0x60] sm:$0xf]
  %v150 = vld [vmem:[%s4 + $0x64] sm:$0xf]
  %v151 = vld [vmem:[%s4 + $0x68] sm:$0xf]
  %v179 = vunpack.c.l.b16 %v125
  %v180 = vunpack.c.l.b16 %v126
  %v181 = vunpack.c.l.b16 %v127
  %v182 = vunpack.c.l.b16 %v128
  %v183 = vunpack.c.l.b16 %v129
  %v184 = vunpack.c.l.b16 %v130
  %v185 = vunpack.c.l.b16 %v131
  %v186 = vunpack.c.l.b16 %v132
  %v187 = vunpack.c.l.b16 %v133
  %v188 = vunpack.c.l.b16 %v134
  %v189 = vunpack.c.l.b16 %v135
  %v190 = vunpack.c.l.b16 %v136
  %v191 = vunpack.c.l.b16 %v137
  %v192 = vunpack.c.l.b16 %v138
  %v193 = vunpack.c.l.b16 %v139
  %v194 = vunpack.c.l.b16 %v140
  %v195 = vunpack.c.l.b16 %v141
  %v196 = vunpack.c.l.b16 %v142
  %v197 = vunpack.c.l.b16 %v143
  %v198 = vunpack.c.l.b16 %v144
  %v199 = vunpack.c.l.b16 %v145
  %v200 = vunpack.c.l.b16 %v146
  %v201 = vunpack.c.l.b16 %v147
  %v202 = vunpack.c.l.b16 %v148
  %v203 = vunpack.c.l.b16 %v149
  %v204 = vunpack.c.l.b16 %v150
  %v205 = vunpack.c.l.b16 %v151
  %v206 = vpack.c.b16 %v180, %v179
  %v207 = vpack.c.b16 %v182, %v181
  %v208 = vpack.c.b16 %v184, %v183
  %v209 = vpack.c.b16 %v186, %v185
  %v210 = vpack.c.b16 %v188, %v187
  %v211 = vpack.c.b16 %v190, %v189
  %v212 = vpack.c.b16 %v192, %v191
  %v213 = vpack.c.b16 %v194, %v193
  %v214 = vpack.c.b16 %v196, %v195
  %v215 = vpack.c.b16 %v198, %v197
  %v216 = vpack.c.b16 %v200, %v199
  %v217 = vpack.c.b16 %v202, %v201
  %v218 = vpack.c.b16 %v204, %v203
  %v219 = vpack.c.b16 %v205, %v205
  %vm233 = vcmask 719872
  %v235 = vsel %vm233, %v118, 0
  %v238 = vsel %vm233, %v120, 0
  %v241 = vsel %vm233, %v122, 0
  %v244 = vsel %vm233, %v124, 0
  %vm246 = vcmask 1043456
  %v248 = vsel %vm246, %v219, 0
  %250 = vmatprep.subr.bf16.mxu0 0
  %251 = vmatpush1.bf16.msra.mxu0 %v206
  %252 = vmatprep.subr.bf16.mxu0 0
  %253 = vmatpush1.bf16.msra.mxu0 %v207
  %254 = vmatprep.subr.bf16.mxu0 0
  %255 = vmatpush1.bf16.msra.mxu0 %v208
  %256 = vmatprep.subr.bf16.mxu0 0
  %257 = vmatpush1.bf16.msra.mxu0 %v209
  %258 = vmatprep.subr.bf16.mxu0 0
  %259 = vmatpush1.bf16.msra.mxu0 %v210
  %260 = vmatprep.subr.bf16.mxu0 0
  %261 = vmatpush1.bf16.msra.mxu0 %v211
  %262 = vmatprep.subr.bf16.mxu0 0
  %263 = vmatpush1.bf16.msra.mxu0 %v212
  %264 = vmatprep.subr.bf16.mxu0 0
  %265 = vmatpush1.bf16.msra.mxu0 %v213
  %266 = vmatprep.subr.bf16.mxu0 0
  %267 = vmatpush1.bf16.msra.mxu0 %v214
  %268 = vmatprep.subr.bf16.mxu0 0
  %269 = vmatpush1.bf16.msra.mxu0 %v215
  %270 = vmatprep.subr.bf16.mxu0 0
  %271 = vmatpush1.bf16.msra.mxu0 %v216
  %272 = vmatprep.subr.bf16.mxu0 0
  %273 = vmatpush1.bf16.msra.mxu0 %v217
  %274 = vmatprep.subr.bf16.mxu0 0
  %275 = vmatpush1.bf16.msra.mxu0 %v218
  %276 = vmatprep.subr.bf16.mxu0 0
  %277 = vmatpush1.bf16.msra.mxu0 %v248
  %278 = vmatprep.subr.bf16.mxu0 0
  %279 = vmatpush1.bf16.msra.mxu0 0
  %280 = vmatprep.subr.bf16.mxu0 0
  %281 = vmatpush1.bf16.msra.mxu0 0
  %282 = vmatprep.mubr.bf16.mxu0 %v235
  %283 = vmatmul.mubr.bf16.gmra.mrb[0].mxu0 %v117
  %v284 = vpop.f32.mrb[0].mxu0
  %v285 = vadd.f32 0.0, %v284
  %v286 = vpop.f32.mrb[0].mxu0
  %v287 = vpop.f32.mrb[0].mxu0
  %v288 = vadd.f32 0.0, %v287
  %v289 = vpop.f32.mrb[0].mxu0
  %290 = vmatprep.mubr.bf16.mxu0 %v238
  %291 = vmatmul.mubr.bf16.gmra.mrb[0].mxu0 %v119
  %v292 = vpop.f32.mrb[0].mxu0
  %v293 = vadd.f32 0.0, %v292
  %v294 = vpop.f32.mrb[0].mxu0
  %v295 = vpop.f32.mrb[0].mxu0
  %v296 = vadd.f32 0.0, %v295
  %v297 = vpop.f32.mrb[0].mxu0
  %298 = vmatprep.mubr.bf16.mxu0 %v241
  %299 = vmatmul.mubr.bf16.gmra.mrb[0].mxu0 %v121
  %v300 = vpop.f32.mrb[0].mxu0
  %v301 = vadd.f32 0.0, %v300
  %v302 = vpop.f32.mrb[0].mxu0
  %v303 = vpop.f32.mrb[0].mxu0
  %v304 = vadd.f32 0.0, %v303
  %v305 = vpop.f32.mrb[0].mxu0
  %306 = vmatprep.mubr.bf16.mxu0 %v244
  %307 = vmatmul.mubr.bf16.gmra.mrb[0].mxu0 %v123
  %v308 = vpop.f32.mrb[0].mxu0
  %v309 = vadd.f32 0.0, %v308
  %v310 = vpop.f32.mrb[0].mxu0
  %v311 = vpop.f32.mrb[0].mxu0
  %v312 = vpop.f32.mrb[0].mxu0
  %313 = vdwg.mxu0
  %v314 = vld [vmem:[%s1] sm:$0xf]
  %v315 = vld [vmem:[%s1 + $0x4] sm:$0xf]
  %v316 = vld [vmem:[%s1 + $0x8] sm:$0xf]
  %v317 = vld [vmem:[%s1 + $0xc] sm:$0xf]
  %v318 = vld [vmem:[%s1 + $0x10] sm:$0xf]
  %v319 = vld [vmem:[%s1 + $0x14] sm:$0xf]
  %v320 = vld [vmem:[%s1 + $0x18] sm:$0xf]
  %v321 = vunpack.c.l.bf16 %v314
  %v322 = vunpack.c.l.bf16 %v315
  %v323 = vunpack.c.l.bf16 %v316
  %v324 = vunpack.c.l.bf16 %v317
  %v325 = vunpack.c.l.bf16 %v318
  %v326 = vunpack.c.l.bf16 %v319
  %v327 = vunpack.c.l.bf16 %v320
  %v328 = vld [vmem:[%s5] sm:$0xff]
  %v329 = vld [vmem:[%s5 + $0x8] sm:$0xff]
  %v330 = vld [vmem:[%s5 + $0x10] sm:$0xff]
  %v331 = vld [vmem:[%s5 + $0x18] sm:$0x7]
  %vm332 = vcmask 220160
  %v334 = vsel %vm332, %v321, 0
  %v337 = vsel %vm332, %v322, 0
  %v340 = vsel %vm332, %v323, 0
  %v343 = vsel %vm332, %v324, 0
  %v346 = vsel %vm332, %v325, 0
  %v349 = vsel %vm332, %v326, 0
  %v352 = vsel %vm332, %v327, 0
  %vm354 = vcmask 1042432
  %v356 = vsel %vm354, %v331, 0
  %358 = vmatprep.subr.mxu0 0.0
  %359 = vmatpush1.msra.mxu0 %v328
  %360 = vmatprep.subr.mxu0 0.0
  %361 = vmatpush1.msra.mxu0 %v329
  %362 = vmatprep.subr.mxu0 0.0
  %363 = vmatpush1.msra.mxu0 %v330
  %364 = vmatprep.subr.mxu0 0.0
  %365 = vmatpush1.msra.mxu0 %v356
  %366 = vmatprep.subr.mxu0 0.0
  %367 = vmatpush1.msra.mxu0 0.0
  %368 = vmatprep.subr.mxu0 0.0
  %369 = vmatpush1.msra.mxu0 0.0
  %370 = vmatprep.subr.mxu0 0.0
  %371 = vmatpush1.msra.mxu0 0.0
  %372 = vmatprep.subr.mxu0 0.0
  %373 = vmatpush1.msra.mxu0 0.0
  %374 = vmatprep.subr.mxu0 0.0
  %375 = vmatpush1.msra.mxu0 0.0
  %376 = vmatprep.subr.mxu0 0.0
  %377 = vmatpush1.msra.mxu0 0.0
  %378 = vmatprep.subr.mxu0 0.0
  %379 = vmatpush1.msra.mxu0 0.0
  %380 = vmatprep.subr.mxu0 0.0
  %381 = vmatpush1.msra.mxu0 0.0
  %382 = vmatprep.subr.mxu0 0.0
  %383 = vmatpush1.msra.mxu0 0.0
  %384 = vmatprep.subr.mxu0 0.0
  %385 = vmatpush1.msra.mxu0 0.0
  %386 = vmatprep.subr.mxu0 0.0
  %387 = vmatpush1.msra.mxu0 0.0
  %388 = vmatprep.subr.mxu0 0.0
  %389 = vmatpush1.msra.mxu0 0.0
  %390 = vmatprep.subr.mxu0 0.0
  %391 = vmatpush1.msra.mxu0 0.0
  %392 = vmatprep.subr.mxu0 0.0
  %393 = vmatpush1.msra.mxu0 0.0
  %394 = vmatprep.subr.mxu0 0.0
  %395 = vmatpush1.msra.mxu0 0.0
  %396 = vmatprep.subr.mxu0 0.0
  %397 = vmatpush1.msra.mxu0 0.0
  %398 = vmatprep.subr.mxu0 0.0
  %399 = vmatpush1.msra.mxu0 0.0
  %400 = vmatprep.subr.mxu0 0.0
  %401 = vmatpush1.msra.mxu0 0.0
  %402 = vmatprep.subr.mxu0 0.0
  %403 = vmatpush1.msra.mxu0 0.0
  %404 = vmatprep.subr.mxu0 0.0
  %405 = vmatpush1.msra.mxu0 0.0
  %406 = vmatprep.subr.mxu0 0.0
  %407 = vmatpush1.msra.mxu0 0.0
  %408 = vmatprep.subr.mxu0 0.0
  %409 = vmatpush1.msra.mxu0 0.0
  %410 = vmatprep.subr.mxu0 0.0
  %411 = vmatpush1.msra.mxu0 0.0
  %412 = vmatprep.subr.mxu0 0.0
  %413 = vmatpush1.msra.mxu0 0.0
  %414 = vmatprep.subr.mxu0 0.0
  %415 = vmatpush1.msra.mxu0 0.0
  %416 = vmatprep.subr.mxu0 0.0
  %417 = vmatpush1.msra.mxu0 0.0
  %418 = vmatprep.subr.mxu0 0.0
  %419 = vmatpush1.msra.mxu0 0.0
  %420 = vmatprep.subr.mxu0 0.0
  %421 = vmatpush1.msra.mxu0 0.0
  %422 = vmatprep.mubr.f32.mxu0 0.0
  %423 = vmatmul.mubr.f32.gmra.mrb[0].mxu0 %v334
  %v424 = vpop.f32.mrb[0].mxu0
  %v425 = vadd.f32 0.0, %v424
  %v426 = vpop.f32.mrb[0].mxu0
  %427 = vmatprep.mubr.f32.mxu0 0.0
  %428 = vmatmul.mubr.f32.gmra.mrb[0].mxu0 %v337
  %v429 = vpop.f32.mrb[0].mxu0
  %v430 = vadd.f32 0.0, %v429
  %v431 = vpop.f32.mrb[0].mxu0
  %432 = vmatprep.mubr.f32.mxu0 0.0
  %433 = vmatmul.mubr.f32.gmra.mrb[0].mxu0 %v340
  %v434 = vpop.f32.mrb[0].mxu0
  %v435 = vadd.f32 0.0, %v434
  %v436 = vpop.f32.mrb[0].mxu0
  %437 = vmatprep.mubr.f32.mxu0 0.0
  %438 = vmatmul.mubr.f32.gmra.mrb[0].mxu0 %v343
  %v439 = vpop.f32.mrb[0].mxu0
  %v440 = vadd.f32 0.0, %v439
  %v441 = vpop.f32.mrb[0].mxu0
  %442 = vmatprep.mubr.f32.mxu0 0.0
  %443 = vmatmul.mubr.f32.gmra.mrb[0].mxu0 %v346
  %v444 = vpop.f32.mrb[0].mxu0
  %v445 = vadd.f32 0.0, %v444
  %v446 = vpop.f32.mrb[0].mxu0
  %447 = vmatprep.mubr.f32.mxu0 0.0
  %448 = vmatmul.mubr.f32.gmra.mrb[0].mxu0 %v349
  %v449 = vpop.f32.mrb[0].mxu0
  %v450 = vadd.f32 0.0, %v449
  %v451 = vpop.f32.mrb[0].mxu0
  %452 = vmatprep.mubr.f32.mxu0 0.0
  %453 = vmatmul.mubr.f32.gmra.mrb[0].mxu0 %v352
  %v454 = vpop.f32.mrb[0].mxu0
  %v455 = vadd.f32 0.0, %v454
  %v456 = vpop.f32.mrb[0].mxu0
  %457 = vdwg.mxu0
  %v458 = vsub.f32 %v285, %v425
  %v459 = vsub.f32 %v288, %v430
  %v460 = vsub.f32 %v293, %v435
  %v461 = vsub.f32 %v296, %v440
  %v462 = vsub.f32 %v301, %v445
  %v463 = vsub.f32 %v304, %v450
  %v464 = vsub.f32 %v309, %v455
  %v465 = vld [vmem:[%s6] sm:$0xf]
  %v466 = vld [vmem:[%s6 + $0x4] sm:$0xf]
  %v467 = vld [vmem:[%s6 + $0x8] sm:$0xf]
  %v468 = vld [vmem:[%s6 + $0xc] sm:$0xf]
  %v469 = vld [vmem:[%s6 + $0x10] sm:$0xf]
  %v470 = vld [vmem:[%s6 + $0x14] sm:$0xf]
  %v471 = vld [vmem:[%s6 + $0x18] sm:$0xf]
  %v472 = vunpack.c.l.bf16 %v465
  %v473 = vunpack.c.l.bf16 %v466
  %v474 = vunpack.c.l.bf16 %v467
  %v475 = vunpack.c.l.bf16 %v468
  %v476 = vunpack.c.l.bf16 %v469
  %v477 = vunpack.c.l.bf16 %v470
  %v478 = vunpack.c.l.bf16 %v471
  %v479 = vadd.f32 %v458, %v472
  %v480 = vadd.f32 %v459, %v473
  %v481 = vadd.f32 %v460, %v474
  %v482 = vadd.f32 %v461, %v475
  %v483 = vadd.f32 %v462, %v476
  %v484 = vadd.f32 %v463, %v477
  %v485 = vadd.f32 %v464, %v478
  %s486 = smul.u32 0, 56
  %v487 = vlaneseq
  %v488 = vshrl.u32 %v487, 7
  %v489 = vadd.s32 %v488, 8
  %v490 = vadd.s32 %v488, 16
  %v491 = vadd.s32 %v488, 24
  %v492 = vadd.s32 %v488, 32
  %v493 = vadd.s32 %v488, 40
  %v494 = vadd.s32 %v488, 48
  %v495 = vstv %s486
  %v496 = vadd.s32 %v495, %v488
  %v497 = vadd.s32 %v495, %v489
  %v498 = vadd.s32 %v495, %v490
  %v499 = vadd.s32 %v495, %v491
  %v500 = vadd.s32 %v495, %v492
  %v501 = vadd.s32 %v495, %v493
  %v502 = vadd.s32 %v495, %v494
  %vm503 = vcmp.lt.s32.totalorder %v496, 54
  %vm504 = vcmp.lt.s32.totalorder %v497, 54
  %vm505 = vcmp.lt.s32.totalorder %v498, 54
  %vm506 = vcmp.lt.s32.totalorder %v499, 54
  %vm507 = vcmp.lt.s32.totalorder %v500, 54
  %vm508 = vcmp.lt.s32.totalorder %v501, 54
  %vm509 = vcmp.lt.s32.totalorder %v502, 54
  %v510 = vsel %vm503, 1, 0
  %v511 = vsel %vm504, 1, 0
  %v512 = vsel %vm505, 1, 0
  %v513 = vsel %vm506, 1, 0
  %v514 = vsel %vm507, 1, 0
  %v515 = vsel %vm508, 1, 0
  %v516 = vsel %vm509, 1, 0
  %vm517 = vcmp.eq.s32.totalorder %v510, 1
  %vm518 = vcmp.eq.s32.totalorder %v511, 1
  %vm519 = vcmp.eq.s32.totalorder %v512, 1
  %vm520 = vcmp.eq.s32.totalorder %v513, 1
  %vm521 = vcmp.eq.s32.totalorder %v514, 1
  %vm522 = vcmp.eq.s32.totalorder %v515, 1
  %vm523 = vcmp.eq.s32.totalorder %v516, 1
  %v524 = vsel %vm517, %v479, 0.0
  %v525 = vsel %vm518, %v480, 0.0
  %v526 = vsel %vm519, %v481, 0.0
  %v527 = vsel %vm520, %v482, 0.0
  %v528 = vsel %vm521, %v483, 0.0
  %v529 = vsel %vm522, %v484, 0.0
  %v530 = vsel %vm523, %v485, 0.0
  %vm531 = vcmask 64512
  %v532 = vsel %vm531, %v524, 0.0
  %v533 = vsel %vm531, %v525, 0.0
  %v534 = vadd.f32 %v532, %v533
  %v535 = vsel %vm531, %v526, 0.0
  %v536 = vadd.f32 %v534, %v535
  %v537 = vsel %vm531, %v527, 0.0
  %v538 = vadd.f32 %v536, %v537
  %v539 = vsel %vm531, %v528, 0.0
  %v540 = vadd.f32 %v538, %v539
  %v541 = vsel %vm531, %v529, 0.0
  %v542 = vadd.f32 %v540, %v541
  %v543 = vsel %vm531, %v530, 0.0
  %v544 = vadd.f32 %v542, %v543
  %v545 = vrot.slane %v544, 4
  %v546 = vadd.f32 %v544, %v545
  %v547 = vrot.slane %v546, 2
  %v548 = vadd.f32 %v546, %v547
  %v549 = vrot.slane %v548, 1
  %v550 = vadd.f32 %v548, %v549
  %vm551 = vcmask 57344
  %552 = vst.msk [vmem:[%s8] sm:$0x1] %vm551, %v550
  %v553 = vmul.f32 %v524, %v524
  %v554 = vmul.f32 %v525, %v525
  %v555 = vmul.f32 %v526, %v526
  %v556 = vmul.f32 %v527, %v527
  %v557 = vmul.f32 %v528, %v528
  %v558 = vmul.f32 %v529, %v529
  %v559 = vmul.f32 %v530, %v530
  %v560 = vsel %vm531, %v553, 0.0
  %v561 = vsel %vm531, %v554, 0.0
  %v562 = vadd.f32 %v560, %v561
  %v563 = vsel %vm531, %v555, 0.0
  %v564 = vadd.f32 %v562, %v563
  %v565 = vsel %vm531, %v556, 0.0
  %v566 = vadd.f32 %v564, %v565
  %v567 = vsel %vm531, %v557, 0.0
  %v568 = vadd.f32 %v566, %v567
  %v569 = vsel %vm531, %v558, 0.0
  %v570 = vadd.f32 %v568, %v569
  %v571 = vsel %vm531, %v559, 0.0
  %v572 = vadd.f32 %v570, %v571
  %v573 = vrot.slane %v572, 4
  %v574 = vadd.f32 %v572, %v573
  %v575 = vrot.slane %v574, 2
  %v576 = vadd.f32 %v574, %v575
  %v577 = vrot.slane %v576, 1
  %v578 = vadd.f32 %v576, %v577
  %579 = vst.msk [vmem:[%s9] sm:$0x1] %vm551, %v578
  %v580 = vpack.c.bf16 %v525, %v524
  %v581 = vpack.c.bf16 %v527, %v526
  %v582 = vpack.c.bf16 %v529, %v528
  %v583 = vpack.c.bf16 %v530, %v530
  %v588 = vunpack.c.l.b16 %v580
  %v589 = vunpack.c.h.b16 %v580
  %v590 = vunpack.c.l.b16 %v581
  %v591 = vunpack.c.h.b16 %v581
  %v592 = vunpack.c.l.b16 %v582
  %v593 = vunpack.c.h.b16 %v582
  %v594 = vunpack.c.l.b16 %v583
  %v595 = vpack.c.b16 %v588, %v588
  %v596 = vpack.c.b16 %v589, %v589
  %v597 = vpack.c.b16 %v590, %v590
  %v598 = vpack.c.b16 %v591, %v591
  %v599 = vpack.c.b16 %v592, %v592
  %v600 = vpack.c.b16 %v593, %v593
  %v601 = vpack.c.b16 %v594, %v594
  %vm609 = vcmask 60416
  %610 = vst.msk [vmem:[%s7] sm:$0xf] %vm609, %v595
  %611 = vst.msk [vmem:[%s7 + $0x4] sm:$0xf] %vm609, %v596
  %612 = vst.msk [vmem:[%s7 + $0x8] sm:$0xf] %vm609, %v597
  %613 = vst.msk [vmem:[%s7 + $0xc] sm:$0xf] %vm609, %v598
  %614 = vst.msk [vmem:[%s7 + $0x10] sm:$0xf] %vm609, %v599
  %615 = vst.msk [vmem:[%s7 + $0x14] sm:$0xf] %vm609, %v600
  %616 = vst.msk [vmem:[%s7 + $0x18] sm:$0xf] %vm609, %v601
  // Predicated region
  $region30: #{motion_prediction_forward.17} parent=0 // pred_check
    _
  $region31: #{motion_prediction_forward.17} parent=0 // pred_check_branch
    %618 = sbr.rel (0) target = $region33
  $region32: #{motion_prediction_forward.17} parent=0 // pred_region
    _
  $region33: #{motion_prediction_forward.17} parent=0 // pred_fallthru
    _
  // Predicated region
  $region34: #{motion_prediction_forward.17} parent=0 // pred_check
    _
  $region35: #{motion_prediction_forward.17} parent=0 // pred_check_branch
    %620 = sbr.rel (0) target = $region37
  $region36: #{motion_prediction_forward.17} parent=0 // pred_region
    _
  $region37: #{motion_prediction_forward.17} parent=0 // pred_fallthru
    _
  // Predicated region
  $region38: #{motion_prediction_forward.17} parent=0 // pred_check
    _
  $region39: #{motion_prediction_forward.17} parent=0 // pred_check_branch
    %622 = sbr.rel (0) target = $region41
  $region40: #{motion_prediction_forward.17} parent=0 // pred_region
    _
  $region41: #{motion_prediction_forward.17} parent=0 // pred_fallthru
    _
  // Predicated region
  $region42: #{motion_prediction_forward.17} parent=0 // pred_check
    _
  $region43: #{motion_prediction_forward.17} parent=0 // pred_check_branch
    %624 = sbr.rel (0) target = $region45
  $region44: #{motion_prediction_forward.17} parent=0 // pred_region
    _
  $region45: #{motion_prediction_forward.17} parent=0 // pred_fallthru
    _
  // Predicated region
  $region46: #{motion_prediction_forward.17} parent=0 // pred_check
    _
  $region47: #{motion_prediction_forward.17} parent=0 // pred_check_branch
    %626 = sbr.rel (0) target = $region49
  $region48: #{motion_prediction_forward.17} parent=0 // pred_region
    _
  $region49: #{motion_prediction_forward.17} parent=0 // pred_fallthru
    _
  // Predicated region
  $region50: #{motion_prediction_forward.17} parent=0 // pred_check
    _
  $region51: #{motion_prediction_forward.17} parent=0 // pred_check_branch
    %628 = sbr.rel (0) target = $region53
  $region52: #{motion_prediction_forward.17} parent=0 // pred_region
    _
  $region53: #{motion_prediction_forward.17} parent=0 // pred_fallthru
    _

// kernel: motion_prediction_forward.19
$region0: #{motion_prediction_forward.19}
  #allocation0 [shape = 'u32[]', space=smem, size = 0x4, offset = 0x4, fixed_abs, tag = 'smem constant byte address 0x4 - core index']
  #allocation1 [shape = 'u32[144,128]{1,0:T(1,128)}', space=vmem, size = 0x12000, scoped, tag = 'internal scratch']
  %s0 = inlined_call_operand.vmem [shape: bf16[24,216], index: 0, kind: input, shape index: {}]
  %s1 = inlined_call_operand.vmem [shape: bf16[24,27], index: 1, kind: input, shape index: {}]
  %s2 = inlined_call_operand.vmem [shape: f32[1,216], index: 2, kind: input, shape index: {}]
  %s3 = inlined_call_operand.vmem [shape: f32[1,216], index: 3, kind: input, shape index: {}]
  %s4 = inlined_call_operand.vmem [shape: bf16[216,8], index: 4, kind: input, shape index: {}]
  %s5 = inlined_call_operand.vmem [shape: f32[27,8], index: 5, kind: input, shape index: {}]
  %s6 = inlined_call_operand.vmem [shape: bf16[24,8], index: 6, kind: output, shape index: {0}]
  %s7 = inlined_call_operand.vmem [shape: f32[1,1,8], index: 7, kind: output, shape index: {1}]
  %s8 = inlined_call_operand.vmem [shape: f32[1,1,8], index: 8, kind: output, shape index: {2}]
  %9 = xla_tuple %s6, %s7, %s8
  %s10 = sld [smem:[#allocation0]]
  $region50: #{motion_prediction_forward.19} parent=0
    _
  %s12 = ssub.s32 1, %s10
  %s13 = scalar_select 0, %s12, %s10
  // Predicated region
  $region2: #{motion_prediction_forward.19} parent=0 // pred_check
    _
  $region3: #{motion_prediction_forward.19} parent=0 // pred_check_branch
    %15 = sbr.rel (0) target = $region5
  $region4: #{motion_prediction_forward.19} parent=0 // pred_region
    _
  $region5: #{motion_prediction_forward.19} parent=0 // pred_fallthru
    _
  // Predicated region
  $region6: #{motion_prediction_forward.19} parent=0 // pred_check
    _
  $region7: #{motion_prediction_forward.19} parent=0 // pred_check_branch
    %17 = sbr.rel (0) target = $region9
  $region8: #{motion_prediction_forward.19} parent=0 // pred_region
    _
  $region9: #{motion_prediction_forward.19} parent=0 // pred_fallthru
    _
  // Predicated region
  $region10: #{motion_prediction_forward.19} parent=0 // pred_check
    _
  $region11: #{motion_prediction_forward.19} parent=0 // pred_check_branch
    %19 = sbr.rel (0) target = $region13
  $region12: #{motion_prediction_forward.19} parent=0 // pred_region
    _
  $region13: #{motion_prediction_forward.19} parent=0 // pred_fallthru
    _
  // Predicated region
  $region14: #{motion_prediction_forward.19} parent=0 // pred_check
    _
  $region15: #{motion_prediction_forward.19} parent=0 // pred_check_branch
    %21 = sbr.rel (0) target = $region17
  $region16: #{motion_prediction_forward.19} parent=0 // pred_region
    _
  $region17: #{motion_prediction_forward.19} parent=0 // pred_fallthru
    _
  // Predicated region
  $region18: #{motion_prediction_forward.19} parent=0 // pred_check
    _
  $region19: #{motion_prediction_forward.19} parent=0 // pred_check_branch
    %23 = sbr.rel (0) target = $region21
  $region20: #{motion_prediction_forward.19} parent=0 // pred_region
    _
  $region21: #{motion_prediction_forward.19} parent=0 // pred_fallthru
    _
  // Predicated region
  $region22: #{motion_prediction_forward.19} parent=0 // pred_check
    _
  $region23: #{motion_prediction_forward.19} parent=0 // pred_check_branch
    %25 = sbr.rel (0) target = $region25
  $region24: #{motion_prediction_forward.19} parent=0 // pred_region
    _
  $region25: #{motion_prediction_forward.19} parent=0 // pred_fallthru
    _
  %v27 = vld [vmem:[%s0] sm:$0xff]
  %v28 = vld [vmem:[%s0 + $0x8] sm:$0xff]
  %v29 = vld [vmem:[%s0 + $0x10] sm:$0xff]
  %v30 = vunpack.c.l.bf16 %v27
  %v31 = vunpack.c.h.bf16 %v27
  %v32 = vunpack.c.l.bf16 %v28
  %v33 = vunpack.c.h.bf16 %v28
  %v34 = vunpack.c.l.bf16 %v29
  %v35 = vunpack.c.h.bf16 %v29
  %v36 = vld [vmem:[%s2] sm:$0x3]
  %v38 = vlaneseq
  %v39 = vshrl.u32 %v38, 7
  %v40 = vsub.s32 0, %v39
  %v41 = vrot.slane %v36, %v40
  %v42 = vlaneseq
  %v43 = vshrl.u32 %v42, 7
  %v44 = vsub.s32 1, %v43
  %v45 = vrot.slane %v36, %v44
  %v48 = vmul.f32 %v30, %v41
  %v49 = vmul.f32 %v31, %v45
  %v50 = vmul.f32 %v32, %v41
  %v51 = vmul.f32 %v33, %v45
  %v52 = vmul.f32 %v34, %v41
  %v53 = vmul.f32 %v35, %v45
  %v54 = vld [vmem:[%s3] sm:$0x3]
  %v56 = vlaneseq
  %v57 = vshrl.u32 %v56, 7
  %v58 = vsub.s32 0, %v57
  %v59 = vrot.slane %v54, %v58
  %v60 = vlaneseq
  %v61 = vshrl.u32 %v60, 7
  %v62 = vsub.s32 1, %v61
  %v63 = vrot.slane %v54, %v62
  %v66 = vadd.f32 %v48, %v59
  %v67 = vadd.f32 %v49, %v63
  %v68 = vadd.f32 %v50, %v59
  %v69 = vadd.f32 %v51, %v63
  %v70 = vadd.f32 %v52, %v59
  %v71 = vadd.f32 %v53, %v63
  %v72 = vmax.f32 %v66, 0.0
  %v73 = vmax.f32 %v67, 0.0
  %v74 = vmax.f32 %v68, 0.0
  %v75 = vmax.f32 %v69, 0.0
  %v76 = vmax.f32 %v70, 0.0
  %v77 = vmax.f32 %v71, 0.0
  %v78 = vpack.c.bf16 %v74, %v72
  %v79 = vpack.c.bf16 %v75, %v73
  %v80 = vpack.c.bf16 %v76, %v76
  %v81 = vpack.c.bf16 %v77, %v77
  %v82 = vld [vmem:[%s4] sm:$0xf]
  %v83 = vld [vmem:[%s4 + $0x4] sm:$0xf]
  %v84 = vld [vmem:[%s4 + $0x8] sm:$0xf]
  %v85 = vld [vmem:[%s4 + $0xc] sm:$0xf]
  %v86 = vld [vmem:[%s4 + $0x10] sm:$0xf]
  %v87 = vld [vmem:[%s4 + $0x14] sm:$0xf]
  %v88 = vld [vmem:[%s4 + $0x18] sm:$0xf]
  %v89 = vld [vmem:[%s4 + $0x1c] sm:$0xf]
  %v90 = vld [vmem:[%s4 + $0x20] sm:$0xf]
  %v91 = vld [vmem:[%s4 + $0x24] sm:$0xf]
  %v92 = vld [vmem:[%s4 + $0x28] sm:$0xf]
  %v93 = vld [vmem:[%s4 + $0x2c] sm:$0xf]
  %v94 = vld [vmem:[%s4 + $0x30] sm:$0xf]
  %v95 = vld [vmem:[%s4 + $0x34] sm:$0xf]
  %v96 = vld [vmem:[%s4 + $0x38] sm:$0xf]
  %v97 = vld [vmem:[%s4 + $0x3c] sm:$0xf]
  %v98 = vld [vmem:[%s4 + $0x40] sm:$0xf]
  %v99 = vld [vmem:[%s4 + $0x44] sm:$0xf]
  %v100 = vld [vmem:[%s4 + $0x48] sm:$0xf]
  %v101 = vld [vmem:[%s4 + $0x4c] sm:$0xf]
  %v102 = vld [vmem:[%s4 + $0x50] sm:$0xf]
  %v103 = vld [vmem:[%s4 + $0x54] sm:$0xf]
  %v104 = vld [vmem:[%s4 + $0x58] sm:$0xf]
  %v105 = vld [vmem:[%s4 + $0x5c] sm:$0xf]
  %v106 = vld [vmem:[%s4 + $0x60] sm:$0xf]
  %v107 = vld [vmem:[%s4 + $0x64] sm:$0xf]
  %v108 = vld [vmem:[%s4 + $0x68] sm:$0xf]
  %v136 = vunpack.c.l.b16 %v82
  %v137 = vunpack.c.l.b16 %v83
  %v138 = vunpack.c.l.b16 %v84
  %v139 = vunpack.c.l.b16 %v85
  %v140 = vunpack.c.l.b16 %v86
  %v141 = vunpack.c.l.b16 %v87
  %v142 = vunpack.c.l.b16 %v88
  %v143 = vunpack.c.l.b16 %v89
  %v144 = vunpack.c.l.b16 %v90
  %v145 = vunpack.c.l.b16 %v91
  %v146 = vunpack.c.l.b16 %v92
  %v147 = vunpack.c.l.b16 %v93
  %v148 = vunpack.c.l.b16 %v94
  %v149 = vunpack.c.l.b16 %v95
  %v150 = vunpack.c.l.b16 %v96
  %v151 = vunpack.c.l.b16 %v97
  %v152 = vunpack.c.l.b16 %v98
  %v153 = vunpack.c.l.b16 %v99
  %v154 = vunpack.c.l.b16 %v100
  %v155 = vunpack.c.l.b16 %v101
  %v156 = vunpack.c.l.b16 %v102
  %v157 = vunpack.c.l.b16 %v103
  %v158 = vunpack.c.l.b16 %v104
  %v159 = vunpack.c.l.b16 %v105
  %v160 = vunpack.c.l.b16 %v106
  %v161 = vunpack.c.l.b16 %v107
  %v162 = vunpack.c.l.b16 %v108
  %v163 = vpack.c.b16 %v137, %v136
  %v164 = vpack.c.b16 %v139, %v138
  %v165 = vpack.c.b16 %v141, %v140
  %v166 = vpack.c.b16 %v143, %v142
  %v167 = vpack.c.b16 %v145, %v144
  %v168 = vpack.c.b16 %v147, %v146
  %v169 = vpack.c.b16 %v149, %v148
  %v170 = vpack.c.b16 %v151, %v150
  %v171 = vpack.c.b16 %v153, %v152
  %v172 = vpack.c.b16 %v155, %v154
  %v173 = vpack.c.b16 %v157, %v156
  %v174 = vpack.c.b16 %v159, %v158
  %v175 = vpack.c.b16 %v161, %v160
  %v176 = vpack.c.b16 %v162, %v162
  %vm190 = vcmask 719872
  %v192 = vsel %vm190, %v79, 0
  %v195 = vsel %vm190, %v81, 0
  %vm197 = vcmask 1043456
  %v199 = vsel %vm197, %v176, 0
  %201 = vmatprep.subr.bf16.mxu0 0
  %202 = vmatpush1.bf16.msra.mxu0 %v163
  %203 = vmatprep.subr.bf16.mxu0 0
  %204 = vmatpush1.bf16.msra.mxu0 %v164
  %205 = vmatprep.subr.bf16.mxu0 0
  %206 = vmatpush1.bf16.msra.mxu0 %v165
  %207 = vmatprep.subr.bf16.mxu0 0
  %208 = vmatpush1.bf16.msra.mxu0 %v166
  %209 = vmatprep.subr.bf16.mxu0 0
  %210 = vmatpush1.bf16.msra.mxu0 %v167
  %211 = vmatprep.subr.bf16.mxu0 0
  %212 = vmatpush1.bf16.msra.mxu0 %v168
  %213 = vmatprep.subr.bf16.mxu0 0
  %214 = vmatpush1.bf16.msra.mxu0 %v169
  %215 = vmatprep.subr.bf16.mxu0 0
  %216 = vmatpush1.bf16.msra.mxu0 %v170
  %217 = vmatprep.subr.bf16.mxu0 0
  %218 = vmatpush1.bf16.msra.mxu0 %v171
  %219 = vmatprep.subr.bf16.mxu0 0
  %220 = vmatpush1.bf16.msra.mxu0 %v172
  %221 = vmatprep.subr.bf16.mxu0 0
  %222 = vmatpush1.bf16.msra.mxu0 %v173
  %223 = vmatprep.subr.bf16.mxu0 0
  %224 = vmatpush1.bf16.msra.mxu0 %v174
  %225 = vmatprep.subr.bf16.mxu0 0
  %226 = vmatpush1.bf16.msra.mxu0 %v175
  %227 = vmatprep.subr.bf16.mxu0 0
  %228 = vmatpush1.bf16.msra.mxu0 %v199
  %229 = vmatprep.subr.bf16.mxu0 0
  %230 = vmatpush1.bf16.msra.mxu0 0
  %231 = vmatprep.subr.bf16.mxu0 0
  %232 = vmatpush1.bf16.msra.mxu0 0
  %233 = vmatprep.mubr.bf16.mxu0 %v192
  %234 = vmatmul.mubr.bf16.gmra.mrb[0].mxu0 %v78
  %v235 = vpop.f32.mrb[0].mxu0
  %v236 = vadd.f32 0.0, %v235
  %v237 = vpop.f32.mrb[0].mxu0
  %v238 = vpop.f32.mrb[0].mxu0
  %v239 = vadd.f32 0.0, %v238
  %v240 = vpop.f32.mrb[0].mxu0
  %241 = vmatprep.mubr.bf16.mxu0 %v195
  %242 = vmatmul.mubr.bf16.gmra.mrb[0].mxu0 %v80
  %v243 = vpop.f32.mrb[0].mxu0
  %v244 = vadd.f32 0.0, %v243
  %v245 = vpop.f32.mrb[0].mxu0
  %v246 = vpop.f32.mrb[0].mxu0
  %v247 = vpop.f32.mrb[0].mxu0
  %248 = vdwg.mxu0
  %v249 = vld [vmem:[%s1] sm:$0xf]
  %v250 = vld [vmem:[%s1 + $0x4] sm:$0xf]
  %v251 = vld [vmem:[%s1 + $0x8] sm:$0xf]
  %v252 = vunpack.c.l.bf16 %v249
  %v253 = vunpack.c.l.bf16 %v250
  %v254 = vunpack.c.l.bf16 %v251
  %v255 = vld [vmem:[%s5] sm:$0xff]
  %v256 = vld [vmem:[%s5 + $0x8] sm:$0xff]
  %v257 = vld [vmem:[%s5 + $0x10] sm:$0xff]
  %v258 = vld [vmem:[%s5 + $0x18] sm:$0x7]
  %vm259 = vcmask 220160
  %v261 = vsel %vm259, %v252, 0
  %v264 = vsel %vm259, %v253, 0
  %v267 = vsel %vm259, %v254, 0
  %vm269 = vcmask 1042432
  %v271 = vsel %vm269, %v258, 0
  %273 = vmatprep.subr.mxu0 0.0
  %274 = vmatpush1.msra.mxu0 %v255
  %275 = vmatprep.subr.mxu0 0.0
  %276 = vmatpush1.msra.mxu0 %v256
  %277 = vmatprep.subr.mxu0 0.0
  %278 = vmatpush1.msra.mxu0 %v257
  %279 = vmatprep.subr.mxu0 0.0
  %280 = vmatpush1.msra.mxu0 %v271
  %281 = vmatprep.subr.mxu0 0.0
  %282 = vmatpush1.msra.mxu0 0.0
  %283 = vmatprep.subr.mxu0 0.0
  %284 = vmatpush1.msra.mxu0 0.0
  %285 = vmatprep.subr.mxu0 0.0
  %286 = vmatpush1.msra.mxu0 0.0
  %287 = vmatprep.subr.mxu0 0.0
  %288 = vmatpush1.msra.mxu0 0.0
  %289 = vmatprep.subr.mxu0 0.0
  %290 = vmatpush1.msra.mxu0 0.0
  %291 = vmatprep.subr.mxu0 0.0
  %292 = vmatpush1.msra.mxu0 0.0
  %293 = vmatprep.subr.mxu0 0.0
  %294 = vmatpush1.msra.mxu0 0.0
  %295 = vmatprep.subr.mxu0 0.0
  %296 = vmatpush1.msra.mxu0 0.0
  %297 = vmatprep.subr.mxu0 0.0
  %298 = vmatpush1.msra.mxu0 0.0
  %299 = vmatprep.subr.mxu0 0.0
  %300 = vmatpush1.msra.mxu0 0.0
  %301 = vmatprep.subr.mxu0 0.0
  %302 = vmatpush1.msra.mxu0 0.0
  %303 = vmatprep.subr.mxu0 0.0
  %304 = vmatpush1.msra.mxu0 0.0
  %305 = vmatprep.subr.mxu0 0.0
  %306 = vmatpush1.msra.mxu0 0.0
  %307 = vmatprep.subr.mxu0 0.0
  %308 = vmatpush1.msra.mxu0 0.0
  %309 = vmatprep.subr.mxu0 0.0
  %310 = vmatpush1.msra.mxu0 0.0
  %311 = vmatprep.subr.mxu0 0.0
  %312 = vmatpush1.msra.mxu0 0.0
  %313 = vmatprep.subr.mxu0 0.0
  %314 = vmatpush1.msra.mxu0 0.0
  %315 = vmatprep.subr.mxu0 0.0
  %316 = vmatpush1.msra.mxu0 0.0
  %317 = vmatprep.subr.mxu0 0.0
  %318 = vmatpush1.msra.mxu0 0.0
  %319 = vmatprep.subr.mxu0 0.0
  %320 = vmatpush1.msra.mxu0 0.0
  %321 = vmatprep.subr.mxu0 0.0
  %322 = vmatpush1.msra.mxu0 0.0
  %323 = vmatprep.subr.mxu0 0.0
  %324 = vmatpush1.msra.mxu0 0.0
  %325 = vmatprep.subr.mxu0 0.0
  %326 = vmatpush1.msra.mxu0 0.0
  %327 = vmatprep.subr.mxu0 0.0
  %328 = vmatpush1.msra.mxu0 0.0
  %329 = vmatprep.subr.mxu0 0.0
  %330 = vmatpush1.msra.mxu0 0.0
  %331 = vmatprep.subr.mxu0 0.0
  %332 = vmatpush1.msra.mxu0 0.0
  %333 = vmatprep.subr.mxu0 0.0
  %334 = vmatpush1.msra.mxu0 0.0
  %335 = vmatprep.subr.mxu0 0.0
  %336 = vmatpush1.msra.mxu0 0.0
  %337 = vmatprep.mubr.f32.mxu0 0.0
  %338 = vmatmul.mubr.f32.gmra.mrb[0].mxu0 %v261
  %v339 = vpop.f32.mrb[0].mxu0
  %v340 = vadd.f32 0.0, %v339
  %v341 = vpop.f32.mrb[0].mxu0
  %342 = vmatprep.mubr.f32.mxu0 0.0
  %343 = vmatmul.mubr.f32.gmra.mrb[0].mxu0 %v264
  %v344 = vpop.f32.mrb[0].mxu0
  %v345 = vadd.f32 0.0, %v344
  %v346 = vpop.f32.mrb[0].mxu0
  %347 = vmatprep.mubr.f32.mxu0 0.0
  %348 = vmatmul.mubr.f32.gmra.mrb[0].mxu0 %v267
  %v349 = vpop.f32.mrb[0].mxu0
  %v350 = vadd.f32 0.0, %v349
  %v351 = vpop.f32.mrb[0].mxu0
  %352 = vdwg.mxu0
  %v353 = vsub.f32 %v236, %v340
  %v354 = vsub.f32 %v239, %v345
  %v355 = vsub.f32 %v244, %v350
  %s356 = smul.u32 0, 24
  %v357 = vlaneseq
  %v358 = vshrl.u32 %v357, 7
  %v359 = vadd.s32 %v358, 8
  %v360 = vadd.s32 %v358, 16
  %v361 = vstv %s356
  %v362 = vadd.s32 %v361, %v358
  %v363 = vadd.s32 %v361, %v359
  %v364 = vadd.s32 %v361, %v360
  %vm365 = vcmp.lt.s32.totalorder %v362, 16
  %vm366 = vcmp.lt.s32.totalorder %v363, 16
  %vm367 = vcmp.lt.s32.totalorder %v364, 16
  %v368 = vsel %vm365, 1, 0
  %v369 = vsel %vm366, 1, 0
  %v370 = vsel %vm367, 1, 0
  %vm371 = vcmp.eq.s32.totalorder %v368, 1
  %vm372 = vcmp.eq.s32.totalorder %v369, 1
  %vm373 = vcmp.eq.s32.totalorder %v370, 1
  %v374 = vsel %vm371, %v353, 0.0
  %v375 = vsel %vm372, %v354, 0.0
  %v376 = vsel %vm373, %v355, 0.0
  %vm377 = vcmask 64512
  %v378 = vsel %vm377, %v374, 0.0
  %v379 = vsel %vm377, %v375, 0.0
  %v380 = vadd.f32 %v378, %v379
  %v381 = vsel %vm377, %v376, 0.0
  %v382 = vadd.f32 %v380, %v381
  %v383 = vrot.slane %v382, 4
  %v384 = vadd.f32 %v382, %v383
  %v385 = vrot.slane %v384, 2
  %v386 = vadd.f32 %v384, %v385
  %v387 = vrot.slane %v386, 1
  %v388 = vadd.f32 %v386, %v387
  %vm389 = vcmask 57344
  %390 = vst.msk [vmem:[%s7] sm:$0x1] %vm389, %v388
  %v391 = vmul.f32 %v374, %v374
  %v392 = vmul.f32 %v375, %v375
  %v393 = vmul.f32 %v376, %v376
  %v394 = vsel %vm377, %v391, 0.0
  %v395 = vsel %vm377, %v392, 0.0
  %v396 = vadd.f32 %v394, %v395
  %v397 = vsel %vm377, %v393, 0.0
  %v398 = vadd.f32 %v396, %v397
  %v399 = vrot.slane %v398, 4
  %v400 = vadd.f32 %v398, %v399
  %v401 = vrot.slane %v400, 2
  %v402 = vadd.f32 %v400, %v401
  %v403 = vrot.slane %v402, 1
  %v404 = vadd.f32 %v402, %v403
  %405 = vst.msk [vmem:[%s8] sm:$0x1] %vm389, %v404
  %v406 = vpack.c.bf16 %v375, %v374
  %v407 = vpack.c.bf16 %v376, %v376
  %v410 = vunpack.c.l.b16 %v406
  %v411 = vunpack.c.h.b16 %v406
  %v412 = vunpack.c.l.b16 %v407
  %v413 = vpack.c.b16 %v410, %v410
  %v414 = vpack.c.b16 %v411, %v411
  %v415 = vpack.c.b16 %v412, %v412
  %vm419 = vcmask 60416
  %420 = vst.msk [vmem:[%s6] sm:$0xf] %vm419, %v413
  %421 = vst.msk [vmem:[%s6 + $0x4] sm:$0xf] %vm419, %v414
  %422 = vst.msk [vmem:[%s6 + $0x8] sm:$0xf] %vm419, %v415
  // Predicated region
  $region26: #{motion_prediction_forward.19} parent=0 // pred_check
    _
  $region27: #{motion_prediction_forward.19} parent=0 // pred_check_branch
    %424 = sbr.rel (0) target = $region29
  $region28: #{motion_prediction_forward.19} parent=0 // pred_region
    _
  $region29: #{motion_prediction_forward.19} parent=0 // pred_fallthru
    _
  // Predicated region
  $region30: #{motion_prediction_forward.19} parent=0 // pred_check
    _
  $region31: #{motion_prediction_forward.19} parent=0 // pred_check_branch
    %426 = sbr.rel (0) target = $region33
  $region32: #{motion_prediction_forward.19} parent=0 // pred_region
    _
  $region33: #{motion_prediction_forward.19} parent=0 // pred_fallthru
    _
  // Predicated region
  $region34: #{motion_prediction_forward.19} parent=0 // pred_check
    _
  $region35: #{motion_prediction_forward.19} parent=0 // pred_check_branch
    %428 = sbr.rel (0) target = $region37
  $region36: #{motion_prediction_forward.19} parent=0 // pred_region
    _
  $region37: #{motion_prediction_forward.19} parent=0 // pred_fallthru
    _
  // Predicated region
  $region38: #{motion_prediction_forward.19} parent=0 // pred_check
    _
  $region39: #{motion_prediction_forward.19} parent=0 // pred_check_branch
    %430 = sbr.rel (0) target = $region41
  $region40: #{motion_prediction_forward.19} parent=0 // pred_region
    _
  $region41: #{motion_prediction_forward.19} parent=0 // pred_fallthru
    _
  // Predicated region
  $region42: #{motion_prediction_forward.19} parent=0 // pred_check
    _
  $region43: #{motion_prediction_forward.19} parent=0 // pred_check_branch
    %432 = sbr.rel (0) target = $region45
  $region44: #{motion_prediction_forward.19} parent=0 // pred_region
    _
  $region45: #{motion_prediction_forward.19} parent=0 // pred_fallthru
    _
  // Predicated region
  $region46: #{motion_prediction_forward.19} parent=0 // pred_check
    _
  $region47: #{motion_prediction_forward.19} parent=0 // pred_check_branch
    %434 = sbr.rel (0) target = $region49
  $region48: #{motion_prediction_forward.19} parent=0 // pred_region
    _
  $region49: #{motion_prediction_forward.19} parent=0 // pred_fallthru
    _

// kernel: motion_prediction_forward.22
$region0: #{motion_prediction_forward.22}
  #allocation0 [shape = 'u32[]', space=smem, size = 0x4, offset = 0x4, fixed_abs, tag = 'smem constant byte address 0x4 - core index']
  #allocation1 [shape = 'u32[144,128]{1,0:T(1,128)}', space=vmem, size = 0x12000, scoped, tag = 'internal scratch']
  %s0 = inlined_call_operand.vmem [shape: bf16[152,8], index: 0, kind: input, shape index: {}]
  %s1 = inlined_call_operand.vmem [shape: f32[1,1,8], index: 1, kind: output, shape index: {0}]
  %s2 = inlined_call_operand.vmem [shape: f32[1,1,8], index: 2, kind: output, shape index: {1}]
  %3 = xla_tuple %s1, %s2
  %s4 = sld [smem:[#allocation0]]
  $region22: #{motion_prediction_forward.22} parent=0
    _
  %s6 = ssub.s32 1, %s4
  %s7 = scalar_select 0, %s6, %s4
  // Predicated region
  $region2: #{motion_prediction_forward.22} parent=0 // pred_check
    _
  $region3: #{motion_prediction_forward.22} parent=0 // pred_check_branch
    %9 = sbr.rel (0) target = $region5
  $region4: #{motion_prediction_forward.22} parent=0 // pred_region
    _
  $region5: #{motion_prediction_forward.22} parent=0 // pred_fallthru
    _
  %v10 = vld [vmem:[%s0] sm:$0xf]
  %v11 = vld [vmem:[%s0 + $0x4] sm:$0xf]
  %v12 = vld [vmem:[%s0 + $0x8] sm:$0xf]
  %v13 = vld [vmem:[%s0 + $0xc] sm:$0xf]
  %v14 = vld [vmem:[%s0 + $0x10] sm:$0xf]
  %v15 = vld [vmem:[%s0 + $0x14] sm:$0xf]
  %v16 = vld [vmem:[%s0 + $0x18] sm:$0xf]
  %v17 = vld [vmem:[%s0 + $0x1c] sm:$0xf]
  %v18 = vld [vmem:[%s0 + $0x20] sm:$0xf]
  %v19 = vld [vmem:[%s0 + $0x24] sm:$0xf]
  %v20 = vld [vmem:[%s0 + $0x28] sm:$0xf]
  %v21 = vld [vmem:[%s0 + $0x2c] sm:$0xf]
  %v22 = vld [vmem:[%s0 + $0x30] sm:$0xf]
  %v23 = vld [vmem:[%s0 + $0x34] sm:$0xf]
  %v24 = vld [vmem:[%s0 + $0x38] sm:$0xf]
  %v25 = vld [vmem:[%s0 + $0x3c] sm:$0xf]
  %v26 = vld [vmem:[%s0 + $0x40] sm:$0xf]
  %v27 = vld [vmem:[%s0 + $0x44] sm:$0xf]
  %v28 = vld [vmem:[%s0 + $0x48] sm:$0xf]
  %v29 = vunpack.c.l.bf16 %v10
  %v30 = vunpack.c.l.bf16 %v11
  %v31 = vunpack.c.l.bf16 %v12
  %v32 = vunpack.c.l.bf16 %v13
  %v33 = vunpack.c.l.bf16 %v14
  %v34 = vunpack.c.l.bf16 %v15
  %v35 = vunpack.c.l.bf16 %v16
  %v36 = vunpack.c.l.bf16 %v17
  %v37 = vunpack.c.l.bf16 %v18
  %v38 = vunpack.c.l.bf16 %v19
  %v39 = vunpack.c.l.bf16 %v20
  %v40 = vunpack.c.l.bf16 %v21
  %v41 = vunpack.c.l.bf16 %v22
  %v42 = vunpack.c.l.bf16 %v23
  %v43 = vunpack.c.l.bf16 %v24
  %v44 = vunpack.c.l.bf16 %v25
  %v45 = vunpack.c.l.bf16 %v26
  %v46 = vunpack.c.l.bf16 %v27
  %v47 = vunpack.c.l.bf16 %v28
  %vm48 = vcmask 64512
  %v49 = vsel %vm48, %v29, 0.0
  %v50 = vsel %vm48, %v30, 0.0
  %v51 = vadd.f32 %v49, %v50
  %v52 = vsel %vm48, %v31, 0.0
  %v53 = vadd.f32 %v51, %v52
  %v54 = vsel %vm48, %v32, 0.0
  %v55 = vadd.f32 %v53, %v54
  %v56 = vsel %vm48, %v33, 0.0
  %v57 = vadd.f32 %v55, %v56
  %v58 = vsel %vm48, %v34, 0.0
  %v59 = vadd.f32 %v57, %v58
  %v60 = vsel %vm48, %v35, 0.0
  %v61 = vadd.f32 %v59, %v60
  %v62 = vsel %vm48, %v36, 0.0
  %v63 = vadd.f32 %v61, %v62
  %v64 = vsel %vm48, %v37, 0.0
  %v65 = vadd.f32 %v63, %v64
  %v66 = vsel %vm48, %v38, 0.0
  %v67 = vadd.f32 %v65, %v66
  %v68 = vsel %vm48, %v39, 0.0
  %v69 = vadd.f32 %v67, %v68
  %v70 = vsel %vm48, %v40, 0.0
  %v71 = vadd.f32 %v69, %v70
  %v72 = vsel %vm48, %v41, 0.0
  %v73 = vadd.f32 %v71, %v72
  %v74 = vsel %vm48, %v42, 0.0
  %v75 = vadd.f32 %v73, %v74
  %v76 = vsel %vm48, %v43, 0.0
  %v77 = vadd.f32 %v75, %v76
  %v78 = vsel %vm48, %v44, 0.0
  %v79 = vadd.f32 %v77, %v78
  %v80 = vsel %vm48, %v45, 0.0
  %v81 = vadd.f32 %v79, %v80
  %v82 = vsel %vm48, %v46, 0.0
  %v83 = vadd.f32 %v81, %v82
  %v84 = vsel %vm48, %v47, 0.0
  %v85 = vadd.f32 %v83, %v84
  %v86 = vrot.slane %v85, 4
  %v87 = vadd.f32 %v85, %v86
  %v88 = vrot.slane %v87, 2
  %v89 = vadd.f32 %v87, %v88
  %v90 = vrot.slane %v89, 1
  %v91 = vadd.f32 %v89, %v90
  %vm92 = vcmask 57344
  %93 = vst.msk [vmem:[%s1] sm:$0x1] %vm92, %v91
  %v94 = vmul.f32 %v29, %v29
  %v95 = vmul.f32 %v30, %v30
  %v96 = vmul.f32 %v31, %v31
  %v97 = vmul.f32 %v32, %v32
  %v98 = vmul.f32 %v33, %v33
  %v99 = vmul.f32 %v34, %v34
  %v100 = vmul.f32 %v35, %v35
  %v101 = vmul.f32 %v36, %v36
  %v102 = vmul.f32 %v37, %v37
  %v103 = vmul.f32 %v38, %v38
  %v104 = vmul.f32 %v39, %v39
  %v105 = vmul.f32 %v40, %v40
  %v106 = vmul.f32 %v41, %v41
  %v107 = vmul.f32 %v42, %v42
  %v108 = vmul.f32 %v43, %v43
  %v109 = vmul.f32 %v44, %v44
  %v110 = vmul.f32 %v45, %v45
  %v111 = vmul.f32 %v46, %v46
  %v112 = vmul.f32 %v47, %v47
  %v113 = vsel %vm48, %v94, 0.0
  %v114 = vsel %vm48, %v95, 0.0
  %v115 = vadd.f32 %v113, %v114
  %v116 = vsel %vm48, %v96, 0.0
  %v117 = vadd.f32 %v115, %v116
  %v118 = vsel %vm48, %v97, 0.0
  %v119 = vadd.f32 %v117, %v118
  %v120 = vsel %vm48, %v98, 0.0
  %v121 = vadd.f32 %v119, %v120
  %v122 = vsel %vm48, %v99, 0.0
  %v123 = vadd.f32 %v121, %v122
  %v124 = vsel %vm48, %v100, 0.0
  %v125 = vadd.f32 %v123, %v124
  %v126 = vsel %vm48, %v101, 0.0
  %v127 = vadd.f32 %v125, %v126
  %v128 = vsel %vm48, %v102, 0.0
  %v129 = vadd.f32 %v127, %v128
  %v130 = vsel %vm48, %v103, 0.0
  %v131 = vadd.f32 %v129, %v130
  %v132 = vsel %vm48, %v104, 0.0
  %v133 = vadd.f32 %v131, %v132
  %v134 = vsel %vm48, %v105, 0.0
  %v135 = vadd.f32 %v133, %v134
  %v136 = vsel %vm48, %v106, 0.0
  %v137 = vadd.f32 %v135, %v136
  %v138 = vsel %vm48, %v107, 0.0
  %v139 = vadd.f32 %v137, %v138
  %v140 = vsel %vm48, %v108, 0.0
  %v141 = vadd.f32 %v139, %v140
  %v142 = vsel %vm48, %v109, 0.0
  %v143 = vadd.f32 %v141, %v142
  %v144 = vsel %vm48, %v110, 0.0
  %v145 = vadd.f32 %v143, %v144
  %v146 = vsel %vm48, %v111, 0.0
  %v147 = vadd.f32 %v145, %v146
  %v148 = vsel %vm48, %v112, 0.0
  %v149 = vadd.f32 %v147, %v148
  %v150 = vrot.slane %v149, 4
  %v151 = vadd.f32 %v149, %v150
  %v152 = vrot.slane %v151, 2
  %v153 = vadd.f32 %v151, %v152
  %v154 = vrot.slane %v153, 1
  %v155 = vadd.f32 %v153, %v154
  %156 = vst.msk [vmem:[%s2] sm:$0x1] %vm92, %v155
  // Predicated region
  $region6: #{motion_prediction_forward.22} parent=0 // pred_check
    _
  $region7: #{motion_prediction_forward.22} parent=0 // pred_check_branch
    %158 = sbr.rel (0) target = $region9
  $region8: #{motion_prediction_forward.22} parent=0 // pred_region
    _
  $region9: #{motion_prediction_forward.22} parent=0 // pred_fallthru
    _
  // Predicated region
  $region10: #{motion_prediction_forward.22} parent=0 // pred_check
    _
  $region11: #{motion_prediction_forward.22} parent=0 // pred_check_branch
    %160 = sbr.rel (0) target = $region13
  $region12: #{motion_prediction_forward.22} parent=0 // pred_region
    _
  $region13: #{motion_prediction_forward.22} parent=0 // pred_fallthru
    _
  // Predicated region
  $region14: #{motion_prediction_forward.22} parent=0 // pred_check
    _
  $region15: #{motion_prediction_forward.22} parent=0 // pred_check_branch
    %162 = sbr.rel (0) target = $region17
  $region16: #{motion_prediction_forward.22} parent=0 // pred_region
    _
  $region17: #{motion_prediction_forward.22} parent=0 // pred_fallthru
    _
  // Predicated region
  $region18: #{motion_prediction_forward.22} parent=0 // pred_check
    _
  $region19: #{motion_prediction_forward.22} parent=0 // pred_check_branch
    %164 = sbr.rel (0) target = $region21
  $region20: #{motion_prediction_forward.22} parent=0 // pred_region
    _
  $region21: #{motion_prediction_forward.22} parent=0 // pred_fallthru
    _

// kernel: motion_prediction_forward.18
$region0: #{motion_prediction_forward.18}
  #allocation0 [shape = 'u32[]', space=smem, size = 0x4, offset = 0x4, fixed_abs, tag = 'smem constant byte address 0x4 - core index']
  #allocation1 [shape = 'u32[144,128]{1,0:T(1,128)}', space=vmem, size = 0x12000, scoped, tag = 'internal scratch']
  %s0 = inlined_call_operand.vmem [shape: bf16[24,64], index: 0, kind: input, shape index: {}]
  %s1 = inlined_call_operand.vmem [shape: bf16[24,8], index: 1, kind: input, shape index: {}]
  %s2 = inlined_call_operand.vmem [shape: f32[1,64], index: 2, kind: input, shape index: {}]
  %s3 = inlined_call_operand.vmem [shape: f32[1,64], index: 3, kind: input, shape index: {}]
  %s4 = inlined_call_operand.vmem [shape: bf16[64,8], index: 4, kind: input, shape index: {}]
  %s5 = inlined_call_operand.vmem [shape: f32[8,8], index: 5, kind: input, shape index: {}]
  %s6 = inlined_call_operand.vmem [shape: bf16[24,8], index: 6, kind: output, shape index: {0}]
  %s7 = inlined_call_operand.vmem [shape: f32[1,1,8], index: 7, kind: output, shape index: {1}]
  %s8 = inlined_call_operand.vmem [shape: f32[1,1,8], index: 8, kind: output, shape index: {2}]
  %9 = xla_tuple %s6, %s7, %s8
  %s10 = sld [smem:[#allocation0]]
  $region50: #{motion_prediction_forward.18} parent=0
    _
  %s12 = ssub.s32 1, %s10
  %s13 = scalar_select 0, %s12, %s10
  // Predicated region
  $region2: #{motion_prediction_forward.18} parent=0 // pred_check
    _
  $region3: #{motion_prediction_forward.18} parent=0 // pred_check_branch
    %15 = sbr.rel (0) target = $region5
  $region4: #{motion_prediction_forward.18} parent=0 // pred_region
    _
  $region5: #{motion_prediction_forward.18} parent=0 // pred_fallthru
    _
  // Predicated region
  $region6: #{motion_prediction_forward.18} parent=0 // pred_check
    _
  $region7: #{motion_prediction_forward.18} parent=0 // pred_check_branch
    %17 = sbr.rel (0) target = $region9
  $region8: #{motion_prediction_forward.18} parent=0 // pred_region
    _
  $region9: #{motion_prediction_forward.18} parent=0 // pred_fallthru
    _
  // Predicated region
  $region10: #{motion_prediction_forward.18} parent=0 // pred_check
    _
  $region11: #{motion_prediction_forward.18} parent=0 // pred_check_branch
    %19 = sbr.rel (0) target = $region13
  $region12: #{motion_prediction_forward.18} parent=0 // pred_region
    _
  $region13: #{motion_prediction_forward.18} parent=0 // pred_fallthru
    _
  // Predicated region
  $region14: #{motion_prediction_forward.18} parent=0 // pred_check
    _
  $region15: #{motion_prediction_forward.18} parent=0 // pred_check_branch
    %21 = sbr.rel (0) target = $region17
  $region16: #{motion_prediction_forward.18} parent=0 // pred_region
    _
  $region17: #{motion_prediction_forward.18} parent=0 // pred_fallthru
    _
  // Predicated region
  $region18: #{motion_prediction_forward.18} parent=0 // pred_check
    _
  $region19: #{motion_prediction_forward.18} parent=0 // pred_check_branch
    %23 = sbr.rel (0) target = $region21
  $region20: #{motion_prediction_forward.18} parent=0 // pred_region
    _
  $region21: #{motion_prediction_forward.18} parent=0 // pred_fallthru
    _
  // Predicated region
  $region22: #{motion_prediction_forward.18} parent=0 // pred_check
    _
  $region23: #{motion_prediction_forward.18} parent=0 // pred_check_branch
    %25 = sbr.rel (0) target = $region25
  $region24: #{motion_prediction_forward.18} parent=0 // pred_region
    _
  $region25: #{motion_prediction_forward.18} parent=0 // pred_fallthru
    _
  %v27 = vld [vmem:[%s0] sm:$0xf]
  %v28 = vld [vmem:[%s0 + $0x4] sm:$0xf]
  %v29 = vld [vmem:[%s0 + $0x8] sm:$0xf]
  %v30 = vunpack.c.l.bf16 %v27
  %v31 = vunpack.c.l.bf16 %v28
  %v32 = vunpack.c.l.bf16 %v29
  %v33 = vld [vmem:[%s2] sm:$0x1]
  %v35 = vlaneseq
  %v36 = vshrl.u32 %v35, 7
  %v37 = vsub.s32 0, %v36
  %v38 = vrot.slane %v33, %v37
  %v40 = vmul.f32 %v30, %v38
  %v41 = vmul.f32 %v31, %v38
  %v42 = vmul.f32 %v32, %v38
  %v43 = vld [vmem:[%s3] sm:$0x1]
  %v45 = vlaneseq
  %v46 = vshrl.u32 %v45, 7
  %v47 = vsub.s32 0, %v46
  %v48 = vrot.slane %v43, %v47
  %v50 = vadd.f32 %v40, %v48
  %v51 = vadd.f32 %v41, %v48
  %v52 = vadd.f32 %v42, %v48
  %v53 = vmax.f32 %v50, 0.0
  %v54 = vmax.f32 %v51, 0.0
  %v55 = vmax.f32 %v52, 0.0
  %v56 = vpack.c.bf16 %v54, %v53
  %v57 = vpack.c.bf16 %v55, %v55
  %v58 = vld [vmem:[%s4] sm:$0xf]
  %v59 = vld [vmem:[%s4 + $0x4] sm:$0xf]
  %v60 = vld [vmem:[%s4 + $0x8] sm:$0xf]
  %v61 = vld [vmem:[%s4 + $0xc] sm:$0xf]
  %v62 = vld [vmem:[%s4 + $0x10] sm:$0xf]
  %v63 = vld [vmem:[%s4 + $0x14] sm:$0xf]
  %v64 = vld [vmem:[%s4 + $0x18] sm:$0xf]
  %v65 = vld [vmem:[%s4 + $0x1c] sm:$0xf]
  %v74 = vunpack.c.l.b16 %v58
  %v75 = vunpack.c.l.b16 %v59
  %v76 = vunpack.c.l.b16 %v60
  %v77 = vunpack.c.l.b16 %v61
  %v78 = vunpack.c.l.b16 %v62
  %v79 = vunpack.c.l.b16 %v63
  %v80 = vunpack.c.l.b16 %v64
  %v81 = vunpack.c.l.b16 %v65
  %v82 = vpack.c.b16 %v75, %v74
  %v83 = vpack.c.b16 %v77, %v76
  %v84 = vpack.c.b16 %v79, %v78
  %v85 = vpack.c.b16 %v81, %v80
  %vm90 = vcmask 523264
  %v92 = vsel %vm90, %v56, 0
  %v95 = vsel %vm90, %v57, 0
  %97 = vmatprep.subr.bf16.mxu0 0
  %98 = vmatpush1.bf16.msra.mxu0 %v82
  %99 = vmatprep.subr.bf16.mxu0 0
  %100 = vmatpush1.bf16.msra.mxu0 %v83
  %101 = vmatprep.subr.bf16.mxu0 0
  %102 = vmatpush1.bf16.msra.mxu0 %v84
  %103 = vmatprep.subr.bf16.mxu0 0
  %104 = vmatpush1.bf16.msra.mxu0 %v85
  %105 = vmatprep.subr.bf16.mxu0 0
  %106 = vmatpush1.bf16.msra.mxu0 0
  %107 = vmatprep.subr.bf16.mxu0 0
  %108 = vmatpush1.bf16.msra.mxu0 0
  %109 = vmatprep.subr.bf16.mxu0 0
  %110 = vmatpush1.bf16.msra.mxu0 0
  %111 = vmatprep.subr.bf16.mxu0 0
  %112 = vmatpush1.bf16.msra.mxu0 0
  %113 = vmatprep.subr.bf16.mxu0 0
  %114 = vmatpush1.bf16.msra.mxu0 0
  %115 = vmatprep.subr.bf16.mxu0 0
  %116 = vmatpush1.bf16.msra.mxu0 0
  %117 = vmatprep.subr.bf16.mxu0 0
  %118 = vmatpush1.bf16.msra.mxu0 0
  %119 = vmatprep.subr.bf16.mxu0 0
  %120 = vmatpush1.bf16.msra.mxu0 0
  %121 = vmatprep.subr.bf16.mxu0 0
  %122 = vmatpush1.bf16.msra.mxu0 0
  %123 = vmatprep.subr.bf16.mxu0 0
  %124 = vmatpush1.bf16.msra.mxu0 0
  %125 = vmatprep.subr.bf16.mxu0 0
  %126 = vmatpush1.bf16.msra.mxu0 0
  %127 = vmatprep.subr.bf16.mxu0 0
  %128 = vmatpush1.bf16.msra.mxu0 0
  %129 = vmatprep.mubr.bf16.mxu0 0
  %130 = vmatmul.mubr.bf16.gmra.mrb[0].mxu0 %v92
  %v131 = vpop.f32.mrb[0].mxu0
  %v132 = vadd.f32 0.0, %v131
  %v133 = vpop.f32.mrb[0].mxu0
  %v134 = vpop.f32.mrb[0].mxu0
  %v135 = vadd.f32 0.0, %v134
  %v136 = vpop.f32.mrb[0].mxu0
  %137 = vmatprep.mubr.bf16.mxu0 0
  %138 = vmatmul.mubr.bf16.gmra.mrb[0].mxu0 %v95
  %v139 = vpop.f32.mrb[0].mxu0
  %v140 = vadd.f32 0.0, %v139
  %v141 = vpop.f32.mrb[0].mxu0
  %v142 = vpop.f32.mrb[0].mxu0
  %v143 = vpop.f32.mrb[0].mxu0
  %144 = vdwg.mxu0
  %v145 = vld [vmem:[%s1] sm:$0xf]
  %v146 = vld [vmem:[%s1 + $0x4] sm:$0xf]
  %v147 = vld [vmem:[%s1 + $0x8] sm:$0xf]
  %v148 = vunpack.c.l.bf16 %v145
  %v149 = vunpack.c.l.bf16 %v146
  %v150 = vunpack.c.l.bf16 %v147
  %v151 = vld [vmem:[%s5] sm:$0xff]
  %vm152 = vcmask 64512
  %v154 = vsel %vm152, %v148, 0
  %v157 = vsel %vm152, %v149, 0
  %v160 = vsel %vm152, %v150, 0
  %162 = vmatprep.subr.mxu0 0.0
  %163 = vmatpush1.msra.mxu0 %v151
  %164 = vmatprep.subr.mxu0 0.0
  %165 = vmatpush1.msra.mxu0 0.0
  %166 = vmatprep.subr.mxu0 0.0
  %167 = vmatpush1.msra.mxu0 0.0
  %168 = vmatprep.subr.mxu0 0.0
  %169 = vmatpush1.msra.mxu0 0.0
  %170 = vmatprep.subr.mxu0 0.0
  %171 = vmatpush1.msra.mxu0 0.0
  %172 = vmatprep.subr.mxu0 0.0
  %173 = vmatpush1.msra.mxu0 0.0
  %174 = vmatprep.subr.mxu0 0.0
  %175 = vmatpush1.msra.mxu0 0.0
  %176 = vmatprep.subr.mxu0 0.0
  %177 = vmatpush1.msra.mxu0 0.0
  %178 = vmatprep.subr.mxu0 0.0
  %179 = vmatpush1.msra.mxu0 0.0
  %180 = vmatprep.subr.mxu0 0.0
  %181 = vmatpush1.msra.mxu0 0.0
  %182 = vmatprep.subr.mxu0 0.0
  %183 = vmatpush1.msra.mxu0 0.0
  %184 = vmatprep.subr.mxu0 0.0
  %185 = vmatpush1.msra.mxu0 0.0
  %186 = vmatprep.subr.mxu0 0.0
  %187 = vmatpush1.msra.mxu0 0.0
  %188 = vmatprep.subr.mxu0 0.0
  %189 = vmatpush1.msra.mxu0 0.0
  %190 = vmatprep.subr.mxu0 0.0
  %191 = vmatpush1.msra.mxu0 0.0
  %192 = vmatprep.subr.mxu0 0.0
  %193 = vmatpush1.msra.mxu0 0.0
  %194 = vmatprep.subr.mxu0 0.0
  %195 = vmatpush1.msra.mxu0 0.0
  %196 = vmatprep.subr.mxu0 0.0
  %197 = vmatpush1.msra.mxu0 0.0
  %198 = vmatprep.subr.mxu0 0.0
  %199 = vmatpush1.msra.mxu0 0.0
  %200 = vmatprep.subr.mxu0 0.0
  %201 = vmatpush1.msra.mxu0 0.0
  %202 = vmatprep.subr.mxu0 0.0
  %203 = vmatpush1.msra.mxu0 0.0
  %204 = vmatprep.subr.mxu0 0.0
  %205 = vmatpush1.msra.mxu0 0.0
  %206 = vmatprep.subr.mxu0 0.0
  %207 = vmatpush1.msra.mxu0 0.0
  %208 = vmatprep.subr.mxu0 0.0
  %209 = vmatpush1.msra.mxu0 0.0
  %210 = vmatprep.subr.mxu0 0.0
  %211 = vmatpush1.msra.mxu0 0.0
  %212 = vmatprep.subr.mxu0 0.0
  %213 = vmatpush1.msra.mxu0 0.0
  %214 = vmatprep.subr.mxu0 0.0
  %215 = vmatpush1.msra.mxu0 0.0
  %216 = vmatprep.subr.mxu0 0.0
  %217 = vmatpush1.msra.mxu0 0.0
  %218 = vmatprep.subr.mxu0 0.0
  %219 = vmatpush1.msra.mxu0 0.0
  %220 = vmatprep.subr.mxu0 0.0
  %221 = vmatpush1.msra.mxu0 0.0
  %222 = vmatprep.subr.mxu0 0.0
  %223 = vmatpush1.msra.mxu0 0.0
  %224 = vmatprep.subr.mxu0 0.0
  %225 = vmatpush1.msra.mxu0 0.0
  %226 = vmatprep.mubr.f32.mxu0 0.0
  %227 = vmatmul.mubr.f32.gmra.mrb[0].mxu0 %v154
  %v228 = vpop.f32.mrb[0].mxu0
  %v229 = vadd.f32 0.0, %v228
  %v230 = vpop.f32.mrb[0].mxu0
  %231 = vmatprep.mubr.f32.mxu0 0.0
  %232 = vmatmul.mubr.f32.gmra.mrb[0].mxu0 %v157
  %v233 = vpop.f32.mrb[0].mxu0
  %v234 = vadd.f32 0.0, %v233
  %v235 = vpop.f32.mrb[0].mxu0
  %236 = vmatprep.mubr.f32.mxu0 0.0
  %237 = vmatmul.mubr.f32.gmra.mrb[0].mxu0 %v160
  %v238 = vpop.f32.mrb[0].mxu0
  %v239 = vadd.f32 0.0, %v238
  %v240 = vpop.f32.mrb[0].mxu0
  %241 = vdwg.mxu0
  %v242 = vsub.f32 %v132, %v229
  %v243 = vsub.f32 %v135, %v234
  %v244 = vsub.f32 %v140, %v239
  %s245 = smul.u32 0, 24
  %v246 = vlaneseq
  %v247 = vshrl.u32 %v246, 7
  %v248 = vadd.s32 %v247, 8
  %v249 = vadd.s32 %v247, 16
  %v250 = vstv %s245
  %v251 = vadd.s32 %v250, %v247
  %v252 = vadd.s32 %v250, %v248
  %v253 = vadd.s32 %v250, %v249
  %vm254 = vcmp.lt.s32.totalorder %v251, 16
  %vm255 = vcmp.lt.s32.totalorder %v252, 16
  %vm256 = vcmp.lt.s32.totalorder %v253, 16
  %v257 = vsel %vm254, 1, 0
  %v258 = vsel %vm255, 1, 0
  %v259 = vsel %vm256, 1, 0
  %vm260 = vcmp.eq.s32.totalorder %v257, 1
  %vm261 = vcmp.eq.s32.totalorder %v258, 1
  %vm262 = vcmp.eq.s32.totalorder %v259, 1
  %v263 = vsel %vm260, %v242, 0.0
  %v264 = vsel %vm261, %v243, 0.0
  %v265 = vsel %vm262, %v244, 0.0
  %v266 = vsel %vm152, %v263, 0.0
  %v267 = vsel %vm152, %v264, 0.0
  %v268 = vadd.f32 %v266, %v267
  %v269 = vsel %vm152, %v265, 0.0
  %v270 = vadd.f32 %v268, %v269
  %v271 = vrot.slane %v270, 4
  %v272 = vadd.f32 %v270, %v271
  %v273 = vrot.slane %v272, 2
  %v274 = vadd.f32 %v272, %v273
  %v275 = vrot.slane %v274, 1
  %v276 = vadd.f32 %v274, %v275
  %vm277 = vcmask 57344
  %278 = vst.msk [vmem:[%s7] sm:$0x1] %vm277, %v276
  %v279 = vmul.f32 %v263, %v263
  %v280 = vmul.f32 %v264, %v264
  %v281 = vmul.f32 %v265, %v265
  %v282 = vsel %vm152, %v279, 0.0
  %v283 = vsel %vm152, %v280, 0.0
  %v284 = vadd.f32 %v282, %v283
  %v285 = vsel %vm152, %v281, 0.0
  %v286 = vadd.f32 %v284, %v285
  %v287 = vrot.slane %v286, 4
  %v288 = vadd.f32 %v286, %v287
  %v289 = vrot.slane %v288, 2
  %v290 = vadd.f32 %v288, %v289
  %v291 = vrot.slane %v290, 1
  %v292 = vadd.f32 %v290, %v291
  %293 = vst.msk [vmem:[%s8] sm:$0x1] %vm277, %v292
  %v294 = vpack.c.bf16 %v264, %v263
  %v295 = vpack.c.bf16 %v265, %v265
  %v298 = vunpack.c.l.b16 %v294
  %v299 = vunpack.c.h.b16 %v294
  %v300 = vunpack.c.l.b16 %v295
  %v301 = vpack.c.b16 %v298, %v298
  %v302 = vpack.c.b16 %v299, %v299
  %v303 = vpack.c.b16 %v300, %v300
  %vm307 = vcmask 60416
  %308 = vst.msk [vmem:[%s6] sm:$0xf] %vm307, %v301
  %309 = vst.msk [vmem:[%s6 + $0x4] sm:$0xf] %vm307, %v302
  %310 = vst.msk [vmem:[%s6 + $0x8] sm:$0xf] %vm307, %v303
  // Predicated region
  $region26: #{motion_prediction_forward.18} parent=0 // pred_check
    _
  $region27: #{motion_prediction_forward.18} parent=0 // pred_check_branch
    %312 = sbr.rel (0) target = $region29
  $region28: #{motion_prediction_forward.18} parent=0 // pred_region
    _
  $region29: #{motion_prediction_forward.18} parent=0 // pred_fallthru
    _
  // Predicated region
  $region30: #{motion_prediction_forward.18} parent=0 // pred_check
    _
  $region31: #{motion_prediction_forward.18} parent=0 // pred_check_branch
    %314 = sbr.rel (0) target = $region33
  $region32: #{motion_prediction_forward.18} parent=0 // pred_region
    _
  $region33: #{motion_prediction_forward.18} parent=0 // pred_fallthru
    _
  // Predicated region
  $region34: #{motion_prediction_forward.18} parent=0 // pred_check
    _
  $region35: #{motion_prediction_forward.18} parent=0 // pred_check_branch
    %316 = sbr.rel (0) target = $region37
  $region36: #{motion_prediction_forward.18} parent=0 // pred_region
    _
  $region37: #{motion_prediction_forward.18} parent=0 // pred_fallthru
    _
  // Predicated region
  $region38: #{motion_prediction_forward.18} parent=0 // pred_check
    _
  $region39: #{motion_prediction_forward.18} parent=0 // pred_check_branch
    %318 = sbr.rel (0) target = $region41
  $region40: #{motion_prediction_forward.18} parent=0 // pred_region
    _
  $region41: #{motion_prediction_forward.18} parent=0 // pred_fallthru
    _
  // Predicated region
  $region42: #{motion_prediction_forward.18} parent=0 // pred_check
    _
  $region43: #{motion_prediction_forward.18} parent=0 // pred_check_branch
    %320 = sbr.rel (0) target = $region45
  $region44: #{motion_prediction_forward.18} parent=0 // pred_region
    _
  $region45: #{motion_prediction_forward.18} parent=0 // pred_fallthru
    _
  // Predicated region
  $region46: #{motion_prediction_forward.18} parent=0 // pred_check
    _
  $region47: #{motion_prediction_forward.18} parent=0 // pred_check_branch
    %322 = sbr.rel (0) target = $region49
  $region48: #{motion_prediction_forward.18} parent=0 // pred_region
    _
  $region49: #{motion_prediction_forward.18} parent=0 // pred_fallthru
    _

// kernel: motion_prediction_forward.23
$region0: #{motion_prediction_forward.23}
  #allocation0 [shape = 'u32[]', space=smem, size = 0x4, offset = 0x4, fixed_abs, tag = 'smem constant byte address 0x4 - core index']
  #allocation1 [shape = 'u32[144,128]{1,0:T(1,128)}', space=vmem, size = 0x12000, scoped, tag = 'internal scratch']
  %s0 = inlined_call_operand.vmem [shape: bf16[152,8], index: 0, kind: input, shape index: {}]
  %s1 = inlined_call_operand.vmem [shape: bf16[152,8], index: 1, kind: input, shape index: {}]
  %s2 = inlined_call_operand.vmem [shape: bf16[152,8], index: 2, kind: input, shape index: {}]
  %s3 = inlined_call_operand.vmem [shape: f32[3,1,8], index: 3, kind: input, shape index: {}]
  %s4 = inlined_call_operand.vmem [shape: f32[3,1,8], index: 4, kind: input, shape index: {}]
  %s5 = inlined_call_operand.vmem [shape: bf16[3,8,3], index: 5, kind: input, shape index: {}]
  %s6 = inlined_call_operand.vmem [shape: f32[1,3], index: 6, kind: input, shape index: {}]
  %s7 = inlined_call_operand.vmem [shape: f32[152,3], index: 7, kind: output, shape index: {}]
  %s8 = sld [smem:[#allocation0]]
  $region38: #{motion_prediction_forward.23} parent=0
    _
  %s10 = ssub.s32 1, %s8
  %s11 = scalar_select 0, %s10, %s8
  // Predicated region
  $region2: #{motion_prediction_forward.23} parent=0 // pred_check
    _
  $region3: #{motion_prediction_forward.23} parent=0 // pred_check_branch
    %13 = sbr.rel (0) target = $region5
  $region4: #{motion_prediction_forward.23} parent=0 // pred_region
    _
  $region5: #{motion_prediction_forward.23} parent=0 // pred_fallthru
    _
  // Predicated region
  $region6: #{motion_prediction_forward.23} parent=0 // pred_check
    _
  $region7: #{motion_prediction_forward.23} parent=0 // pred_check_branch
    %15 = sbr.rel (0) target = $region9
  $region8: #{motion_prediction_forward.23} parent=0 // pred_region
    _
  $region9: #{motion_prediction_forward.23} parent=0 // pred_fallthru
    _
  // Predicated region
  $region10: #{motion_prediction_forward.23} parent=0 // pred_check
    _
  $region11: #{motion_prediction_forward.23} parent=0 // pred_check_branch
    %17 = sbr.rel (0) target = $region13
  $region12: #{motion_prediction_forward.23} parent=0 // pred_region
    _
  $region13: #{motion_prediction_forward.23} parent=0 // pred_fallthru
    _
  // Predicated region
  $region14: #{motion_prediction_forward.23} parent=0 // pred_check
    _
  $region15: #{motion_prediction_forward.23} parent=0 // pred_check_branch
    %19 = sbr.rel (0) target = $region17
  $region16: #{motion_prediction_forward.23} parent=0 // pred_region
    _
  $region17: #{motion_prediction_forward.23} parent=0 // pred_fallthru
    _
  // Predicated region
  $region18: #{motion_prediction_forward.23} parent=0 // pred_check
    _
  $region19: #{motion_prediction_forward.23} parent=0 // pred_check_branch
    %21 = sbr.rel (0) target = $region21
  $region20: #{motion_prediction_forward.23} parent=0 // pred_region
    _
  $region21: #{motion_prediction_forward.23} parent=0 // pred_fallthru
    _
  // Predicated region
  $region22: #{motion_prediction_forward.23} parent=0 // pred_check
    _
  $region23: #{motion_prediction_forward.23} parent=0 // pred_check_branch
    %23 = sbr.rel (0) target = $region25
  $region24: #{motion_prediction_forward.23} parent=0 // pred_region
    _
  $region25: #{motion_prediction_forward.23} parent=0 // pred_fallthru
    _
  // Predicated region
  $region26: #{motion_prediction_forward.23} parent=0 // pred_check
    _
  $region27: #{motion_prediction_forward.23} parent=0 // pred_check_branch
    %25 = sbr.rel (0) target = $region29
  $region28: #{motion_prediction_forward.23} parent=0 // pred_region
    _
  $region29: #{motion_prediction_forward.23} parent=0 // pred_fallthru
    _
  %v27 = vld [vmem:[%s0] sm:$0xf]
  %v28 = vld [vmem:[%s0 + $0x4] sm:$0xf]
  %v29 = vld [vmem:[%s0 + $0x8] sm:$0xf]
  %v30 = vld [vmem:[%s0 + $0xc] sm:$0xf]
  %v31 = vld [vmem:[%s0 + $0x10] sm:$0xf]
  %v32 = vld [vmem:[%s0 + $0x14] sm:$0xf]
  %v33 = vld [vmem:[%s0 + $0x18] sm:$0xf]
  %v34 = vld [vmem:[%s0 + $0x1c] sm:$0xf]
  %v35 = vld [vmem:[%s0 + $0x20] sm:$0xf]
  %v36 = vld [vmem:[%s0 + $0x24] sm:$0xf]
  %v37 = vld [vmem:[%s0 + $0x28] sm:$0xf]
  %v38 = vld [vmem:[%s0 + $0x2c] sm:$0xf]
  %v39 = vld [vmem:[%s0 + $0x30] sm:$0xf]
  %v40 = vld [vmem:[%s0 + $0x34] sm:$0xf]
  %v41 = vld [vmem:[%s0 + $0x38] sm:$0xf]
  %v42 = vld [vmem:[%s0 + $0x3c] sm:$0xf]
  %v43 = vld [vmem:[%s0 + $0x40] sm:$0xf]
  %v44 = vld [vmem:[%s0 + $0x44] sm:$0xf]
  %v45 = vld [vmem:[%s0 + $0x48] sm:$0xf]
  %v46 = vunpack.c.l.bf16 %v27
  %v47 = vunpack.c.l.bf16 %v28
  %v48 = vunpack.c.l.bf16 %v29
  %v49 = vunpack.c.l.bf16 %v30
  %v50 = vunpack.c.l.bf16 %v31
  %v51 = vunpack.c.l.bf16 %v32
  %v52 = vunpack.c.l.bf16 %v33
  %v53 = vunpack.c.l.bf16 %v34
  %v54 = vunpack.c.l.bf16 %v35
  %v55 = vunpack.c.l.bf16 %v36
  %v56 = vunpack.c.l.bf16 %v37
  %v57 = vunpack.c.l.bf16 %v38
  %v58 = vunpack.c.l.bf16 %v39
  %v59 = vunpack.c.l.bf16 %v40
  %v60 = vunpack.c.l.bf16 %v41
  %v61 = vunpack.c.l.bf16 %v42
  %v62 = vunpack.c.l.bf16 %v43
  %v63 = vunpack.c.l.bf16 %v44
  %v64 = vunpack.c.l.bf16 %v45
  %v65 = vld [vmem:[%s3] sm:$0x1]
  %v67 = vlaneseq
  %v68 = vshrl.u32 %v67, 7
  %v69 = vsub.s32 0, %v68
  %v70 = vrot.slane %v65, %v69
  %v72 = vmul.f32 %v46, %v70
  %v73 = vmul.f32 %v47, %v70
  %v74 = vmul.f32 %v48, %v70
  %v75 = vmul.f32 %v49, %v70
  %v76 = vmul.f32 %v50, %v70
  %v77 = vmul.f32 %v51, %v70
  %v78 = vmul.f32 %v52, %v70
  %v79 = vmul.f32 %v53, %v70
  %v80 = vmul.f32 %v54, %v70
  %v81 = vmul.f32 %v55, %v70
  %v82 = vmul.f32 %v56, %v70
  %v83 = vmul.f32 %v57, %v70
  %v84 = vmul.f32 %v58, %v70
  %v85 = vmul.f32 %v59, %v70
  %v86 = vmul.f32 %v60, %v70
  %v87 = vmul.f32 %v61, %v70
  %v88 = vmul.f32 %v62, %v70
  %v89 = vmul.f32 %v63, %v70
  %v90 = vmul.f32 %v64, %v70
  %v91 = vld [vmem:[%s4] sm:$0x1]
  %v93 = vlaneseq
  %v94 = vshrl.u32 %v93, 7
  %v95 = vsub.s32 0, %v94
  %v96 = vrot.slane %v91, %v95
  %v98 = vadd.f32 %v72, %v96
  %v99 = vadd.f32 %v73, %v96
  %v100 = vadd.f32 %v74, %v96
  %v101 = vadd.f32 %v75, %v96
  %v102 = vadd.f32 %v76, %v96
  %v103 = vadd.f32 %v77, %v96
  %v104 = vadd.f32 %v78, %v96
  %v105 = vadd.f32 %v79, %v96
  %v106 = vadd.f32 %v80, %v96
  %v107 = vadd.f32 %v81, %v96
  %v108 = vadd.f32 %v82, %v96
  %v109 = vadd.f32 %v83, %v96
  %v110 = vadd.f32 %v84, %v96
  %v111 = vadd.f32 %v85, %v96
  %v112 = vadd.f32 %v86, %v96
  %v113 = vadd.f32 %v87, %v96
  %v114 = vadd.f32 %v88, %v96
  %v115 = vadd.f32 %v89, %v96
  %v116 = vadd.f32 %v90, %v96
  %v117 = vmax.f32 %v98, 0.0
  %v118 = vmax.f32 %v99, 0.0
  %v119 = vmax.f32 %v100, 0.0
  %v120 = vmax.f32 %v101, 0.0
  %v121 = vmax.f32 %v102, 0.0
  %v122 = vmax.f32 %v103, 0.0
  %v123 = vmax.f32 %v104, 0.0
  %v124 = vmax.f32 %v105, 0.0
  %v125 = vmax.f32 %v106, 0.0
  %v126 = vmax.f32 %v107, 0.0
  %v127 = vmax.f32 %v108, 0.0
  %v128 = vmax.f32 %v109, 0.0
  %v129 = vmax.f32 %v110, 0.0
  %v130 = vmax.f32 %v111, 0.0
  %v131 = vmax.f32 %v112, 0.0
  %v132 = vmax.f32 %v113, 0.0
  %v133 = vmax.f32 %v114, 0.0
  %v134 = vmax.f32 %v115, 0.0
  %v135 = vmax.f32 %v116, 0.0
  %v136 = vpack.c.bf16 %v118, %v117
  %v137 = vpack.c.bf16 %v120, %v119
  %v138 = vpack.c.bf16 %v122, %v121
  %v139 = vpack.c.bf16 %v124, %v123
  %v140 = vpack.c.bf16 %v126, %v125
  %v141 = vpack.c.bf16 %v128, %v127
  %v142 = vpack.c.bf16 %v130, %v129
  %v143 = vpack.c.bf16 %v132, %v131
  %v144 = vpack.c.bf16 %v134, %v133
  %v145 = vpack.c.bf16 %v135, %v135
  %v146 = vld [vmem:[%s5] sm:$0xf]
  %v147 = vld [vmem:[%s1] sm:$0xf]
  %v148 = vld [vmem:[%s1 + $0x4] sm:$0xf]
  %v149 = vld [vmem:[%s1 + $0x8] sm:$0xf]
  %v150 = vld [vmem:[%s1 + $0xc] sm:$0xf]
  %v151 = vld [vmem:[%s1 + $0x10] sm:$0xf]
  %v152 = vld [vmem:[%s1 + $0x14] sm:$0xf]
  %v153 = vld [vmem:[%s1 + $0x18] sm:$0xf]
  %v154 = vld [vmem:[%s1 + $0x1c] sm:$0xf]
  %v155 = vld [vmem:[%s1 + $0x20] sm:$0xf]
  %v156 = vld [vmem:[%s1 + $0x24] sm:$0xf]
  %v157 = vld [vmem:[%s1 + $0x28] sm:$0xf]
  %v158 = vld [vmem:[%s1 + $0x2c] sm:$0xf]
  %v159 = vld [vmem:[%s1 + $0x30] sm:$0xf]
  %v160 = vld [vmem:[%s1 + $0x34] sm:$0xf]
  %v161 = vld [vmem:[%s1 + $0x38] sm:$0xf]
  %v162 = vld [vmem:[%s1 + $0x3c] sm:$0xf]
  %v163 = vld [vmem:[%s1 + $0x40] sm:$0xf]
  %v164 = vld [vmem:[%s1 + $0x44] sm:$0xf]
  %v165 = vld [vmem:[%s1 + $0x48] sm:$0xf]
  %v166 = vunpack.c.l.bf16 %v147
  %v167 = vunpack.c.l.bf16 %v148
  %v168 = vunpack.c.l.bf16 %v149
  %v169 = vunpack.c.l.bf16 %v150
  %v170 = vunpack.c.l.bf16 %v151
  %v171 = vunpack.c.l.bf16 %v152
  %v172 = vunpack.c.l.bf16 %v153
  %v173 = vunpack.c.l.bf16 %v154
  %v174 = vunpack.c.l.bf16 %v155
  %v175 = vunpack.c.l.bf16 %v156
  %v176 = vunpack.c.l.bf16 %v157
  %v177 = vunpack.c.l.bf16 %v158
  %v178 = vunpack.c.l.bf16 %v159
  %v179 = vunpack.c.l.bf16 %v160
  %v180 = vunpack.c.l.bf16 %v161
  %v181 = vunpack.c.l.bf16 %v162
  %v182 = vunpack.c.l.bf16 %v163
  %v183 = vunpack.c.l.bf16 %v164
  %v184 = vunpack.c.l.bf16 %v165
  %s185 = scalar_lea.vmem %s3, 1
  %v186 = vld [vmem:[%s185] sm:$0x1]
  %v188 = vlaneseq
  %v189 = vshrl.u32 %v188, 7
  %v190 = vsub.s32 0, %v189
  %v191 = vrot.slane %v186, %v190
  %v193 = vmul.f32 %v166, %v191
  %v194 = vmul.f32 %v167, %v191
  %v195 = vmul.f32 %v168, %v191
  %v196 = vmul.f32 %v169, %v191
  %v197 = vmul.f32 %v170, %v191
  %v198 = vmul.f32 %v171, %v191
  %v199 = vmul.f32 %v172, %v191
  %v200 = vmul.f32 %v173, %v191
  %v201 = vmul.f32 %v174, %v191
  %v202 = vmul.f32 %v175, %v191
  %v203 = vmul.f32 %v176, %v191
  %v204 = vmul.f32 %v177, %v191
  %v205 = vmul.f32 %v178, %v191
  %v206 = vmul.f32 %v179, %v191
  %v207 = vmul.f32 %v180, %v191
  %v208 = vmul.f32 %v181, %v191
  %v209 = vmul.f32 %v182, %v191
  %v210 = vmul.f32 %v183, %v191
  %v211 = vmul.f32 %v184, %v191
  %s212 = scalar_lea.vmem %s4, 1
  %v213 = vld [vmem:[%s212] sm:$0x1]
  %v215 = vlaneseq
  %v216 = vshrl.u32 %v215, 7
  %v217 = vsub.s32 0, %v216
  %v218 = vrot.slane %v213, %v217
  %v220 = vadd.f32 %v193, %v218
  %v221 = vadd.f32 %v194, %v218
  %v222 = vadd.f32 %v195, %v218
  %v223 = vadd.f32 %v196, %v218
  %v224 = vadd.f32 %v197, %v218
  %v225 = vadd.f32 %v198, %v218
  %v226 = vadd.f32 %v199, %v218
  %v227 = vadd.f32 %v200, %v218
  %v228 = vadd.f32 %v201, %v218
  %v229 = vadd.f32 %v202, %v218
  %v230 = vadd.f32 %v203, %v218
  %v231 = vadd.f32 %v204, %v218
  %v232 = vadd.f32 %v205, %v218
  %v233 = vadd.f32 %v206, %v218
  %v234 = vadd.f32 %v207, %v218
  %v235 = vadd.f32 %v208, %v218
  %v236 = vadd.f32 %v209, %v218
  %v237 = vadd.f32 %v210, %v218
  %v238 = vadd.f32 %v211, %v218
  %v239 = vmax.f32 %v220, 0.0
  %v240 = vmax.f32 %v221, 0.0
  %v241 = vmax.f32 %v222, 0.0
  %v242 = vmax.f32 %v223, 0.0
  %v243 = vmax.f32 %v224, 0.0
  %v244 = vmax.f32 %v225, 0.0
  %v245 = vmax.f32 %v226, 0.0
  %v246 = vmax.f32 %v227, 0.0
  %v247 = vmax.f32 %v228, 0.0
  %v248 = vmax.f32 %v229, 0.0
  %v249 = vmax.f32 %v230, 0.0
  %v250 = vmax.f32 %v231, 0.0
  %v251 = vmax.f32 %v232, 0.0
  %v252 = vmax.f32 %v233, 0.0
  %v253 = vmax.f32 %v234, 0.0
  %v254 = vmax.f32 %v235, 0.0
  %v255 = vmax.f32 %v236, 0.0
  %v256 = vmax.f32 %v237, 0.0
  %v257 = vmax.f32 %v238, 0.0
  %v258 = vpack.c.bf16 %v240, %v239
  %v259 = vpack.c.bf16 %v242, %v241
  %v260 = vpack.c.bf16 %v244, %v243
  %v261 = vpack.c.bf16 %v246, %v245
  %v262 = vpack.c.bf16 %v248, %v247
  %v263 = vpack.c.bf16 %v250, %v249
  %v264 = vpack.c.bf16 %v252, %v251
  %v265 = vpack.c.bf16 %v254, %v253
  %v266 = vpack.c.bf16 %v256, %v255
  %v267 = vpack.c.bf16 %v257, %v257
  %s268 = scalar_lea.vmem %s5, 4
  %v269 = vld [vmem:[%s268] sm:$0xf]
  %vm270 = vcmask 64512
  %v272 = vsel %vm270, %v258, 0
  %v275 = vsel %vm270, %v259, 0
  %v278 = vsel %vm270, %v260, 0
  %v281 = vsel %vm270, %v261, 0
  %v284 = vsel %vm270, %v262, 0
  %v287 = vsel %vm270, %v263, 0
  %v290 = vsel %vm270, %v264, 0
  %v293 = vsel %vm270, %v265, 0
  %v296 = vsel %vm270, %v266, 0
  %v299 = vsel %vm270, %v267, 0
  %vm301 = vcmask 1043456
  %v303 = vsel %vm301, %v269, 0
  %305 = vmatprep.subr.bf16.mxu0 0
  %306 = vmatpush1.bf16.msra.mxu0 %v303
  %307 = vmatprep.subr.bf16.mxu0 0
  %308 = vmatpush1.bf16.msra.mxu0 0
  %309 = vmatprep.subr.bf16.mxu0 0
  %310 = vmatpush1.bf16.msra.mxu0 0
  %311 = vmatprep.subr.bf16.mxu0 0
  %312 = vmatpush1.bf16.msra.mxu0 0
  %313 = vmatprep.subr.bf16.mxu0 0
  %314 = vmatpush1.bf16.msra.mxu0 0
  %315 = vmatprep.subr.bf16.mxu0 0
  %316 = vmatpush1.bf16.msra.mxu0 0
  %317 = vmatprep.subr.bf16.mxu0 0
  %318 = vmatpush1.bf16.msra.mxu0 0
  %319 = vmatprep.subr.bf16.mxu0 0
  %320 = vmatpush1.bf16.msra.mxu0 0
  %321 = vmatprep.subr.bf16.mxu0 0
  %322 = vmatpush1.bf16.msra.mxu0 0
  %323 = vmatprep.subr.bf16.mxu0 0
  %324 = vmatpush1.bf16.msra.mxu0 0
  %325 = vmatprep.subr.bf16.mxu0 0
  %326 = vmatpush1.bf16.msra.mxu0 0
  %327 = vmatprep.subr.bf16.mxu0 0
  %328 = vmatpush1.bf16.msra.mxu0 0
  %329 = vmatprep.subr.bf16.mxu0 0
  %330 = vmatpush1.bf16.msra.mxu0 0
  %331 = vmatprep.subr.bf16.mxu0 0
  %332 = vmatpush1.bf16.msra.mxu0 0
  %333 = vmatprep.subr.bf16.mxu0 0
  %334 = vmatpush1.bf16.msra.mxu0 0
  %335 = vmatprep.subr.bf16.mxu0 0
  %336 = vmatpush1.bf16.msra.mxu0 0
  %337 = vmatprep.mubr.bf16.mxu0 0
  %338 = vmatmul.mubr.bf16.gmra.mrb[0].mxu0 %v272
  %v339 = vpop.f32.mrb[0].mxu0
  %v340 = vadd.f32 0.0, %v339
  %v341 = vpop.f32.mrb[0].mxu0
  %v342 = vpop.f32.mrb[0].mxu0
  %v343 = vadd.f32 0.0, %v342
  %v344 = vpop.f32.mrb[0].mxu0
  %345 = vmatprep.mubr.bf16.mxu0 0
  %346 = vmatmul.mubr.bf16.gmra.mrb[0].mxu0 %v275
  %v347 = vpop.f32.mrb[0].mxu0
  %v348 = vadd.f32 0.0, %v347
  %v349 = vpop.f32.mrb[0].mxu0
  %v350 = vpop.f32.mrb[0].mxu0
  %v351 = vadd.f32 0.0, %v350
  %v352 = vpop.f32.mrb[0].mxu0
  %353 = vmatprep.mubr.bf16.mxu0 0
  %354 = vmatmul.mubr.bf16.gmra.mrb[0].mxu0 %v278
  %v355 = vpop.f32.mrb[0].mxu0
  %v356 = vadd.f32 0.0, %v355
  %v357 = vpop.f32.mrb[0].mxu0
  %v358 = vpop.f32.mrb[0].mxu0
  %v359 = vadd.f32 0.0, %v358
  %v360 = vpop.f32.mrb[0].mxu0
  %361 = vmatprep.mubr.bf16.mxu0 0
  %362 = vmatmul.mubr.bf16.gmra.mrb[0].mxu0 %v281
  %v363 = vpop.f32.mrb[0].mxu0
  %v364 = vadd.f32 0.0, %v363
  %v365 = vpop.f32.mrb[0].mxu0
  %v366 = vpop.f32.mrb[0].mxu0
  %v367 = vadd.f32 0.0, %v366
  %v368 = vpop.f32.mrb[0].mxu0
  %369 = vmatprep.mubr.bf16.mxu0 0
  %370 = vmatmul.mubr.bf16.gmra.mrb[0].mxu0 %v284
  %v371 = vpop.f32.mrb[0].mxu0
  %v372 = vadd.f32 0.0, %v371
  %v373 = vpop.f32.mrb[0].mxu0
  %v374 = vpop.f32.mrb[0].mxu0
  %v375 = vadd.f32 0.0, %v374
  %v376 = vpop.f32.mrb[0].mxu0
  %377 = vmatprep.mubr.bf16.mxu0 0
  %378 = vmatmul.mubr.bf16.gmra.mrb[0].mxu0 %v287
  %v379 = vpop.f32.mrb[0].mxu0
  %v380 = vadd.f32 0.0, %v379
  %v381 = vpop.f32.mrb[0].mxu0
  %v382 = vpop.f32.mrb[0].mxu0
  %v383 = vadd.f32 0.0, %v382
  %v384 = vpop.f32.mrb[0].mxu0
  %385 = vmatprep.mubr.bf16.mxu0 0
  %386 = vmatmul.mubr.bf16.gmra.mrb[0].mxu0 %v290
  %v387 = vpop.f32.mrb[0].mxu0
  %v388 = vadd.f32 0.0, %v387
  %v389 = vpop.f32.mrb[0].mxu0
  %v390 = vpop.f32.mrb[0].mxu0
  %v391 = vadd.f32 0.0, %v390
  %v392 = vpop.f32.mrb[0].mxu0
  %393 = vmatprep.mubr.bf16.mxu0 0
  %394 = vmatmul.mubr.bf16.gmra.mrb[0].mxu0 %v293
  %v395 = vpop.f32.mrb[0].mxu0
  %v396 = vadd.f32 0.0, %v395
  %v397 = vpop.f32.mrb[0].mxu0
  %v398 = vpop.f32.mrb[0].mxu0
  %v399 = vadd.f32 0.0, %v398
  %v400 = vpop.f32.mrb[0].mxu0
  %401 = vmatprep.mubr.bf16.mxu0 0
  %402 = vmatmul.mubr.bf16.gmra.mrb[0].mxu0 %v296
  %v403 = vpop.f32.mrb[0].mxu0
  %v404 = vadd.f32 0.0, %v403
  %v405 = vpop.f32.mrb[0].mxu0
  %v406 = vpop.f32.mrb[0].mxu0
  %v407 = vadd.f32 0.0, %v406
  %v408 = vpop.f32.mrb[0].mxu0
  %409 = vmatprep.mubr.bf16.mxu0 0
  %410 = vmatmul.mubr.bf16.gmra.mrb[0].mxu0 %v299
  %v411 = vpop.f32.mrb[0].mxu0
  %v412 = vadd.f32 0.0, %v411
  %v413 = vpop.f32.mrb[0].mxu0
  %v414 = vpop.f32.mrb[0].mxu0
  %v415 = vpop.f32.mrb[0].mxu0
  %416 = vdwg.mxu0
  %v418 = vsel %vm270, %v136, 0
  %v421 = vsel %vm270, %v137, 0
  %v424 = vsel %vm270, %v138, 0
  %v427 = vsel %vm270, %v139, 0
  %v430 = vsel %vm270, %v140, 0
  %v433 = vsel %vm270, %v141, 0
  %v436 = vsel %vm270, %v142, 0
  %v439 = vsel %vm270, %v143, 0
  %v442 = vsel %vm270, %v144, 0
  %v445 = vsel %vm270, %v145, 0
  %v448 = vsel %vm301, %v146, 0
  %450 = vmatprep.subr.bf16.mxu0 0
  %451 = vmatpush1.bf16.msra.mxu0 %v448
  %452 = vmatprep.subr.bf16.mxu0 0
  %453 = vmatpush1.bf16.msra.mxu0 0
  %454 = vmatprep.subr.bf16.mxu0 0
  %455 = vmatpush1.bf16.msra.mxu0 0
  %456 = vmatprep.subr.bf16.mxu0 0
  %457 = vmatpush1.bf16.msra.mxu0 0
  %458 = vmatprep.subr.bf16.mxu0 0
  %459 = vmatpush1.bf16.msra.mxu0 0
  %460 = vmatprep.subr.bf16.mxu0 0
  %461 = vmatpush1.bf16.msra.mxu0 0
  %462 = vmatprep.subr.bf16.mxu0 0
  %463 = vmatpush1.bf16.msra.mxu0 0
  %464 = vmatprep.subr.bf16.mxu0 0
  %465 = vmatpush1.bf16.msra.mxu0 0
  %466 = vmatprep.subr.bf16.mxu0 0
  %467 = vmatpush1.bf16.msra.mxu0 0
  %468 = vmatprep.subr.bf16.mxu0 0
  %469 = vmatpush1.bf16.msra.mxu0 0
  %470 = vmatprep.subr.bf16.mxu0 0
  %471 = vmatpush1.bf16.msra.mxu0 0
  %472 = vmatprep.subr.bf16.mxu0 0
  %473 = vmatpush1.bf16.msra.mxu0 0
  %474 = vmatprep.subr.bf16.mxu0 0
  %475 = vmatpush1.bf16.msra.mxu0 0
  %476 = vmatprep.subr.bf16.mxu0 0
  %477 = vmatpush1.bf16.msra.mxu0 0
  %478 = vmatprep.subr.bf16.mxu0 0
  %479 = vmatpush1.bf16.msra.mxu0 0
  %480 = vmatprep.subr.bf16.mxu0 0
  %481 = vmatpush1.bf16.msra.mxu0 0
  %482 = vmatprep.mubr.bf16.mxu0 0
  %483 = vmatmul.mubr.bf16.gmra.mrb[0].mxu0 %v418
  %v484 = vpop.f32.mrb[0].mxu0
  %v485 = vadd.f32 %v340, %v484
  %v486 = vpop.f32.mrb[0].mxu0
  %v487 = vpop.f32.mrb[0].mxu0
  %v488 = vadd.f32 %v343, %v487
  %v489 = vpop.f32.mrb[0].mxu0
  %490 = vmatprep.mubr.bf16.mxu0 0
  %491 = vmatmul.mubr.bf16.gmra.mrb[0].mxu0 %v421
  %v492 = vpop.f32.mrb[0].mxu0
  %v493 = vadd.f32 %v348, %v492
  %v494 = vpop.f32.mrb[0].mxu0
  %v495 = vpop.f32.mrb[0].mxu0
  %v496 = vadd.f32 %v351, %v495
  %v497 = vpop.f32.mrb[0].mxu0
  %498 = vmatprep.mubr.bf16.mxu0 0
  %499 = vmatmul.mubr.bf16.gmra.mrb[0].mxu0 %v424
  %v500 = vpop.f32.mrb[0].mxu0
  %v501 = vadd.f32 %v356, %v500
  %v502 = vpop.f32.mrb[0].mxu0
  %v503 = vpop.f32.mrb[0].mxu0
  %v504 = vadd.f32 %v359, %v503
  %v505 = vpop.f32.mrb[0].mxu0
  %506 = vmatprep.mubr.bf16.mxu0 0
  %507 = vmatmul.mubr.bf16.gmra.mrb[0].mxu0 %v427
  %v508 = vpop.f32.mrb[0].mxu0
  %v509 = vadd.f32 %v364, %v508
  %v510 = vpop.f32.mrb[0].mxu0
  %v511 = vpop.f32.mrb[0].mxu0
  %v512 = vadd.f32 %v367, %v511
  %v513 = vpop.f32.mrb[0].mxu0
  %514 = vmatprep.mubr.bf16.mxu0 0
  %515 = vmatmul.mubr.bf16.gmra.mrb[0].mxu0 %v430
  %v516 = vpop.f32.mrb[0].mxu0
  %v517 = vadd.f32 %v372, %v516
  %v518 = vpop.f32.mrb[0].mxu0
  %v519 = vpop.f32.mrb[0].mxu0
  %v520 = vadd.f32 %v375, %v519
  %v521 = vpop.f32.mrb[0].mxu0
  %522 = vmatprep.mubr.bf16.mxu0 0
  %523 = vmatmul.mubr.bf16.gmra.mrb[0].mxu0 %v433
  %v524 = vpop.f32.mrb[0].mxu0
  %v525 = vadd.f32 %v380, %v524
  %v526 = vpop.f32.mrb[0].mxu0
  %v527 = vpop.f32.mrb[0].mxu0
  %v528 = vadd.f32 %v383, %v527
  %v529 = vpop.f32.mrb[0].mxu0
  %530 = vmatprep.mubr.bf16.mxu0 0
  %531 = vmatmul.mubr.bf16.gmra.mrb[0].mxu0 %v436
  %v532 = vpop.f32.mrb[0].mxu0
  %v533 = vadd.f32 %v388, %v532
  %v534 = vpop.f32.mrb[0].mxu0
  %v535 = vpop.f32.mrb[0].mxu0
  %v536 = vadd.f32 %v391, %v535
  %v537 = vpop.f32.mrb[0].mxu0
  %538 = vmatprep.mubr.bf16.mxu0 0
  %539 = vmatmul.mubr.bf16.gmra.mrb[0].mxu0 %v439
  %v540 = vpop.f32.mrb[0].mxu0
  %v541 = vadd.f32 %v396, %v540
  %v542 = vpop.f32.mrb[0].mxu0
  %v543 = vpop.f32.mrb[0].mxu0
  %v544 = vadd.f32 %v399, %v543
  %v545 = vpop.f32.mrb[0].mxu0
  %546 = vmatprep.mubr.bf16.mxu0 0
  %547 = vmatmul.mubr.bf16.gmra.mrb[0].mxu0 %v442
  %v548 = vpop.f32.mrb[0].mxu0
  %v549 = vadd.f32 %v404, %v548
  %v550 = vpop.f32.mrb[0].mxu0
  %v551 = vpop.f32.mrb[0].mxu0
  %v552 = vadd.f32 %v407, %v551
  %v553 = vpop.f32.mrb[0].mxu0
  %554 = vmatprep.mubr.bf16.mxu0 0
  %555 = vmatmul.mubr.bf16.gmra.mrb[0].mxu0 %v445
  %v556 = vpop.f32.mrb[0].mxu0
  %v557 = vadd.f32 %v412, %v556
  %v558 = vpop.f32.mrb[0].mxu0
  %v559 = vpop.f32.mrb[0].mxu0
  %v560 = vpop.f32.mrb[0].mxu0
  %561 = vdwg.mxu0
  %v562 = vld [vmem:[%s2] sm:$0xf]
  %v563 = vld [vmem:[%s2 + $0x4] sm:$0xf]
  %v564 = vld [vmem:[%s2 + $0x8] sm:$0xf]
  %v565 = vld [vmem:[%s2 + $0xc] sm:$0xf]
  %v566 = vld [vmem:[%s2 + $0x10] sm:$0xf]
  %v567 = vld [vmem:[%s2 + $0x14] sm:$0xf]
  %v568 = vld [vmem:[%s2 + $0x18] sm:$0xf]
  %v569 = vld [vmem:[%s2 + $0x1c] sm:$0xf]
  %v570 = vld [vmem:[%s2 + $0x20] sm:$0xf]
  %v571 = vld [vmem:[%s2 + $0x24] sm:$0xf]
  %v572 = vld [vmem:[%s2 + $0x28] sm:$0xf]
  %v573 = vld [vmem:[%s2 + $0x2c] sm:$0xf]
  %v574 = vld [vmem:[%s2 + $0x30] sm:$0xf]
  %v575 = vld [vmem:[%s2 + $0x34] sm:$0xf]
  %v576 = vld [vmem:[%s2 + $0x38] sm:$0xf]
  %v577 = vld [vmem:[%s2 + $0x3c] sm:$0xf]
  %v578 = vld [vmem:[%s2 + $0x40] sm:$0xf]
  %v579 = vld [vmem:[%s2 + $0x44] sm:$0xf]
  %v580 = vld [vmem:[%s2 + $0x48] sm:$0xf]
  %v581 = vunpack.c.l.bf16 %v562
  %v582 = vunpack.c.l.bf16 %v563
  %v583 = vunpack.c.l.bf16 %v564
  %v584 = vunpack.c.l.bf16 %v565
  %v585 = vunpack.c.l.bf16 %v566
  %v586 = vunpack.c.l.bf16 %v567
  %v587 = vunpack.c.l.bf16 %v568
  %v588 = vunpack.c.l.bf16 %v569
  %v589 = vunpack.c.l.bf16 %v570
  %v590 = vunpack.c.l.bf16 %v571
  %v591 = vunpack.c.l.bf16 %v572
  %v592 = vunpack.c.l.bf16 %v573
  %v593 = vunpack.c.l.bf16 %v574
  %v594 = vunpack.c.l.bf16 %v575
  %v595 = vunpack.c.l.bf16 %v576
  %v596 = vunpack.c.l.bf16 %v577
  %v597 = vunpack.c.l.bf16 %v578
  %v598 = vunpack.c.l.bf16 %v579
  %v599 = vunpack.c.l.bf16 %v580
  %s600 = scalar_lea.vmem %s3, 2
  %v601 = vld [vmem:[%s600] sm:$0x1]
  %v603 = vlaneseq
  %v604 = vshrl.u32 %v603, 7
  %v605 = vsub.s32 0, %v604
  %v606 = vrot.slane %v601, %v605
  %v608 = vmul.f32 %v581, %v606
  %v609 = vmul.f32 %v582, %v606
  %v610 = vmul.f32 %v583, %v606
  %v611 = vmul.f32 %v584, %v606
  %v612 = vmul.f32 %v585, %v606
  %v613 = vmul.f32 %v586, %v606
  %v614 = vmul.f32 %v587, %v606
  %v615 = vmul.f32 %v588, %v606
  %v616 = vmul.f32 %v589, %v606
  %v617 = vmul.f32 %v590, %v606
  %v618 = vmul.f32 %v591, %v606
  %v619 = vmul.f32 %v592, %v606
  %v620 = vmul.f32 %v593, %v606
  %v621 = vmul.f32 %v594, %v606
  %v622 = vmul.f32 %v595, %v606
  %v623 = vmul.f32 %v596, %v606
  %v624 = vmul.f32 %v597, %v606
  %v625 = vmul.f32 %v598, %v606
  %v626 = vmul.f32 %v599, %v606
  %s627 = scalar_lea.vmem %s4, 2
  %v628 = vld [vmem:[%s627] sm:$0x1]
  %v630 = vlaneseq
  %v631 = vshrl.u32 %v630, 7
  %v632 = vsub.s32 0, %v631
  %v633 = vrot.slane %v628, %v632
  %v635 = vadd.f32 %v608, %v633
  %v636 = vadd.f32 %v609, %v633
  %v637 = vadd.f32 %v610, %v633
  %v638 = vadd.f32 %v611, %v633
  %v639 = vadd.f32 %v612, %v633
  %v640 = vadd.f32 %v613, %v633
  %v641 = vadd.f32 %v614, %v633
  %v642 = vadd.f32 %v615, %v633
  %v643 = vadd.f32 %v616, %v633
  %v644 = vadd.f32 %v617, %v633
  %v645 = vadd.f32 %v618, %v633
  %v646 = vadd.f32 %v619, %v633
  %v647 = vadd.f32 %v620, %v633
  %v648 = vadd.f32 %v621, %v633
  %v649 = vadd.f32 %v622, %v633
  %v650 = vadd.f32 %v623, %v633
  %v651 = vadd.f32 %v624, %v633
  %v652 = vadd.f32 %v625, %v633
  %v653 = vadd.f32 %v626, %v633
  %v654 = vmax.f32 %v635, 0.0
  %v655 = vmax.f32 %v636, 0.0
  %v656 = vmax.f32 %v637, 0.0
  %v657 = vmax.f32 %v638, 0.0
  %v658 = vmax.f32 %v639, 0.0
  %v659 = vmax.f32 %v640, 0.0
  %v660 = vmax.f32 %v641, 0.0
  %v661 = vmax.f32 %v642, 0.0
  %v662 = vmax.f32 %v643, 0.0
  %v663 = vmax.f32 %v644, 0.0
  %v664 = vmax.f32 %v645, 0.0
  %v665 = vmax.f32 %v646, 0.0
  %v666 = vmax.f32 %v647, 0.0
  %v667 = vmax.f32 %v648, 0.0
  %v668 = vmax.f32 %v649, 0.0
  %v669 = vmax.f32 %v650, 0.0
  %v670 = vmax.f32 %v651, 0.0
  %v671 = vmax.f32 %v652, 0.0
  %v672 = vmax.f32 %v653, 0.0
  %v673 = vpack.c.bf16 %v655, %v654
  %v674 = vpack.c.bf16 %v657, %v656
  %v675 = vpack.c.bf16 %v659, %v658
  %v676 = vpack.c.bf16 %v661, %v660
  %v677 = vpack.c.bf16 %v663, %v662
  %v678 = vpack.c.bf16 %v665, %v664
  %v679 = vpack.c.bf16 %v667, %v666
  %v680 = vpack.c.bf16 %v669, %v668
  %v681 = vpack.c.bf16 %v671, %v670
  %v682 = vpack.c.bf16 %v672, %v672
  %s683 = scalar_lea.vmem %s5, 8
  %v684 = vld [vmem:[%s683] sm:$0xf]
  %v686 = vsel %vm270, %v673, 0
  %v689 = vsel %vm270, %v674, 0
  %v692 = vsel %vm270, %v675, 0
  %v695 = vsel %vm270, %v676, 0
  %v698 = vsel %vm270, %v677, 0
  %v701 = vsel %vm270, %v678, 0
  %v704 = vsel %vm270, %v679, 0
  %v707 = vsel %vm270, %v680, 0
  %v710 = vsel %vm270, %v681, 0
  %v713 = vsel %vm270, %v682, 0
  %v716 = vsel %vm301, %v684, 0
  %718 = vmatprep.subr.bf16.mxu0 0
  %719 = vmatpush1.bf16.msra.mxu0 %v716
  %720 = vmatprep.subr.bf16.mxu0 0
  %721 = vmatpush1.bf16.msra.mxu0 0
  %722 = vmatprep.subr.bf16.mxu0 0
  %723 = vmatpush1.bf16.msra.mxu0 0
  %724 = vmatprep.subr.bf16.mxu0 0
  %725 = vmatpush1.bf16.msra.mxu0 0
  %726 = vmatprep.subr.bf16.mxu0 0
  %727 = vmatpush1.bf16.msra.mxu0 0
  %728 = vmatprep.subr.bf16.mxu0 0
  %729 = vmatpush1.bf16.msra.mxu0 0
  %730 = vmatprep.subr.bf16.mxu0 0
  %731 = vmatpush1.bf16.msra.mxu0 0
  %732 = vmatprep.subr.bf16.mxu0 0
  %733 = vmatpush1.bf16.msra.mxu0 0
  %734 = vmatprep.subr.bf16.mxu0 0
  %735 = vmatpush1.bf16.msra.mxu0 0
  %736 = vmatprep.subr.bf16.mxu0 0
  %737 = vmatpush1.bf16.msra.mxu0 0
  %738 = vmatprep.subr.bf16.mxu0 0
  %739 = vmatpush1.bf16.msra.mxu0 0
  %740 = vmatprep.subr.bf16.mxu0 0
  %741 = vmatpush1.bf16.msra.mxu0 0
  %742 = vmatprep.subr.bf16.mxu0 0
  %743 = vmatpush1.bf16.msra.mxu0 0
  %744 = vmatprep.subr.bf16.mxu0 0
  %745 = vmatpush1.bf16.msra.mxu0 0
  %746 = vmatprep.subr.bf16.mxu0 0
  %747 = vmatpush1.bf16.msra.mxu0 0
  %748 = vmatprep.subr.bf16.mxu0 0
  %749 = vmatpush1.bf16.msra.mxu0 0
  %750 = vmatprep.mubr.bf16.mxu0 0
  %751 = vmatmul.mubr.bf16.gmra.mrb[0].mxu0 %v686
  %v752 = vpop.f32.mrb[0].mxu0
  %v753 = vadd.f32 0.0, %v752
  %v754 = vpop.f32.mrb[0].mxu0
  %v755 = vpop.f32.mrb[0].mxu0
  %v756 = vadd.f32 0.0, %v755
  %v757 = vpop.f32.mrb[0].mxu0
  %758 = vmatprep.mubr.bf16.mxu0 0
  %759 = vmatmul.mubr.bf16.gmra.mrb[0].mxu0 %v689
  %v760 = vpop.f32.mrb[0].mxu0
  %v761 = vadd.f32 0.0, %v760
  %v762 = vpop.f32.mrb[0].mxu0
  %v763 = vpop.f32.mrb[0].mxu0
  %v764 = vadd.f32 0.0, %v763
  %v765 = vpop.f32.mrb[0].mxu0
  %766 = vmatprep.mubr.bf16.mxu0 0
  %767 = vmatmul.mubr.bf16.gmra.mrb[0].mxu0 %v692
  %v768 = vpop.f32.mrb[0].mxu0
  %v769 = vadd.f32 0.0, %v768
  %v770 = vpop.f32.mrb[0].mxu0
  %v771 = vpop.f32.mrb[0].mxu0
  %v772 = vadd.f32 0.0, %v771
  %v773 = vpop.f32.mrb[0].mxu0
  %774 = vmatprep.mubr.bf16.mxu0 0
  %775 = vmatmul.mubr.bf16.gmra.mrb[0].mxu0 %v695
  %v776 = vpop.f32.mrb[0].mxu0
  %v777 = vadd.f32 0.0, %v776
  %v778 = vpop.f32.mrb[0].mxu0
  %v779 = vpop.f32.mrb[0].mxu0
  %v780 = vadd.f32 0.0, %v779
  %v781 = vpop.f32.mrb[0].mxu0
  %782 = vmatprep.mubr.bf16.mxu0 0
  %783 = vmatmul.mubr.bf16.gmra.mrb[0].mxu0 %v698
  %v784 = vpop.f32.mrb[0].mxu0
  %v785 = vadd.f32 0.0, %v784
  %v786 = vpop.f32.mrb[0].mxu0
  %v787 = vpop.f32.mrb[0].mxu0
  %v788 = vadd.f32 0.0, %v787
  %v789 = vpop.f32.mrb[0].mxu0
  %790 = vmatprep.mubr.bf16.mxu0 0
  %791 = vmatmul.mubr.bf16.gmra.mrb[0].mxu0 %v701
  %v792 = vpop.f32.mrb[0].mxu0
  %v793 = vadd.f32 0.0, %v792
  %v794 = vpop.f32.mrb[0].mxu0
  %v795 = vpop.f32.mrb[0].mxu0
  %v796 = vadd.f32 0.0, %v795
  %v797 = vpop.f32.mrb[0].mxu0
  %798 = vmatprep.mubr.bf16.mxu0 0
  %799 = vmatmul.mubr.bf16.gmra.mrb[0].mxu0 %v704
  %v800 = vpop.f32.mrb[0].mxu0
  %v801 = vadd.f32 0.0, %v800
  %v802 = vpop.f32.mrb[0].mxu0
  %v803 = vpop.f32.mrb[0].mxu0
  %v804 = vadd.f32 0.0, %v803
  %v805 = vpop.f32.mrb[0].mxu0
  %806 = vmatprep.mubr.bf16.mxu0 0
  %807 = vmatmul.mubr.bf16.gmra.mrb[0].mxu0 %v707
  %v808 = vpop.f32.mrb[0].mxu0
  %v809 = vadd.f32 0.0, %v808
  %v810 = vpop.f32.mrb[0].mxu0
  %v811 = vpop.f32.mrb[0].mxu0
  %v812 = vadd.f32 0.0, %v811
  %v813 = vpop.f32.mrb[0].mxu0
  %814 = vmatprep.mubr.bf16.mxu0 0
  %815 = vmatmul.mubr.bf16.gmra.mrb[0].mxu0 %v710
  %v816 = vpop.f32.mrb[0].mxu0
  %v817 = vadd.f32 0.0, %v816
  %v818 = vpop.f32.mrb[0].mxu0
  %v819 = vpop.f32.mrb[0].mxu0
  %v820 = vadd.f32 0.0, %v819
  %v821 = vpop.f32.mrb[0].mxu0
  %822 = vmatprep.mubr.bf16.mxu0 0
  %823 = vmatmul.mubr.bf16.gmra.mrb[0].mxu0 %v713
  %v824 = vpop.f32.mrb[0].mxu0
  %v825 = vadd.f32 0.0, %v824
  %v826 = vpop.f32.mrb[0].mxu0
  %v827 = vpop.f32.mrb[0].mxu0
  %v828 = vpop.f32.mrb[0].mxu0
  %829 = vdwg.mxu0
  %v830 = vadd.f32 %v485, %v753
  %v831 = vadd.f32 %v488, %v756
  %v832 = vadd.f32 %v493, %v761
  %v833 = vadd.f32 %v496, %v764
  %v834 = vadd.f32 %v501, %v769
  %v835 = vadd.f32 %v504, %v772
  %v836 = vadd.f32 %v509, %v777
  %v837 = vadd.f32 %v512, %v780
  %v838 = vadd.f32 %v517, %v785
  %v839 = vadd.f32 %v520, %v788
  %v840 = vadd.f32 %v525, %v793
  %v841 = vadd.f32 %v528, %v796
  %v842 = vadd.f32 %v533, %v801
  %v843 = vadd.f32 %v536, %v804
  %v844 = vadd.f32 %v541, %v809
  %v845 = vadd.f32 %v544, %v812
  %v846 = vadd.f32 %v549, %v817
  %v847 = vadd.f32 %v552, %v820
  %v848 = vadd.f32 %v557, %v825
  %v849 = vld [vmem:[%s6] sm:$0x1]
  %v851 = vlaneseq
  %v852 = vshrl.u32 %v851, 7
  %v853 = vsub.s32 0, %v852
  %v854 = vrot.slane %v849, %v853
  %v856 = vadd.f32 %v830, %v854
  %v857 = vadd.f32 %v831, %v854
  %v858 = vadd.f32 %v832, %v854
  %v859 = vadd.f32 %v833, %v854
  %v860 = vadd.f32 %v834, %v854
  %v861 = vadd.f32 %v835, %v854
  %v862 = vadd.f32 %v836, %v854
  %v863 = vadd.f32 %v837, %v854
  %v864 = vadd.f32 %v838, %v854
  %v865 = vadd.f32 %v839, %v854
  %v866 = vadd.f32 %v840, %v854
  %v867 = vadd.f32 %v841, %v854
  %v868 = vadd.f32 %v842, %v854
  %v869 = vadd.f32 %v843, %v854
  %v870 = vadd.f32 %v844, %v854
  %v871 = vadd.f32 %v845, %v854
  %v872 = vadd.f32 %v846, %v854
  %v873 = vadd.f32 %v847, %v854
  %v874 = vadd.f32 %v848, %v854
  %vm875 = vcmask 23552
  %876 = vst.msk [vmem:[%s7] sm:$0xff] %vm875, %v856
  %877 = vst.msk [vmem:[%s7 + $0x8] sm:$0xff] %vm875, %v857
  %878 = vst.msk [vmem:[%s7 + $0x10] sm:$0xff] %vm875, %v858
  %879 = vst.msk [vmem:[%s7 + $0x18] sm:$0xff] %vm875, %v859
  %880 = vst.msk [vmem:[%s7 + $0x20] sm:$0xff] %vm875, %v860
  %881 = vst.msk [vmem:[%s7 + $0x28] sm:$0xff] %vm875, %v861
  %882 = vst.msk [vmem:[%s7 + $0x30] sm:$0xff] %vm875, %v862
  %883 = vst.msk [vmem:[%s7 + $0x38] sm:$0xff] %vm875, %v863
  %884 = vst.msk [vmem:[%s7 + $0x40] sm:$0xff] %vm875, %v864
  %885 = vst.msk [vmem:[%s7 + $0x48] sm:$0xff] %vm875, %v865
  %886 = vst.msk [vmem:[%s7 + $0x50] sm:$0xff] %vm875, %v866
  %887 = vst.msk [vmem:[%s7 + $0x58] sm:$0xff] %vm875, %v867
  %888 = vst.msk [vmem:[%s7 + $0x60] sm:$0xff] %vm875, %v868
  %889 = vst.msk [vmem:[%s7 + $0x68] sm:$0xff] %vm875, %v869
  %890 = vst.msk [vmem:[%s7 + $0x70] sm:$0xff] %vm875, %v870
  %891 = vst.msk [vmem:[%s7 + $0x78] sm:$0xff] %vm875, %v871
  %892 = vst.msk [vmem:[%s7 + $0x80] sm:$0xff] %vm875, %v872
  %893 = vst.msk [vmem:[%s7 + $0x88] sm:$0xff] %vm875, %v873
  %894 = vst.msk [vmem:[%s7 + $0x90] sm:$0xff] %vm875, %v874
  // Predicated region
  $region30: #{motion_prediction_forward.23} parent=0 // pred_check
    _
  $region31: #{motion_prediction_forward.23} parent=0 // pred_check_branch
    %896 = sbr.rel (0) target = $region33
  $region32: #{motion_prediction_forward.23} parent=0 // pred_region
    _
  $region33: #{motion_prediction_forward.23} parent=0 // pred_fallthru
    _
  // Predicated region
  $region34: #{motion_prediction_forward.23} parent=0 // pred_check
    _
  $region35: #{motion_prediction_forward.23} parent=0 // pred_check_branch
    %898 = sbr.rel (0) target = $region37
  $region36: #{motion_prediction_forward.23} parent=0 // pred_region
    _
  $region37: #{motion_prediction_forward.23} parent=0 // pred_fallthru
    _

// kernel: motion_prediction_forward.20
$region0: #{motion_prediction_forward.20}
  #allocation0 [shape = 'u32[]', space=smem, size = 0x4, offset = 0x4, fixed_abs, tag = 'smem constant byte address 0x4 - core index']
  #allocation1 [shape = 'u32[144,128]{1,0:T(1,128)}', space=vmem, size = 0x12000, scoped, tag = 'internal scratch']
  %s0 = inlined_call_operand.vmem [shape: bf16[24,216], index: 0, kind: input, shape index: {}]
  %s1 = inlined_call_operand.vmem [shape: bf16[24,27], index: 1, kind: input, shape index: {}]
  %s2 = inlined_call_operand.vmem [shape: f32[1,216], index: 2, kind: input, shape index: {}]
  %s3 = inlined_call_operand.vmem [shape: f32[1,216], index: 3, kind: input, shape index: {}]
  %s4 = inlined_call_operand.vmem [shape: bf16[216,8], index: 4, kind: input, shape index: {}]
  %s5 = inlined_call_operand.vmem [shape: f32[27,8], index: 5, kind: input, shape index: {}]
  %s6 = inlined_call_operand.vmem [shape: bf16[24,8], index: 6, kind: input, shape index: {}]
  %s7 = inlined_call_operand.vmem [shape: bf16[24,8], index: 7, kind: output, shape index: {0}]
  %s8 = inlined_call_operand.hbm [shape: f32[1,1,8], index: 8, kind: output, shape index: {1}]
  %s9 = inlined_call_operand.hbm [shape: f32[1,1,8], index: 9, kind: output, shape index: {2}]
  %10 = xla_tuple %s7, %s8, %s9
  %s11 = sld [smem:[#allocation0]]
  $region54: #{motion_prediction_forward.20} parent=0
    _
  %s13 = ssub.s32 1, %s11
  %s14 = scalar_select 0, %s13, %s11
  $region1: #{motion_prediction_forward.20} parent=0
    #allocation2 [shape = 'u8[512]{0}', space=vmem, size = 0x400, scoped, tag = 'output window, operand 1, single buffered']
    #allocation3 [shape = 's32[1]{0}', space=sflag, size = 0x4, scoped, tag = 'scoped memory for motion_prediction_forward.20']
    #allocation4 [shape = 'u8[512]{0}', space=vmem, size = 0x400, scoped, tag = 'output window, operand 2, single buffered']
    #allocation5 [shape = 's32[1]{0}', space=sflag, size = 0x4, scoped, tag = 'scoped memory for motion_prediction_forward.20']
    %15 = vsyncpa [#allocation3], 0
    %16 = vsyncpa [#allocation5], 0
    // Predicated region
    $region2: #{motion_prediction_forward.20} parent=1 // pred_check
      _
    $region3: #{motion_prediction_forward.20} parent=1 // pred_check_branch
      %18 = sbr.rel (0) target = $region5
    $region4: #{motion_prediction_forward.20} parent=1 // pred_region
      _
    $region5: #{motion_prediction_forward.20} parent=1 // pred_fallthru
      _
    // Predicated region
    $region6: #{motion_prediction_forward.20} parent=1 // pred_check
      _
    $region7: #{motion_prediction_forward.20} parent=1 // pred_check_branch
      %20 = sbr.rel (0) target = $region9
    $region8: #{motion_prediction_forward.20} parent=1 // pred_region
      _
    $region9: #{motion_prediction_forward.20} parent=1 // pred_fallthru
      _
    // Predicated region
    $region10: #{motion_prediction_forward.20} parent=1 // pred_check
      _
    $region11: #{motion_prediction_forward.20} parent=1 // pred_check_branch
      %22 = sbr.rel (0) target = $region13
    $region12: #{motion_prediction_forward.20} parent=1 // pred_region
      _
    $region13: #{motion_prediction_forward.20} parent=1 // pred_fallthru
      _
    // Predicated region
    $region14: #{motion_prediction_forward.20} parent=1 // pred_check
      _
    $region15: #{motion_prediction_forward.20} parent=1 // pred_check_branch
      %24 = sbr.rel (0) target = $region17
    $region16: #{motion_prediction_forward.20} parent=1 // pred_region
      _
    $region17: #{motion_prediction_forward.20} parent=1 // pred_fallthru
      _
    // Predicated region
    $region18: #{motion_prediction_forward.20} parent=1 // pred_check
      _
    $region19: #{motion_prediction_forward.20} parent=1 // pred_check_branch
      %26 = sbr.rel (0) target = $region21
    $region20: #{motion_prediction_forward.20} parent=1 // pred_region
      _
    $region21: #{motion_prediction_forward.20} parent=1 // pred_fallthru
      _
    // Predicated region
    $region22: #{motion_prediction_forward.20} parent=1 // pred_check
      _
    $region23: #{motion_prediction_forward.20} parent=1 // pred_check_branch
      %28 = sbr.rel (0) target = $region25
    $region24: #{motion_prediction_forward.20} parent=1 // pred_region
      _
    $region25: #{motion_prediction_forward.20} parent=1 // pred_fallthru
      _
    // Predicated region
    $region26: #{motion_prediction_forward.20} parent=1 // pred_check
      _
    $region27: #{motion_prediction_forward.20} parent=1 // pred_check_branch
      %30 = sbr.rel (0) target = $region29
    $region28: #{motion_prediction_forward.20} parent=1 // pred_region
      _
    $region29: #{motion_prediction_forward.20} parent=1 // pred_fallthru
      _
    %v32 = vld [vmem:[%s0] sm:$0xff]
    %v33 = vld [vmem:[%s0 + $0x8] sm:$0xff]
    %v34 = vld [vmem:[%s0 + $0x10] sm:$0xff]
    %v35 = vunpack.c.l.bf16 %v32
    %v36 = vunpack.c.h.bf16 %v32
    %v37 = vunpack.c.l.bf16 %v33
    %v38 = vunpack.c.h.bf16 %v33
    %v39 = vunpack.c.l.bf16 %v34
    %v40 = vunpack.c.h.bf16 %v34
    %v41 = vld [vmem:[%s2] sm:$0x3]
    %v43 = vlaneseq
    %v44 = vshrl.u32 %v43, 7
    %v45 = vsub.s32 0, %v44
    %v46 = vrot.slane %v41, %v45
    %v47 = vlaneseq
    %v48 = vshrl.u32 %v47, 7
    %v49 = vsub.s32 1, %v48
    %v50 = vrot.slane %v41, %v49
    %v53 = vmul.f32 %v35, %v46
    %v54 = vmul.f32 %v36, %v50
    %v55 = vmul.f32 %v37, %v46
    %v56 = vmul.f32 %v38, %v50
    %v57 = vmul.f32 %v39, %v46
    %v58 = vmul.f32 %v40, %v50
    %v59 = vld [vmem:[%s3] sm:$0x3]
    %v61 = vlaneseq
    %v62 = vshrl.u32 %v61, 7
    %v63 = vsub.s32 0, %v62
    %v64 = vrot.slane %v59, %v63
    %v65 = vlaneseq
    %v66 = vshrl.u32 %v65, 7
    %v67 = vsub.s32 1, %v66
    %v68 = vrot.slane %v59, %v67
    %v71 = vadd.f32 %v53, %v64
    %v72 = vadd.f32 %v54, %v68
    %v73 = vadd.f32 %v55, %v64
    %v74 = vadd.f32 %v56, %v68
    %v75 = vadd.f32 %v57, %v64
    %v76 = vadd.f32 %v58, %v68
    %v77 = vmax.f32 %v71, 0.0
    %v78 = vmax.f32 %v72, 0.0
    %v79 = vmax.f32 %v73, 0.0
    %v80 = vmax.f32 %v74, 0.0
    %v81 = vmax.f32 %v75, 0.0
    %v82 = vmax.f32 %v76, 0.0
    %v83 = vpack.c.bf16 %v79, %v77
    %v84 = vpack.c.bf16 %v80, %v78
    %v85 = vpack.c.bf16 %v81, %v81
    %v86 = vpack.c.bf16 %v82, %v82
    %v87 = vld [vmem:[%s4] sm:$0xf]
    %v88 = vld [vmem:[%s4 + $0x4] sm:$0xf]
    %v89 = vld [vmem:[%s4 + $0x8] sm:$0xf]
    %v90 = vld [vmem:[%s4 + $0xc] sm:$0xf]
    %v91 = vld [vmem:[%s4 + $0x10] sm:$0xf]
    %v92 = vld [vmem:[%s4 + $0x14] sm:$0xf]
    %v93 = vld [vmem:[%s4 + $0x18] sm:$0xf]
    %v94 = vld [vmem:[%s4 + $0x1c] sm:$0xf]
    %v95 = vld [vmem:[%s4 + $0x20] sm:$0xf]
    %v96 = vld [vmem:[%s4 + $0x24] sm:$0xf]
    %v97 = vld [vmem:[%s4 + $0x28] sm:$0xf]
    %v98 = vld [vmem:[%s4 + $0x2c] sm:$0xf]
    %v99 = vld [vmem:[%s4 + $0x30] sm:$0xf]
    %v100 = vld [vmem:[%s4 + $0x34] sm:$0xf]
    %v101 = vld [vmem:[%s4 + $0x38] sm:$0xf]
    %v102 = vld [vmem:[%s4 + $0x3c] sm:$0xf]
    %v103 = vld [vmem:[%s4 + $0x40] sm:$0xf]
    %v104 = vld [vmem:[%s4 + $0x44] sm:$0xf]
    %v105 = vld [vmem:[%s4 + $0x48] sm:$0xf]
    %v106 = vld [vmem:[%s4 + $0x4c] sm:$0xf]
    %v107 = vld [vmem:[%s4 + $0x50] sm:$0xf]
    %v108 = vld [vmem:[%s4 + $0x54] sm:$0xf]
    %v109 = vld [vmem:[%s4 + $0x58] sm:$0xf]
    %v110 = vld [vmem:[%s4 + $0x5c] sm:$0xf]
    %v111 = vld [vmem:[%s4 + $0x60] sm:$0xf]
    %v112 = vld [vmem:[%s4 + $0x64] sm:$0xf]
    %v113 = vld [vmem:[%s4 + $0x68] sm:$0xf]
    %v141 = vunpack.c.l.b16 %v87
    %v142 = vunpack.c.l.b16 %v88
    %v143 = vunpack.c.l.b16 %v89
    %v144 = vunpack.c.l.b16 %v90
    %v145 = vunpack.c.l.b16 %v91
    %v146 = vunpack.c.l.b16 %v92
    %v147 = vunpack.c.l.b16 %v93
    %v148 = vunpack.c.l.b16 %v94
    %v149 = vunpack.c.l.b16 %v95
    %v150 = vunpack.c.l.b16 %v96
    %v151 = vunpack.c.l.b16 %v97
    %v152 = vunpack.c.l.b16 %v98
    %v153 = vunpack.c.l.b16 %v99
    %v154 = vunpack.c.l.b16 %v100
    %v155 = vunpack.c.l.b16 %v101
    %v156 = vunpack.c.l.b16 %v102
    %v157 = vunpack.c.l.b16 %v103
    %v158 = vunpack.c.l.b16 %v104
    %v159 = vunpack.c.l.b16 %v105
    %v160 = vunpack.c.l.b16 %v106
    %v161 = vunpack.c.l.b16 %v107
    %v162 = vunpack.c.l.b16 %v108
    %v163 = vunpack.c.l.b16 %v109
    %v164 = vunpack.c.l.b16 %v110
    %v165 = vunpack.c.l.b16 %v111
    %v166 = vunpack.c.l.b16 %v112
    %v167 = vunpack.c.l.b16 %v113
    %v168 = vpack.c.b16 %v142, %v141
    %v169 = vpack.c.b16 %v144, %v143
    %v170 = vpack.c.b16 %v146, %v145
    %v171 = vpack.c.b16 %v148, %v147
    %v172 = vpack.c.b16 %v150, %v149
    %v173 = vpack.c.b16 %v152, %v151
    %v174 = vpack.c.b16 %v154, %v153
    %v175 = vpack.c.b16 %v156, %v155
    %v176 = vpack.c.b16 %v158, %v157
    %v177 = vpack.c.b16 %v160, %v159
    %v178 = vpack.c.b16 %v162, %v161
    %v179 = vpack.c.b16 %v164, %v163
    %v180 = vpack.c.b16 %v166, %v165
    %v181 = vpack.c.b16 %v167, %v167
    %vm195 = vcmask 719872
    %v197 = vsel %vm195, %v84, 0
    %v200 = vsel %vm195, %v86, 0
    %vm202 = vcmask 1043456
    %v204 = vsel %vm202, %v181, 0
    %206 = vmatprep.subr.bf16.mxu0 0
    %207 = vmatpush1.bf16.msra.mxu0 %v168
    %208 = vmatprep.subr.bf16.mxu0 0
    %209 = vmatpush1.bf16.msra.mxu0 %v169
    %210 = vmatprep.subr.bf16.mxu0 0
    %211 = vmatpush1.bf16.msra.mxu0 %v170
    %212 = vmatprep.subr.bf16.mxu0 0
    %213 = vmatpush1.bf16.msra.mxu0 %v171
    %214 = vmatprep.subr.bf16.mxu0 0
    %215 = vmatpush1.bf16.msra.mxu0 %v172
    %216 = vmatprep.subr.bf16.mxu0 0
    %217 = vmatpush1.bf16.msra.mxu0 %v173
    %218 = vmatprep.subr.bf16.mxu0 0
    %219 = vmatpush1.bf16.msra.mxu0 %v174
    %220 = vmatprep.subr.bf16.mxu0 0
    %221 = vmatpush1.bf16.msra.mxu0 %v175
    %222 = vmatprep.subr.bf16.mxu0 0
    %223 = vmatpush1.bf16.msra.mxu0 %v176
    %224 = vmatprep.subr.bf16.mxu0 0
    %225 = vmatpush1.bf16.msra.mxu0 %v177
    %226 = vmatprep.subr.bf16.mxu0 0
    %227 = vmatpush1.bf16.msra.mxu0 %v178
    %228 = vmatprep.subr.bf16.mxu0 0
    %229 = vmatpush1.bf16.msra.mxu0 %v179
    %230 = vmatprep.subr.bf16.mxu0 0
    %231 = vmatpush1.bf16.msra.mxu0 %v180
    %232 = vmatprep.subr.bf16.mxu0 0
    %233 = vmatpush1.bf16.msra.mxu0 %v204
    %234 = vmatprep.subr.bf16.mxu0 0
    %235 = vmatpush1.bf16.msra.mxu0 0
    %236 = vmatprep.subr.bf16.mxu0 0
    %237 = vmatpush1.bf16.msra.mxu0 0
    %238 = vmatprep.mubr.bf16.mxu0 %v197
    %239 = vmatmul.mubr.bf16.gmra.mrb[0].mxu0 %v83
    %v240 = vpop.f32.mrb[0].mxu0
    %v241 = vadd.f32 0.0, %v240
    %v242 = vpop.f32.mrb[0].mxu0
    %v243 = vpop.f32.mrb[0].mxu0
    %v244 = vadd.f32 0.0, %v243
    %v245 = vpop.f32.mrb[0].mxu0
    %246 = vmatprep.mubr.bf16.mxu0 %v200
    %247 = vmatmul.mubr.bf16.gmra.mrb[0].mxu0 %v85
    %v248 = vpop.f32.mrb[0].mxu0
    %v249 = vadd.f32 0.0, %v248
    %v250 = vpop.f32.mrb[0].mxu0
    %v251 = vpop.f32.mrb[0].mxu0
    %v252 = vpop.f32.mrb[0].mxu0
    %253 = vdwg.mxu0
    %v254 = vld [vmem:[%s1] sm:$0xf]
    %v255 = vld [vmem:[%s1 + $0x4] sm:$0xf]
    %v256 = vld [vmem:[%s1 + $0x8] sm:$0xf]
    %v257 = vunpack.c.l.bf16 %v254
    %v258 = vunpack.c.l.bf16 %v255
    %v259 = vunpack.c.l.bf16 %v256
    %v260 = vld [vmem:[%s5] sm:$0xff]
    %v261 = vld [vmem:[%s5 + $0x8] sm:$0xff]
    %v262 = vld [vmem:[%s5 + $0x10] sm:$0xff]
    %v263 = vld [vmem:[%s5 + $0x18] sm:$0x7]
    %vm264 = vcmask 220160
    %v266 = vsel %vm264, %v257, 0
    %v269 = vsel %vm264, %v258, 0
    %v272 = vsel %vm264, %v259, 0
    %vm274 = vcmask 1042432
    %v276 = vsel %vm274, %v263, 0
    %278 = vmatprep.subr.mxu0 0.0
    %279 = vmatpush1.msra.mxu0 %v260
    %280 = vmatprep.subr.mxu0 0.0
    %281 = vmatpush1.msra.mxu0 %v261
    %282 = vmatprep.subr.mxu0 0.0
    %283 = vmatpush1.msra.mxu0 %v262
    %284 = vmatprep.subr.mxu0 0.0
    %285 = vmatpush1.msra.mxu0 %v276
    %286 = vmatprep.subr.mxu0 0.0
    %287 = vmatpush1.msra.mxu0 0.0
    %288 = vmatprep.subr.mxu0 0.0
    %289 = vmatpush1.msra.mxu0 0.0
    %290 = vmatprep.subr.mxu0 0.0
    %291 = vmatpush1.msra.mxu0 0.0
    %292 = vmatprep.subr.mxu0 0.0
    %293 = vmatpush1.msra.mxu0 0.0
    %294 = vmatprep.subr.mxu0 0.0
    %295 = vmatpush1.msra.mxu0 0.0
    %296 = vmatprep.subr.mxu0 0.0
    %297 = vmatpush1.msra.mxu0 0.0
    %298 = vmatprep.subr.mxu0 0.0
    %299 = vmatpush1.msra.mxu0 0.0
    %300 = vmatprep.subr.mxu0 0.0
    %301 = vmatpush1.msra.mxu0 0.0
    %302 = vmatprep.subr.mxu0 0.0
    %303 = vmatpush1.msra.mxu0 0.0
    %304 = vmatprep.subr.mxu0 0.0
    %305 = vmatpush1.msra.mxu0 0.0
    %306 = vmatprep.subr.mxu0 0.0
    %307 = vmatpush1.msra.mxu0 0.0
    %308 = vmatprep.subr.mxu0 0.0
    %309 = vmatpush1.msra.mxu0 0.0
    %310 = vmatprep.subr.mxu0 0.0
    %311 = vmatpush1.msra.mxu0 0.0
    %312 = vmatprep.subr.mxu0 0.0
    %313 = vmatpush1.msra.mxu0 0.0
    %314 = vmatprep.subr.mxu0 0.0
    %315 = vmatpush1.msra.mxu0 0.0
    %316 = vmatprep.subr.mxu0 0.0
    %317 = vmatpush1.msra.mxu0 0.0
    %318 = vmatprep.subr.mxu0 0.0
    %319 = vmatpush1.msra.mxu0 0.0
    %320 = vmatprep.subr.mxu0 0.0
    %321 = vmatpush1.msra.mxu0 0.0
    %322 = vmatprep.subr.mxu0 0.0
    %323 = vmatpush1.msra.mxu0 0.0
    %324 = vmatprep.subr.mxu0 0.0
    %325 = vmatpush1.msra.mxu0 0.0
    %326 = vmatprep.subr.mxu0 0.0
    %327 = vmatpush1.msra.mxu0 0.0
    %328 = vmatprep.subr.mxu0 0.0
    %329 = vmatpush1.msra.mxu0 0.0
    %330 = vmatprep.subr.mxu0 0.0
    %331 = vmatpush1.msra.mxu0 0.0
    %332 = vmatprep.subr.mxu0 0.0
    %333 = vmatpush1.msra.mxu0 0.0
    %334 = vmatprep.subr.mxu0 0.0
    %335 = vmatpush1.msra.mxu0 0.0
    %336 = vmatprep.subr.mxu0 0.0
    %337 = vmatpush1.msra.mxu0 0.0
    %338 = vmatprep.subr.mxu0 0.0
    %339 = vmatpush1.msra.mxu0 0.0
    %340 = vmatprep.subr.mxu0 0.0
    %341 = vmatpush1.msra.mxu0 0.0
    %342 = vmatprep.mubr.f32.mxu0 0.0
    %343 = vmatmul.mubr.f32.gmra.mrb[0].mxu0 %v266
    %v344 = vpop.f32.mrb[0].mxu0
    %v345 = vadd.f32 0.0, %v344
    %v346 = vpop.f32.mrb[0].mxu0
    %347 = vmatprep.mubr.f32.mxu0 0.0
    %348 = vmatmul.mubr.f32.gmra.mrb[0].mxu0 %v269
    %v349 = vpop.f32.mrb[0].mxu0
    %v350 = vadd.f32 0.0, %v349
    %v351 = vpop.f32.mrb[0].mxu0
    %352 = vmatprep.mubr.f32.mxu0 0.0
    %353 = vmatmul.mubr.f32.gmra.mrb[0].mxu0 %v272
    %v354 = vpop.f32.mrb[0].mxu0
    %v355 = vadd.f32 0.0, %v354
    %v356 = vpop.f32.mrb[0].mxu0
    %357 = vdwg.mxu0
    %v358 = vsub.f32 %v241, %v345
    %v359 = vsub.f32 %v244, %v350
    %v360 = vsub.f32 %v249, %v355
    %v361 = vld [vmem:[%s6] sm:$0xf]
    %v362 = vld [vmem:[%s6 + $0x4] sm:$0xf]
    %v363 = vld [vmem:[%s6 + $0x8] sm:$0xf]
    %v364 = vunpack.c.l.bf16 %v361
    %v365 = vunpack.c.l.bf16 %v362
    %v366 = vunpack.c.l.bf16 %v363
    %v367 = vadd.f32 %v358, %v364
    %v368 = vadd.f32 %v359, %v365
    %v369 = vadd.f32 %v360, %v366
    %s370 = smul.u32 0, 24
    %v371 = vlaneseq
    %v372 = vshrl.u32 %v371, 7
    %v373 = vadd.s32 %v372, 8
    %v374 = vadd.s32 %v372, 16
    %v375 = vstv %s370
    %v376 = vadd.s32 %v375, %v372
    %v377 = vadd.s32 %v375, %v373
    %v378 = vadd.s32 %v375, %v374
    %vm379 = vcmp.lt.s32.totalorder %v376, 16
    %vm380 = vcmp.lt.s32.totalorder %v377, 16
    %vm381 = vcmp.lt.s32.totalorder %v378, 16
    %v382 = vsel %vm379, 1, 0
    %v383 = vsel %vm380, 1, 0
    %v384 = vsel %vm381, 1, 0
    %vm385 = vcmp.eq.s32.totalorder %v382, 1
    %vm386 = vcmp.eq.s32.totalorder %v383, 1
    %vm387 = vcmp.eq.s32.totalorder %v384, 1
    %v388 = vsel %vm385, %v367, 0.0
    %v389 = vsel %vm386, %v368, 0.0
    %v390 = vsel %vm387, %v369, 0.0
    %vm391 = vcmask 64512
    %v392 = vsel %vm391, %v388, 0.0
    %v393 = vsel %vm391, %v389, 0.0
    %v394 = vadd.f32 %v392, %v393
    %v395 = vsel %vm391, %v390, 0.0
    %v396 = vadd.f32 %v394, %v395
    %v397 = vrot.slane %v396, 4
    %v398 = vadd.f32 %v396, %v397
    %v399 = vrot.slane %v398, 2
    %v400 = vadd.f32 %v398, %v399
    %v401 = vrot.slane %v400, 1
    %v402 = vadd.f32 %v400, %v401
    %vm403 = vcmask 57344
    %404 = vst.msk [vmem:[#allocation2] sm:$0x1] %vm403, %v402
    %v405 = vmul.f32 %v388, %v388
    %v406 = vmul.f32 %v389, %v389
    %v407 = vmul.f32 %v390, %v390
    %v408 = vsel %vm391, %v405, 0.0
    %v409 = vsel %vm391, %v406, 0.0
    %v410 = vadd.f32 %v408, %v409
    %v411 = vsel %vm391, %v407, 0.0
    %v412 = vadd.f32 %v410, %v411
    %v413 = vrot.slane %v412, 4
    %v414 = vadd.f32 %v412, %v413
    %v415 = vrot.slane %v414, 2
    %v416 = vadd.f32 %v414, %v415
    %v417 = vrot.slane %v416, 1
    %v418 = vadd.f32 %v416, %v417
    %419 = vst.msk [vmem:[#allocation4] sm:$0x1] %vm403, %v418
    %v420 = vpack.c.bf16 %v389, %v388
    %v421 = vpack.c.bf16 %v390, %v390
    %v424 = vunpack.c.l.b16 %v420
    %v425 = vunpack.c.h.b16 %v420
    %v426 = vunpack.c.l.b16 %v421
    %v427 = vpack.c.b16 %v424, %v424
    %v428 = vpack.c.b16 %v425, %v425
    %v429 = vpack.c.b16 %v426, %v426
    %vm433 = vcmask 60416
    %434 = vst.msk [vmem:[%s7] sm:$0xf] %vm433, %v427
    %435 = vst.msk [vmem:[%s7 + $0x4] sm:$0xf] %vm433, %v428
    %436 = vst.msk [vmem:[%s7 + $0x8] sm:$0xf] %vm433, %v429
    // Predicated region
    $region30: #{motion_prediction_forward.20} parent=1 // pred_check
      _
    $region31: #{motion_prediction_forward.20} parent=1 // pred_check_branch
      %438 = sbr.rel (0) target = $region33
    $region32: #{motion_prediction_forward.20} parent=1 // pred_region
      _
    $region33: #{motion_prediction_forward.20} parent=1 // pred_fallthru
      _
    // Predicated region
    $region34: #{motion_prediction_forward.20} parent=1 // pred_check
      _
    $region35: #{motion_prediction_forward.20} parent=1 // pred_check_branch
      %440 = sbr.rel (0) target = $region37
    $region36: #{motion_prediction_forward.20} parent=1 // pred_region
      %s442 = ssub.s32 16, 16
      %443 = vsyncadd [#allocation3], %s442
      %s445 = sshll.u32 [#allocation2], 4
      %s446 = int_to_ptr.vmem [resolvable:$true] %s445
      %448 = dma.vmem_to_hbm [thread:$0]  %s446, 16, %s8, [#allocation3]
    $region37: #{motion_prediction_forward.20} parent=1 // pred_fallthru
      _
    // Predicated region
    $region38: #{motion_prediction_forward.20} parent=1 // pred_check
      _
    $region39: #{motion_prediction_forward.20} parent=1 // pred_check_branch
      %450 = sbr.rel (0) target = $region41
    $region40: #{motion_prediction_forward.20} parent=1 // pred_region
      %s452 = ssub.s32 16, 16
      %453 = vsyncadd [#allocation5], %s452
      %s455 = sshll.u32 [#allocation4], 4
      %s456 = int_to_ptr.vmem [resolvable:$true] %s455
      %458 = dma.vmem_to_hbm [thread:$0]  %s456, 16, %s9, [#allocation5]
    $region41: #{motion_prediction_forward.20} parent=1 // pred_fallthru
      _
    // Predicated region
    $region42: #{motion_prediction_forward.20} parent=1 // pred_check
      _
    $region43: #{motion_prediction_forward.20} parent=1 // pred_check_branch
      %460 = sbr.rel (0) target = $region45
    $region44: #{motion_prediction_forward.20} parent=1 // pred_region
      _
    $region45: #{motion_prediction_forward.20} parent=1 // pred_fallthru
      _
    // Predicated region
    $region46: #{motion_prediction_forward.20} parent=1 // pred_check
      _
    $region47: #{motion_prediction_forward.20} parent=1 // pred_check_branch
      %462 = sbr.rel (0) target = $region49
    $region48: #{motion_prediction_forward.20} parent=1 // pred_region
      %463 = dma.done [#allocation3], 16
    $region49: #{motion_prediction_forward.20} parent=1 // pred_fallthru
      _
    // Predicated region
    $region50: #{motion_prediction_forward.20} parent=1 // pred_check
      _
    $region51: #{motion_prediction_forward.20} parent=1 // pred_check_branch
      %465 = sbr.rel (0) target = $region53
    $region52: #{motion_prediction_forward.20} parent=1 // pred_region
      %466 = dma.done [#allocation5], 16
    $region53: #{motion_prediction_forward.20} parent=1 // pred_fallthru
      _
    %467 = vsyncpa [#allocation3], 1
    %468 = vsyncpa [#allocation5], 1

</llo_original>
